<compile_context>
chip_gen: v7x
topology: tpu7x:2x2x1
jax: 0.10.0
libtpu: 0.0.40
codegen_flags: <defaults>
</compile_context>

<pallas_src>
import functools

import jax
import jax.numpy as jnp
from jax.experimental import pallas as pl
from jax.experimental.pallas import tpu as pltpu

LANES = 128          # lane width; all matmul N dims are padded to this
KH = KW = 5          # conv kernel size (fixed by the model)


def _pick_tile(n, cap):
    """Largest divisor of n that is <= cap (static Python int)."""
    best = 1
    for d in range(1, min(n, cap) + 1):
        if n % d == 0:
            best = d
    return best


# ----------------------------- Pallas kernels ------------------------------


def _conv1_kernel(x_ref, w_ref, b_ref, o_ref, *, oh, ow):
    """conv1: in-kernel im2col (lane concat of taps) + MXU matmul + bias.

    x_ref: (TN, H, W, Cin) f32   raw image tile
    w_ref: (KH*KW*Cin, 128) bf16 lane-padded conv1 weights, rows in (ki,kj,c) order
    b_ref: (1, 128) f32          lane-padded bias
    o_ref: (TN*oh*ow, 128) f32   conv output rows ordered (n, i, j)
    """
    x = x_ref[...]
    cols = []
    for ki in range(KH):
        for kj in range(KW):
            cols.append(x[:, ki:ki + oh, kj:kj + ow, :])
    patches = jnp.concatenate(cols, axis=-1)            # (TN, oh, ow, KH*KW*Cin)
    patches = patches.reshape(-1, patches.shape[-1])    # (TN*oh*ow, K); ow % 8 == 0
    acc = jnp.dot(patches.astype(jnp.bfloat16), w_ref[...],
                  preferred_element_type=jnp.float32)   # MXU, f32 accumulate
    o_ref[...] = acc + b_ref[...]                       # f32 epilogue


def _conv2_kernel(p00_ref, p01_ref, p10_ref, p11_ref, w_ref, b_ref, o_ref,
                  *, cin, oh, ow):
    """Fused pool1(2x2)+ReLU prologue + conv2 (in-kernel im2col + matmul + bias).

    p??_ref: (TN, PH, PW, 128) f32  the 4 phase views of the conv1 output
    w_ref:   (KH*KW*cin, 128) bf16
    b_ref:   (1, 128) f32
    o_ref:   (TN*oh*ow, 128) f32
    """
    x = jnp.maximum(jnp.maximum(p00_ref[...], p01_ref[...]),
                    jnp.maximum(p10_ref[...], p11_ref[...]))   # 2x2 max-pool
    x = jnp.maximum(x, 0.0)                                    # ReLU (f32)
    x = x[..., :cin]                                           # compact channels
    cols = []
    for ki in range(KH):
        for kj in range(KW):
            cols.append(x[:, ki:ki + oh, kj:kj + ow, :])
    patches = jnp.concatenate(cols, axis=-1)                   # (TN, oh, ow, 25*cin)
    patches = patches.reshape(-1, patches.shape[-1])           # ow % 8 == 0
    acc = jnp.dot(patches.astype(jnp.bfloat16), w_ref[...],
                  preferred_element_type=jnp.float32)
    o_ref[...] = acc + b_ref[...]


def _head_kernel(f00_ref, f01_ref, f10_ref, f11_ref,
                 w1_ref, b1_ref, w2_ref, b2_ref, o_ref):
    """Fused pool2(2x2)+ReLU + fc1(+ReLU) + fc2.

    f??_ref: (TM, 2048) f32   flattened phase views of the conv2 output
    w1_ref:  (2048, 128) bf16 fc1 weights re-indexed to NHWC flatten order + padded
    w2_ref:  (128, 128)  bf16
    """
    x = jnp.maximum(jnp.maximum(f00_ref[...], f01_ref[...]),
                    jnp.maximum(f10_ref[...], f11_ref[...]))   # 2x2 max-pool
    x = jnp.maximum(x, 0.0)                                    # ReLU (f32)
    h = jnp.dot(x.astype(jnp.bfloat16), w1_ref[...],
                preferred_element_type=jnp.float32)
    h = jnp.maximum(h + b1_ref[...], 0.0)                      # fc1 bias + ReLU (f32)
    # TODO(synk): F.dropout(x, training=True) path not implemented; inference identity.
    out = jnp.dot(h.astype(jnp.bfloat16), w2_ref[...],
                  preferred_element_type=jnp.float32)
    o_ref[...] = out + b2_ref[...]


# ------------------------------ pallas_call wrappers ------------------------


def _conv1_call(x, w, b):
    n, h, wdt, c = x.shape
    oh, ow = h - KH + 1, wdt - KW + 1                 # 24, 24
    m = oh * ow
    kern = functools.partial(_conv1_kernel, oh=oh, ow=ow)
    out = pl.pallas_call(
        kern,
        out_shape=jax.ShapeDtypeStruct((n * m, LANES), jnp.float32),
        grid=(n,),                                     # one image per step; scales with batch
        in_specs=[
            pl.BlockSpec((1, h, wdt, c), lambda i: (i, 0, 0, 0)),
            pl.BlockSpec(w.shape, lambda i: (0, 0)),
            pl.BlockSpec((1, LANES), lambda i: (0, 0)),
        ],
        out_specs=pl.BlockSpec((m, LANES), lambda i: (i, 0)),
        compiler_params=pltpu.CompilerParams(dimension_semantics=("parallel",)),
    )(x, w, b)
    return out.reshape(n, oh, ow, LANES)


def _conv2_call(phases, w, b, cin):
    n, ph, pw, _ = phases[0].shape                    # (N, 12, 12, 128)
    oh, ow = ph - KH + 1, pw - KW + 1                 # 8, 8
    m = oh * ow
    tn = _pick_tile(n, 8)
    kern = functools.partial(_conv2_kernel, cin=cin, oh=oh, ow=ow)
    phase_spec = pl.BlockSpec((tn, ph, pw, LANES), lambda i: (i, 0, 0, 0))
    out = pl.pallas_call(
        kern,
        out_shape=jax.ShapeDtypeStruct((n * m, LANES), jnp.float32),
        grid=(n // tn,),
        in_specs=[phase_spec, phase_spec, phase_spec, phase_spec,
                  pl.BlockSpec(w.shape, lambda i: (0, 0)),
                  pl.BlockSpec((1, LANES), lambda i: (0, 0))],
        out_specs=pl.BlockSpec((tn * m, LANES), lambda i: (i, 0)),
        compiler_params=pltpu.CompilerParams(dimension_semantics=("parallel",)),
    )(*phases, w, b)
    return out.reshape(n, oh, ow, LANES)


def _head_call(flats, w1, b1, w2, b2):
    n, f = flats[0].shape
    tm = _pick_tile(n, 256)
    flat_spec = pl.BlockSpec((tm, f), lambda i: (i, 0))
    return pl.pallas_call(
        _head_kernel,
        out_shape=jax.ShapeDtypeStruct((n, LANES), jnp.float32),
        grid=(n // tm,),
        in_specs=[flat_spec, flat_spec, flat_spec, flat_spec,
                  pl.BlockSpec(w1.shape, lambda i: (0, 0)),
                  pl.BlockSpec((1, LANES), lambda i: (0, 0)),
                  pl.BlockSpec(w2.shape, lambda i: (0, 0)),
                  pl.BlockSpec((1, LANES), lambda i: (0, 0))],
        out_specs=pl.BlockSpec((tm, LANES), lambda i: (i, 0)),
        compiler_params=pltpu.CompilerParams(dimension_semantics=("parallel",)),
    )(*flats, w1, b1, w2, b2)


# ------------------------------- forward pass --------------------------------


def cnn_mnist_forward(prepped, x_nchw, *, num_classes=10):
    """Inference forward pass of CNNMnist (dropouts are identity)."""
    x = jnp.transpose(x_nchw, (0, 2, 3, 1)).astype(jnp.float32)   # NCHW -> NHWC
    n = x.shape[0]

    # conv1 (bias fused); output lane-padded to 128 channels.
    y1 = _conv1_call(x, prepped["w1"], prepped["b1"])             # (N, 24, 24, 128)

    # relu(max_pool2d(conv1, 2)) fused into conv2's prologue via 4 phase views.
    ph1 = [y1[:, pi::2, pj::2, :] for pi in (0, 1) for pj in (0, 1)]

    cin2 = prepped["w2"].shape[0] // (KH * KW)                    # 10 (static)
    y2 = _conv2_call(ph1, prepped["w2"], prepped["b2"], cin=cin2)  # (N, 8, 8, 128)
    # TODO(synk): Dropout2d on conv2 output not implemented; inference identity.

    # relu(max_pool2d(conv2, 2)) + flatten + fc1(+ReLU) + fc2 -> one fused kernel.
    ph2 = [y2[:, pi::2, pj::2, :].reshape(n, -1) for pi in (0, 1) for pj in (0, 1)]
    logits = _head_call(ph2, prepped["w_fc1"], prepped["b_fc1"],
                        prepped["w_fc2"], prepped["b_fc2"])       # (N, 128)
    return logits[:, :num_classes]                                # slice at the very end


# ----------------------------- parameter handling -----------------------------


def prepare_params(raw):
    """One-time prep: lane-pad to 128, re-order weights to NHWC-friendly layouts,
    and store MXU operands in bf16 (biases stay f32)."""
    def pad_cols(m):
        k, ncol = m.shape
        return jnp.zeros((k, LANES), jnp.float32).at[:, :ncol].set(m)

    def pad_bias(v):
        return jnp.zeros((1, LANES), jnp.float32).at[0, :v.shape[0]].set(v)

    def conv_mat(w):                                   # (O, Cin, kh, kw) -> (kh*kw*Cin, O)
        o, c, kh, kw = w.shape
        return jnp.transpose(w, (2, 3, 1, 0)).reshape(kh * kw * c, o)

    w1 = pad_cols(conv_mat(raw["conv1_w"])).astype(jnp.bfloat16)   # (25*C, 128)
    w2 = pad_cols(conv_mat(raw["conv2_w"])).astype(jnp.bfloat16)   # (250, 128)

    # fc1: torch flattens pooled conv2 output in (c, h, w) order with (c,h,w)=(20,4,4).
    # Re-index to our (h, w, c-padded-to-128) flatten order (no activation transpose).
    fc1 = raw["fc1_w"]                                              # (50, 320)
    o1, feat = fc1.shape
    c2_out, ph, pw = raw["conv2_w"].shape[0], 4, 4
    assert feat == c2_out * ph * pw
    fc1_chw = fc1.T.reshape(c2_out, ph, pw, o1)                     # (c, h, w, k)
    fc1_hwc = jnp.transpose(fc1_chw, (1, 2, 0, 3))                  # (h, w, c, k)
    fc1_pad = jnp.zeros((ph, pw, LANES, LANES), jnp.float32)
    fc1_pad = fc1_pad.at[:, :, :c2_out, :o1].set(fc1_hwc)
    w_fc1 = fc1_pad.reshape(ph * pw * LANES, LANES).astype(jnp.bfloat16)  # (2048, 128)

    fc2 = raw["fc2_w"]                                              # (ncls, 50)
    ncls, h1 = fc2.shape
    w_fc2 = jnp.zeros((LANES, LANES), jnp.float32).at[:h1, :ncls].set(fc2.T)
    w_fc2 = w_fc2.astype(jnp.bfloat16)

    return {
        "w1": w1, "b1": pad_bias(raw["conv1_b"]),
        "w2": w2, "b2": pad_bias(raw["conv2_b"]),
        "w_fc1": w_fc1, "b_fc1": pad_bias(raw["fc1_b"]),
        "w_fc2": w_fc2, "b_fc2": pad_bias(raw["fc2_b"]),
    }


def init_params(key, num_channels=1, num_classes=10):
    ks = jax.random.split(key, 8)

    def u(k, shape, fan_in):
        bound = 1.0 / (fan_in ** 0.5)
        return jax.random.uniform(k, shape, jnp.float32, -bound, bound)

    return {
        "conv1_w": u(ks[0], (10, num_channels, 5, 5), num_channels * 25),
        "conv1_b": u(ks[1], (10,), num_channels * 25),
        "conv2_w": u(ks[2], (20, 10, 5, 5), 10 * 25),
        "conv2_b": u(ks[3], (20,), 10 * 25),
        "fc1_w":  u(ks[4], (50, 320), 320),
        "fc1_b":  u(ks[5], (50,), 320),
        "fc2_w":  u(ks[6], (num_classes, 50), 50),
        "fc2_b":  u(ks[7], (num_classes,), 50),
    }


# ------------------------ pure-JAX reference (for checking) -------------------


def _ref_conv(x, w, b):
    n, h, wdt, c = x.shape
    o = w.shape[0]
    oh, ow = h - KH + 1, wdt - KW + 1
    cols = [x[:, ki:ki + oh, kj:kj + ow, :] for ki in range(KH) for kj in range(KW)]
    patches = jnp.concatenate(cols, axis=-1).reshape(n * oh * ow, KH * KW * c)
    wm = jnp.transpose(w, (2, 3, 1, 0)).reshape(KH * KW * c, o)
    y = jnp.dot(patches.astype(jnp.bfloat16), wm.astype(jnp.bfloat16),
                preferred_element_type=jnp.float32) + b
    return y.reshape(n, oh, ow, o)


def _ref_pool_relu(y):
    p = jnp.maximum(jnp.maximum(y[:, 0::2, 0::2, :], y[:, 0::2, 1::2, :]),
                    jnp.maximum(y[:, 1::2, 0::2, :], y[:, 1::2, 1::2, :]))
    return jnp.maximum(p, 0.0)


def reference_forward(raw, x_nchw):
    """Non-Pallas reference with matching bf16 matmul inputs / f32 accumulation."""
    x = jnp.transpose(x_nchw, (0, 2, 3, 1)).astype(jnp.float32)
    x = _ref_pool_relu(_ref_conv(x, raw["conv1_w"], raw["conv1_b"]))
    x = _ref_pool_relu(_ref_conv(x, raw["conv2_w"], raw["conv2_b"]))
    n = x.shape[0]
    flat = jnp.transpose(x, (0, 3, 1, 2)).reshape(n, -1)           # torch (C,H,W) flatten
    h = jnp.dot(flat.astype(jnp.bfloat16), raw["fc1_w"].T.astype(jnp.bfloat16),
                preferred_element_type=jnp.float32) + raw["fc1_b"]
    h = jnp.maximum(h, 0.0)
    out = jnp.dot(h.astype(jnp.bfloat16), raw["fc2_w"].T.astype(jnp.bfloat16),
                  preferred_element_type=jnp.float32) + raw["fc2_b"]
    return out


if __name__ == "__main__":
    key = jax.random.PRNGKey(0)
    pkey, xkey = jax.random.split(key)
    raw = init_params(pkey, num_channels=1, num_classes=10)
    prepped = prepare_params(raw)

    # Geometry is fixed by fc1's 320 = 20*4*4 input features => 28x28 MNIST images.
    x = jax.random.normal(xkey, (2, 1, 28, 28), jnp.float32)

    fwd = jax.jit(functools.partial(cnn_mnist_forward, num_classes=10))
    out = jax.block_until_ready(fwd(prepped, x))
    assert out.shape == (2, 10)

    ref = jax.block_until_ready(jax.jit(reference_forward)(raw, x))
    err = float(jnp.max(jnp.abs(out - ref)))
    assert err < 5e-2, f"max |pallas - reference| = {err}"
    print("KERNEL_OK")
</pallas_src>

<mosaic_0001>
module attributes {stable_mosaic.version = 11 : i64} {
  func.func @_conv1_kernel(%arg0: i32, %arg1: memref<1x28x28x1xf32, #tpu.memory_space<vmem>>, %arg2: memref<25x128xbf16, #tpu.memory_space<vmem>>, %arg3: memref<1x128xf32, #tpu.memory_space<vmem>>, %arg4: memref<576x128xf32, #tpu.memory_space<vmem>>) attributes {dimension_semantics = [#tpu.dimension_semantics<parallel>], iteration_bounds = array<i64: 2>, scalar_prefetch = 0 : i64, scratch_operands = 0 : i64, tpu.core_type = #tpu.core_type<tc>, window_params = [{transform_indices = @transform_0, window_bounds = array<i64: 1, 28, 28, 1>}, {pipeline_mode = #tpu.pipeline_mode<synchronous>, transform_indices = @transform_1, window_bounds = array<i64: 25, 128>}, {pipeline_mode = #tpu.pipeline_mode<synchronous>, transform_indices = @transform_2, window_bounds = array<i64: 1, 128>}, {transform_indices = @transform_3, window_bounds = array<i64: 576, 128>}]} {
    %c0 = arith.constant 0 : index
    %c0_0 = arith.constant 0 : index
    %c0_1 = arith.constant 0 : index
    %c0_2 = arith.constant 0 : index
    %0 = vector.load %arg1[%c0, %c0_0, %c0_1, %c0_2] : memref<1x28x28x1xf32, #tpu.memory_space<vmem>>, vector<1x28x28x1xf32>
    %1 = vector.extract_strided_slice %0 {offsets = [0, 0, 0, 0], sizes = [1, 24, 24, 1], strides = [1, 1, 1, 1]} : vector<1x28x28x1xf32> to vector<1x24x24x1xf32>
    %2 = vector.extract_strided_slice %0 {offsets = [0, 0, 1, 0], sizes = [1, 24, 24, 1], strides = [1, 1, 1, 1]} : vector<1x28x28x1xf32> to vector<1x24x24x1xf32>
    %3 = vector.extract_strided_slice %0 {offsets = [0, 0, 2, 0], sizes = [1, 24, 24, 1], strides = [1, 1, 1, 1]} : vector<1x28x28x1xf32> to vector<1x24x24x1xf32>
    %4 = vector.extract_strided_slice %0 {offsets = [0, 0, 3, 0], sizes = [1, 24, 24, 1], strides = [1, 1, 1, 1]} : vector<1x28x28x1xf32> to vector<1x24x24x1xf32>
    %5 = vector.extract_strided_slice %0 {offsets = [0, 0, 4, 0], sizes = [1, 24, 24, 1], strides = [1, 1, 1, 1]} : vector<1x28x28x1xf32> to vector<1x24x24x1xf32>
    %6 = vector.extract_strided_slice %0 {offsets = [0, 1, 0, 0], sizes = [1, 24, 24, 1], strides = [1, 1, 1, 1]} : vector<1x28x28x1xf32> to vector<1x24x24x1xf32>
    %7 = vector.extract_strided_slice %0 {offsets = [0, 1, 1, 0], sizes = [1, 24, 24, 1], strides = [1, 1, 1, 1]} : vector<1x28x28x1xf32> to vector<1x24x24x1xf32>
    %8 = vector.extract_strided_slice %0 {offsets = [0, 1, 2, 0], sizes = [1, 24, 24, 1], strides = [1, 1, 1, 1]} : vector<1x28x28x1xf32> to vector<1x24x24x1xf32>
    %9 = vector.extract_strided_slice %0 {offsets = [0, 1, 3, 0], sizes = [1, 24, 24, 1], strides = [1, 1, 1, 1]} : vector<1x28x28x1xf32> to vector<1x24x24x1xf32>
    %10 = vector.extract_strided_slice %0 {offsets = [0, 1, 4, 0], sizes = [1, 24, 24, 1], strides = [1, 1, 1, 1]} : vector<1x28x28x1xf32> to vector<1x24x24x1xf32>
    %11 = vector.extract_strided_slice %0 {offsets = [0, 2, 0, 0], sizes = [1, 24, 24, 1], strides = [1, 1, 1, 1]} : vector<1x28x28x1xf32> to vector<1x24x24x1xf32>
    %12 = vector.extract_strided_slice %0 {offsets = [0, 2, 1, 0], sizes = [1, 24, 24, 1], strides = [1, 1, 1, 1]} : vector<1x28x28x1xf32> to vector<1x24x24x1xf32>
    %13 = vector.extract_strided_slice %0 {offsets = [0, 2, 2, 0], sizes = [1, 24, 24, 1], strides = [1, 1, 1, 1]} : vector<1x28x28x1xf32> to vector<1x24x24x1xf32>
    %14 = vector.extract_strided_slice %0 {offsets = [0, 2, 3, 0], sizes = [1, 24, 24, 1], strides = [1, 1, 1, 1]} : vector<1x28x28x1xf32> to vector<1x24x24x1xf32>
    %15 = vector.extract_strided_slice %0 {offsets = [0, 2, 4, 0], sizes = [1, 24, 24, 1], strides = [1, 1, 1, 1]} : vector<1x28x28x1xf32> to vector<1x24x24x1xf32>
    %16 = vector.extract_strided_slice %0 {offsets = [0, 3, 0, 0], sizes = [1, 24, 24, 1], strides = [1, 1, 1, 1]} : vector<1x28x28x1xf32> to vector<1x24x24x1xf32>
    %17 = vector.extract_strided_slice %0 {offsets = [0, 3, 1, 0], sizes = [1, 24, 24, 1], strides = [1, 1, 1, 1]} : vector<1x28x28x1xf32> to vector<1x24x24x1xf32>
    %18 = vector.extract_strided_slice %0 {offsets = [0, 3, 2, 0], sizes = [1, 24, 24, 1], strides = [1, 1, 1, 1]} : vector<1x28x28x1xf32> to vector<1x24x24x1xf32>
    %19 = vector.extract_strided_slice %0 {offsets = [0, 3, 3, 0], sizes = [1, 24, 24, 1], strides = [1, 1, 1, 1]} : vector<1x28x28x1xf32> to vector<1x24x24x1xf32>
    %20 = vector.extract_strided_slice %0 {offsets = [0, 3, 4, 0], sizes = [1, 24, 24, 1], strides = [1, 1, 1, 1]} : vector<1x28x28x1xf32> to vector<1x24x24x1xf32>
    %21 = vector.extract_strided_slice %0 {offsets = [0, 4, 0, 0], sizes = [1, 24, 24, 1], strides = [1, 1, 1, 1]} : vector<1x28x28x1xf32> to vector<1x24x24x1xf32>
    %22 = vector.extract_strided_slice %0 {offsets = [0, 4, 1, 0], sizes = [1, 24, 24, 1], strides = [1, 1, 1, 1]} : vector<1x28x28x1xf32> to vector<1x24x24x1xf32>
    %23 = vector.extract_strided_slice %0 {offsets = [0, 4, 2, 0], sizes = [1, 24, 24, 1], strides = [1, 1, 1, 1]} : vector<1x28x28x1xf32> to vector<1x24x24x1xf32>
    %24 = vector.extract_strided_slice %0 {offsets = [0, 4, 3, 0], sizes = [1, 24, 24, 1], strides = [1, 1, 1, 1]} : vector<1x28x28x1xf32> to vector<1x24x24x1xf32>
    %25 = vector.extract_strided_slice %0 {offsets = [0, 4, 4, 0], sizes = [1, 24, 24, 1], strides = [1, 1, 1, 1]} : vector<1x28x28x1xf32> to vector<1x24x24x1xf32>
    %26 = tpu.concatenate %1, %2, %3, %4, %5, %6, %7, %8, %9, %10, %11, %12, %13, %14, %15, %16 in 3 : vector<1x24x24x1xf32>, vector<1x24x24x1xf32>, vector<1x24x24x1xf32>, vector<1x24x24x1xf32>, vector<1x24x24x1xf32>, vector<1x24x24x1xf32>, vector<1x24x24x1xf32>, vector<1x24x24x1xf32>, vector<1x24x24x1xf32>, vector<1x24x24x1xf32>, vector<1x24x24x1xf32>, vector<1x24x24x1xf32>, vector<1x24x24x1xf32>, vector<1x24x24x1xf32>, vector<1x24x24x1xf32>, vector<1x24x24x1xf32> -> vector<1x24x24x16xf32>
    %27 = tpu.concatenate %17, %18, %19, %20, %21, %22, %23, %24, %25 in 3 : vector<1x24x24x1xf32>, vector<1x24x24x1xf32>, vector<1x24x24x1xf32>, vector<1x24x24x1xf32>, vector<1x24x24x1xf32>, vector<1x24x24x1xf32>, vector<1x24x24x1xf32>, vector<1x24x24x1xf32>, vector<1x24x24x1xf32> -> vector<1x24x24x9xf32>
    %28 = tpu.concatenate %26, %27 in 3 : vector<1x24x24x16xf32>, vector<1x24x24x9xf32> -> vector<1x24x24x25xf32>
    %29 = vector.shape_cast %28 : vector<1x24x24x25xf32> to vector<576x25xf32>
    %30 = arith.truncf %29 : vector<576x25xf32> to vector<576x25xbf16>
    %c0_3 = arith.constant 0 : index
    %c0_4 = arith.constant 0 : index
    %31 = vector.load %arg2[%c0_3, %c0_4] : memref<25x128xbf16, #tpu.memory_space<vmem>>, vector<25x128xbf16>
    %cst = arith.constant dense<0.000000e+00> : vector<576x128xf32>
    %32 = tpu.matmul %30, %31, %cst {dimension_numbers = #tpu.dot_dimension_numbers<[1], [0], [0], [1], [0, 0, 1, 1], [], []>} : vector<576x25xbf16>, vector<25x128xbf16>, vector<576x128xf32> -> vector<576x128xf32>
    %c0_5 = arith.constant 0 : index
    %c0_6 = arith.constant 0 : index
    %33 = vector.load %arg3[%c0_5, %c0_6] : memref<1x128xf32, #tpu.memory_space<vmem>>, vector<1x128xf32>
    %34 = vector.broadcast %33 : vector<1x128xf32> to vector<576x128xf32>
    %35 = arith.addf %32, %34 : vector<576x128xf32>
    %c0_7 = arith.constant 0 : index
    %c0_8 = arith.constant 0 : index
    %36 = vector.load %arg4[%c0_7, %c0_8] : memref<576x128xf32, #tpu.memory_space<vmem>>, vector<576x128xf32>
    tpu.vector_store %arg4[%c0_7, %c0_8], %35 {strides = array<i32>} : memref<576x128xf32, #tpu.memory_space<vmem>>, vector<576x128xf32>,
    return
  }
  func.func @transform_0(%arg0: i32) -> (i32, i32, i32, i32) {
    %c0_i32 = arith.constant 0 : i32
    %c0_i32_0 = arith.constant 0 : i32
    %c0_i32_1 = arith.constant 0 : i32
    %c0_i32_2 = arith.constant 0 : i32
    return %arg0, %c0_i32, %c0_i32_0, %c0_i32_1 : i32, i32, i32, i32
  }
  func.func @transform_1(%arg0: i32) -> (i32, i32) {
    %c0_i32 = arith.constant 0 : i32
    %c0_i32_0 = arith.constant 0 : i32
    %c0_i32_1 = arith.constant 0 : i32
    return %c0_i32, %c0_i32_0 : i32, i32
  }
  func.func @transform_2(%arg0: i32) -> (i32, i32) {
    %c0_i32 = arith.constant 0 : i32
    %c0_i32_0 = arith.constant 0 : i32
    %c0_i32_1 = arith.constant 0 : i32
    return %c0_i32, %c0_i32_0 : i32, i32
  }
  func.func @transform_3(%arg0: i32) -> (i32, i32) {
    %c0_i32 = arith.constant 0 : i32
    %c0_i32_0 = arith.constant 0 : i32
    return %arg0, %c0_i32 : i32, i32
  }
}

module attributes {stable_mosaic.version = 11 : i64} {
  func.func @_conv2_kernel(%arg0: i32, %arg1: memref<2x12x12x128xf32, #tpu.memory_space<vmem>>, %arg2: memref<2x12x12x128xf32, #tpu.memory_space<vmem>>, %arg3: memref<2x12x12x128xf32, #tpu.memory_space<vmem>>, %arg4: memref<2x12x12x128xf32, #tpu.memory_space<vmem>>, %arg5: memref<250x128xbf16, #tpu.memory_space<vmem>>, %arg6: memref<1x128xf32, #tpu.memory_space<vmem>>, %arg7: memref<128x128xf32, #tpu.memory_space<vmem>>) attributes {dimension_semantics = [#tpu.dimension_semantics<parallel>], iteration_bounds = array<i64: 1>, scalar_prefetch = 0 : i64, scratch_operands = 0 : i64, tpu.core_type = #tpu.core_type<tc>, window_params = [{transform_indices = @transform_0, window_bounds = array<i64: 2, 12, 12, 128>}, {transform_indices = @transform_1, window_bounds = array<i64: 2, 12, 12, 128>}, {transform_indices = @transform_2, window_bounds = array<i64: 2, 12, 12, 128>}, {transform_indices = @transform_3, window_bounds = array<i64: 2, 12, 12, 128>}, {pipeline_mode = #tpu.pipeline_mode<synchronous>, transform_indices = @transform_4, window_bounds = array<i64: 250, 128>}, {pipeline_mode = #tpu.pipeline_mode<synchronous>, transform_indices = @transform_5, window_bounds = array<i64: 1, 128>}, {transform_indices = @transform_6, window_bounds = array<i64: 128, 128>}]} {
    %c0 = arith.constant 0 : index
    %c0_0 = arith.constant 0 : index
    %c0_1 = arith.constant 0 : index
    %c0_2 = arith.constant 0 : index
    %0 = vector.load %arg1[%c0, %c0_0, %c0_1, %c0_2] : memref<2x12x12x128xf32, #tpu.memory_space<vmem>>, vector<2x12x12x128xf32>
    %c0_3 = arith.constant 0 : index
    %c0_4 = arith.constant 0 : index
    %c0_5 = arith.constant 0 : index
    %c0_6 = arith.constant 0 : index
    %1 = vector.load %arg2[%c0_3, %c0_4, %c0_5, %c0_6] : memref<2x12x12x128xf32, #tpu.memory_space<vmem>>, vector<2x12x12x128xf32>
    %2 = arith.maximumf %0, %1 : vector<2x12x12x128xf32>
    %c0_7 = arith.constant 0 : index
    %c0_8 = arith.constant 0 : index
    %c0_9 = arith.constant 0 : index
    %c0_10 = arith.constant 0 : index
    %3 = vector.load %arg3[%c0_7, %c0_8, %c0_9, %c0_10] : memref<2x12x12x128xf32, #tpu.memory_space<vmem>>, vector<2x12x12x128xf32>
    %c0_11 = arith.constant 0 : index
    %c0_12 = arith.constant 0 : index
    %c0_13 = arith.constant 0 : index
    %c0_14 = arith.constant 0 : index
    %4 = vector.load %arg4[%c0_11, %c0_12, %c0_13, %c0_14] : memref<2x12x12x128xf32, #tpu.memory_space<vmem>>, vector<2x12x12x128xf32>
    %5 = arith.maximumf %3, %4 : vector<2x12x12x128xf32>
    %6 = arith.maximumf %2, %5 : vector<2x12x12x128xf32>
    %cst = arith.constant 0.000000e+00 : f32
    %7 = vector.broadcast %cst : f32 to vector<2x12x12x128xf32>
    %8 = arith.maximumf %6, %7 : vector<2x12x12x128xf32>
    %9 = vector.extract_strided_slice %8 {offsets = [0, 0, 0, 0], sizes = [2, 12, 12, 10], strides = [1, 1, 1, 1]} : vector<2x12x12x128xf32> to vector<2x12x12x10xf32>
    %10 = vector.extract_strided_slice %9 {offsets = [0, 0, 0, 0], sizes = [2, 8, 8, 10], strides = [1, 1, 1, 1]} : vector<2x12x12x10xf32> to vector<2x8x8x10xf32>
    %11 = vector.extract_strided_slice %9 {offsets = [0, 0, 1, 0], sizes = [2, 8, 8, 10], strides = [1, 1, 1, 1]} : vector<2x12x12x10xf32> to vector<2x8x8x10xf32>
    %12 = vector.extract_strided_slice %9 {offsets = [0, 0, 2, 0], sizes = [2, 8, 8, 10], strides = [1, 1, 1, 1]} : vector<2x12x12x10xf32> to vector<2x8x8x10xf32>
    %13 = vector.extract_strided_slice %9 {offsets = [0, 0, 3, 0], sizes = [2, 8, 8, 10], strides = [1, 1, 1, 1]} : vector<2x12x12x10xf32> to vector<2x8x8x10xf32>
    %14 = vector.extract_strided_slice %9 {offsets = [0, 0, 4, 0], sizes = [2, 8, 8, 10], strides = [1, 1, 1, 1]} : vector<2x12x12x10xf32> to vector<2x8x8x10xf32>
    %15 = vector.extract_strided_slice %9 {offsets = [0, 1, 0, 0], sizes = [2, 8, 8, 10], strides = [1, 1, 1, 1]} : vector<2x12x12x10xf32> to vector<2x8x8x10xf32>
    %16 = vector.extract_strided_slice %9 {offsets = [0, 1, 1, 0], sizes = [2, 8, 8, 10], strides = [1, 1, 1, 1]} : vector<2x12x12x10xf32> to vector<2x8x8x10xf32>
    %17 = vector.extract_strided_slice %9 {offsets = [0, 1, 2, 0], sizes = [2, 8, 8, 10], strides = [1, 1, 1, 1]} : vector<2x12x12x10xf32> to vector<2x8x8x10xf32>
    %18 = vector.extract_strided_slice %9 {offsets = [0, 1, 3, 0], sizes = [2, 8, 8, 10], strides = [1, 1, 1, 1]} : vector<2x12x12x10xf32> to vector<2x8x8x10xf32>
    %19 = vector.extract_strided_slice %9 {offsets = [0, 1, 4, 0], sizes = [2, 8, 8, 10], strides = [1, 1, 1, 1]} : vector<2x12x12x10xf32> to vector<2x8x8x10xf32>
    %20 = vector.extract_strided_slice %9 {offsets = [0, 2, 0, 0], sizes = [2, 8, 8, 10], strides = [1, 1, 1, 1]} : vector<2x12x12x10xf32> to vector<2x8x8x10xf32>
    %21 = vector.extract_strided_slice %9 {offsets = [0, 2, 1, 0], sizes = [2, 8, 8, 10], strides = [1, 1, 1, 1]} : vector<2x12x12x10xf32> to vector<2x8x8x10xf32>
    %22 = vector.extract_strided_slice %9 {offsets = [0, 2, 2, 0], sizes = [2, 8, 8, 10], strides = [1, 1, 1, 1]} : vector<2x12x12x10xf32> to vector<2x8x8x10xf32>
    %23 = vector.extract_strided_slice %9 {offsets = [0, 2, 3, 0], sizes = [2, 8, 8, 10], strides = [1, 1, 1, 1]} : vector<2x12x12x10xf32> to vector<2x8x8x10xf32>
    %24 = vector.extract_strided_slice %9 {offsets = [0, 2, 4, 0], sizes = [2, 8, 8, 10], strides = [1, 1, 1, 1]} : vector<2x12x12x10xf32> to vector<2x8x8x10xf32>
    %25 = vector.extract_strided_slice %9 {offsets = [0, 3, 0, 0], sizes = [2, 8, 8, 10], strides = [1, 1, 1, 1]} : vector<2x12x12x10xf32> to vector<2x8x8x10xf32>
    %26 = vector.extract_strided_slice %9 {offsets = [0, 3, 1, 0], sizes = [2, 8, 8, 10], strides = [1, 1, 1, 1]} : vector<2x12x12x10xf32> to vector<2x8x8x10xf32>
    %27 = vector.extract_strided_slice %9 {offsets = [0, 3, 2, 0], sizes = [2, 8, 8, 10], strides = [1, 1, 1, 1]} : vector<2x12x12x10xf32> to vector<2x8x8x10xf32>
    %28 = vector.extract_strided_slice %9 {offsets = [0, 3, 3, 0], sizes = [2, 8, 8, 10], strides = [1, 1, 1, 1]} : vector<2x12x12x10xf32> to vector<2x8x8x10xf32>
    %29 = vector.extract_strided_slice %9 {offsets = [0, 3, 4, 0], sizes = [2, 8, 8, 10], strides = [1, 1, 1, 1]} : vector<2x12x12x10xf32> to vector<2x8x8x10xf32>
    %30 = vector.extract_strided_slice %9 {offsets = [0, 4, 0, 0], sizes = [2, 8, 8, 10], strides = [1, 1, 1, 1]} : vector<2x12x12x10xf32> to vector<2x8x8x10xf32>
    %31 = vector.extract_strided_slice %9 {offsets = [0, 4, 1, 0], sizes = [2, 8, 8, 10], strides = [1, 1, 1, 1]} : vector<2x12x12x10xf32> to vector<2x8x8x10xf32>
    %32 = vector.extract_strided_slice %9 {offsets = [0, 4, 2, 0], sizes = [2, 8, 8, 10], strides = [1, 1, 1, 1]} : vector<2x12x12x10xf32> to vector<2x8x8x10xf32>
    %33 = vector.extract_strided_slice %9 {offsets = [0, 4, 3, 0], sizes = [2, 8, 8, 10], strides = [1, 1, 1, 1]} : vector<2x12x12x10xf32> to vector<2x8x8x10xf32>
    %34 = vector.extract_strided_slice %9 {offsets = [0, 4, 4, 0], sizes = [2, 8, 8, 10], strides = [1, 1, 1, 1]} : vector<2x12x12x10xf32> to vector<2x8x8x10xf32>
    %35 = tpu.concatenate %10, %11, %12, %13, %14, %15, %16, %17, %18, %19, %20, %21, %22, %23, %24, %25 in 3 : vector<2x8x8x10xf32>, vector<2x8x8x10xf32>, vector<2x8x8x10xf32>, vector<2x8x8x10xf32>, vector<2x8x8x10xf32>, vector<2x8x8x10xf32>, vector<2x8x8x10xf32>, vector<2x8x8x10xf32>, vector<2x8x8x10xf32>, vector<2x8x8x10xf32>, vector<2x8x8x10xf32>, vector<2x8x8x10xf32>, vector<2x8x8x10xf32>, vector<2x8x8x10xf32>, vector<2x8x8x10xf32>, vector<2x8x8x10xf32> -> vector<2x8x8x160xf32>
    %36 = tpu.concatenate %26, %27, %28, %29, %30, %31, %32, %33, %34 in 3 : vector<2x8x8x10xf32>, vector<2x8x8x10xf32>, vector<2x8x8x10xf32>, vector<2x8x8x10xf32>, vector<2x8x8x10xf32>, vector<2x8x8x10xf32>, vector<2x8x8x10xf32>, vector<2x8x8x10xf32>, vector<2x8x8x10xf32> -> vector<2x8x8x90xf32>
    %37 = tpu.concatenate %35, %36 in 3 : vector<2x8x8x160xf32>, vector<2x8x8x90xf32> -> vector<2x8x8x250xf32>
    %38 = vector.shape_cast %37 : vector<2x8x8x250xf32> to vector<128x250xf32>
    %39 = arith.truncf %38 : vector<128x250xf32> to vector<128x250xbf16>
    %c0_15 = arith.constant 0 : index
    %c0_16 = arith.constant 0 : index
    %40 = vector.load %arg5[%c0_15, %c0_16] : memref<250x128xbf16, #tpu.memory_space<vmem>>, vector<250x128xbf16>
    %cst_17 = arith.constant dense<0.000000e+00> : vector<128x128xf32>
    %41 = tpu.matmul %39, %40, %cst_17 {dimension_numbers = #tpu.dot_dimension_numbers<[1], [0], [0], [1], [0, 0, 1, 1], [], []>} : vector<128x250xbf16>, vector<250x128xbf16>, vector<128x128xf32> -> vector<128x128xf32>
    %c0_18 = arith.constant 0 : index
    %c0_19 = arith.constant 0 : index
    %42 = vector.load %arg6[%c0_18, %c0_19] : memref<1x128xf32, #tpu.memory_space<vmem>>, vector<1x128xf32>
    %43 = vector.broadcast %42 : vector<1x128xf32> to vector<128x128xf32>
    %44 = arith.addf %41, %43 : vector<128x128xf32>
    %c0_20 = arith.constant 0 : index
    %c0_21 = arith.constant 0 : index
    %45 = vector.load %arg7[%c0_20, %c0_21] : memref<128x128xf32, #tpu.memory_space<vmem>>, vector<128x128xf32>
    tpu.vector_store %arg7[%c0_20, %c0_21], %44 {strides = array<i32>} : memref<128x128xf32, #tpu.memory_space<vmem>>, vector<128x128xf32>,
    return
  }
  func.func @transform_0(%arg0: i32) -> (i32, i32, i32, i32) {
    %c0_i32 = arith.constant 0 : i32
    %c0_i32_0 = arith.constant 0 : i32
    %c0_i32_1 = arith.constant 0 : i32
    %c0_i32_2 = arith.constant 0 : i32
    return %arg0, %c0_i32, %c0_i32_0, %c0_i32_1 : i32, i32, i32, i32
  }
  func.func @transform_1(%arg0: i32) -> (i32, i32, i32, i32) {
    %c0_i32 = arith.constant 0 : i32
    %c0_i32_0 = arith.constant 0 : i32
    %c0_i32_1 = arith.constant 0 : i32
    %c0_i32_2 = arith.constant 0 : i32
    return %arg0, %c0_i32, %c0_i32_0, %c0_i32_1 : i32, i32, i32, i32
  }
  func.func @transform_2(%arg0: i32) -> (i32, i32, i32, i32) {
    %c0_i32 = arith.constant 0 : i32
    %c0_i32_0 = arith.constant 0 : i32
    %c0_i32_1 = arith.constant 0 : i32
    %c0_i32_2 = arith.constant 0 : i32
    return %arg0, %c0_i32, %c0_i32_0, %c0_i32_1 : i32, i32, i32, i32
  }
  func.func @transform_3(%arg0: i32) -> (i32, i32, i32, i32) {
    %c0_i32 = arith.constant 0 : i32
    %c0_i32_0 = arith.constant 0 : i32
    %c0_i32_1 = arith.constant 0 : i32
    %c0_i32_2 = arith.constant 0 : i32
    return %arg0, %c0_i32, %c0_i32_0, %c0_i32_1 : i32, i32, i32, i32
  }
  func.func @transform_4(%arg0: i32) -> (i32, i32) {
    %c0_i32 = arith.constant 0 : i32
    %c0_i32_0 = arith.constant 0 : i32
    %c0_i32_1 = arith.constant 0 : i32
    return %c0_i32, %c0_i32_0 : i32, i32
  }
  func.func @transform_5(%arg0: i32) -> (i32, i32) {
    %c0_i32 = arith.constant 0 : i32
    %c0_i32_0 = arith.constant 0 : i32
    %c0_i32_1 = arith.constant 0 : i32
    return %c0_i32, %c0_i32_0 : i32, i32
  }
  func.func @transform_6(%arg0: i32) -> (i32, i32) {
    %c0_i32 = arith.constant 0 : i32
    %c0_i32_0 = arith.constant 0 : i32
    return %arg0, %c0_i32 : i32, i32
  }
}

module attributes {stable_mosaic.version = 11 : i64} {
  func.func @_head_kernel(%arg0: i32, %arg1: memref<2x2048xf32, #tpu.memory_space<vmem>>, %arg2: memref<2x2048xf32, #tpu.memory_space<vmem>>, %arg3: memref<2x2048xf32, #tpu.memory_space<vmem>>, %arg4: memref<2x2048xf32, #tpu.memory_space<vmem>>, %arg5: memref<2048x128xbf16, #tpu.memory_space<vmem>>, %arg6: memref<1x128xf32, #tpu.memory_space<vmem>>, %arg7: memref<128x128xbf16, #tpu.memory_space<vmem>>, %arg8: memref<1x128xf32, #tpu.memory_space<vmem>>, %arg9: memref<2x128xf32, #tpu.memory_space<vmem>>) attributes {dimension_semantics = [#tpu.dimension_semantics<parallel>], iteration_bounds = array<i64: 1>, scalar_prefetch = 0 : i64, scratch_operands = 0 : i64, tpu.core_type = #tpu.core_type<tc>, window_params = [{transform_indices = @transform_0, window_bounds = array<i64: 2, 2048>}, {transform_indices = @transform_1, window_bounds = array<i64: 2, 2048>}, {transform_indices = @transform_2, window_bounds = array<i64: 2, 2048>}, {transform_indices = @transform_3, window_bounds = array<i64: 2, 2048>}, {pipeline_mode = #tpu.pipeline_mode<synchronous>, transform_indices = @transform_4, window_bounds = array<i64: 2048, 128>}, {pipeline_mode = #tpu.pipeline_mode<synchronous>, transform_indices = @transform_5, window_bounds = array<i64: 1, 128>}, {pipeline_mode = #tpu.pipeline_mode<synchronous>, transform_indices = @transform_6, window_bounds = array<i64: 128, 128>}, {pipeline_mode = #tpu.pipeline_mode<synchronous>, transform_indices = @transform_7, window_bounds = array<i64: 1, 128>}, {transform_indices = @transform_8, window_bounds = array<i64: 2, 128>}]} {
    %c0 = arith.constant 0 : index
    %c0_0 = arith.constant 0 : index
    %0 = vector.load %arg1[%c0, %c0_0] : memref<2x2048xf32, #tpu.memory_space<vmem>>, vector<2x2048xf32>
    %c0_1 = arith.constant 0 : index
    %c0_2 = arith.constant 0 : index
    %1 = vector.load %arg2[%c0_1, %c0_2] : memref<2x2048xf32, #tpu.memory_space<vmem>>, vector<2x2048xf32>
    %2 = arith.maximumf %0, %1 : vector<2x2048xf32>
    %c0_3 = arith.constant 0 : index
    %c0_4 = arith.constant 0 : index
    %3 = vector.load %arg3[%c0_3, %c0_4] : memref<2x2048xf32, #tpu.memory_space<vmem>>, vector<2x2048xf32>
    %c0_5 = arith.constant 0 : index
    %c0_6 = arith.constant 0 : index
    %4 = vector.load %arg4[%c0_5, %c0_6] : memref<2x2048xf32, #tpu.memory_space<vmem>>, vector<2x2048xf32>
    %5 = arith.maximumf %3, %4 : vector<2x2048xf32>
    %6 = arith.maximumf %2, %5 : vector<2x2048xf32>
    %cst = arith.constant 0.000000e+00 : f32
    %7 = vector.broadcast %cst : f32 to vector<2x2048xf32>
    %8 = arith.maximumf %6, %7 : vector<2x2048xf32>
    %9 = arith.truncf %8 : vector<2x2048xf32> to vector<2x2048xbf16>
    %c0_7 = arith.constant 0 : index
    %c0_8 = arith.constant 0 : index
    %10 = vector.load %arg5[%c0_7, %c0_8] : memref<2048x128xbf16, #tpu.memory_space<vmem>>, vector<2048x128xbf16>
    %cst_9 = arith.constant dense<0.000000e+00> : vector<2x128xf32>
    %11 = tpu.matmul %9, %10, %cst_9 {dimension_numbers = #tpu.dot_dimension_numbers<[1], [0], [0], [1], [0, 0, 1, 1], [], []>} : vector<2x2048xbf16>, vector<2048x128xbf16>, vector<2x128xf32> -> vector<2x128xf32>
    %c0_10 = arith.constant 0 : index
    %c0_11 = arith.constant 0 : index
    %12 = vector.load %arg6[%c0_10, %c0_11] : memref<1x128xf32, #tpu.memory_space<vmem>>, vector<1x128xf32>
    %13 = vector.broadcast %12 : vector<1x128xf32> to vector<2x128xf32>
    %14 = arith.addf %11, %13 : vector<2x128xf32>
    %cst_12 = arith.constant 0.000000e+00 : f32
    %15 = vector.broadcast %cst_12 : f32 to vector<2x128xf32>
    %16 = arith.maximumf %14, %15 : vector<2x128xf32>
    %17 = arith.truncf %16 : vector<2x128xf32> to vector<2x128xbf16>
    %c0_13 = arith.constant 0 : index
    %c0_14 = arith.constant 0 : index
    %18 = vector.load %arg7[%c0_13, %c0_14] : memref<128x128xbf16, #tpu.memory_space<vmem>>, vector<128x128xbf16>
    %cst_15 = arith.constant dense<0.000000e+00> : vector<2x128xf32>
    %19 = tpu.matmul %17, %18, %cst_15 {dimension_numbers = #tpu.dot_dimension_numbers<[1], [0], [0], [1], [0, 0, 1, 1], [], []>} : vector<2x128xbf16>, vector<128x128xbf16>, vector<2x128xf32> -> vector<2x128xf32>
    %c0_16 = arith.constant 0 : index
    %c0_17 = arith.constant 0 : index
    %20 = vector.load %arg8[%c0_16, %c0_17] : memref<1x128xf32, #tpu.memory_space<vmem>>, vector<1x128xf32>
    %21 = vector.broadcast %20 : vector<1x128xf32> to vector<2x128xf32>
    %22 = arith.addf %19, %21 : vector<2x128xf32>
    %c0_18 = arith.constant 0 : index
    %c0_19 = arith.constant 0 : index
    %23 = vector.load %arg9[%c0_18, %c0_19] : memref<2x128xf32, #tpu.memory_space<vmem>>, vector<2x128xf32>
    tpu.vector_store %arg9[%c0_18, %c0_19], %22 {strides = array<i32>} : memref<2x128xf32, #tpu.memory_space<vmem>>, vector<2x128xf32>,
    return
  }
  func.func @transform_0(%arg0: i32) -> (i32, i32) {
    %c0_i32 = arith.constant 0 : i32
    %c0_i32_0 = arith.constant 0 : i32
    return %arg0, %c0_i32 : i32, i32
  }
  func.func @transform_1(%arg0: i32) -> (i32, i32) {
    %c0_i32 = arith.constant 0 : i32
    %c0_i32_0 = arith.constant 0 : i32
    return %arg0, %c0_i32 : i32, i32
  }
  func.func @transform_2(%arg0: i32) -> (i32, i32) {
    %c0_i32 = arith.constant 0 : i32
    %c0_i32_0 = arith.constant 0 : i32
    return %arg0, %c0_i32 : i32, i32
  }
  func.func @transform_3(%arg0: i32) -> (i32, i32) {
    %c0_i32 = arith.constant 0 : i32
    %c0_i32_0 = arith.constant 0 : i32
    return %arg0, %c0_i32 : i32, i32
  }
  func.func @transform_4(%arg0: i32) -> (i32, i32) {
    %c0_i32 = arith.constant 0 : i32
    %c0_i32_0 = arith.constant 0 : i32
    %c0_i32_1 = arith.constant 0 : i32
    return %c0_i32, %c0_i32_0 : i32, i32
  }
  func.func @transform_5(%arg0: i32) -> (i32, i32) {
    %c0_i32 = arith.constant 0 : i32
    %c0_i32_0 = arith.constant 0 : i32
    %c0_i32_1 = arith.constant 0 : i32
    return %c0_i32, %c0_i32_0 : i32, i32
  }
  func.func @transform_6(%arg0: i32) -> (i32, i32) {
    %c0_i32 = arith.constant 0 : i32
    %c0_i32_0 = arith.constant 0 : i32
    %c0_i32_1 = arith.constant 0 : i32
    return %c0_i32, %c0_i32_0 : i32, i32
  }
  func.func @transform_7(%arg0: i32) -> (i32, i32) {
    %c0_i32 = arith.constant 0 : i32
    %c0_i32_0 = arith.constant 0 : i32
    %c0_i32_1 = arith.constant 0 : i32
    return %c0_i32, %c0_i32_0 : i32, i32
  }
  func.func @transform_8(%arg0: i32) -> (i32, i32) {
    %c0_i32 = arith.constant 0 : i32
    %c0_i32_0 = arith.constant 0 : i32
    return %arg0, %c0_i32 : i32, i32
  }
}

</mosaic_0001>

<llo_original>
// kernel: cnn_mnist_forward.5
$region0: #{cnn_mnist_forward.5}
  #allocation0 [shape = 'u32[]', space=smem, size = 0x4, offset = 0x4, fixed_abs, tag = 'smem constant byte address 0x4 - core index']
  #allocation1 [shape = 'u32[144,128]{1,0:T(1,128)}', space=vmem, size = 0x12000, scoped, tag = 'internal scratch']
  %s0 = inlined_call_operand.vmem [shape: f32[2,2048], index: 0, kind: input, shape index: {}]
  %s1 = inlined_call_operand.vmem [shape: f32[2,2048], index: 1, kind: input, shape index: {}]
  %s2 = inlined_call_operand.vmem [shape: f32[2,2048], index: 2, kind: input, shape index: {}]
  %s3 = inlined_call_operand.vmem [shape: f32[2,2048], index: 3, kind: input, shape index: {}]
  %s4 = inlined_call_operand.vmem [shape: bf16[2048,128], index: 4, kind: input, shape index: {}]
  %s5 = inlined_call_operand.vmem [shape: f32[1,128], index: 5, kind: input, shape index: {}]
  %s6 = inlined_call_operand.vmem [shape: bf16[128,128], index: 6, kind: input, shape index: {}]
  %s7 = inlined_call_operand.vmem [shape: f32[1,128], index: 7, kind: input, shape index: {}]
  %s8 = inlined_call_operand.hbm [shape: f32[2,128], index: 8, kind: output, shape index: {}]
  %s9 = sld [smem:[#allocation0]]
  $region42: #{cnn_mnist_forward.5} parent=0
    _
  %s11 = ssub.s32 1, %s9
  %s12 = scalar_select 0, %s11, %s9
  $region1: #{cnn_mnist_forward.5} parent=0
    #allocation2 [shape = 'u8[1024]{0}', space=vmem, size = 0x400, scoped, tag = 'output window, operand 0, single buffered']
    #allocation3 [shape = 's32[1]{0}', space=sflag, size = 0x4, scoped, tag = 'scoped memory for cnn_mnist_forward.5']
    %13 = vsyncpa [#allocation3], 0
    // Predicated region
    $region2: #{cnn_mnist_forward.5} parent=1 // pred_check
      _
    $region3: #{cnn_mnist_forward.5} parent=1 // pred_check_branch
      %15 = sbr.rel (0) target = $region5
    $region4: #{cnn_mnist_forward.5} parent=1 // pred_region
      _
    $region5: #{cnn_mnist_forward.5} parent=1 // pred_fallthru
      _
    // Predicated region
    $region6: #{cnn_mnist_forward.5} parent=1 // pred_check
      _
    $region7: #{cnn_mnist_forward.5} parent=1 // pred_check_branch
      %17 = sbr.rel (0) target = $region9
    $region8: #{cnn_mnist_forward.5} parent=1 // pred_region
      _
    $region9: #{cnn_mnist_forward.5} parent=1 // pred_fallthru
      _
    // Predicated region
    $region10: #{cnn_mnist_forward.5} parent=1 // pred_check
      _
    $region11: #{cnn_mnist_forward.5} parent=1 // pred_check_branch
      %19 = sbr.rel (0) target = $region13
    $region12: #{cnn_mnist_forward.5} parent=1 // pred_region
      _
    $region13: #{cnn_mnist_forward.5} parent=1 // pred_fallthru
      _
    // Predicated region
    $region14: #{cnn_mnist_forward.5} parent=1 // pred_check
      _
    $region15: #{cnn_mnist_forward.5} parent=1 // pred_check_branch
      %21 = sbr.rel (0) target = $region17
    $region16: #{cnn_mnist_forward.5} parent=1 // pred_region
      _
    $region17: #{cnn_mnist_forward.5} parent=1 // pred_fallthru
      _
    // Predicated region
    $region18: #{cnn_mnist_forward.5} parent=1 // pred_check
      _
    $region19: #{cnn_mnist_forward.5} parent=1 // pred_check_branch
      %23 = sbr.rel (0) target = $region21
    $region20: #{cnn_mnist_forward.5} parent=1 // pred_region
      _
    $region21: #{cnn_mnist_forward.5} parent=1 // pred_fallthru
      _
    // Predicated region
    $region22: #{cnn_mnist_forward.5} parent=1 // pred_check
      _
    $region23: #{cnn_mnist_forward.5} parent=1 // pred_check_branch
      %25 = sbr.rel (0) target = $region25
    $region24: #{cnn_mnist_forward.5} parent=1 // pred_region
      _
    $region25: #{cnn_mnist_forward.5} parent=1 // pred_fallthru
      _
    // Predicated region
    $region26: #{cnn_mnist_forward.5} parent=1 // pred_check
      _
    $region27: #{cnn_mnist_forward.5} parent=1 // pred_check_branch
      %27 = sbr.rel (0) target = $region29
    $region28: #{cnn_mnist_forward.5} parent=1 // pred_region
      _
    $region29: #{cnn_mnist_forward.5} parent=1 // pred_fallthru
      _
    // Predicated region
    $region30: #{cnn_mnist_forward.5} parent=1 // pred_check
      _
    $region31: #{cnn_mnist_forward.5} parent=1 // pred_check_branch
      %29 = sbr.rel (0) target = $region33
    $region32: #{cnn_mnist_forward.5} parent=1 // pred_region
      _
    $region33: #{cnn_mnist_forward.5} parent=1 // pred_fallthru
      _
    %v31 = vld [vmem:[%s0] sm:$0xff]
    %v32 = vld [vmem:[%s0 + $0x8] sm:$0xff]
    %v33 = vld [vmem:[%s0 + $0x10] sm:$0xff]
    %v34 = vld [vmem:[%s0 + $0x18] sm:$0xff]
    %v35 = vld [vmem:[%s1] sm:$0xff]
    %v36 = vld [vmem:[%s1 + $0x8] sm:$0xff]
    %v37 = vld [vmem:[%s1 + $0x10] sm:$0xff]
    %v38 = vld [vmem:[%s1 + $0x18] sm:$0xff]
    %v39 = vmax.f32 %v31, %v35
    %v40 = vmax.f32 %v32, %v36
    %v41 = vmax.f32 %v33, %v37
    %v42 = vmax.f32 %v34, %v38
    %v43 = vld [vmem:[%s2] sm:$0xff]
    %v44 = vld [vmem:[%s2 + $0x8] sm:$0xff]
    %v45 = vld [vmem:[%s2 + $0x10] sm:$0xff]
    %v46 = vld [vmem:[%s2 + $0x18] sm:$0xff]
    %v47 = vld [vmem:[%s3] sm:$0xff]
    %v48 = vld [vmem:[%s3 + $0x8] sm:$0xff]
    %v49 = vld [vmem:[%s3 + $0x10] sm:$0xff]
    %v50 = vld [vmem:[%s3 + $0x18] sm:$0xff]
    %v51 = vmax.f32 %v43, %v47
    %v52 = vmax.f32 %v44, %v48
    %v53 = vmax.f32 %v45, %v49
    %v54 = vmax.f32 %v46, %v50
    %v55 = vmax.f32 %v39, %v51
    %v56 = vmax.f32 %v40, %v52
    %v57 = vmax.f32 %v41, %v53
    %v58 = vmax.f32 %v42, %v54
    %v59 = vmax.f32 %v55, 0.0
    %v60 = vmax.f32 %v56, 0.0
    %v61 = vmax.f32 %v57, 0.0
    %v62 = vmax.f32 %v58, 0.0
    %v67 = vcombine.high %v59, %v59
    %v69 = vunpack.c.l.s4 1983009808
    %v70 = vunpack.c.0.s8 %v69
    %v71 = vlaneseq
    %v72 = vshrl.u32 %v71, 7
    %v73 = vsub.s32 %v70, %v72
    %v74 = vrot.slane %v59, %v73
    %v76 = vunpack.c.l.s4 1983009808
    %v77 = vunpack.c.0.s8 %v76
    %v78 = vlaneseq
    %v79 = vshrl.u32 %v78, 7
    %v80 = vsub.s32 %v77, %v79
    %v81 = vrot.slane %v67, %v80
    %v82 = vcombine.high %v74, %v74
    %v83 = vcombine.high %v81, %v81
    %v84 = vcombine.high %v60, %v60
    %v86 = vunpack.c.l.s4 1983009808
    %v87 = vunpack.c.0.s8 %v86
    %v88 = vlaneseq
    %v89 = vshrl.u32 %v88, 7
    %v90 = vsub.s32 %v87, %v89
    %v91 = vrot.slane %v60, %v90
    %v93 = vunpack.c.l.s4 1983009808
    %v94 = vunpack.c.0.s8 %v93
    %v95 = vlaneseq
    %v96 = vshrl.u32 %v95, 7
    %v97 = vsub.s32 %v94, %v96
    %v98 = vrot.slane %v84, %v97
    %v99 = vcombine.high %v91, %v91
    %v100 = vcombine.high %v98, %v98
    %v101 = vcombine.high %v61, %v61
    %v103 = vunpack.c.l.s4 1983009808
    %v104 = vunpack.c.0.s8 %v103
    %v105 = vlaneseq
    %v106 = vshrl.u32 %v105, 7
    %v107 = vsub.s32 %v104, %v106
    %v108 = vrot.slane %v61, %v107
    %v110 = vunpack.c.l.s4 1983009808
    %v111 = vunpack.c.0.s8 %v110
    %v112 = vlaneseq
    %v113 = vshrl.u32 %v112, 7
    %v114 = vsub.s32 %v111, %v113
    %v115 = vrot.slane %v101, %v114
    %v116 = vcombine.high %v108, %v108
    %v117 = vcombine.high %v115, %v115
    %v118 = vcombine.high %v62, %v62
    %v120 = vunpack.c.l.s4 1983009808
    %v121 = vunpack.c.0.s8 %v120
    %v122 = vlaneseq
    %v123 = vshrl.u32 %v122, 7
    %v124 = vsub.s32 %v121, %v123
    %v125 = vrot.slane %v62, %v124
    %v127 = vunpack.c.l.s4 1983009808
    %v128 = vunpack.c.0.s8 %v127
    %v129 = vlaneseq
    %v130 = vshrl.u32 %v129, 7
    %v131 = vsub.s32 %v128, %v130
    %v132 = vrot.slane %v118, %v131
    %v133 = vcombine.high %v125, %v125
    %v134 = vcombine.high %v132, %v132
    %v151 = vpack.c.bf16 %v74, %v74
    %v152 = vpack.c.bf16 %v82, %v82
    %v153 = vpack.c.bf16 %v81, %v81
    %v154 = vpack.c.bf16 %v83, %v83
    %v155 = vpack.c.bf16 %v91, %v91
    %v156 = vpack.c.bf16 %v99, %v99
    %v157 = vpack.c.bf16 %v98, %v98
    %v158 = vpack.c.bf16 %v100, %v100
    %v159 = vpack.c.bf16 %v108, %v108
    %v160 = vpack.c.bf16 %v116, %v116
    %v161 = vpack.c.bf16 %v115, %v115
    %v162 = vpack.c.bf16 %v117, %v117
    %v163 = vpack.c.bf16 %v125, %v125
    %v164 = vpack.c.bf16 %v133, %v133
    %v165 = vpack.c.bf16 %v132, %v132
    %v166 = vpack.c.bf16 %v134, %v134
    %v167 = vld [vmem:[%s4] sm:$0xf]
    %v168 = vld [vmem:[%s4 + $0x4] sm:$0xf]
    %v169 = vld [vmem:[%s4 + $0x8] sm:$0xf]
    %v170 = vld [vmem:[%s4 + $0xc] sm:$0xf]
    %v171 = vld [vmem:[%s4 + $0x10] sm:$0xf]
    %v172 = vld [vmem:[%s4 + $0x14] sm:$0xf]
    %v173 = vld [vmem:[%s4 + $0x18] sm:$0xf]
    %v174 = vld [vmem:[%s4 + $0x1c] sm:$0xf]
    %v175 = vld [vmem:[%s4 + $0x20] sm:$0xf]
    %v176 = vld [vmem:[%s4 + $0x24] sm:$0xf]
    %v177 = vld [vmem:[%s4 + $0x28] sm:$0xf]
    %v178 = vld [vmem:[%s4 + $0x2c] sm:$0xf]
    %v179 = vld [vmem:[%s4 + $0x30] sm:$0xf]
    %v180 = vld [vmem:[%s4 + $0x34] sm:$0xf]
    %v181 = vld [vmem:[%s4 + $0x38] sm:$0xf]
    %v182 = vld [vmem:[%s4 + $0x3c] sm:$0xf]
    %v183 = vld [vmem:[%s4 + $0x40] sm:$0xf]
    %v184 = vld [vmem:[%s4 + $0x44] sm:$0xf]
    %v185 = vld [vmem:[%s4 + $0x48] sm:$0xf]
    %v186 = vld [vmem:[%s4 + $0x4c] sm:$0xf]
    %v187 = vld [vmem:[%s4 + $0x50] sm:$0xf]
    %v188 = vld [vmem:[%s4 + $0x54] sm:$0xf]
    %v189 = vld [vmem:[%s4 + $0x58] sm:$0xf]
    %v190 = vld [vmem:[%s4 + $0x5c] sm:$0xf]
    %v191 = vld [vmem:[%s4 + $0x60] sm:$0xf]
    %v192 = vld [vmem:[%s4 + $0x64] sm:$0xf]
    %v193 = vld [vmem:[%s4 + $0x68] sm:$0xf]
    %v194 = vld [vmem:[%s4 + $0x6c] sm:$0xf]
    %v195 = vld [vmem:[%s4 + $0x70] sm:$0xf]
    %v196 = vld [vmem:[%s4 + $0x74] sm:$0xf]
    %v197 = vld [vmem:[%s4 + $0x78] sm:$0xf]
    %v198 = vld [vmem:[%s4 + $0x7c] sm:$0xf]
    %v199 = vld [vmem:[%s4 + $0x80] sm:$0xf]
    %v200 = vld [vmem:[%s4 + $0x84] sm:$0xf]
    %v201 = vld [vmem:[%s4 + $0x88] sm:$0xf]
    %v202 = vld [vmem:[%s4 + $0x8c] sm:$0xf]
    %v203 = vld [vmem:[%s4 + $0x90] sm:$0xf]
    %v204 = vld [vmem:[%s4 + $0x94] sm:$0xf]
    %v205 = vld [vmem:[%s4 + $0x98] sm:$0xf]
    %v206 = vld [vmem:[%s4 + $0x9c] sm:$0xf]
    %v207 = vld [vmem:[%s4 + $0xa0] sm:$0xf]
    %v208 = vld [vmem:[%s4 + $0xa4] sm:$0xf]
    %v209 = vld [vmem:[%s4 + $0xa8] sm:$0xf]
    %v210 = vld [vmem:[%s4 + $0xac] sm:$0xf]
    %v211 = vld [vmem:[%s4 + $0xb0] sm:$0xf]
    %v212 = vld [vmem:[%s4 + $0xb4] sm:$0xf]
    %v213 = vld [vmem:[%s4 + $0xb8] sm:$0xf]
    %v214 = vld [vmem:[%s4 + $0xbc] sm:$0xf]
    %v215 = vld [vmem:[%s4 + $0xc0] sm:$0xf]
    %v216 = vld [vmem:[%s4 + $0xc4] sm:$0xf]
    %v217 = vld [vmem:[%s4 + $0xc8] sm:$0xf]
    %v218 = vld [vmem:[%s4 + $0xcc] sm:$0xf]
    %v219 = vld [vmem:[%s4 + $0xd0] sm:$0xf]
    %v220 = vld [vmem:[%s4 + $0xd4] sm:$0xf]
    %v221 = vld [vmem:[%s4 + $0xd8] sm:$0xf]
    %v222 = vld [vmem:[%s4 + $0xdc] sm:$0xf]
    %v223 = vld [vmem:[%s4 + $0xe0] sm:$0xf]
    %v224 = vld [vmem:[%s4 + $0xe4] sm:$0xf]
    %v225 = vld [vmem:[%s4 + $0xe8] sm:$0xf]
    %v226 = vld [vmem:[%s4 + $0xec] sm:$0xf]
    %v227 = vld [vmem:[%s4 + $0xf0] sm:$0xf]
    %v228 = vld [vmem:[%s4 + $0xf4] sm:$0xf]
    %v229 = vld [vmem:[%s4 + $0xf8] sm:$0xf]
    %v230 = vld [vmem:[%s4 + $0xfc] sm:$0xf]
    %v231 = vld [vmem:[%s4 + $0x100] sm:$0xf]
    %v232 = vld [vmem:[%s4 + $0x104] sm:$0xf]
    %v233 = vld [vmem:[%s4 + $0x108] sm:$0xf]
    %v234 = vld [vmem:[%s4 + $0x10c] sm:$0xf]
    %v235 = vld [vmem:[%s4 + $0x110] sm:$0xf]
    %v236 = vld [vmem:[%s4 + $0x114] sm:$0xf]
    %v237 = vld [vmem:[%s4 + $0x118] sm:$0xf]
    %v238 = vld [vmem:[%s4 + $0x11c] sm:$0xf]
    %v239 = vld [vmem:[%s4 + $0x120] sm:$0xf]
    %v240 = vld [vmem:[%s4 + $0x124] sm:$0xf]
    %v241 = vld [vmem:[%s4 + $0x128] sm:$0xf]
    %v242 = vld [vmem:[%s4 + $0x12c] sm:$0xf]
    %v243 = vld [vmem:[%s4 + $0x130] sm:$0xf]
    %v244 = vld [vmem:[%s4 + $0x134] sm:$0xf]
    %v245 = vld [vmem:[%s4 + $0x138] sm:$0xf]
    %v246 = vld [vmem:[%s4 + $0x13c] sm:$0xf]
    %v247 = vld [vmem:[%s4 + $0x140] sm:$0xf]
    %v248 = vld [vmem:[%s4 + $0x144] sm:$0xf]
    %v249 = vld [vmem:[%s4 + $0x148] sm:$0xf]
    %v250 = vld [vmem:[%s4 + $0x14c] sm:$0xf]
    %v251 = vld [vmem:[%s4 + $0x150] sm:$0xf]
    %v252 = vld [vmem:[%s4 + $0x154] sm:$0xf]
    %v253 = vld [vmem:[%s4 + $0x158] sm:$0xf]
    %v254 = vld [vmem:[%s4 + $0x15c] sm:$0xf]
    %v255 = vld [vmem:[%s4 + $0x160] sm:$0xf]
    %v256 = vld [vmem:[%s4 + $0x164] sm:$0xf]
    %v257 = vld [vmem:[%s4 + $0x168] sm:$0xf]
    %v258 = vld [vmem:[%s4 + $0x16c] sm:$0xf]
    %v259 = vld [vmem:[%s4 + $0x170] sm:$0xf]
    %v260 = vld [vmem:[%s4 + $0x174] sm:$0xf]
    %v261 = vld [vmem:[%s4 + $0x178] sm:$0xf]
    %v262 = vld [vmem:[%s4 + $0x17c] sm:$0xf]
    %v263 = vld [vmem:[%s4 + $0x180] sm:$0xf]
    %v264 = vld [vmem:[%s4 + $0x184] sm:$0xf]
    %v265 = vld [vmem:[%s4 + $0x188] sm:$0xf]
    %v266 = vld [vmem:[%s4 + $0x18c] sm:$0xf]
    %v267 = vld [vmem:[%s4 + $0x190] sm:$0xf]
    %v268 = vld [vmem:[%s4 + $0x194] sm:$0xf]
    %v269 = vld [vmem:[%s4 + $0x198] sm:$0xf]
    %v270 = vld [vmem:[%s4 + $0x19c] sm:$0xf]
    %v271 = vld [vmem:[%s4 + $0x1a0] sm:$0xf]
    %v272 = vld [vmem:[%s4 + $0x1a4] sm:$0xf]
    %v273 = vld [vmem:[%s4 + $0x1a8] sm:$0xf]
    %v274 = vld [vmem:[%s4 + $0x1ac] sm:$0xf]
    %v275 = vld [vmem:[%s4 + $0x1b0] sm:$0xf]
    %v276 = vld [vmem:[%s4 + $0x1b4] sm:$0xf]
    %v277 = vld [vmem:[%s4 + $0x1b8] sm:$0xf]
    %v278 = vld [vmem:[%s4 + $0x1bc] sm:$0xf]
    %v279 = vld [vmem:[%s4 + $0x1c0] sm:$0xf]
    %v280 = vld [vmem:[%s4 + $0x1c4] sm:$0xf]
    %v281 = vld [vmem:[%s4 + $0x1c8] sm:$0xf]
    %v282 = vld [vmem:[%s4 + $0x1cc] sm:$0xf]
    %v283 = vld [vmem:[%s4 + $0x1d0] sm:$0xf]
    %v284 = vld [vmem:[%s4 + $0x1d4] sm:$0xf]
    %v285 = vld [vmem:[%s4 + $0x1d8] sm:$0xf]
    %v286 = vld [vmem:[%s4 + $0x1dc] sm:$0xf]
    %v287 = vld [vmem:[%s4 + $0x1e0] sm:$0xf]
    %v288 = vld [vmem:[%s4 + $0x1e4] sm:$0xf]
    %v289 = vld [vmem:[%s4 + $0x1e8] sm:$0xf]
    %v290 = vld [vmem:[%s4 + $0x1ec] sm:$0xf]
    %v291 = vld [vmem:[%s4 + $0x1f0] sm:$0xf]
    %v292 = vld [vmem:[%s4 + $0x1f4] sm:$0xf]
    %v293 = vld [vmem:[%s4 + $0x1f8] sm:$0xf]
    %v294 = vld [vmem:[%s4 + $0x1fc] sm:$0xf]
    %v295 = vld [vmem:[%s4 + $0x200] sm:$0xf]
    %v296 = vld [vmem:[%s4 + $0x204] sm:$0xf]
    %v297 = vld [vmem:[%s4 + $0x208] sm:$0xf]
    %v298 = vld [vmem:[%s4 + $0x20c] sm:$0xf]
    %v299 = vld [vmem:[%s4 + $0x210] sm:$0xf]
    %v300 = vld [vmem:[%s4 + $0x214] sm:$0xf]
    %v301 = vld [vmem:[%s4 + $0x218] sm:$0xf]
    %v302 = vld [vmem:[%s4 + $0x21c] sm:$0xf]
    %v303 = vld [vmem:[%s4 + $0x220] sm:$0xf]
    %v304 = vld [vmem:[%s4 + $0x224] sm:$0xf]
    %v305 = vld [vmem:[%s4 + $0x228] sm:$0xf]
    %v306 = vld [vmem:[%s4 + $0x22c] sm:$0xf]
    %v307 = vld [vmem:[%s4 + $0x230] sm:$0xf]
    %v308 = vld [vmem:[%s4 + $0x234] sm:$0xf]
    %v309 = vld [vmem:[%s4 + $0x238] sm:$0xf]
    %v310 = vld [vmem:[%s4 + $0x23c] sm:$0xf]
    %v311 = vld [vmem:[%s4 + $0x240] sm:$0xf]
    %v312 = vld [vmem:[%s4 + $0x244] sm:$0xf]
    %v313 = vld [vmem:[%s4 + $0x248] sm:$0xf]
    %v314 = vld [vmem:[%s4 + $0x24c] sm:$0xf]
    %v315 = vld [vmem:[%s4 + $0x250] sm:$0xf]
    %v316 = vld [vmem:[%s4 + $0x254] sm:$0xf]
    %v317 = vld [vmem:[%s4 + $0x258] sm:$0xf]
    %v318 = vld [vmem:[%s4 + $0x25c] sm:$0xf]
    %v319 = vld [vmem:[%s4 + $0x260] sm:$0xf]
    %v320 = vld [vmem:[%s4 + $0x264] sm:$0xf]
    %v321 = vld [vmem:[%s4 + $0x268] sm:$0xf]
    %v322 = vld [vmem:[%s4 + $0x26c] sm:$0xf]
    %v323 = vld [vmem:[%s4 + $0x270] sm:$0xf]
    %v324 = vld [vmem:[%s4 + $0x274] sm:$0xf]
    %v325 = vld [vmem:[%s4 + $0x278] sm:$0xf]
    %v326 = vld [vmem:[%s4 + $0x27c] sm:$0xf]
    %v327 = vld [vmem:[%s4 + $0x280] sm:$0xf]
    %v328 = vld [vmem:[%s4 + $0x284] sm:$0xf]
    %v329 = vld [vmem:[%s4 + $0x288] sm:$0xf]
    %v330 = vld [vmem:[%s4 + $0x28c] sm:$0xf]
    %v331 = vld [vmem:[%s4 + $0x290] sm:$0xf]
    %v332 = vld [vmem:[%s4 + $0x294] sm:$0xf]
    %v333 = vld [vmem:[%s4 + $0x298] sm:$0xf]
    %v334 = vld [vmem:[%s4 + $0x29c] sm:$0xf]
    %v335 = vld [vmem:[%s4 + $0x2a0] sm:$0xf]
    %v336 = vld [vmem:[%s4 + $0x2a4] sm:$0xf]
    %v337 = vld [vmem:[%s4 + $0x2a8] sm:$0xf]
    %v338 = vld [vmem:[%s4 + $0x2ac] sm:$0xf]
    %v339 = vld [vmem:[%s4 + $0x2b0] sm:$0xf]
    %v340 = vld [vmem:[%s4 + $0x2b4] sm:$0xf]
    %v341 = vld [vmem:[%s4 + $0x2b8] sm:$0xf]
    %v342 = vld [vmem:[%s4 + $0x2bc] sm:$0xf]
    %v343 = vld [vmem:[%s4 + $0x2c0] sm:$0xf]
    %v344 = vld [vmem:[%s4 + $0x2c4] sm:$0xf]
    %v345 = vld [vmem:[%s4 + $0x2c8] sm:$0xf]
    %v346 = vld [vmem:[%s4 + $0x2cc] sm:$0xf]
    %v347 = vld [vmem:[%s4 + $0x2d0] sm:$0xf]
    %v348 = vld [vmem:[%s4 + $0x2d4] sm:$0xf]
    %v349 = vld [vmem:[%s4 + $0x2d8] sm:$0xf]
    %v350 = vld [vmem:[%s4 + $0x2dc] sm:$0xf]
    %v351 = vld [vmem:[%s4 + $0x2e0] sm:$0xf]
    %v352 = vld [vmem:[%s4 + $0x2e4] sm:$0xf]
    %v353 = vld [vmem:[%s4 + $0x2e8] sm:$0xf]
    %v354 = vld [vmem:[%s4 + $0x2ec] sm:$0xf]
    %v355 = vld [vmem:[%s4 + $0x2f0] sm:$0xf]
    %v356 = vld [vmem:[%s4 + $0x2f4] sm:$0xf]
    %v357 = vld [vmem:[%s4 + $0x2f8] sm:$0xf]
    %v358 = vld [vmem:[%s4 + $0x2fc] sm:$0xf]
    %v359 = vld [vmem:[%s4 + $0x300] sm:$0xf]
    %v360 = vld [vmem:[%s4 + $0x304] sm:$0xf]
    %v361 = vld [vmem:[%s4 + $0x308] sm:$0xf]
    %v362 = vld [vmem:[%s4 + $0x30c] sm:$0xf]
    %v363 = vld [vmem:[%s4 + $0x310] sm:$0xf]
    %v364 = vld [vmem:[%s4 + $0x314] sm:$0xf]
    %v365 = vld [vmem:[%s4 + $0x318] sm:$0xf]
    %v366 = vld [vmem:[%s4 + $0x31c] sm:$0xf]
    %v367 = vld [vmem:[%s4 + $0x320] sm:$0xf]
    %v368 = vld [vmem:[%s4 + $0x324] sm:$0xf]
    %v369 = vld [vmem:[%s4 + $0x328] sm:$0xf]
    %v370 = vld [vmem:[%s4 + $0x32c] sm:$0xf]
    %v371 = vld [vmem:[%s4 + $0x330] sm:$0xf]
    %v372 = vld [vmem:[%s4 + $0x334] sm:$0xf]
    %v373 = vld [vmem:[%s4 + $0x338] sm:$0xf]
    %v374 = vld [vmem:[%s4 + $0x33c] sm:$0xf]
    %v375 = vld [vmem:[%s4 + $0x340] sm:$0xf]
    %v376 = vld [vmem:[%s4 + $0x344] sm:$0xf]
    %v377 = vld [vmem:[%s4 + $0x348] sm:$0xf]
    %v378 = vld [vmem:[%s4 + $0x34c] sm:$0xf]
    %v379 = vld [vmem:[%s4 + $0x350] sm:$0xf]
    %v380 = vld [vmem:[%s4 + $0x354] sm:$0xf]
    %v381 = vld [vmem:[%s4 + $0x358] sm:$0xf]
    %v382 = vld [vmem:[%s4 + $0x35c] sm:$0xf]
    %v383 = vld [vmem:[%s4 + $0x360] sm:$0xf]
    %v384 = vld [vmem:[%s4 + $0x364] sm:$0xf]
    %v385 = vld [vmem:[%s4 + $0x368] sm:$0xf]
    %v386 = vld [vmem:[%s4 + $0x36c] sm:$0xf]
    %v387 = vld [vmem:[%s4 + $0x370] sm:$0xf]
    %v388 = vld [vmem:[%s4 + $0x374] sm:$0xf]
    %v389 = vld [vmem:[%s4 + $0x378] sm:$0xf]
    %v390 = vld [vmem:[%s4 + $0x37c] sm:$0xf]
    %v391 = vld [vmem:[%s4 + $0x380] sm:$0xf]
    %v392 = vld [vmem:[%s4 + $0x384] sm:$0xf]
    %v393 = vld [vmem:[%s4 + $0x388] sm:$0xf]
    %v394 = vld [vmem:[%s4 + $0x38c] sm:$0xf]
    %v395 = vld [vmem:[%s4 + $0x390] sm:$0xf]
    %v396 = vld [vmem:[%s4 + $0x394] sm:$0xf]
    %v397 = vld [vmem:[%s4 + $0x398] sm:$0xf]
    %v398 = vld [vmem:[%s4 + $0x39c] sm:$0xf]
    %v399 = vld [vmem:[%s4 + $0x3a0] sm:$0xf]
    %v400 = vld [vmem:[%s4 + $0x3a4] sm:$0xf]
    %v401 = vld [vmem:[%s4 + $0x3a8] sm:$0xf]
    %v402 = vld [vmem:[%s4 + $0x3ac] sm:$0xf]
    %v403 = vld [vmem:[%s4 + $0x3b0] sm:$0xf]
    %v404 = vld [vmem:[%s4 + $0x3b4] sm:$0xf]
    %v405 = vld [vmem:[%s4 + $0x3b8] sm:$0xf]
    %v406 = vld [vmem:[%s4 + $0x3bc] sm:$0xf]
    %v407 = vld [vmem:[%s4 + $0x3c0] sm:$0xf]
    %v408 = vld [vmem:[%s4 + $0x3c4] sm:$0xf]
    %v409 = vld [vmem:[%s4 + $0x3c8] sm:$0xf]
    %v410 = vld [vmem:[%s4 + $0x3cc] sm:$0xf]
    %v411 = vld [vmem:[%s4 + $0x3d0] sm:$0xf]
    %v412 = vld [vmem:[%s4 + $0x3d4] sm:$0xf]
    %v413 = vld [vmem:[%s4 + $0x3d8] sm:$0xf]
    %v414 = vld [vmem:[%s4 + $0x3dc] sm:$0xf]
    %v415 = vld [vmem:[%s4 + $0x3e0] sm:$0xf]
    %v416 = vld [vmem:[%s4 + $0x3e4] sm:$0xf]
    %v417 = vld [vmem:[%s4 + $0x3e8] sm:$0xf]
    %v418 = vld [vmem:[%s4 + $0x3ec] sm:$0xf]
    %v419 = vld [vmem:[%s4 + $0x3f0] sm:$0xf]
    %v420 = vld [vmem:[%s4 + $0x3f4] sm:$0xf]
    %v421 = vld [vmem:[%s4 + $0x3f8] sm:$0xf]
    %v422 = vld [vmem:[%s4 + $0x3fc] sm:$0xf]
    %v423 = vld [vmem:[%s5] sm:$0x1]
    %v425 = vlaneseq
    %v426 = vshrl.u32 %v425, 7
    %v427 = vsub.s32 0, %v426
    %v428 = vrot.slane %v423, %v427
    %v686 = vunpack.c.l.b16 %v167
    %v687 = vunpack.c.l.b16 %v168
    %v688 = vunpack.c.l.b16 %v169
    %v689 = vunpack.c.l.b16 %v170
    %v690 = vunpack.c.l.b16 %v171
    %v691 = vunpack.c.l.b16 %v172
    %v692 = vunpack.c.l.b16 %v173
    %v693 = vunpack.c.l.b16 %v174
    %v694 = vunpack.c.l.b16 %v175
    %v695 = vunpack.c.l.b16 %v176
    %v696 = vunpack.c.l.b16 %v177
    %v697 = vunpack.c.l.b16 %v178
    %v698 = vunpack.c.l.b16 %v179
    %v699 = vunpack.c.l.b16 %v180
    %v700 = vunpack.c.l.b16 %v181
    %v701 = vunpack.c.l.b16 %v182
    %v702 = vunpack.c.l.b16 %v183
    %v703 = vunpack.c.l.b16 %v184
    %v704 = vunpack.c.l.b16 %v185
    %v705 = vunpack.c.l.b16 %v186
    %v706 = vunpack.c.l.b16 %v187
    %v707 = vunpack.c.l.b16 %v188
    %v708 = vunpack.c.l.b16 %v189
    %v709 = vunpack.c.l.b16 %v190
    %v710 = vunpack.c.l.b16 %v191
    %v711 = vunpack.c.l.b16 %v192
    %v712 = vunpack.c.l.b16 %v193
    %v713 = vunpack.c.l.b16 %v194
    %v714 = vunpack.c.l.b16 %v195
    %v715 = vunpack.c.l.b16 %v196
    %v716 = vunpack.c.l.b16 %v197
    %v717 = vunpack.c.l.b16 %v198
    %v718 = vunpack.c.l.b16 %v199
    %v719 = vunpack.c.l.b16 %v200
    %v720 = vunpack.c.l.b16 %v201
    %v721 = vunpack.c.l.b16 %v202
    %v722 = vunpack.c.l.b16 %v203
    %v723 = vunpack.c.l.b16 %v204
    %v724 = vunpack.c.l.b16 %v205
    %v725 = vunpack.c.l.b16 %v206
    %v726 = vunpack.c.l.b16 %v207
    %v727 = vunpack.c.l.b16 %v208
    %v728 = vunpack.c.l.b16 %v209
    %v729 = vunpack.c.l.b16 %v210
    %v730 = vunpack.c.l.b16 %v211
    %v731 = vunpack.c.l.b16 %v212
    %v732 = vunpack.c.l.b16 %v213
    %v733 = vunpack.c.l.b16 %v214
    %v734 = vunpack.c.l.b16 %v215
    %v735 = vunpack.c.l.b16 %v216
    %v736 = vunpack.c.l.b16 %v217
    %v737 = vunpack.c.l.b16 %v218
    %v738 = vunpack.c.l.b16 %v219
    %v739 = vunpack.c.l.b16 %v220
    %v740 = vunpack.c.l.b16 %v221
    %v741 = vunpack.c.l.b16 %v222
    %v742 = vunpack.c.l.b16 %v223
    %v743 = vunpack.c.l.b16 %v224
    %v744 = vunpack.c.l.b16 %v225
    %v745 = vunpack.c.l.b16 %v226
    %v746 = vunpack.c.l.b16 %v227
    %v747 = vunpack.c.l.b16 %v228
    %v748 = vunpack.c.l.b16 %v229
    %v749 = vunpack.c.l.b16 %v230
    %v750 = vunpack.c.l.b16 %v231
    %v751 = vunpack.c.l.b16 %v232
    %v752 = vunpack.c.l.b16 %v233
    %v753 = vunpack.c.l.b16 %v234
    %v754 = vunpack.c.l.b16 %v235
    %v755 = vunpack.c.l.b16 %v236
    %v756 = vunpack.c.l.b16 %v237
    %v757 = vunpack.c.l.b16 %v238
    %v758 = vunpack.c.l.b16 %v239
    %v759 = vunpack.c.l.b16 %v240
    %v760 = vunpack.c.l.b16 %v241
    %v761 = vunpack.c.l.b16 %v242
    %v762 = vunpack.c.l.b16 %v243
    %v763 = vunpack.c.l.b16 %v244
    %v764 = vunpack.c.l.b16 %v245
    %v765 = vunpack.c.l.b16 %v246
    %v766 = vunpack.c.l.b16 %v247
    %v767 = vunpack.c.l.b16 %v248
    %v768 = vunpack.c.l.b16 %v249
    %v769 = vunpack.c.l.b16 %v250
    %v770 = vunpack.c.l.b16 %v251
    %v771 = vunpack.c.l.b16 %v252
    %v772 = vunpack.c.l.b16 %v253
    %v773 = vunpack.c.l.b16 %v254
    %v774 = vunpack.c.l.b16 %v255
    %v775 = vunpack.c.l.b16 %v256
    %v776 = vunpack.c.l.b16 %v257
    %v777 = vunpack.c.l.b16 %v258
    %v778 = vunpack.c.l.b16 %v259
    %v779 = vunpack.c.l.b16 %v260
    %v780 = vunpack.c.l.b16 %v261
    %v781 = vunpack.c.l.b16 %v262
    %v782 = vunpack.c.l.b16 %v263
    %v783 = vunpack.c.l.b16 %v264
    %v784 = vunpack.c.l.b16 %v265
    %v785 = vunpack.c.l.b16 %v266
    %v786 = vunpack.c.l.b16 %v267
    %v787 = vunpack.c.l.b16 %v268
    %v788 = vunpack.c.l.b16 %v269
    %v789 = vunpack.c.l.b16 %v270
    %v790 = vunpack.c.l.b16 %v271
    %v791 = vunpack.c.l.b16 %v272
    %v792 = vunpack.c.l.b16 %v273
    %v793 = vunpack.c.l.b16 %v274
    %v794 = vunpack.c.l.b16 %v275
    %v795 = vunpack.c.l.b16 %v276
    %v796 = vunpack.c.l.b16 %v277
    %v797 = vunpack.c.l.b16 %v278
    %v798 = vunpack.c.l.b16 %v279
    %v799 = vunpack.c.l.b16 %v280
    %v800 = vunpack.c.l.b16 %v281
    %v801 = vunpack.c.l.b16 %v282
    %v802 = vunpack.c.l.b16 %v283
    %v803 = vunpack.c.l.b16 %v284
    %v804 = vunpack.c.l.b16 %v285
    %v805 = vunpack.c.l.b16 %v286
    %v806 = vunpack.c.l.b16 %v287
    %v807 = vunpack.c.l.b16 %v288
    %v808 = vunpack.c.l.b16 %v289
    %v809 = vunpack.c.l.b16 %v290
    %v810 = vunpack.c.l.b16 %v291
    %v811 = vunpack.c.l.b16 %v292
    %v812 = vunpack.c.l.b16 %v293
    %v813 = vunpack.c.l.b16 %v294
    %v814 = vunpack.c.l.b16 %v295
    %v815 = vunpack.c.l.b16 %v296
    %v816 = vunpack.c.l.b16 %v297
    %v817 = vunpack.c.l.b16 %v298
    %v818 = vunpack.c.l.b16 %v299
    %v819 = vunpack.c.l.b16 %v300
    %v820 = vunpack.c.l.b16 %v301
    %v821 = vunpack.c.l.b16 %v302
    %v822 = vunpack.c.l.b16 %v303
    %v823 = vunpack.c.l.b16 %v304
    %v824 = vunpack.c.l.b16 %v305
    %v825 = vunpack.c.l.b16 %v306
    %v826 = vunpack.c.l.b16 %v307
    %v827 = vunpack.c.l.b16 %v308
    %v828 = vunpack.c.l.b16 %v309
    %v829 = vunpack.c.l.b16 %v310
    %v830 = vunpack.c.l.b16 %v311
    %v831 = vunpack.c.l.b16 %v312
    %v832 = vunpack.c.l.b16 %v313
    %v833 = vunpack.c.l.b16 %v314
    %v834 = vunpack.c.l.b16 %v315
    %v835 = vunpack.c.l.b16 %v316
    %v836 = vunpack.c.l.b16 %v317
    %v837 = vunpack.c.l.b16 %v318
    %v838 = vunpack.c.l.b16 %v319
    %v839 = vunpack.c.l.b16 %v320
    %v840 = vunpack.c.l.b16 %v321
    %v841 = vunpack.c.l.b16 %v322
    %v842 = vunpack.c.l.b16 %v323
    %v843 = vunpack.c.l.b16 %v324
    %v844 = vunpack.c.l.b16 %v325
    %v845 = vunpack.c.l.b16 %v326
    %v846 = vunpack.c.l.b16 %v327
    %v847 = vunpack.c.l.b16 %v328
    %v848 = vunpack.c.l.b16 %v329
    %v849 = vunpack.c.l.b16 %v330
    %v850 = vunpack.c.l.b16 %v331
    %v851 = vunpack.c.l.b16 %v332
    %v852 = vunpack.c.l.b16 %v333
    %v853 = vunpack.c.l.b16 %v334
    %v854 = vunpack.c.l.b16 %v335
    %v855 = vunpack.c.l.b16 %v336
    %v856 = vunpack.c.l.b16 %v337
    %v857 = vunpack.c.l.b16 %v338
    %v858 = vunpack.c.l.b16 %v339
    %v859 = vunpack.c.l.b16 %v340
    %v860 = vunpack.c.l.b16 %v341
    %v861 = vunpack.c.l.b16 %v342
    %v862 = vunpack.c.l.b16 %v343
    %v863 = vunpack.c.l.b16 %v344
    %v864 = vunpack.c.l.b16 %v345
    %v865 = vunpack.c.l.b16 %v346
    %v866 = vunpack.c.l.b16 %v347
    %v867 = vunpack.c.l.b16 %v348
    %v868 = vunpack.c.l.b16 %v349
    %v869 = vunpack.c.l.b16 %v350
    %v870 = vunpack.c.l.b16 %v351
    %v871 = vunpack.c.l.b16 %v352
    %v872 = vunpack.c.l.b16 %v353
    %v873 = vunpack.c.l.b16 %v354
    %v874 = vunpack.c.l.b16 %v355
    %v875 = vunpack.c.l.b16 %v356
    %v876 = vunpack.c.l.b16 %v357
    %v877 = vunpack.c.l.b16 %v358
    %v878 = vunpack.c.l.b16 %v359
    %v879 = vunpack.c.l.b16 %v360
    %v880 = vunpack.c.l.b16 %v361
    %v881 = vunpack.c.l.b16 %v362
    %v882 = vunpack.c.l.b16 %v363
    %v883 = vunpack.c.l.b16 %v364
    %v884 = vunpack.c.l.b16 %v365
    %v885 = vunpack.c.l.b16 %v366
    %v886 = vunpack.c.l.b16 %v367
    %v887 = vunpack.c.l.b16 %v368
    %v888 = vunpack.c.l.b16 %v369
    %v889 = vunpack.c.l.b16 %v370
    %v890 = vunpack.c.l.b16 %v371
    %v891 = vunpack.c.l.b16 %v372
    %v892 = vunpack.c.l.b16 %v373
    %v893 = vunpack.c.l.b16 %v374
    %v894 = vunpack.c.l.b16 %v375
    %v895 = vunpack.c.l.b16 %v376
    %v896 = vunpack.c.l.b16 %v377
    %v897 = vunpack.c.l.b16 %v378
    %v898 = vunpack.c.l.b16 %v379
    %v899 = vunpack.c.l.b16 %v380
    %v900 = vunpack.c.l.b16 %v381
    %v901 = vunpack.c.l.b16 %v382
    %v902 = vunpack.c.l.b16 %v383
    %v903 = vunpack.c.l.b16 %v384
    %v904 = vunpack.c.l.b16 %v385
    %v905 = vunpack.c.l.b16 %v386
    %v906 = vunpack.c.l.b16 %v387
    %v907 = vunpack.c.l.b16 %v388
    %v908 = vunpack.c.l.b16 %v389
    %v909 = vunpack.c.l.b16 %v390
    %v910 = vunpack.c.l.b16 %v391
    %v911 = vunpack.c.l.b16 %v392
    %v912 = vunpack.c.l.b16 %v393
    %v913 = vunpack.c.l.b16 %v394
    %v914 = vunpack.c.l.b16 %v395
    %v915 = vunpack.c.l.b16 %v396
    %v916 = vunpack.c.l.b16 %v397
    %v917 = vunpack.c.l.b16 %v398
    %v918 = vunpack.c.l.b16 %v399
    %v919 = vunpack.c.l.b16 %v400
    %v920 = vunpack.c.l.b16 %v401
    %v921 = vunpack.c.l.b16 %v402
    %v922 = vunpack.c.l.b16 %v403
    %v923 = vunpack.c.l.b16 %v404
    %v924 = vunpack.c.l.b16 %v405
    %v925 = vunpack.c.l.b16 %v406
    %v926 = vunpack.c.l.b16 %v407
    %v927 = vunpack.c.l.b16 %v408
    %v928 = vunpack.c.l.b16 %v409
    %v929 = vunpack.c.l.b16 %v410
    %v930 = vunpack.c.l.b16 %v411
    %v931 = vunpack.c.l.b16 %v412
    %v932 = vunpack.c.l.b16 %v413
    %v933 = vunpack.c.l.b16 %v414
    %v934 = vunpack.c.l.b16 %v415
    %v935 = vunpack.c.l.b16 %v416
    %v936 = vunpack.c.l.b16 %v417
    %v937 = vunpack.c.l.b16 %v418
    %v938 = vunpack.c.l.b16 %v419
    %v939 = vunpack.c.l.b16 %v420
    %v940 = vunpack.c.l.b16 %v421
    %v941 = vunpack.c.l.b16 %v422
    %v942 = vpack.c.b16 %v687, %v686
    %v943 = vpack.c.b16 %v689, %v688
    %v944 = vpack.c.b16 %v691, %v690
    %v945 = vpack.c.b16 %v693, %v692
    %v946 = vpack.c.b16 %v695, %v694
    %v947 = vpack.c.b16 %v697, %v696
    %v948 = vpack.c.b16 %v699, %v698
    %v949 = vpack.c.b16 %v701, %v700
    %v950 = vpack.c.b16 %v703, %v702
    %v951 = vpack.c.b16 %v705, %v704
    %v952 = vpack.c.b16 %v707, %v706
    %v953 = vpack.c.b16 %v709, %v708
    %v954 = vpack.c.b16 %v711, %v710
    %v955 = vpack.c.b16 %v713, %v712
    %v956 = vpack.c.b16 %v715, %v714
    %v957 = vpack.c.b16 %v717, %v716
    %v958 = vpack.c.b16 %v719, %v718
    %v959 = vpack.c.b16 %v721, %v720
    %v960 = vpack.c.b16 %v723, %v722
    %v961 = vpack.c.b16 %v725, %v724
    %v962 = vpack.c.b16 %v727, %v726
    %v963 = vpack.c.b16 %v729, %v728
    %v964 = vpack.c.b16 %v731, %v730
    %v965 = vpack.c.b16 %v733, %v732
    %v966 = vpack.c.b16 %v735, %v734
    %v967 = vpack.c.b16 %v737, %v736
    %v968 = vpack.c.b16 %v739, %v738
    %v969 = vpack.c.b16 %v741, %v740
    %v970 = vpack.c.b16 %v743, %v742
    %v971 = vpack.c.b16 %v745, %v744
    %v972 = vpack.c.b16 %v747, %v746
    %v973 = vpack.c.b16 %v749, %v748
    %v974 = vpack.c.b16 %v751, %v750
    %v975 = vpack.c.b16 %v753, %v752
    %v976 = vpack.c.b16 %v755, %v754
    %v977 = vpack.c.b16 %v757, %v756
    %v978 = vpack.c.b16 %v759, %v758
    %v979 = vpack.c.b16 %v761, %v760
    %v980 = vpack.c.b16 %v763, %v762
    %v981 = vpack.c.b16 %v765, %v764
    %v982 = vpack.c.b16 %v767, %v766
    %v983 = vpack.c.b16 %v769, %v768
    %v984 = vpack.c.b16 %v771, %v770
    %v985 = vpack.c.b16 %v773, %v772
    %v986 = vpack.c.b16 %v775, %v774
    %v987 = vpack.c.b16 %v777, %v776
    %v988 = vpack.c.b16 %v779, %v778
    %v989 = vpack.c.b16 %v781, %v780
    %v990 = vpack.c.b16 %v783, %v782
    %v991 = vpack.c.b16 %v785, %v784
    %v992 = vpack.c.b16 %v787, %v786
    %v993 = vpack.c.b16 %v789, %v788
    %v994 = vpack.c.b16 %v791, %v790
    %v995 = vpack.c.b16 %v793, %v792
    %v996 = vpack.c.b16 %v795, %v794
    %v997 = vpack.c.b16 %v797, %v796
    %v998 = vpack.c.b16 %v799, %v798
    %v999 = vpack.c.b16 %v801, %v800
    %v1000 = vpack.c.b16 %v803, %v802
    %v1001 = vpack.c.b16 %v805, %v804
    %v1002 = vpack.c.b16 %v807, %v806
    %v1003 = vpack.c.b16 %v809, %v808
    %v1004 = vpack.c.b16 %v811, %v810
    %v1005 = vpack.c.b16 %v813, %v812
    %v1006 = vpack.c.b16 %v815, %v814
    %v1007 = vpack.c.b16 %v817, %v816
    %v1008 = vpack.c.b16 %v819, %v818
    %v1009 = vpack.c.b16 %v821, %v820
    %v1010 = vpack.c.b16 %v823, %v822
    %v1011 = vpack.c.b16 %v825, %v824
    %v1012 = vpack.c.b16 %v827, %v826
    %v1013 = vpack.c.b16 %v829, %v828
    %v1014 = vpack.c.b16 %v831, %v830
    %v1015 = vpack.c.b16 %v833, %v832
    %v1016 = vpack.c.b16 %v835, %v834
    %v1017 = vpack.c.b16 %v837, %v836
    %v1018 = vpack.c.b16 %v839, %v838
    %v1019 = vpack.c.b16 %v841, %v840
    %v1020 = vpack.c.b16 %v843, %v842
    %v1021 = vpack.c.b16 %v845, %v844
    %v1022 = vpack.c.b16 %v847, %v846
    %v1023 = vpack.c.b16 %v849, %v848
    %v1024 = vpack.c.b16 %v851, %v850
    %v1025 = vpack.c.b16 %v853, %v852
    %v1026 = vpack.c.b16 %v855, %v854
    %v1027 = vpack.c.b16 %v857, %v856
    %v1028 = vpack.c.b16 %v859, %v858
    %v1029 = vpack.c.b16 %v861, %v860
    %v1030 = vpack.c.b16 %v863, %v862
    %v1031 = vpack.c.b16 %v865, %v864
    %v1032 = vpack.c.b16 %v867, %v866
    %v1033 = vpack.c.b16 %v869, %v868
    %v1034 = vpack.c.b16 %v871, %v870
    %v1035 = vpack.c.b16 %v873, %v872
    %v1036 = vpack.c.b16 %v875, %v874
    %v1037 = vpack.c.b16 %v877, %v876
    %v1038 = vpack.c.b16 %v879, %v878
    %v1039 = vpack.c.b16 %v881, %v880
    %v1040 = vpack.c.b16 %v883, %v882
    %v1041 = vpack.c.b16 %v885, %v884
    %v1042 = vpack.c.b16 %v887, %v886
    %v1043 = vpack.c.b16 %v889, %v888
    %v1044 = vpack.c.b16 %v891, %v890
    %v1045 = vpack.c.b16 %v893, %v892
    %v1046 = vpack.c.b16 %v895, %v894
    %v1047 = vpack.c.b16 %v897, %v896
    %v1048 = vpack.c.b16 %v899, %v898
    %v1049 = vpack.c.b16 %v901, %v900
    %v1050 = vpack.c.b16 %v903, %v902
    %v1051 = vpack.c.b16 %v905, %v904
    %v1052 = vpack.c.b16 %v907, %v906
    %v1053 = vpack.c.b16 %v909, %v908
    %v1054 = vpack.c.b16 %v911, %v910
    %v1055 = vpack.c.b16 %v913, %v912
    %v1056 = vpack.c.b16 %v915, %v914
    %v1057 = vpack.c.b16 %v917, %v916
    %v1058 = vpack.c.b16 %v919, %v918
    %v1059 = vpack.c.b16 %v921, %v920
    %v1060 = vpack.c.b16 %v923, %v922
    %v1061 = vpack.c.b16 %v925, %v924
    %v1062 = vpack.c.b16 %v927, %v926
    %v1063 = vpack.c.b16 %v929, %v928
    %v1064 = vpack.c.b16 %v931, %v930
    %v1065 = vpack.c.b16 %v933, %v932
    %v1066 = vpack.c.b16 %v935, %v934
    %v1067 = vpack.c.b16 %v937, %v936
    %v1068 = vpack.c.b16 %v939, %v938
    %v1069 = vpack.c.b16 %v941, %v940
    %1198 = vmatprep.subr.bf16.mxu0 0
    %1199 = vmatpush1.bf16.msra.mxu0 %v942
    %1200 = vmatprep.subr.bf16.mxu0 0
    %1201 = vmatpush1.bf16.msra.mxu0 %v943
    %1202 = vmatprep.subr.bf16.mxu0 0
    %1203 = vmatpush1.bf16.msra.mxu0 %v944
    %1204 = vmatprep.subr.bf16.mxu0 0
    %1205 = vmatpush1.bf16.msra.mxu0 %v945
    %1206 = vmatprep.subr.bf16.mxu0 0
    %1207 = vmatpush1.bf16.msra.mxu0 %v946
    %1208 = vmatprep.subr.bf16.mxu0 0
    %1209 = vmatpush1.bf16.msra.mxu0 %v947
    %1210 = vmatprep.subr.bf16.mxu0 0
    %1211 = vmatpush1.bf16.msra.mxu0 %v948
    %1212 = vmatprep.subr.bf16.mxu0 0
    %1213 = vmatpush1.bf16.msra.mxu0 %v949
    %1214 = vmatprep.subr.bf16.mxu0 0
    %1215 = vmatpush1.bf16.msra.mxu0 %v950
    %1216 = vmatprep.subr.bf16.mxu0 0
    %1217 = vmatpush1.bf16.msra.mxu0 %v951
    %1218 = vmatprep.subr.bf16.mxu0 0
    %1219 = vmatpush1.bf16.msra.mxu0 %v952
    %1220 = vmatprep.subr.bf16.mxu0 0
    %1221 = vmatpush1.bf16.msra.mxu0 %v953
    %1222 = vmatprep.subr.bf16.mxu0 0
    %1223 = vmatpush1.bf16.msra.mxu0 %v954
    %1224 = vmatprep.subr.bf16.mxu0 0
    %1225 = vmatpush1.bf16.msra.mxu0 %v955
    %1226 = vmatprep.subr.bf16.mxu0 0
    %1227 = vmatpush1.bf16.msra.mxu0 %v956
    %1228 = vmatprep.subr.bf16.mxu0 0
    %1229 = vmatpush1.bf16.msra.mxu0 %v957
    %1230 = vmatprep.mubr.bf16.mxu0 %v152
    %1231 = vmatmul.mubr.bf16.gmra.mrb[0].mxu0 %v151
    %v1232 = vpop.f32.mrb[0].mxu0
    %v1233 = vadd.f32 %v428, %v1232
    %v1234 = vpop.f32.mrb[0].mxu0
    %v1235 = vpop.f32.mrb[0].mxu0
    %v1236 = vpop.f32.mrb[0].mxu0
    %1237 = vdwg.mxu0
    %1238 = vmatprep.subr.bf16.mxu0 0
    %1239 = vmatpush1.bf16.msra.mxu0 %v958
    %1240 = vmatprep.subr.bf16.mxu0 0
    %1241 = vmatpush1.bf16.msra.mxu0 %v959
    %1242 = vmatprep.subr.bf16.mxu0 0
    %1243 = vmatpush1.bf16.msra.mxu0 %v960
    %1244 = vmatprep.subr.bf16.mxu0 0
    %1245 = vmatpush1.bf16.msra.mxu0 %v961
    %1246 = vmatprep.subr.bf16.mxu0 0
    %1247 = vmatpush1.bf16.msra.mxu0 %v962
    %1248 = vmatprep.subr.bf16.mxu0 0
    %1249 = vmatpush1.bf16.msra.mxu0 %v963
    %1250 = vmatprep.subr.bf16.mxu0 0
    %1251 = vmatpush1.bf16.msra.mxu0 %v964
    %1252 = vmatprep.subr.bf16.mxu0 0
    %1253 = vmatpush1.bf16.msra.mxu0 %v965
    %1254 = vmatprep.subr.bf16.mxu0 0
    %1255 = vmatpush1.bf16.msra.mxu0 %v966
    %1256 = vmatprep.subr.bf16.mxu0 0
    %1257 = vmatpush1.bf16.msra.mxu0 %v967
    %1258 = vmatprep.subr.bf16.mxu0 0
    %1259 = vmatpush1.bf16.msra.mxu0 %v968
    %1260 = vmatprep.subr.bf16.mxu0 0
    %1261 = vmatpush1.bf16.msra.mxu0 %v969
    %1262 = vmatprep.subr.bf16.mxu0 0
    %1263 = vmatpush1.bf16.msra.mxu0 %v970
    %1264 = vmatprep.subr.bf16.mxu0 0
    %1265 = vmatpush1.bf16.msra.mxu0 %v971
    %1266 = vmatprep.subr.bf16.mxu0 0
    %1267 = vmatpush1.bf16.msra.mxu0 %v972
    %1268 = vmatprep.subr.bf16.mxu0 0
    %1269 = vmatpush1.bf16.msra.mxu0 %v973
    %1270 = vmatprep.mubr.bf16.mxu0 %v154
    %1271 = vmatmul.mubr.bf16.gmra.mrb[0].mxu0 %v153
    %v1272 = vpop.f32.mrb[0].mxu0
    %v1273 = vadd.f32 %v1233, %v1272
    %v1274 = vpop.f32.mrb[0].mxu0
    %v1275 = vpop.f32.mrb[0].mxu0
    %v1276 = vpop.f32.mrb[0].mxu0
    %1277 = vdwg.mxu0
    %1278 = vmatprep.subr.bf16.mxu0 0
    %1279 = vmatpush1.bf16.msra.mxu0 %v974
    %1280 = vmatprep.subr.bf16.mxu0 0
    %1281 = vmatpush1.bf16.msra.mxu0 %v975
    %1282 = vmatprep.subr.bf16.mxu0 0
    %1283 = vmatpush1.bf16.msra.mxu0 %v976
    %1284 = vmatprep.subr.bf16.mxu0 0
    %1285 = vmatpush1.bf16.msra.mxu0 %v977
    %1286 = vmatprep.subr.bf16.mxu0 0
    %1287 = vmatpush1.bf16.msra.mxu0 %v978
    %1288 = vmatprep.subr.bf16.mxu0 0
    %1289 = vmatpush1.bf16.msra.mxu0 %v979
    %1290 = vmatprep.subr.bf16.mxu0 0
    %1291 = vmatpush1.bf16.msra.mxu0 %v980
    %1292 = vmatprep.subr.bf16.mxu0 0
    %1293 = vmatpush1.bf16.msra.mxu0 %v981
    %1294 = vmatprep.subr.bf16.mxu0 0
    %1295 = vmatpush1.bf16.msra.mxu0 %v982
    %1296 = vmatprep.subr.bf16.mxu0 0
    %1297 = vmatpush1.bf16.msra.mxu0 %v983
    %1298 = vmatprep.subr.bf16.mxu0 0
    %1299 = vmatpush1.bf16.msra.mxu0 %v984
    %1300 = vmatprep.subr.bf16.mxu0 0
    %1301 = vmatpush1.bf16.msra.mxu0 %v985
    %1302 = vmatprep.subr.bf16.mxu0 0
    %1303 = vmatpush1.bf16.msra.mxu0 %v986
    %1304 = vmatprep.subr.bf16.mxu0 0
    %1305 = vmatpush1.bf16.msra.mxu0 %v987
    %1306 = vmatprep.subr.bf16.mxu0 0
    %1307 = vmatpush1.bf16.msra.mxu0 %v988
    %1308 = vmatprep.subr.bf16.mxu0 0
    %1309 = vmatpush1.bf16.msra.mxu0 %v989
    %1310 = vmatprep.mubr.bf16.mxu0 %v156
    %1311 = vmatmul.mubr.bf16.gmra.mrb[0].mxu0 %v155
    %v1312 = vpop.f32.mrb[0].mxu0
    %v1313 = vadd.f32 %v1273, %v1312
    %v1314 = vpop.f32.mrb[0].mxu0
    %v1315 = vpop.f32.mrb[0].mxu0
    %v1316 = vpop.f32.mrb[0].mxu0
    %1317 = vdwg.mxu0
    %1318 = vmatprep.subr.bf16.mxu0 0
    %1319 = vmatpush1.bf16.msra.mxu0 %v990
    %1320 = vmatprep.subr.bf16.mxu0 0
    %1321 = vmatpush1.bf16.msra.mxu0 %v991
    %1322 = vmatprep.subr.bf16.mxu0 0
    %1323 = vmatpush1.bf16.msra.mxu0 %v992
    %1324 = vmatprep.subr.bf16.mxu0 0
    %1325 = vmatpush1.bf16.msra.mxu0 %v993
    %1326 = vmatprep.subr.bf16.mxu0 0
    %1327 = vmatpush1.bf16.msra.mxu0 %v994
    %1328 = vmatprep.subr.bf16.mxu0 0
    %1329 = vmatpush1.bf16.msra.mxu0 %v995
    %1330 = vmatprep.subr.bf16.mxu0 0
    %1331 = vmatpush1.bf16.msra.mxu0 %v996
    %1332 = vmatprep.subr.bf16.mxu0 0
    %1333 = vmatpush1.bf16.msra.mxu0 %v997
    %1334 = vmatprep.subr.bf16.mxu0 0
    %1335 = vmatpush1.bf16.msra.mxu0 %v998
    %1336 = vmatprep.subr.bf16.mxu0 0
    %1337 = vmatpush1.bf16.msra.mxu0 %v999
    %1338 = vmatprep.subr.bf16.mxu0 0
    %1339 = vmatpush1.bf16.msra.mxu0 %v1000
    %1340 = vmatprep.subr.bf16.mxu0 0
    %1341 = vmatpush1.bf16.msra.mxu0 %v1001
    %1342 = vmatprep.subr.bf16.mxu0 0
    %1343 = vmatpush1.bf16.msra.mxu0 %v1002
    %1344 = vmatprep.subr.bf16.mxu0 0
    %1345 = vmatpush1.bf16.msra.mxu0 %v1003
    %1346 = vmatprep.subr.bf16.mxu0 0
    %1347 = vmatpush1.bf16.msra.mxu0 %v1004
    %1348 = vmatprep.subr.bf16.mxu0 0
    %1349 = vmatpush1.bf16.msra.mxu0 %v1005
    %1350 = vmatprep.mubr.bf16.mxu0 %v158
    %1351 = vmatmul.mubr.bf16.gmra.mrb[0].mxu0 %v157
    %v1352 = vpop.f32.mrb[0].mxu0
    %v1353 = vadd.f32 %v1313, %v1352
    %v1354 = vpop.f32.mrb[0].mxu0
    %v1355 = vpop.f32.mrb[0].mxu0
    %v1356 = vpop.f32.mrb[0].mxu0
    %1357 = vdwg.mxu0
    %1358 = vmatprep.subr.bf16.mxu0 0
    %1359 = vmatpush1.bf16.msra.mxu0 %v1006
    %1360 = vmatprep.subr.bf16.mxu0 0
    %1361 = vmatpush1.bf16.msra.mxu0 %v1007
    %1362 = vmatprep.subr.bf16.mxu0 0
    %1363 = vmatpush1.bf16.msra.mxu0 %v1008
    %1364 = vmatprep.subr.bf16.mxu0 0
    %1365 = vmatpush1.bf16.msra.mxu0 %v1009
    %1366 = vmatprep.subr.bf16.mxu0 0
    %1367 = vmatpush1.bf16.msra.mxu0 %v1010
    %1368 = vmatprep.subr.bf16.mxu0 0
    %1369 = vmatpush1.bf16.msra.mxu0 %v1011
    %1370 = vmatprep.subr.bf16.mxu0 0
    %1371 = vmatpush1.bf16.msra.mxu0 %v1012
    %1372 = vmatprep.subr.bf16.mxu0 0
    %1373 = vmatpush1.bf16.msra.mxu0 %v1013
    %1374 = vmatprep.subr.bf16.mxu0 0
    %1375 = vmatpush1.bf16.msra.mxu0 %v1014
    %1376 = vmatprep.subr.bf16.mxu0 0
    %1377 = vmatpush1.bf16.msra.mxu0 %v1015
    %1378 = vmatprep.subr.bf16.mxu0 0
    %1379 = vmatpush1.bf16.msra.mxu0 %v1016
    %1380 = vmatprep.subr.bf16.mxu0 0
    %1381 = vmatpush1.bf16.msra.mxu0 %v1017
    %1382 = vmatprep.subr.bf16.mxu0 0
    %1383 = vmatpush1.bf16.msra.mxu0 %v1018
    %1384 = vmatprep.subr.bf16.mxu0 0
    %1385 = vmatpush1.bf16.msra.mxu0 %v1019
    %1386 = vmatprep.subr.bf16.mxu0 0
    %1387 = vmatpush1.bf16.msra.mxu0 %v1020
    %1388 = vmatprep.subr.bf16.mxu0 0
    %1389 = vmatpush1.bf16.msra.mxu0 %v1021
    %1390 = vmatprep.mubr.bf16.mxu0 %v160
    %1391 = vmatmul.mubr.bf16.gmra.mrb[0].mxu0 %v159
    %v1392 = vpop.f32.mrb[0].mxu0
    %v1393 = vadd.f32 %v1353, %v1392
    %v1394 = vpop.f32.mrb[0].mxu0
    %v1395 = vpop.f32.mrb[0].mxu0
    %v1396 = vpop.f32.mrb[0].mxu0
    %1397 = vdwg.mxu0
    %1398 = vmatprep.subr.bf16.mxu0 0
    %1399 = vmatpush1.bf16.msra.mxu0 %v1022
    %1400 = vmatprep.subr.bf16.mxu0 0
    %1401 = vmatpush1.bf16.msra.mxu0 %v1023
    %1402 = vmatprep.subr.bf16.mxu0 0
    %1403 = vmatpush1.bf16.msra.mxu0 %v1024
    %1404 = vmatprep.subr.bf16.mxu0 0
    %1405 = vmatpush1.bf16.msra.mxu0 %v1025
    %1406 = vmatprep.subr.bf16.mxu0 0
    %1407 = vmatpush1.bf16.msra.mxu0 %v1026
    %1408 = vmatprep.subr.bf16.mxu0 0
    %1409 = vmatpush1.bf16.msra.mxu0 %v1027
    %1410 = vmatprep.subr.bf16.mxu0 0
    %1411 = vmatpush1.bf16.msra.mxu0 %v1028
    %1412 = vmatprep.subr.bf16.mxu0 0
    %1413 = vmatpush1.bf16.msra.mxu0 %v1029
    %1414 = vmatprep.subr.bf16.mxu0 0
    %1415 = vmatpush1.bf16.msra.mxu0 %v1030
    %1416 = vmatprep.subr.bf16.mxu0 0
    %1417 = vmatpush1.bf16.msra.mxu0 %v1031
    %1418 = vmatprep.subr.bf16.mxu0 0
    %1419 = vmatpush1.bf16.msra.mxu0 %v1032
    %1420 = vmatprep.subr.bf16.mxu0 0
    %1421 = vmatpush1.bf16.msra.mxu0 %v1033
    %1422 = vmatprep.subr.bf16.mxu0 0
    %1423 = vmatpush1.bf16.msra.mxu0 %v1034
    %1424 = vmatprep.subr.bf16.mxu0 0
    %1425 = vmatpush1.bf16.msra.mxu0 %v1035
    %1426 = vmatprep.subr.bf16.mxu0 0
    %1427 = vmatpush1.bf16.msra.mxu0 %v1036
    %1428 = vmatprep.subr.bf16.mxu0 0
    %1429 = vmatpush1.bf16.msra.mxu0 %v1037
    %1430 = vmatprep.mubr.bf16.mxu0 %v162
    %1431 = vmatmul.mubr.bf16.gmra.mrb[0].mxu0 %v161
    %v1432 = vpop.f32.mrb[0].mxu0
    %v1433 = vadd.f32 %v1393, %v1432
    %v1434 = vpop.f32.mrb[0].mxu0
    %v1435 = vpop.f32.mrb[0].mxu0
    %v1436 = vpop.f32.mrb[0].mxu0
    %1437 = vdwg.mxu0
    %1438 = vmatprep.subr.bf16.mxu0 0
    %1439 = vmatpush1.bf16.msra.mxu0 %v1038
    %1440 = vmatprep.subr.bf16.mxu0 0
    %1441 = vmatpush1.bf16.msra.mxu0 %v1039
    %1442 = vmatprep.subr.bf16.mxu0 0
    %1443 = vmatpush1.bf16.msra.mxu0 %v1040
    %1444 = vmatprep.subr.bf16.mxu0 0
    %1445 = vmatpush1.bf16.msra.mxu0 %v1041
    %1446 = vmatprep.subr.bf16.mxu0 0
    %1447 = vmatpush1.bf16.msra.mxu0 %v1042
    %1448 = vmatprep.subr.bf16.mxu0 0
    %1449 = vmatpush1.bf16.msra.mxu0 %v1043
    %1450 = vmatprep.subr.bf16.mxu0 0
    %1451 = vmatpush1.bf16.msra.mxu0 %v1044
    %1452 = vmatprep.subr.bf16.mxu0 0
    %1453 = vmatpush1.bf16.msra.mxu0 %v1045
    %1454 = vmatprep.subr.bf16.mxu0 0
    %1455 = vmatpush1.bf16.msra.mxu0 %v1046
    %1456 = vmatprep.subr.bf16.mxu0 0
    %1457 = vmatpush1.bf16.msra.mxu0 %v1047
    %1458 = vmatprep.subr.bf16.mxu0 0
    %1459 = vmatpush1.bf16.msra.mxu0 %v1048
    %1460 = vmatprep.subr.bf16.mxu0 0
    %1461 = vmatpush1.bf16.msra.mxu0 %v1049
    %1462 = vmatprep.subr.bf16.mxu0 0
    %1463 = vmatpush1.bf16.msra.mxu0 %v1050
    %1464 = vmatprep.subr.bf16.mxu0 0
    %1465 = vmatpush1.bf16.msra.mxu0 %v1051
    %1466 = vmatprep.subr.bf16.mxu0 0
    %1467 = vmatpush1.bf16.msra.mxu0 %v1052
    %1468 = vmatprep.subr.bf16.mxu0 0
    %1469 = vmatpush1.bf16.msra.mxu0 %v1053
    %1470 = vmatprep.mubr.bf16.mxu0 %v164
    %1471 = vmatmul.mubr.bf16.gmra.mrb[0].mxu0 %v163
    %v1472 = vpop.f32.mrb[0].mxu0
    %v1473 = vadd.f32 %v1433, %v1472
    %v1474 = vpop.f32.mrb[0].mxu0
    %v1475 = vpop.f32.mrb[0].mxu0
    %v1476 = vpop.f32.mrb[0].mxu0
    %1477 = vdwg.mxu0
    %1478 = vmatprep.subr.bf16.mxu0 0
    %1479 = vmatpush1.bf16.msra.mxu0 %v1054
    %1480 = vmatprep.subr.bf16.mxu0 0
    %1481 = vmatpush1.bf16.msra.mxu0 %v1055
    %1482 = vmatprep.subr.bf16.mxu0 0
    %1483 = vmatpush1.bf16.msra.mxu0 %v1056
    %1484 = vmatprep.subr.bf16.mxu0 0
    %1485 = vmatpush1.bf16.msra.mxu0 %v1057
    %1486 = vmatprep.subr.bf16.mxu0 0
    %1487 = vmatpush1.bf16.msra.mxu0 %v1058
    %1488 = vmatprep.subr.bf16.mxu0 0
    %1489 = vmatpush1.bf16.msra.mxu0 %v1059
    %1490 = vmatprep.subr.bf16.mxu0 0
    %1491 = vmatpush1.bf16.msra.mxu0 %v1060
    %1492 = vmatprep.subr.bf16.mxu0 0
    %1493 = vmatpush1.bf16.msra.mxu0 %v1061
    %1494 = vmatprep.subr.bf16.mxu0 0
    %1495 = vmatpush1.bf16.msra.mxu0 %v1062
    %1496 = vmatprep.subr.bf16.mxu0 0
    %1497 = vmatpush1.bf16.msra.mxu0 %v1063
    %1498 = vmatprep.subr.bf16.mxu0 0
    %1499 = vmatpush1.bf16.msra.mxu0 %v1064
    %1500 = vmatprep.subr.bf16.mxu0 0
    %1501 = vmatpush1.bf16.msra.mxu0 %v1065
    %1502 = vmatprep.subr.bf16.mxu0 0
    %1503 = vmatpush1.bf16.msra.mxu0 %v1066
    %1504 = vmatprep.subr.bf16.mxu0 0
    %1505 = vmatpush1.bf16.msra.mxu0 %v1067
    %1506 = vmatprep.subr.bf16.mxu0 0
    %1507 = vmatpush1.bf16.msra.mxu0 %v1068
    %1508 = vmatprep.subr.bf16.mxu0 0
    %1509 = vmatpush1.bf16.msra.mxu0 %v1069
    %1510 = vmatprep.mubr.bf16.mxu0 %v166
    %1511 = vmatmul.mubr.bf16.gmra.mrb[0].mxu0 %v165
    %v1512 = vpop.f32.mrb[0].mxu0
    %v1513 = vadd.f32 %v1473, %v1512
    %v1514 = vpop.f32.mrb[0].mxu0
    %v1515 = vpop.f32.mrb[0].mxu0
    %v1516 = vpop.f32.mrb[0].mxu0
    %1517 = vdwg.mxu0
    %v1518 = vmax.f32 %v1513, 0.0
    %v1519 = vpack.c.bf16 %v1518, %v1518
    %v1520 = vld [vmem:[%s6] sm:$0xf]
    %v1521 = vld [vmem:[%s6 + $0x4] sm:$0xf]
    %v1522 = vld [vmem:[%s6 + $0x8] sm:$0xf]
    %v1523 = vld [vmem:[%s6 + $0xc] sm:$0xf]
    %v1524 = vld [vmem:[%s6 + $0x10] sm:$0xf]
    %v1525 = vld [vmem:[%s6 + $0x14] sm:$0xf]
    %v1526 = vld [vmem:[%s6 + $0x18] sm:$0xf]
    %v1527 = vld [vmem:[%s6 + $0x1c] sm:$0xf]
    %v1528 = vld [vmem:[%s6 + $0x20] sm:$0xf]
    %v1529 = vld [vmem:[%s6 + $0x24] sm:$0xf]
    %v1530 = vld [vmem:[%s6 + $0x28] sm:$0xf]
    %v1531 = vld [vmem:[%s6 + $0x2c] sm:$0xf]
    %v1532 = vld [vmem:[%s6 + $0x30] sm:$0xf]
    %v1533 = vld [vmem:[%s6 + $0x34] sm:$0xf]
    %v1534 = vld [vmem:[%s6 + $0x38] sm:$0xf]
    %v1535 = vld [vmem:[%s6 + $0x3c] sm:$0xf]
    %v1536 = vld [vmem:[%s7] sm:$0x1]
    %v1538 = vlaneseq
    %v1539 = vshrl.u32 %v1538, 7
    %v1540 = vsub.s32 0, %v1539
    %v1541 = vrot.slane %v1536, %v1540
    %v1559 = vunpack.c.l.b16 %v1520
    %v1560 = vunpack.c.l.b16 %v1521
    %v1561 = vunpack.c.l.b16 %v1522
    %v1562 = vunpack.c.l.b16 %v1523
    %v1563 = vunpack.c.l.b16 %v1524
    %v1564 = vunpack.c.l.b16 %v1525
    %v1565 = vunpack.c.l.b16 %v1526
    %v1566 = vunpack.c.l.b16 %v1527
    %v1567 = vunpack.c.l.b16 %v1528
    %v1568 = vunpack.c.l.b16 %v1529
    %v1569 = vunpack.c.l.b16 %v1530
    %v1570 = vunpack.c.l.b16 %v1531
    %v1571 = vunpack.c.l.b16 %v1532
    %v1572 = vunpack.c.l.b16 %v1533
    %v1573 = vunpack.c.l.b16 %v1534
    %v1574 = vunpack.c.l.b16 %v1535
    %v1575 = vpack.c.b16 %v1560, %v1559
    %v1576 = vpack.c.b16 %v1562, %v1561
    %v1577 = vpack.c.b16 %v1564, %v1563
    %v1578 = vpack.c.b16 %v1566, %v1565
    %v1579 = vpack.c.b16 %v1568, %v1567
    %v1580 = vpack.c.b16 %v1570, %v1569
    %v1581 = vpack.c.b16 %v1572, %v1571
    %v1582 = vpack.c.b16 %v1574, %v1573
    %1591 = vmatprep.subr.bf16.mxu0 0
    %1592 = vmatpush1.bf16.msra.mxu0 %v1575
    %1593 = vmatprep.subr.bf16.mxu0 0
    %1594 = vmatpush1.bf16.msra.mxu0 %v1576
    %1595 = vmatprep.subr.bf16.mxu0 0
    %1596 = vmatpush1.bf16.msra.mxu0 %v1577
    %1597 = vmatprep.subr.bf16.mxu0 0
    %1598 = vmatpush1.bf16.msra.mxu0 %v1578
    %1599 = vmatprep.subr.bf16.mxu0 0
    %1600 = vmatpush1.bf16.msra.mxu0 %v1579
    %1601 = vmatprep.subr.bf16.mxu0 0
    %1602 = vmatpush1.bf16.msra.mxu0 %v1580
    %1603 = vmatprep.subr.bf16.mxu0 0
    %1604 = vmatpush1.bf16.msra.mxu0 %v1581
    %1605 = vmatprep.subr.bf16.mxu0 0
    %1606 = vmatpush1.bf16.msra.mxu0 %v1582
    %1607 = vmatprep.subr.bf16.mxu0 0
    %1608 = vmatpush1.bf16.msra.mxu0 0
    %1609 = vmatprep.subr.bf16.mxu0 0
    %1610 = vmatpush1.bf16.msra.mxu0 0
    %1611 = vmatprep.subr.bf16.mxu0 0
    %1612 = vmatpush1.bf16.msra.mxu0 0
    %1613 = vmatprep.subr.bf16.mxu0 0
    %1614 = vmatpush1.bf16.msra.mxu0 0
    %1615 = vmatprep.subr.bf16.mxu0 0
    %1616 = vmatpush1.bf16.msra.mxu0 0
    %1617 = vmatprep.subr.bf16.mxu0 0
    %1618 = vmatpush1.bf16.msra.mxu0 0
    %1619 = vmatprep.subr.bf16.mxu0 0
    %1620 = vmatpush1.bf16.msra.mxu0 0
    %1621 = vmatprep.subr.bf16.mxu0 0
    %1622 = vmatpush1.bf16.msra.mxu0 0
    %1623 = vmatprep.mubr.bf16.mxu0 0
    %1624 = vmatmul.mubr.bf16.gmra.mrb[0].mxu0 %v1519
    %v1625 = vpop.f32.mrb[0].mxu0
    %v1626 = vadd.f32 %v1541, %v1625
    %v1627 = vpop.f32.mrb[0].mxu0
    %v1628 = vpop.f32.mrb[0].mxu0
    %v1629 = vpop.f32.mrb[0].mxu0
    %1630 = vdwg.mxu0
    %1631 = vst [vmem:[#allocation2] sm:$0x3] %v1626
    // Predicated region
    $region34: #{cnn_mnist_forward.5} parent=1 // pred_check
      _
    $region35: #{cnn_mnist_forward.5} parent=1 // pred_check_branch
      %1633 = sbr.rel (0) target = $region37
    $region36: #{cnn_mnist_forward.5} parent=1 // pred_region
      %s1635 = ssub.s32 32, 32
      %1636 = vsyncadd [#allocation3], %s1635
      %s1638 = sshll.u32 [#allocation2], 4
      %s1639 = int_to_ptr.vmem [resolvable:$true] %s1638
      %1641 = dma.vmem_to_hbm [thread:$0]  %s1639, 32, %s8, [#allocation3]
    $region37: #{cnn_mnist_forward.5} parent=1 // pred_fallthru
      _
    // Predicated region
    $region38: #{cnn_mnist_forward.5} parent=1 // pred_check
      _
    $region39: #{cnn_mnist_forward.5} parent=1 // pred_check_branch
      %1643 = sbr.rel (0) target = $region41
    $region40: #{cnn_mnist_forward.5} parent=1 // pred_region
      %1644 = dma.done [#allocation3], 32
    $region41: #{cnn_mnist_forward.5} parent=1 // pred_fallthru
      _
    %1645 = vsyncpa [#allocation3], 1

// kernel: cnn_mnist_forward.4
$region0: #{cnn_mnist_forward.4}
  #allocation0 [shape = 'u32[]', space=smem, size = 0x4, offset = 0x4, fixed_abs, tag = 'smem constant byte address 0x4 - core index']
  #allocation1 [shape = 'u32[144,128]{1,0:T(1,128)}', space=vmem, size = 0x12000, scoped, tag = 'internal scratch']
  %s0 = inlined_call_operand.vmem [shape: f32[2,12,12,128], index: 0, kind: input, shape index: {}]
  %s1 = inlined_call_operand.vmem [shape: f32[2,12,12,128], index: 1, kind: input, shape index: {}]
  %s2 = inlined_call_operand.vmem [shape: f32[2,12,12,128], index: 2, kind: input, shape index: {}]
  %s3 = inlined_call_operand.vmem [shape: f32[2,12,12,128], index: 3, kind: input, shape index: {}]
  %s4 = inlined_call_operand.vmem [shape: bf16[250,128], index: 4, kind: input, shape index: {}]
  %s5 = inlined_call_operand.vmem [shape: f32[1,128], index: 5, kind: input, shape index: {}]
  %s6 = inlined_call_operand.vmem [shape: f32[128,128], index: 6, kind: output, shape index: {}]
  %s7 = sld [smem:[#allocation0]]
  $region34: #{cnn_mnist_forward.4} parent=0
    _
  %s9 = ssub.s32 1, %s7
  %s10 = scalar_select 0, %s9, %s7
  // Predicated region
  $region2: #{cnn_mnist_forward.4} parent=0 // pred_check
    _
  $region3: #{cnn_mnist_forward.4} parent=0 // pred_check_branch
    %12 = sbr.rel (0) target = $region5
  $region4: #{cnn_mnist_forward.4} parent=0 // pred_region
    _
  $region5: #{cnn_mnist_forward.4} parent=0 // pred_fallthru
    _
  // Predicated region
  $region6: #{cnn_mnist_forward.4} parent=0 // pred_check
    _
  $region7: #{cnn_mnist_forward.4} parent=0 // pred_check_branch
    %14 = sbr.rel (0) target = $region9
  $region8: #{cnn_mnist_forward.4} parent=0 // pred_region
    _
  $region9: #{cnn_mnist_forward.4} parent=0 // pred_fallthru
    _
  // Predicated region
  $region10: #{cnn_mnist_forward.4} parent=0 // pred_check
    _
  $region11: #{cnn_mnist_forward.4} parent=0 // pred_check_branch
    %16 = sbr.rel (0) target = $region13
  $region12: #{cnn_mnist_forward.4} parent=0 // pred_region
    _
  $region13: #{cnn_mnist_forward.4} parent=0 // pred_fallthru
    _
  // Predicated region
  $region14: #{cnn_mnist_forward.4} parent=0 // pred_check
    _
  $region15: #{cnn_mnist_forward.4} parent=0 // pred_check_branch
    %18 = sbr.rel (0) target = $region17
  $region16: #{cnn_mnist_forward.4} parent=0 // pred_region
    _
  $region17: #{cnn_mnist_forward.4} parent=0 // pred_fallthru
    _
  // Predicated region
  $region18: #{cnn_mnist_forward.4} parent=0 // pred_check
    _
  $region19: #{cnn_mnist_forward.4} parent=0 // pred_check_branch
    %20 = sbr.rel (0) target = $region21
  $region20: #{cnn_mnist_forward.4} parent=0 // pred_region
    _
  $region21: #{cnn_mnist_forward.4} parent=0 // pred_fallthru
    _
  // Predicated region
  $region22: #{cnn_mnist_forward.4} parent=0 // pred_check
    _
  $region23: #{cnn_mnist_forward.4} parent=0 // pred_check_branch
    %22 = sbr.rel (0) target = $region25
  $region24: #{cnn_mnist_forward.4} parent=0 // pred_region
    _
  $region25: #{cnn_mnist_forward.4} parent=0 // pred_fallthru
    _
  %v24 = vld [vmem:[%s0] sm:$0xff]
  %v25 = vld [vmem:[%s0 + $0x8] sm:$0xf]
  %v26 = vld [vmem:[%s0 + $0x10] sm:$0xff]
  %v27 = vld [vmem:[%s0 + $0x18] sm:$0xf]
  %v28 = vld [vmem:[%s0 + $0x20] sm:$0xff]
  %v29 = vld [vmem:[%s0 + $0x28] sm:$0xf]
  %v30 = vld [vmem:[%s0 + $0x30] sm:$0xff]
  %v31 = vld [vmem:[%s0 + $0x38] sm:$0xf]
  %v32 = vld [vmem:[%s0 + $0x40] sm:$0xff]
  %v33 = vld [vmem:[%s0 + $0x48] sm:$0xf]
  %v34 = vld [vmem:[%s0 + $0x50] sm:$0xff]
  %v35 = vld [vmem:[%s0 + $0x58] sm:$0xf]
  %v36 = vld [vmem:[%s0 + $0x60] sm:$0xff]
  %v37 = vld [vmem:[%s0 + $0x68] sm:$0xf]
  %v38 = vld [vmem:[%s0 + $0x70] sm:$0xff]
  %v39 = vld [vmem:[%s0 + $0x78] sm:$0xf]
  %v40 = vld [vmem:[%s0 + $0x80] sm:$0xff]
  %v41 = vld [vmem:[%s0 + $0x88] sm:$0xf]
  %v42 = vld [vmem:[%s0 + $0x90] sm:$0xff]
  %v43 = vld [vmem:[%s0 + $0x98] sm:$0xf]
  %v44 = vld [vmem:[%s0 + $0xa0] sm:$0xff]
  %v45 = vld [vmem:[%s0 + $0xa8] sm:$0xf]
  %v46 = vld [vmem:[%s0 + $0xb0] sm:$0xff]
  %v47 = vld [vmem:[%s0 + $0xb8] sm:$0xf]
  %v48 = vld [vmem:[%s0 + $0xc0] sm:$0xff]
  %v49 = vld [vmem:[%s0 + $0xc8] sm:$0xf]
  %v50 = vld [vmem:[%s0 + $0xd0] sm:$0xff]
  %v51 = vld [vmem:[%s0 + $0xd8] sm:$0xf]
  %v52 = vld [vmem:[%s0 + $0xe0] sm:$0xff]
  %v53 = vld [vmem:[%s0 + $0xe8] sm:$0xf]
  %v54 = vld [vmem:[%s0 + $0xf0] sm:$0xff]
  %v55 = vld [vmem:[%s0 + $0xf8] sm:$0xf]
  %v56 = vld [vmem:[%s0 + $0x100] sm:$0xff]
  %v57 = vld [vmem:[%s0 + $0x108] sm:$0xf]
  %v58 = vld [vmem:[%s0 + $0x110] sm:$0xff]
  %v59 = vld [vmem:[%s0 + $0x118] sm:$0xf]
  %v60 = vld [vmem:[%s0 + $0x120] sm:$0xff]
  %v61 = vld [vmem:[%s0 + $0x128] sm:$0xf]
  %v62 = vld [vmem:[%s0 + $0x130] sm:$0xff]
  %v63 = vld [vmem:[%s0 + $0x138] sm:$0xf]
  %v64 = vld [vmem:[%s0 + $0x140] sm:$0xff]
  %v65 = vld [vmem:[%s0 + $0x148] sm:$0xf]
  %v66 = vld [vmem:[%s0 + $0x150] sm:$0xff]
  %v67 = vld [vmem:[%s0 + $0x158] sm:$0xf]
  %v68 = vld [vmem:[%s0 + $0x160] sm:$0xff]
  %v69 = vld [vmem:[%s0 + $0x168] sm:$0xf]
  %v70 = vld [vmem:[%s0 + $0x170] sm:$0xff]
  %v71 = vld [vmem:[%s0 + $0x178] sm:$0xf]
  %v72 = vld [vmem:[%s1] sm:$0xff]
  %v73 = vld [vmem:[%s1 + $0x8] sm:$0xf]
  %v74 = vld [vmem:[%s1 + $0x10] sm:$0xff]
  %v75 = vld [vmem:[%s1 + $0x18] sm:$0xf]
  %v76 = vld [vmem:[%s1 + $0x20] sm:$0xff]
  %v77 = vld [vmem:[%s1 + $0x28] sm:$0xf]
  %v78 = vld [vmem:[%s1 + $0x30] sm:$0xff]
  %v79 = vld [vmem:[%s1 + $0x38] sm:$0xf]
  %v80 = vld [vmem:[%s1 + $0x40] sm:$0xff]
  %v81 = vld [vmem:[%s1 + $0x48] sm:$0xf]
  %v82 = vld [vmem:[%s1 + $0x50] sm:$0xff]
  %v83 = vld [vmem:[%s1 + $0x58] sm:$0xf]
  %v84 = vld [vmem:[%s1 + $0x60] sm:$0xff]
  %v85 = vld [vmem:[%s1 + $0x68] sm:$0xf]
  %v86 = vld [vmem:[%s1 + $0x70] sm:$0xff]
  %v87 = vld [vmem:[%s1 + $0x78] sm:$0xf]
  %v88 = vld [vmem:[%s1 + $0x80] sm:$0xff]
  %v89 = vld [vmem:[%s1 + $0x88] sm:$0xf]
  %v90 = vld [vmem:[%s1 + $0x90] sm:$0xff]
  %v91 = vld [vmem:[%s1 + $0x98] sm:$0xf]
  %v92 = vld [vmem:[%s1 + $0xa0] sm:$0xff]
  %v93 = vld [vmem:[%s1 + $0xa8] sm:$0xf]
  %v94 = vld [vmem:[%s1 + $0xb0] sm:$0xff]
  %v95 = vld [vmem:[%s1 + $0xb8] sm:$0xf]
  %v96 = vld [vmem:[%s1 + $0xc0] sm:$0xff]
  %v97 = vld [vmem:[%s1 + $0xc8] sm:$0xf]
  %v98 = vld [vmem:[%s1 + $0xd0] sm:$0xff]
  %v99 = vld [vmem:[%s1 + $0xd8] sm:$0xf]
  %v100 = vld [vmem:[%s1 + $0xe0] sm:$0xff]
  %v101 = vld [vmem:[%s1 + $0xe8] sm:$0xf]
  %v102 = vld [vmem:[%s1 + $0xf0] sm:$0xff]
  %v103 = vld [vmem:[%s1 + $0xf8] sm:$0xf]
  %v104 = vld [vmem:[%s1 + $0x100] sm:$0xff]
  %v105 = vld [vmem:[%s1 + $0x108] sm:$0xf]
  %v106 = vld [vmem:[%s1 + $0x110] sm:$0xff]
  %v107 = vld [vmem:[%s1 + $0x118] sm:$0xf]
  %v108 = vld [vmem:[%s1 + $0x120] sm:$0xff]
  %v109 = vld [vmem:[%s1 + $0x128] sm:$0xf]
  %v110 = vld [vmem:[%s1 + $0x130] sm:$0xff]
  %v111 = vld [vmem:[%s1 + $0x138] sm:$0xf]
  %v112 = vld [vmem:[%s1 + $0x140] sm:$0xff]
  %v113 = vld [vmem:[%s1 + $0x148] sm:$0xf]
  %v114 = vld [vmem:[%s1 + $0x150] sm:$0xff]
  %v115 = vld [vmem:[%s1 + $0x158] sm:$0xf]
  %v116 = vld [vmem:[%s1 + $0x160] sm:$0xff]
  %v117 = vld [vmem:[%s1 + $0x168] sm:$0xf]
  %v118 = vld [vmem:[%s1 + $0x170] sm:$0xff]
  %v119 = vld [vmem:[%s1 + $0x178] sm:$0xf]
  %v120 = vmax.f32 %v24, %v72
  %v121 = vmax.f32 %v25, %v73
  %v122 = vmax.f32 %v26, %v74
  %v123 = vmax.f32 %v27, %v75
  %v124 = vmax.f32 %v28, %v76
  %v125 = vmax.f32 %v29, %v77
  %v126 = vmax.f32 %v30, %v78
  %v127 = vmax.f32 %v31, %v79
  %v128 = vmax.f32 %v32, %v80
  %v129 = vmax.f32 %v33, %v81
  %v130 = vmax.f32 %v34, %v82
  %v131 = vmax.f32 %v35, %v83
  %v132 = vmax.f32 %v36, %v84
  %v133 = vmax.f32 %v37, %v85
  %v134 = vmax.f32 %v38, %v86
  %v135 = vmax.f32 %v39, %v87
  %v136 = vmax.f32 %v40, %v88
  %v137 = vmax.f32 %v41, %v89
  %v138 = vmax.f32 %v42, %v90
  %v139 = vmax.f32 %v43, %v91
  %v140 = vmax.f32 %v44, %v92
  %v141 = vmax.f32 %v45, %v93
  %v142 = vmax.f32 %v46, %v94
  %v143 = vmax.f32 %v47, %v95
  %v144 = vmax.f32 %v48, %v96
  %v145 = vmax.f32 %v49, %v97
  %v146 = vmax.f32 %v50, %v98
  %v147 = vmax.f32 %v51, %v99
  %v148 = vmax.f32 %v52, %v100
  %v149 = vmax.f32 %v53, %v101
  %v150 = vmax.f32 %v54, %v102
  %v151 = vmax.f32 %v55, %v103
  %v152 = vmax.f32 %v56, %v104
  %v153 = vmax.f32 %v57, %v105
  %v154 = vmax.f32 %v58, %v106
  %v155 = vmax.f32 %v59, %v107
  %v156 = vmax.f32 %v60, %v108
  %v157 = vmax.f32 %v61, %v109
  %v158 = vmax.f32 %v62, %v110
  %v159 = vmax.f32 %v63, %v111
  %v160 = vmax.f32 %v64, %v112
  %v161 = vmax.f32 %v65, %v113
  %v162 = vmax.f32 %v66, %v114
  %v163 = vmax.f32 %v67, %v115
  %v164 = vmax.f32 %v68, %v116
  %v165 = vmax.f32 %v69, %v117
  %v166 = vmax.f32 %v70, %v118
  %v167 = vmax.f32 %v71, %v119
  %v168 = vld [vmem:[%s2] sm:$0xff]
  %v169 = vld [vmem:[%s2 + $0x8] sm:$0xf]
  %v170 = vld [vmem:[%s2 + $0x10] sm:$0xff]
  %v171 = vld [vmem:[%s2 + $0x18] sm:$0xf]
  %v172 = vld [vmem:[%s2 + $0x20] sm:$0xff]
  %v173 = vld [vmem:[%s2 + $0x28] sm:$0xf]
  %v174 = vld [vmem:[%s2 + $0x30] sm:$0xff]
  %v175 = vld [vmem:[%s2 + $0x38] sm:$0xf]
  %v176 = vld [vmem:[%s2 + $0x40] sm:$0xff]
  %v177 = vld [vmem:[%s2 + $0x48] sm:$0xf]
  %v178 = vld [vmem:[%s2 + $0x50] sm:$0xff]
  %v179 = vld [vmem:[%s2 + $0x58] sm:$0xf]
  %v180 = vld [vmem:[%s2 + $0x60] sm:$0xff]
  %v181 = vld [vmem:[%s2 + $0x68] sm:$0xf]
  %v182 = vld [vmem:[%s2 + $0x70] sm:$0xff]
  %v183 = vld [vmem:[%s2 + $0x78] sm:$0xf]
  %v184 = vld [vmem:[%s2 + $0x80] sm:$0xff]
  %v185 = vld [vmem:[%s2 + $0x88] sm:$0xf]
  %v186 = vld [vmem:[%s2 + $0x90] sm:$0xff]
  %v187 = vld [vmem:[%s2 + $0x98] sm:$0xf]
  %v188 = vld [vmem:[%s2 + $0xa0] sm:$0xff]
  %v189 = vld [vmem:[%s2 + $0xa8] sm:$0xf]
  %v190 = vld [vmem:[%s2 + $0xb0] sm:$0xff]
  %v191 = vld [vmem:[%s2 + $0xb8] sm:$0xf]
  %v192 = vld [vmem:[%s2 + $0xc0] sm:$0xff]
  %v193 = vld [vmem:[%s2 + $0xc8] sm:$0xf]
  %v194 = vld [vmem:[%s2 + $0xd0] sm:$0xff]
  %v195 = vld [vmem:[%s2 + $0xd8] sm:$0xf]
  %v196 = vld [vmem:[%s2 + $0xe0] sm:$0xff]
  %v197 = vld [vmem:[%s2 + $0xe8] sm:$0xf]
  %v198 = vld [vmem:[%s2 + $0xf0] sm:$0xff]
  %v199 = vld [vmem:[%s2 + $0xf8] sm:$0xf]
  %v200 = vld [vmem:[%s2 + $0x100] sm:$0xff]
  %v201 = vld [vmem:[%s2 + $0x108] sm:$0xf]
  %v202 = vld [vmem:[%s2 + $0x110] sm:$0xff]
  %v203 = vld [vmem:[%s2 + $0x118] sm:$0xf]
  %v204 = vld [vmem:[%s2 + $0x120] sm:$0xff]
  %v205 = vld [vmem:[%s2 + $0x128] sm:$0xf]
  %v206 = vld [vmem:[%s2 + $0x130] sm:$0xff]
  %v207 = vld [vmem:[%s2 + $0x138] sm:$0xf]
  %v208 = vld [vmem:[%s2 + $0x140] sm:$0xff]
  %v209 = vld [vmem:[%s2 + $0x148] sm:$0xf]
  %v210 = vld [vmem:[%s2 + $0x150] sm:$0xff]
  %v211 = vld [vmem:[%s2 + $0x158] sm:$0xf]
  %v212 = vld [vmem:[%s2 + $0x160] sm:$0xff]
  %v213 = vld [vmem:[%s2 + $0x168] sm:$0xf]
  %v214 = vld [vmem:[%s2 + $0x170] sm:$0xff]
  %v215 = vld [vmem:[%s2 + $0x178] sm:$0xf]
  %v216 = vld [vmem:[%s3] sm:$0xff]
  %v217 = vld [vmem:[%s3 + $0x8] sm:$0xf]
  %v218 = vld [vmem:[%s3 + $0x10] sm:$0xff]
  %v219 = vld [vmem:[%s3 + $0x18] sm:$0xf]
  %v220 = vld [vmem:[%s3 + $0x20] sm:$0xff]
  %v221 = vld [vmem:[%s3 + $0x28] sm:$0xf]
  %v222 = vld [vmem:[%s3 + $0x30] sm:$0xff]
  %v223 = vld [vmem:[%s3 + $0x38] sm:$0xf]
  %v224 = vld [vmem:[%s3 + $0x40] sm:$0xff]
  %v225 = vld [vmem:[%s3 + $0x48] sm:$0xf]
  %v226 = vld [vmem:[%s3 + $0x50] sm:$0xff]
  %v227 = vld [vmem:[%s3 + $0x58] sm:$0xf]
  %v228 = vld [vmem:[%s3 + $0x60] sm:$0xff]
  %v229 = vld [vmem:[%s3 + $0x68] sm:$0xf]
  %v230 = vld [vmem:[%s3 + $0x70] sm:$0xff]
  %v231 = vld [vmem:[%s3 + $0x78] sm:$0xf]
  %v232 = vld [vmem:[%s3 + $0x80] sm:$0xff]
  %v233 = vld [vmem:[%s3 + $0x88] sm:$0xf]
  %v234 = vld [vmem:[%s3 + $0x90] sm:$0xff]
  %v235 = vld [vmem:[%s3 + $0x98] sm:$0xf]
  %v236 = vld [vmem:[%s3 + $0xa0] sm:$0xff]
  %v237 = vld [vmem:[%s3 + $0xa8] sm:$0xf]
  %v238 = vld [vmem:[%s3 + $0xb0] sm:$0xff]
  %v239 = vld [vmem:[%s3 + $0xb8] sm:$0xf]
  %v240 = vld [vmem:[%s3 + $0xc0] sm:$0xff]
  %v241 = vld [vmem:[%s3 + $0xc8] sm:$0xf]
  %v242 = vld [vmem:[%s3 + $0xd0] sm:$0xff]
  %v243 = vld [vmem:[%s3 + $0xd8] sm:$0xf]
  %v244 = vld [vmem:[%s3 + $0xe0] sm:$0xff]
  %v245 = vld [vmem:[%s3 + $0xe8] sm:$0xf]
  %v246 = vld [vmem:[%s3 + $0xf0] sm:$0xff]
  %v247 = vld [vmem:[%s3 + $0xf8] sm:$0xf]
  %v248 = vld [vmem:[%s3 + $0x100] sm:$0xff]
  %v249 = vld [vmem:[%s3 + $0x108] sm:$0xf]
  %v250 = vld [vmem:[%s3 + $0x110] sm:$0xff]
  %v251 = vld [vmem:[%s3 + $0x118] sm:$0xf]
  %v252 = vld [vmem:[%s3 + $0x120] sm:$0xff]
  %v253 = vld [vmem:[%s3 + $0x128] sm:$0xf]
  %v254 = vld [vmem:[%s3 + $0x130] sm:$0xff]
  %v255 = vld [vmem:[%s3 + $0x138] sm:$0xf]
  %v256 = vld [vmem:[%s3 + $0x140] sm:$0xff]
  %v257 = vld [vmem:[%s3 + $0x148] sm:$0xf]
  %v258 = vld [vmem:[%s3 + $0x150] sm:$0xff]
  %v259 = vld [vmem:[%s3 + $0x158] sm:$0xf]
  %v260 = vld [vmem:[%s3 + $0x160] sm:$0xff]
  %v261 = vld [vmem:[%s3 + $0x168] sm:$0xf]
  %v262 = vld [vmem:[%s3 + $0x170] sm:$0xff]
  %v263 = vld [vmem:[%s3 + $0x178] sm:$0xf]
  %v264 = vmax.f32 %v168, %v216
  %v265 = vmax.f32 %v169, %v217
  %v266 = vmax.f32 %v170, %v218
  %v267 = vmax.f32 %v171, %v219
  %v268 = vmax.f32 %v172, %v220
  %v269 = vmax.f32 %v173, %v221
  %v270 = vmax.f32 %v174, %v222
  %v271 = vmax.f32 %v175, %v223
  %v272 = vmax.f32 %v176, %v224
  %v273 = vmax.f32 %v177, %v225
  %v274 = vmax.f32 %v178, %v226
  %v275 = vmax.f32 %v179, %v227
  %v276 = vmax.f32 %v180, %v228
  %v277 = vmax.f32 %v181, %v229
  %v278 = vmax.f32 %v182, %v230
  %v279 = vmax.f32 %v183, %v231
  %v280 = vmax.f32 %v184, %v232
  %v281 = vmax.f32 %v185, %v233
  %v282 = vmax.f32 %v186, %v234
  %v283 = vmax.f32 %v187, %v235
  %v284 = vmax.f32 %v188, %v236
  %v285 = vmax.f32 %v189, %v237
  %v286 = vmax.f32 %v190, %v238
  %v287 = vmax.f32 %v191, %v239
  %v288 = vmax.f32 %v192, %v240
  %v289 = vmax.f32 %v193, %v241
  %v290 = vmax.f32 %v194, %v242
  %v291 = vmax.f32 %v195, %v243
  %v292 = vmax.f32 %v196, %v244
  %v293 = vmax.f32 %v197, %v245
  %v294 = vmax.f32 %v198, %v246
  %v295 = vmax.f32 %v199, %v247
  %v296 = vmax.f32 %v200, %v248
  %v297 = vmax.f32 %v201, %v249
  %v298 = vmax.f32 %v202, %v250
  %v299 = vmax.f32 %v203, %v251
  %v300 = vmax.f32 %v204, %v252
  %v301 = vmax.f32 %v205, %v253
  %v302 = vmax.f32 %v206, %v254
  %v303 = vmax.f32 %v207, %v255
  %v304 = vmax.f32 %v208, %v256
  %v305 = vmax.f32 %v209, %v257
  %v306 = vmax.f32 %v210, %v258
  %v307 = vmax.f32 %v211, %v259
  %v308 = vmax.f32 %v212, %v260
  %v309 = vmax.f32 %v213, %v261
  %v310 = vmax.f32 %v214, %v262
  %v311 = vmax.f32 %v215, %v263
  %v312 = vmax.f32 %v120, %v264
  %v313 = vmax.f32 %v121, %v265
  %v314 = vmax.f32 %v122, %v266
  %v315 = vmax.f32 %v123, %v267
  %v316 = vmax.f32 %v124, %v268
  %v317 = vmax.f32 %v125, %v269
  %v318 = vmax.f32 %v126, %v270
  %v319 = vmax.f32 %v127, %v271
  %v320 = vmax.f32 %v128, %v272
  %v321 = vmax.f32 %v129, %v273
  %v322 = vmax.f32 %v130, %v274
  %v323 = vmax.f32 %v131, %v275
  %v324 = vmax.f32 %v132, %v276
  %v325 = vmax.f32 %v133, %v277
  %v326 = vmax.f32 %v134, %v278
  %v327 = vmax.f32 %v135, %v279
  %v328 = vmax.f32 %v136, %v280
  %v329 = vmax.f32 %v137, %v281
  %v330 = vmax.f32 %v138, %v282
  %v331 = vmax.f32 %v139, %v283
  %v332 = vmax.f32 %v140, %v284
  %v333 = vmax.f32 %v141, %v285
  %v334 = vmax.f32 %v142, %v286
  %v335 = vmax.f32 %v143, %v287
  %v336 = vmax.f32 %v144, %v288
  %v337 = vmax.f32 %v145, %v289
  %v338 = vmax.f32 %v146, %v290
  %v339 = vmax.f32 %v147, %v291
  %v340 = vmax.f32 %v148, %v292
  %v341 = vmax.f32 %v149, %v293
  %v342 = vmax.f32 %v150, %v294
  %v343 = vmax.f32 %v151, %v295
  %v344 = vmax.f32 %v152, %v296
  %v345 = vmax.f32 %v153, %v297
  %v346 = vmax.f32 %v154, %v298
  %v347 = vmax.f32 %v155, %v299
  %v348 = vmax.f32 %v156, %v300
  %v349 = vmax.f32 %v157, %v301
  %v350 = vmax.f32 %v158, %v302
  %v351 = vmax.f32 %v159, %v303
  %v352 = vmax.f32 %v160, %v304
  %v353 = vmax.f32 %v161, %v305
  %v354 = vmax.f32 %v162, %v306
  %v355 = vmax.f32 %v163, %v307
  %v356 = vmax.f32 %v164, %v308
  %v357 = vmax.f32 %v165, %v309
  %v358 = vmax.f32 %v166, %v310
  %v359 = vmax.f32 %v167, %v311
  %v360 = vmax.f32 %v312, 0.0
  %v361 = vmax.f32 %v313, 0.0
  %v362 = vmax.f32 %v314, 0.0
  %v363 = vmax.f32 %v315, 0.0
  %v364 = vmax.f32 %v316, 0.0
  %v365 = vmax.f32 %v317, 0.0
  %v366 = vmax.f32 %v318, 0.0
  %v367 = vmax.f32 %v319, 0.0
  %v368 = vmax.f32 %v320, 0.0
  %v369 = vmax.f32 %v321, 0.0
  %v370 = vmax.f32 %v322, 0.0
  %v371 = vmax.f32 %v323, 0.0
  %v372 = vmax.f32 %v324, 0.0
  %v373 = vmax.f32 %v325, 0.0
  %v374 = vmax.f32 %v326, 0.0
  %v375 = vmax.f32 %v327, 0.0
  %v376 = vmax.f32 %v328, 0.0
  %v377 = vmax.f32 %v329, 0.0
  %v378 = vmax.f32 %v330, 0.0
  %v379 = vmax.f32 %v331, 0.0
  %v380 = vmax.f32 %v332, 0.0
  %v381 = vmax.f32 %v333, 0.0
  %v382 = vmax.f32 %v334, 0.0
  %v383 = vmax.f32 %v335, 0.0
  %v384 = vmax.f32 %v336, 0.0
  %v385 = vmax.f32 %v337, 0.0
  %v386 = vmax.f32 %v338, 0.0
  %v387 = vmax.f32 %v339, 0.0
  %v388 = vmax.f32 %v340, 0.0
  %v389 = vmax.f32 %v341, 0.0
  %v390 = vmax.f32 %v342, 0.0
  %v391 = vmax.f32 %v343, 0.0
  %v392 = vmax.f32 %v344, 0.0
  %v393 = vmax.f32 %v345, 0.0
  %v394 = vmax.f32 %v346, 0.0
  %v395 = vmax.f32 %v347, 0.0
  %v396 = vmax.f32 %v348, 0.0
  %v397 = vmax.f32 %v349, 0.0
  %v398 = vmax.f32 %v350, 0.0
  %v399 = vmax.f32 %v351, 0.0
  %v400 = vmax.f32 %v352, 0.0
  %v401 = vmax.f32 %v353, 0.0
  %v402 = vmax.f32 %v354, 0.0
  %v403 = vmax.f32 %v355, 0.0
  %v404 = vmax.f32 %v356, 0.0
  %v405 = vmax.f32 %v357, 0.0
  %v406 = vmax.f32 %v358, 0.0
  %v407 = vmax.f32 %v359, 0.0
  %vm440 = vcmask 1046528
  %v441 = vrot.slane %v360, 1
  %v442 = vrot.slane %v361, 1
  %v443 = vsel %vm440, %v441, %v442
  %v444 = vrot.slane %v362, 1
  %v445 = vrot.slane %v363, 1
  %v446 = vsel %vm440, %v444, %v445
  %v447 = vrot.slane %v364, 1
  %v448 = vrot.slane %v365, 1
  %v449 = vsel %vm440, %v447, %v448
  %v450 = vrot.slane %v366, 1
  %v451 = vrot.slane %v367, 1
  %v452 = vsel %vm440, %v450, %v451
  %v453 = vrot.slane %v368, 1
  %v454 = vrot.slane %v369, 1
  %v455 = vsel %vm440, %v453, %v454
  %v456 = vrot.slane %v370, 1
  %v457 = vrot.slane %v371, 1
  %v458 = vsel %vm440, %v456, %v457
  %v459 = vrot.slane %v372, 1
  %v460 = vrot.slane %v373, 1
  %v461 = vsel %vm440, %v459, %v460
  %v462 = vrot.slane %v374, 1
  %v463 = vrot.slane %v375, 1
  %v464 = vsel %vm440, %v462, %v463
  %v465 = vrot.slane %v384, 1
  %v466 = vrot.slane %v385, 1
  %v467 = vsel %vm440, %v465, %v466
  %v468 = vrot.slane %v386, 1
  %v469 = vrot.slane %v387, 1
  %v470 = vsel %vm440, %v468, %v469
  %v471 = vrot.slane %v388, 1
  %v472 = vrot.slane %v389, 1
  %v473 = vsel %vm440, %v471, %v472
  %v474 = vrot.slane %v390, 1
  %v475 = vrot.slane %v391, 1
  %v476 = vsel %vm440, %v474, %v475
  %v477 = vrot.slane %v392, 1
  %v478 = vrot.slane %v393, 1
  %v479 = vsel %vm440, %v477, %v478
  %v480 = vrot.slane %v394, 1
  %v481 = vrot.slane %v395, 1
  %v482 = vsel %vm440, %v480, %v481
  %v483 = vrot.slane %v396, 1
  %v484 = vrot.slane %v397, 1
  %v485 = vsel %vm440, %v483, %v484
  %v486 = vrot.slane %v398, 1
  %v487 = vrot.slane %v399, 1
  %v488 = vsel %vm440, %v486, %v487
  %489 = vrot.lane.b32.xlu0 %v443, 10
  %v490 = vpop.permute.xlu0 %489
  %491 = vrot.lane.b32.xlu0 %v446, 10
  %v492 = vpop.permute.xlu0 %491
  %493 = vrot.lane.b32.xlu0 %v449, 10
  %v494 = vpop.permute.xlu0 %493
  %495 = vrot.lane.b32.xlu0 %v452, 10
  %v496 = vpop.permute.xlu0 %495
  %497 = vrot.lane.b32.xlu0 %v455, 10
  %v498 = vpop.permute.xlu0 %497
  %499 = vrot.lane.b32.xlu0 %v458, 10
  %v500 = vpop.permute.xlu0 %499
  %501 = vrot.lane.b32.xlu0 %v461, 10
  %v502 = vpop.permute.xlu0 %501
  %503 = vrot.lane.b32.xlu0 %v464, 10
  %v504 = vpop.permute.xlu0 %503
  %505 = vrot.lane.b32.xlu0 %v467, 10
  %v506 = vpop.permute.xlu0 %505
  %507 = vrot.lane.b32.xlu0 %v470, 10
  %v508 = vpop.permute.xlu0 %507
  %509 = vrot.lane.b32.xlu0 %v473, 10
  %v510 = vpop.permute.xlu0 %509
  %511 = vrot.lane.b32.xlu0 %v476, 10
  %v512 = vpop.permute.xlu0 %511
  %513 = vrot.lane.b32.xlu0 %v479, 10
  %v514 = vpop.permute.xlu0 %513
  %515 = vrot.lane.b32.xlu0 %v482, 10
  %v516 = vpop.permute.xlu0 %515
  %517 = vrot.lane.b32.xlu0 %v485, 10
  %v518 = vpop.permute.xlu0 %517
  %519 = vrot.lane.b32.xlu0 %v488, 10
  %v520 = vpop.permute.xlu0 %519
  %vm537 = vcmask 1045504
  %v538 = vrot.slane %v360, 2
  %v539 = vrot.slane %v361, 2
  %v540 = vsel %vm537, %v538, %v539
  %v541 = vrot.slane %v362, 2
  %v542 = vrot.slane %v363, 2
  %v543 = vsel %vm537, %v541, %v542
  %v544 = vrot.slane %v364, 2
  %v545 = vrot.slane %v365, 2
  %v546 = vsel %vm537, %v544, %v545
  %v547 = vrot.slane %v366, 2
  %v548 = vrot.slane %v367, 2
  %v549 = vsel %vm537, %v547, %v548
  %v550 = vrot.slane %v368, 2
  %v551 = vrot.slane %v369, 2
  %v552 = vsel %vm537, %v550, %v551
  %v553 = vrot.slane %v370, 2
  %v554 = vrot.slane %v371, 2
  %v555 = vsel %vm537, %v553, %v554
  %v556 = vrot.slane %v372, 2
  %v557 = vrot.slane %v373, 2
  %v558 = vsel %vm537, %v556, %v557
  %v559 = vrot.slane %v374, 2
  %v560 = vrot.slane %v375, 2
  %v561 = vsel %vm537, %v559, %v560
  %v562 = vrot.slane %v384, 2
  %v563 = vrot.slane %v385, 2
  %v564 = vsel %vm537, %v562, %v563
  %v565 = vrot.slane %v386, 2
  %v566 = vrot.slane %v387, 2
  %v567 = vsel %vm537, %v565, %v566
  %v568 = vrot.slane %v388, 2
  %v569 = vrot.slane %v389, 2
  %v570 = vsel %vm537, %v568, %v569
  %v571 = vrot.slane %v390, 2
  %v572 = vrot.slane %v391, 2
  %v573 = vsel %vm537, %v571, %v572
  %v574 = vrot.slane %v392, 2
  %v575 = vrot.slane %v393, 2
  %v576 = vsel %vm537, %v574, %v575
  %v577 = vrot.slane %v394, 2
  %v578 = vrot.slane %v395, 2
  %v579 = vsel %vm537, %v577, %v578
  %v580 = vrot.slane %v396, 2
  %v581 = vrot.slane %v397, 2
  %v582 = vsel %vm537, %v580, %v581
  %v583 = vrot.slane %v398, 2
  %v584 = vrot.slane %v399, 2
  %v585 = vsel %vm537, %v583, %v584
  %586 = vrot.lane.b32.xlu0 %v540, 20
  %v587 = vpop.permute.xlu0 %586
  %588 = vrot.lane.b32.xlu0 %v543, 20
  %v589 = vpop.permute.xlu0 %588
  %590 = vrot.lane.b32.xlu0 %v546, 20
  %v591 = vpop.permute.xlu0 %590
  %592 = vrot.lane.b32.xlu0 %v549, 20
  %v593 = vpop.permute.xlu0 %592
  %594 = vrot.lane.b32.xlu0 %v552, 20
  %v595 = vpop.permute.xlu0 %594
  %596 = vrot.lane.b32.xlu0 %v555, 20
  %v597 = vpop.permute.xlu0 %596
  %598 = vrot.lane.b32.xlu0 %v558, 20
  %v599 = vpop.permute.xlu0 %598
  %600 = vrot.lane.b32.xlu0 %v561, 20
  %v601 = vpop.permute.xlu0 %600
  %602 = vrot.lane.b32.xlu0 %v564, 20
  %v603 = vpop.permute.xlu0 %602
  %604 = vrot.lane.b32.xlu0 %v567, 20
  %v605 = vpop.permute.xlu0 %604
  %606 = vrot.lane.b32.xlu0 %v570, 20
  %v607 = vpop.permute.xlu0 %606
  %608 = vrot.lane.b32.xlu0 %v573, 20
  %v609 = vpop.permute.xlu0 %608
  %610 = vrot.lane.b32.xlu0 %v576, 20
  %v611 = vpop.permute.xlu0 %610
  %612 = vrot.lane.b32.xlu0 %v579, 20
  %v613 = vpop.permute.xlu0 %612
  %614 = vrot.lane.b32.xlu0 %v582, 20
  %v615 = vpop.permute.xlu0 %614
  %616 = vrot.lane.b32.xlu0 %v585, 20
  %v617 = vpop.permute.xlu0 %616
  %vm634 = vcmask 1044480
  %v635 = vrot.slane %v360, 3
  %v636 = vrot.slane %v361, 3
  %v637 = vsel %vm634, %v635, %v636
  %v638 = vrot.slane %v362, 3
  %v639 = vrot.slane %v363, 3
  %v640 = vsel %vm634, %v638, %v639
  %v641 = vrot.slane %v364, 3
  %v642 = vrot.slane %v365, 3
  %v643 = vsel %vm634, %v641, %v642
  %v644 = vrot.slane %v366, 3
  %v645 = vrot.slane %v367, 3
  %v646 = vsel %vm634, %v644, %v645
  %v647 = vrot.slane %v368, 3
  %v648 = vrot.slane %v369, 3
  %v649 = vsel %vm634, %v647, %v648
  %v650 = vrot.slane %v370, 3
  %v651 = vrot.slane %v371, 3
  %v652 = vsel %vm634, %v650, %v651
  %v653 = vrot.slane %v372, 3
  %v654 = vrot.slane %v373, 3
  %v655 = vsel %vm634, %v653, %v654
  %v656 = vrot.slane %v374, 3
  %v657 = vrot.slane %v375, 3
  %v658 = vsel %vm634, %v656, %v657
  %v659 = vrot.slane %v384, 3
  %v660 = vrot.slane %v385, 3
  %v661 = vsel %vm634, %v659, %v660
  %v662 = vrot.slane %v386, 3
  %v663 = vrot.slane %v387, 3
  %v664 = vsel %vm634, %v662, %v663
  %v665 = vrot.slane %v388, 3
  %v666 = vrot.slane %v389, 3
  %v667 = vsel %vm634, %v665, %v666
  %v668 = vrot.slane %v390, 3
  %v669 = vrot.slane %v391, 3
  %v670 = vsel %vm634, %v668, %v669
  %v671 = vrot.slane %v392, 3
  %v672 = vrot.slane %v393, 3
  %v673 = vsel %vm634, %v671, %v672
  %v674 = vrot.slane %v394, 3
  %v675 = vrot.slane %v395, 3
  %v676 = vsel %vm634, %v674, %v675
  %v677 = vrot.slane %v396, 3
  %v678 = vrot.slane %v397, 3
  %v679 = vsel %vm634, %v677, %v678
  %v680 = vrot.slane %v398, 3
  %v681 = vrot.slane %v399, 3
  %v682 = vsel %vm634, %v680, %v681
  %683 = vrot.lane.b32.xlu0 %v637, 30
  %v684 = vpop.permute.xlu0 %683
  %685 = vrot.lane.b32.xlu0 %v640, 30
  %v686 = vpop.permute.xlu0 %685
  %687 = vrot.lane.b32.xlu0 %v643, 30
  %v688 = vpop.permute.xlu0 %687
  %689 = vrot.lane.b32.xlu0 %v646, 30
  %v690 = vpop.permute.xlu0 %689
  %691 = vrot.lane.b32.xlu0 %v649, 30
  %v692 = vpop.permute.xlu0 %691
  %693 = vrot.lane.b32.xlu0 %v652, 30
  %v694 = vpop.permute.xlu0 %693
  %695 = vrot.lane.b32.xlu0 %v655, 30
  %v696 = vpop.permute.xlu0 %695
  %697 = vrot.lane.b32.xlu0 %v658, 30
  %v698 = vpop.permute.xlu0 %697
  %699 = vrot.lane.b32.xlu0 %v661, 30
  %v700 = vpop.permute.xlu0 %699
  %701 = vrot.lane.b32.xlu0 %v664, 30
  %v702 = vpop.permute.xlu0 %701
  %703 = vrot.lane.b32.xlu0 %v667, 30
  %v704 = vpop.permute.xlu0 %703
  %705 = vrot.lane.b32.xlu0 %v670, 30
  %v706 = vpop.permute.xlu0 %705
  %707 = vrot.lane.b32.xlu0 %v673, 30
  %v708 = vpop.permute.xlu0 %707
  %709 = vrot.lane.b32.xlu0 %v676, 30
  %v710 = vpop.permute.xlu0 %709
  %711 = vrot.lane.b32.xlu0 %v679, 30
  %v712 = vpop.permute.xlu0 %711
  %713 = vrot.lane.b32.xlu0 %v682, 30
  %v714 = vpop.permute.xlu0 %713
  %vm731 = vcmask 1043456
  %v732 = vrot.slane %v360, 4
  %v733 = vrot.slane %v361, 4
  %v734 = vsel %vm731, %v732, %v733
  %v735 = vrot.slane %v362, 4
  %v736 = vrot.slane %v363, 4
  %v737 = vsel %vm731, %v735, %v736
  %v738 = vrot.slane %v364, 4
  %v739 = vrot.slane %v365, 4
  %v740 = vsel %vm731, %v738, %v739
  %v741 = vrot.slane %v366, 4
  %v742 = vrot.slane %v367, 4
  %v743 = vsel %vm731, %v741, %v742
  %v744 = vrot.slane %v368, 4
  %v745 = vrot.slane %v369, 4
  %v746 = vsel %vm731, %v744, %v745
  %v747 = vrot.slane %v370, 4
  %v748 = vrot.slane %v371, 4
  %v749 = vsel %vm731, %v747, %v748
  %v750 = vrot.slane %v372, 4
  %v751 = vrot.slane %v373, 4
  %v752 = vsel %vm731, %v750, %v751
  %v753 = vrot.slane %v374, 4
  %v754 = vrot.slane %v375, 4
  %v755 = vsel %vm731, %v753, %v754
  %v756 = vrot.slane %v384, 4
  %v757 = vrot.slane %v385, 4
  %v758 = vsel %vm731, %v756, %v757
  %v759 = vrot.slane %v386, 4
  %v760 = vrot.slane %v387, 4
  %v761 = vsel %vm731, %v759, %v760
  %v762 = vrot.slane %v388, 4
  %v763 = vrot.slane %v389, 4
  %v764 = vsel %vm731, %v762, %v763
  %v765 = vrot.slane %v390, 4
  %v766 = vrot.slane %v391, 4
  %v767 = vsel %vm731, %v765, %v766
  %v768 = vrot.slane %v392, 4
  %v769 = vrot.slane %v393, 4
  %v770 = vsel %vm731, %v768, %v769
  %v771 = vrot.slane %v394, 4
  %v772 = vrot.slane %v395, 4
  %v773 = vsel %vm731, %v771, %v772
  %v774 = vrot.slane %v396, 4
  %v775 = vrot.slane %v397, 4
  %v776 = vsel %vm731, %v774, %v775
  %v777 = vrot.slane %v398, 4
  %v778 = vrot.slane %v399, 4
  %v779 = vsel %vm731, %v777, %v778
  %780 = vrot.lane.b32.xlu0 %v734, 40
  %v781 = vpop.permute.xlu0 %780
  %782 = vrot.lane.b32.xlu0 %v737, 40
  %v783 = vpop.permute.xlu0 %782
  %784 = vrot.lane.b32.xlu0 %v740, 40
  %v785 = vpop.permute.xlu0 %784
  %786 = vrot.lane.b32.xlu0 %v743, 40
  %v787 = vpop.permute.xlu0 %786
  %788 = vrot.lane.b32.xlu0 %v746, 40
  %v789 = vpop.permute.xlu0 %788
  %790 = vrot.lane.b32.xlu0 %v749, 40
  %v791 = vpop.permute.xlu0 %790
  %792 = vrot.lane.b32.xlu0 %v752, 40
  %v793 = vpop.permute.xlu0 %792
  %794 = vrot.lane.b32.xlu0 %v755, 40
  %v795 = vpop.permute.xlu0 %794
  %796 = vrot.lane.b32.xlu0 %v758, 40
  %v797 = vpop.permute.xlu0 %796
  %798 = vrot.lane.b32.xlu0 %v761, 40
  %v799 = vpop.permute.xlu0 %798
  %800 = vrot.lane.b32.xlu0 %v764, 40
  %v801 = vpop.permute.xlu0 %800
  %802 = vrot.lane.b32.xlu0 %v767, 40
  %v803 = vpop.permute.xlu0 %802
  %804 = vrot.lane.b32.xlu0 %v770, 40
  %v805 = vpop.permute.xlu0 %804
  %806 = vrot.lane.b32.xlu0 %v773, 40
  %v807 = vpop.permute.xlu0 %806
  %808 = vrot.lane.b32.xlu0 %v776, 40
  %v809 = vpop.permute.xlu0 %808
  %810 = vrot.lane.b32.xlu0 %v779, 40
  %v811 = vpop.permute.xlu0 %810
  %830 = vrot.lane.b32.xlu0 %v362, 50
  %v831 = vpop.permute.xlu0 %830
  %832 = vrot.lane.b32.xlu0 %v364, 50
  %v833 = vpop.permute.xlu0 %832
  %834 = vrot.lane.b32.xlu0 %v366, 50
  %v835 = vpop.permute.xlu0 %834
  %836 = vrot.lane.b32.xlu0 %v368, 50
  %v837 = vpop.permute.xlu0 %836
  %838 = vrot.lane.b32.xlu0 %v370, 50
  %v839 = vpop.permute.xlu0 %838
  %840 = vrot.lane.b32.xlu0 %v372, 50
  %v841 = vpop.permute.xlu0 %840
  %842 = vrot.lane.b32.xlu0 %v374, 50
  %v843 = vpop.permute.xlu0 %842
  %844 = vrot.lane.b32.xlu0 %v376, 50
  %v845 = vpop.permute.xlu0 %844
  %846 = vrot.lane.b32.xlu0 %v386, 50
  %v847 = vpop.permute.xlu0 %846
  %848 = vrot.lane.b32.xlu0 %v388, 50
  %v849 = vpop.permute.xlu0 %848
  %850 = vrot.lane.b32.xlu0 %v390, 50
  %v851 = vpop.permute.xlu0 %850
  %852 = vrot.lane.b32.xlu0 %v392, 50
  %v853 = vpop.permute.xlu0 %852
  %854 = vrot.lane.b32.xlu0 %v394, 50
  %v855 = vpop.permute.xlu0 %854
  %856 = vrot.lane.b32.xlu0 %v396, 50
  %v857 = vpop.permute.xlu0 %856
  %858 = vrot.lane.b32.xlu0 %v398, 50
  %v859 = vpop.permute.xlu0 %858
  %860 = vrot.lane.b32.xlu0 %v400, 50
  %v861 = vpop.permute.xlu0 %860
  %v880 = vrot.slane %v376, 1
  %v881 = vrot.slane %v377, 1
  %v882 = vsel %vm440, %v880, %v881
  %v883 = vrot.slane %v400, 1
  %v884 = vrot.slane %v401, 1
  %v885 = vsel %vm440, %v883, %v884
  %886 = vrot.lane.b32.xlu0 %v446, 60
  %v887 = vpop.permute.xlu0 %886
  %888 = vrot.lane.b32.xlu0 %v449, 60
  %v889 = vpop.permute.xlu0 %888
  %890 = vrot.lane.b32.xlu0 %v452, 60
  %v891 = vpop.permute.xlu0 %890
  %892 = vrot.lane.b32.xlu0 %v455, 60
  %v893 = vpop.permute.xlu0 %892
  %894 = vrot.lane.b32.xlu0 %v458, 60
  %v895 = vpop.permute.xlu0 %894
  %896 = vrot.lane.b32.xlu0 %v461, 60
  %v897 = vpop.permute.xlu0 %896
  %898 = vrot.lane.b32.xlu0 %v464, 60
  %v899 = vpop.permute.xlu0 %898
  %900 = vrot.lane.b32.xlu0 %v882, 60
  %v901 = vpop.permute.xlu0 %900
  %902 = vrot.lane.b32.xlu0 %v470, 60
  %v903 = vpop.permute.xlu0 %902
  %904 = vrot.lane.b32.xlu0 %v473, 60
  %v905 = vpop.permute.xlu0 %904
  %906 = vrot.lane.b32.xlu0 %v476, 60
  %v907 = vpop.permute.xlu0 %906
  %908 = vrot.lane.b32.xlu0 %v479, 60
  %v909 = vpop.permute.xlu0 %908
  %910 = vrot.lane.b32.xlu0 %v482, 60
  %v911 = vpop.permute.xlu0 %910
  %912 = vrot.lane.b32.xlu0 %v485, 60
  %v913 = vpop.permute.xlu0 %912
  %914 = vrot.lane.b32.xlu0 %v488, 60
  %v915 = vpop.permute.xlu0 %914
  %916 = vrot.lane.b32.xlu0 %v885, 60
  %v917 = vpop.permute.xlu0 %916
  %v934 = vrot.slane %v376, 2
  %v935 = vrot.slane %v377, 2
  %v936 = vsel %vm537, %v934, %v935
  %v937 = vrot.slane %v400, 2
  %v938 = vrot.slane %v401, 2
  %v939 = vsel %vm537, %v937, %v938
  %940 = vrot.lane.b32.xlu0 %v543, 70
  %v941 = vpop.permute.xlu0 %940
  %942 = vrot.lane.b32.xlu0 %v546, 70
  %v943 = vpop.permute.xlu0 %942
  %944 = vrot.lane.b32.xlu0 %v549, 70
  %v945 = vpop.permute.xlu0 %944
  %946 = vrot.lane.b32.xlu0 %v552, 70
  %v947 = vpop.permute.xlu0 %946
  %948 = vrot.lane.b32.xlu0 %v555, 70
  %v949 = vpop.permute.xlu0 %948
  %950 = vrot.lane.b32.xlu0 %v558, 70
  %v951 = vpop.permute.xlu0 %950
  %952 = vrot.lane.b32.xlu0 %v561, 70
  %v953 = vpop.permute.xlu0 %952
  %954 = vrot.lane.b32.xlu0 %v936, 70
  %v955 = vpop.permute.xlu0 %954
  %956 = vrot.lane.b32.xlu0 %v567, 70
  %v957 = vpop.permute.xlu0 %956
  %958 = vrot.lane.b32.xlu0 %v570, 70
  %v959 = vpop.permute.xlu0 %958
  %960 = vrot.lane.b32.xlu0 %v573, 70
  %v961 = vpop.permute.xlu0 %960
  %962 = vrot.lane.b32.xlu0 %v576, 70
  %v963 = vpop.permute.xlu0 %962
  %964 = vrot.lane.b32.xlu0 %v579, 70
  %v965 = vpop.permute.xlu0 %964
  %966 = vrot.lane.b32.xlu0 %v582, 70
  %v967 = vpop.permute.xlu0 %966
  %968 = vrot.lane.b32.xlu0 %v585, 70
  %v969 = vpop.permute.xlu0 %968
  %970 = vrot.lane.b32.xlu0 %v939, 70
  %v971 = vpop.permute.xlu0 %970
  %v988 = vrot.slane %v376, 3
  %v989 = vrot.slane %v377, 3
  %v990 = vsel %vm634, %v988, %v989
  %v991 = vrot.slane %v400, 3
  %v992 = vrot.slane %v401, 3
  %v993 = vsel %vm634, %v991, %v992
  %994 = vrot.lane.b32.xlu0 %v640, 80
  %v995 = vpop.permute.xlu0 %994
  %996 = vrot.lane.b32.xlu0 %v643, 80
  %v997 = vpop.permute.xlu0 %996
  %998 = vrot.lane.b32.xlu0 %v646, 80
  %v999 = vpop.permute.xlu0 %998
  %1000 = vrot.lane.b32.xlu0 %v649, 80
  %v1001 = vpop.permute.xlu0 %1000
  %1002 = vrot.lane.b32.xlu0 %v652, 80
  %v1003 = vpop.permute.xlu0 %1002
  %1004 = vrot.lane.b32.xlu0 %v655, 80
  %v1005 = vpop.permute.xlu0 %1004
  %1006 = vrot.lane.b32.xlu0 %v658, 80
  %v1007 = vpop.permute.xlu0 %1006
  %1008 = vrot.lane.b32.xlu0 %v990, 80
  %v1009 = vpop.permute.xlu0 %1008
  %1010 = vrot.lane.b32.xlu0 %v664, 80
  %v1011 = vpop.permute.xlu0 %1010
  %1012 = vrot.lane.b32.xlu0 %v667, 80
  %v1013 = vpop.permute.xlu0 %1012
  %1014 = vrot.lane.b32.xlu0 %v670, 80
  %v1015 = vpop.permute.xlu0 %1014
  %1016 = vrot.lane.b32.xlu0 %v673, 80
  %v1017 = vpop.permute.xlu0 %1016
  %1018 = vrot.lane.b32.xlu0 %v676, 80
  %v1019 = vpop.permute.xlu0 %1018
  %1020 = vrot.lane.b32.xlu0 %v679, 80
  %v1021 = vpop.permute.xlu0 %1020
  %1022 = vrot.lane.b32.xlu0 %v682, 80
  %v1023 = vpop.permute.xlu0 %1022
  %1024 = vrot.lane.b32.xlu0 %v993, 80
  %v1025 = vpop.permute.xlu0 %1024
  %v1042 = vrot.slane %v376, 4
  %v1043 = vrot.slane %v377, 4
  %v1044 = vsel %vm731, %v1042, %v1043
  %v1045 = vrot.slane %v400, 4
  %v1046 = vrot.slane %v401, 4
  %v1047 = vsel %vm731, %v1045, %v1046
  %1048 = vrot.lane.b32.xlu0 %v737, 90
  %v1049 = vpop.permute.xlu0 %1048
  %1050 = vrot.lane.b32.xlu0 %v740, 90
  %v1051 = vpop.permute.xlu0 %1050
  %1052 = vrot.lane.b32.xlu0 %v743, 90
  %v1053 = vpop.permute.xlu0 %1052
  %1054 = vrot.lane.b32.xlu0 %v746, 90
  %v1055 = vpop.permute.xlu0 %1054
  %1056 = vrot.lane.b32.xlu0 %v749, 90
  %v1057 = vpop.permute.xlu0 %1056
  %1058 = vrot.lane.b32.xlu0 %v752, 90
  %v1059 = vpop.permute.xlu0 %1058
  %1060 = vrot.lane.b32.xlu0 %v755, 90
  %v1061 = vpop.permute.xlu0 %1060
  %1062 = vrot.lane.b32.xlu0 %v1044, 90
  %v1063 = vpop.permute.xlu0 %1062
  %1064 = vrot.lane.b32.xlu0 %v761, 90
  %v1065 = vpop.permute.xlu0 %1064
  %1066 = vrot.lane.b32.xlu0 %v764, 90
  %v1067 = vpop.permute.xlu0 %1066
  %1068 = vrot.lane.b32.xlu0 %v767, 90
  %v1069 = vpop.permute.xlu0 %1068
  %1070 = vrot.lane.b32.xlu0 %v770, 90
  %v1071 = vpop.permute.xlu0 %1070
  %1072 = vrot.lane.b32.xlu0 %v773, 90
  %v1073 = vpop.permute.xlu0 %1072
  %1074 = vrot.lane.b32.xlu0 %v776, 90
  %v1075 = vpop.permute.xlu0 %1074
  %1076 = vrot.lane.b32.xlu0 %v779, 90
  %v1077 = vpop.permute.xlu0 %1076
  %1078 = vrot.lane.b32.xlu0 %v1047, 90
  %v1079 = vpop.permute.xlu0 %1078
  %1098 = vrot.lane.b32.xlu0 %v364, 100
  %v1099 = vpop.permute.xlu0 %1098
  %1100 = vrot.lane.b32.xlu0 %v366, 100
  %v1101 = vpop.permute.xlu0 %1100
  %1102 = vrot.lane.b32.xlu0 %v368, 100
  %v1103 = vpop.permute.xlu0 %1102
  %1104 = vrot.lane.b32.xlu0 %v370, 100
  %v1105 = vpop.permute.xlu0 %1104
  %1106 = vrot.lane.b32.xlu0 %v372, 100
  %v1107 = vpop.permute.xlu0 %1106
  %1108 = vrot.lane.b32.xlu0 %v374, 100
  %v1109 = vpop.permute.xlu0 %1108
  %1110 = vrot.lane.b32.xlu0 %v376, 100
  %v1111 = vpop.permute.xlu0 %1110
  %1112 = vrot.lane.b32.xlu0 %v378, 100
  %v1113 = vpop.permute.xlu0 %1112
  %1114 = vrot.lane.b32.xlu0 %v388, 100
  %v1115 = vpop.permute.xlu0 %1114
  %1116 = vrot.lane.b32.xlu0 %v390, 100
  %v1117 = vpop.permute.xlu0 %1116
  %1118 = vrot.lane.b32.xlu0 %v392, 100
  %v1119 = vpop.permute.xlu0 %1118
  %1120 = vrot.lane.b32.xlu0 %v394, 100
  %v1121 = vpop.permute.xlu0 %1120
  %1122 = vrot.lane.b32.xlu0 %v396, 100
  %v1123 = vpop.permute.xlu0 %1122
  %1124 = vrot.lane.b32.xlu0 %v398, 100
  %v1125 = vpop.permute.xlu0 %1124
  %1126 = vrot.lane.b32.xlu0 %v400, 100
  %v1127 = vpop.permute.xlu0 %1126
  %1128 = vrot.lane.b32.xlu0 %v402, 100
  %v1129 = vpop.permute.xlu0 %1128
  %v1148 = vrot.slane %v378, 1
  %v1149 = vrot.slane %v379, 1
  %v1150 = vsel %vm440, %v1148, %v1149
  %v1151 = vrot.slane %v402, 1
  %v1152 = vrot.slane %v403, 1
  %v1153 = vsel %vm440, %v1151, %v1152
  %1154 = vrot.lane.b32.xlu0 %v449, 110
  %v1155 = vpop.permute.xlu0 %1154
  %1156 = vrot.lane.b32.xlu0 %v452, 110
  %v1157 = vpop.permute.xlu0 %1156
  %1158 = vrot.lane.b32.xlu0 %v455, 110
  %v1159 = vpop.permute.xlu0 %1158
  %1160 = vrot.lane.b32.xlu0 %v458, 110
  %v1161 = vpop.permute.xlu0 %1160
  %1162 = vrot.lane.b32.xlu0 %v461, 110
  %v1163 = vpop.permute.xlu0 %1162
  %1164 = vrot.lane.b32.xlu0 %v464, 110
  %v1165 = vpop.permute.xlu0 %1164
  %1166 = vrot.lane.b32.xlu0 %v882, 110
  %v1167 = vpop.permute.xlu0 %1166
  %1168 = vrot.lane.b32.xlu0 %v1150, 110
  %v1169 = vpop.permute.xlu0 %1168
  %1170 = vrot.lane.b32.xlu0 %v473, 110
  %v1171 = vpop.permute.xlu0 %1170
  %1172 = vrot.lane.b32.xlu0 %v476, 110
  %v1173 = vpop.permute.xlu0 %1172
  %1174 = vrot.lane.b32.xlu0 %v479, 110
  %v1175 = vpop.permute.xlu0 %1174
  %1176 = vrot.lane.b32.xlu0 %v482, 110
  %v1177 = vpop.permute.xlu0 %1176
  %1178 = vrot.lane.b32.xlu0 %v485, 110
  %v1179 = vpop.permute.xlu0 %1178
  %1180 = vrot.lane.b32.xlu0 %v488, 110
  %v1181 = vpop.permute.xlu0 %1180
  %1182 = vrot.lane.b32.xlu0 %v885, 110
  %v1183 = vpop.permute.xlu0 %1182
  %1184 = vrot.lane.b32.xlu0 %v1153, 110
  %v1185 = vpop.permute.xlu0 %1184
  %v1202 = vrot.slane %v378, 2
  %v1203 = vrot.slane %v379, 2
  %v1204 = vsel %vm537, %v1202, %v1203
  %v1205 = vrot.slane %v402, 2
  %v1206 = vrot.slane %v403, 2
  %v1207 = vsel %vm537, %v1205, %v1206
  %1208 = vrot.lane.b32.xlu0 %v546, 120
  %v1209 = vpop.permute.xlu0 %1208
  %1210 = vrot.lane.b32.xlu0 %v549, 120
  %v1211 = vpop.permute.xlu0 %1210
  %1212 = vrot.lane.b32.xlu0 %v552, 120
  %v1213 = vpop.permute.xlu0 %1212
  %1214 = vrot.lane.b32.xlu0 %v555, 120
  %v1215 = vpop.permute.xlu0 %1214
  %1216 = vrot.lane.b32.xlu0 %v558, 120
  %v1217 = vpop.permute.xlu0 %1216
  %1218 = vrot.lane.b32.xlu0 %v561, 120
  %v1219 = vpop.permute.xlu0 %1218
  %1220 = vrot.lane.b32.xlu0 %v936, 120
  %v1221 = vpop.permute.xlu0 %1220
  %1222 = vrot.lane.b32.xlu0 %v1204, 120
  %v1223 = vpop.permute.xlu0 %1222
  %1224 = vrot.lane.b32.xlu0 %v570, 120
  %v1225 = vpop.permute.xlu0 %1224
  %1226 = vrot.lane.b32.xlu0 %v573, 120
  %v1227 = vpop.permute.xlu0 %1226
  %1228 = vrot.lane.b32.xlu0 %v576, 120
  %v1229 = vpop.permute.xlu0 %1228
  %1230 = vrot.lane.b32.xlu0 %v579, 120
  %v1231 = vpop.permute.xlu0 %1230
  %1232 = vrot.lane.b32.xlu0 %v582, 120
  %v1233 = vpop.permute.xlu0 %1232
  %1234 = vrot.lane.b32.xlu0 %v585, 120
  %v1235 = vpop.permute.xlu0 %1234
  %1236 = vrot.lane.b32.xlu0 %v939, 120
  %v1237 = vpop.permute.xlu0 %1236
  %1238 = vrot.lane.b32.xlu0 %v1207, 120
  %v1239 = vpop.permute.xlu0 %1238
  %v1256 = vrot.slane %v378, 3
  %v1257 = vrot.slane %v379, 3
  %v1258 = vsel %vm634, %v1256, %v1257
  %v1259 = vrot.slane %v402, 3
  %v1260 = vrot.slane %v403, 3
  %v1261 = vsel %vm634, %v1259, %v1260
  %1262 = vrot.lane.b32.xlu0 %v643, 2
  %v1263 = vpop.permute.xlu0 %1262
  %1264 = vrot.lane.b32.xlu0 %v646, 2
  %v1265 = vpop.permute.xlu0 %1264
  %1266 = vrot.lane.b32.xlu0 %v649, 2
  %v1267 = vpop.permute.xlu0 %1266
  %1268 = vrot.lane.b32.xlu0 %v652, 2
  %v1269 = vpop.permute.xlu0 %1268
  %1270 = vrot.lane.b32.xlu0 %v655, 2
  %v1271 = vpop.permute.xlu0 %1270
  %1272 = vrot.lane.b32.xlu0 %v658, 2
  %v1273 = vpop.permute.xlu0 %1272
  %1274 = vrot.lane.b32.xlu0 %v990, 2
  %v1275 = vpop.permute.xlu0 %1274
  %1276 = vrot.lane.b32.xlu0 %v1258, 2
  %v1277 = vpop.permute.xlu0 %1276
  %1278 = vrot.lane.b32.xlu0 %v667, 2
  %v1279 = vpop.permute.xlu0 %1278
  %1280 = vrot.lane.b32.xlu0 %v670, 2
  %v1281 = vpop.permute.xlu0 %1280
  %1282 = vrot.lane.b32.xlu0 %v673, 2
  %v1283 = vpop.permute.xlu0 %1282
  %1284 = vrot.lane.b32.xlu0 %v676, 2
  %v1285 = vpop.permute.xlu0 %1284
  %1286 = vrot.lane.b32.xlu0 %v679, 2
  %v1287 = vpop.permute.xlu0 %1286
  %1288 = vrot.lane.b32.xlu0 %v682, 2
  %v1289 = vpop.permute.xlu0 %1288
  %1290 = vrot.lane.b32.xlu0 %v993, 2
  %v1291 = vpop.permute.xlu0 %1290
  %1292 = vrot.lane.b32.xlu0 %v1261, 2
  %v1293 = vpop.permute.xlu0 %1292
  %v1310 = vrot.slane %v378, 4
  %v1311 = vrot.slane %v379, 4
  %v1312 = vsel %vm731, %v1310, %v1311
  %v1313 = vrot.slane %v402, 4
  %v1314 = vrot.slane %v403, 4
  %v1315 = vsel %vm731, %v1313, %v1314
  %1316 = vrot.lane.b32.xlu0 %v740, 12
  %v1317 = vpop.permute.xlu0 %1316
  %1318 = vrot.lane.b32.xlu0 %v743, 12
  %v1319 = vpop.permute.xlu0 %1318
  %1320 = vrot.lane.b32.xlu0 %v746, 12
  %v1321 = vpop.permute.xlu0 %1320
  %1322 = vrot.lane.b32.xlu0 %v749, 12
  %v1323 = vpop.permute.xlu0 %1322
  %1324 = vrot.lane.b32.xlu0 %v752, 12
  %v1325 = vpop.permute.xlu0 %1324
  %1326 = vrot.lane.b32.xlu0 %v755, 12
  %v1327 = vpop.permute.xlu0 %1326
  %1328 = vrot.lane.b32.xlu0 %v1044, 12
  %v1329 = vpop.permute.xlu0 %1328
  %1330 = vrot.lane.b32.xlu0 %v1312, 12
  %v1331 = vpop.permute.xlu0 %1330
  %1332 = vrot.lane.b32.xlu0 %v764, 12
  %v1333 = vpop.permute.xlu0 %1332
  %1334 = vrot.lane.b32.xlu0 %v767, 12
  %v1335 = vpop.permute.xlu0 %1334
  %1336 = vrot.lane.b32.xlu0 %v770, 12
  %v1337 = vpop.permute.xlu0 %1336
  %1338 = vrot.lane.b32.xlu0 %v773, 12
  %v1339 = vpop.permute.xlu0 %1338
  %1340 = vrot.lane.b32.xlu0 %v776, 12
  %v1341 = vpop.permute.xlu0 %1340
  %1342 = vrot.lane.b32.xlu0 %v779, 12
  %v1343 = vpop.permute.xlu0 %1342
  %1344 = vrot.lane.b32.xlu0 %v1047, 12
  %v1345 = vpop.permute.xlu0 %1344
  %1346 = vrot.lane.b32.xlu0 %v1315, 12
  %v1347 = vpop.permute.xlu0 %1346
  %1366 = vrot.lane.b32.xlu0 %v366, 22
  %v1367 = vpop.permute.xlu0 %1366
  %1368 = vrot.lane.b32.xlu0 %v368, 22
  %v1369 = vpop.permute.xlu0 %1368
  %1370 = vrot.lane.b32.xlu0 %v370, 22
  %v1371 = vpop.permute.xlu0 %1370
  %1372 = vrot.lane.b32.xlu0 %v372, 22
  %v1373 = vpop.permute.xlu0 %1372
  %1374 = vrot.lane.b32.xlu0 %v374, 22
  %v1375 = vpop.permute.xlu0 %1374
  %1376 = vrot.lane.b32.xlu0 %v376, 22
  %v1377 = vpop.permute.xlu0 %1376
  %1378 = vrot.lane.b32.xlu0 %v378, 22
  %v1379 = vpop.permute.xlu0 %1378
  %1380 = vrot.lane.b32.xlu0 %v380, 22
  %v1381 = vpop.permute.xlu0 %1380
  %1382 = vrot.lane.b32.xlu0 %v390, 22
  %v1383 = vpop.permute.xlu0 %1382
  %1384 = vrot.lane.b32.xlu0 %v392, 22
  %v1385 = vpop.permute.xlu0 %1384
  %1386 = vrot.lane.b32.xlu0 %v394, 22
  %v1387 = vpop.permute.xlu0 %1386
  %1388 = vrot.lane.b32.xlu0 %v396, 22
  %v1389 = vpop.permute.xlu0 %1388
  %1390 = vrot.lane.b32.xlu0 %v398, 22
  %v1391 = vpop.permute.xlu0 %1390
  %1392 = vrot.lane.b32.xlu0 %v400, 22
  %v1393 = vpop.permute.xlu0 %1392
  %1394 = vrot.lane.b32.xlu0 %v402, 22
  %v1395 = vpop.permute.xlu0 %1394
  %1396 = vrot.lane.b32.xlu0 %v404, 22
  %v1397 = vpop.permute.xlu0 %1396
  %vm1414 = vcmask 80896
  %v1415 = vsel %vm1414, %v360, %v490
  %v1416 = vsel %vm1414, %v362, %v492
  %v1417 = vsel %vm1414, %v364, %v494
  %v1418 = vsel %vm1414, %v366, %v496
  %v1419 = vsel %vm1414, %v368, %v498
  %v1420 = vsel %vm1414, %v370, %v500
  %v1421 = vsel %vm1414, %v372, %v502
  %v1422 = vsel %vm1414, %v374, %v504
  %v1423 = vsel %vm1414, %v384, %v506
  %v1424 = vsel %vm1414, %v386, %v508
  %v1425 = vsel %vm1414, %v388, %v510
  %v1426 = vsel %vm1414, %v390, %v512
  %v1427 = vsel %vm1414, %v392, %v514
  %v1428 = vsel %vm1414, %v394, %v516
  %v1429 = vsel %vm1414, %v396, %v518
  %v1430 = vsel %vm1414, %v398, %v520
  %vm1431 = vcmask 162816
  %v1432 = vsel %vm1431, %v1415, %v587
  %v1433 = vsel %vm1431, %v1416, %v589
  %v1434 = vsel %vm1431, %v1417, %v591
  %v1435 = vsel %vm1431, %v1418, %v593
  %v1436 = vsel %vm1431, %v1419, %v595
  %v1437 = vsel %vm1431, %v1420, %v597
  %v1438 = vsel %vm1431, %v1421, %v599
  %v1439 = vsel %vm1431, %v1422, %v601
  %v1440 = vsel %vm1431, %v1423, %v603
  %v1441 = vsel %vm1431, %v1424, %v605
  %v1442 = vsel %vm1431, %v1425, %v607
  %v1443 = vsel %vm1431, %v1426, %v609
  %v1444 = vsel %vm1431, %v1427, %v611
  %v1445 = vsel %vm1431, %v1428, %v613
  %v1446 = vsel %vm1431, %v1429, %v615
  %v1447 = vsel %vm1431, %v1430, %v617
  %vm1448 = vcmask 244736
  %v1449 = vsel %vm1448, %v1432, %v684
  %v1450 = vsel %vm1448, %v1433, %v686
  %v1451 = vsel %vm1448, %v1434, %v688
  %v1452 = vsel %vm1448, %v1435, %v690
  %v1453 = vsel %vm1448, %v1436, %v692
  %v1454 = vsel %vm1448, %v1437, %v694
  %v1455 = vsel %vm1448, %v1438, %v696
  %v1456 = vsel %vm1448, %v1439, %v698
  %v1457 = vsel %vm1448, %v1440, %v700
  %v1458 = vsel %vm1448, %v1441, %v702
  %v1459 = vsel %vm1448, %v1442, %v704
  %v1460 = vsel %vm1448, %v1443, %v706
  %v1461 = vsel %vm1448, %v1444, %v708
  %v1462 = vsel %vm1448, %v1445, %v710
  %v1463 = vsel %vm1448, %v1446, %v712
  %v1464 = vsel %vm1448, %v1447, %v714
  %vm1465 = vcmask 326656
  %v1466 = vsel %vm1465, %v1449, %v781
  %v1467 = vsel %vm1465, %v1450, %v783
  %v1468 = vsel %vm1465, %v1451, %v785
  %v1469 = vsel %vm1465, %v1452, %v787
  %v1470 = vsel %vm1465, %v1453, %v789
  %v1471 = vsel %vm1465, %v1454, %v791
  %v1472 = vsel %vm1465, %v1455, %v793
  %v1473 = vsel %vm1465, %v1456, %v795
  %v1474 = vsel %vm1465, %v1457, %v797
  %v1475 = vsel %vm1465, %v1458, %v799
  %v1476 = vsel %vm1465, %v1459, %v801
  %v1477 = vsel %vm1465, %v1460, %v803
  %v1478 = vsel %vm1465, %v1461, %v805
  %v1479 = vsel %vm1465, %v1462, %v807
  %v1480 = vsel %vm1465, %v1463, %v809
  %v1481 = vsel %vm1465, %v1464, %v811
  %vm1482 = vcmask 408576
  %v1483 = vsel %vm1482, %v1466, %v831
  %v1484 = vsel %vm1482, %v1467, %v833
  %v1485 = vsel %vm1482, %v1468, %v835
  %v1486 = vsel %vm1482, %v1469, %v837
  %v1487 = vsel %vm1482, %v1470, %v839
  %v1488 = vsel %vm1482, %v1471, %v841
  %v1489 = vsel %vm1482, %v1472, %v843
  %v1490 = vsel %vm1482, %v1473, %v845
  %v1491 = vsel %vm1482, %v1474, %v847
  %v1492 = vsel %vm1482, %v1475, %v849
  %v1493 = vsel %vm1482, %v1476, %v851
  %v1494 = vsel %vm1482, %v1477, %v853
  %v1495 = vsel %vm1482, %v1478, %v855
  %v1496 = vsel %vm1482, %v1479, %v857
  %v1497 = vsel %vm1482, %v1480, %v859
  %v1498 = vsel %vm1482, %v1481, %v861
  %vm1499 = vcmask 490496
  %v1500 = vsel %vm1499, %v1483, %v887
  %v1501 = vsel %vm1499, %v1484, %v889
  %v1502 = vsel %vm1499, %v1485, %v891
  %v1503 = vsel %vm1499, %v1486, %v893
  %v1504 = vsel %vm1499, %v1487, %v895
  %v1505 = vsel %vm1499, %v1488, %v897
  %v1506 = vsel %vm1499, %v1489, %v899
  %v1507 = vsel %vm1499, %v1490, %v901
  %v1508 = vsel %vm1499, %v1491, %v903
  %v1509 = vsel %vm1499, %v1492, %v905
  %v1510 = vsel %vm1499, %v1493, %v907
  %v1511 = vsel %vm1499, %v1494, %v909
  %v1512 = vsel %vm1499, %v1495, %v911
  %v1513 = vsel %vm1499, %v1496, %v913
  %v1514 = vsel %vm1499, %v1497, %v915
  %v1515 = vsel %vm1499, %v1498, %v917
  %vm1516 = vcmask 572416
  %v1517 = vsel %vm1516, %v1500, %v941
  %v1518 = vsel %vm1516, %v1501, %v943
  %v1519 = vsel %vm1516, %v1502, %v945
  %v1520 = vsel %vm1516, %v1503, %v947
  %v1521 = vsel %vm1516, %v1504, %v949
  %v1522 = vsel %vm1516, %v1505, %v951
  %v1523 = vsel %vm1516, %v1506, %v953
  %v1524 = vsel %vm1516, %v1507, %v955
  %v1525 = vsel %vm1516, %v1508, %v957
  %v1526 = vsel %vm1516, %v1509, %v959
  %v1527 = vsel %vm1516, %v1510, %v961
  %v1528 = vsel %vm1516, %v1511, %v963
  %v1529 = vsel %vm1516, %v1512, %v965
  %v1530 = vsel %vm1516, %v1513, %v967
  %v1531 = vsel %vm1516, %v1514, %v969
  %v1532 = vsel %vm1516, %v1515, %v971
  %vm1533 = vcmask 654336
  %v1534 = vsel %vm1533, %v1517, %v995
  %v1535 = vsel %vm1533, %v1518, %v997
  %v1536 = vsel %vm1533, %v1519, %v999
  %v1537 = vsel %vm1533, %v1520, %v1001
  %v1538 = vsel %vm1533, %v1521, %v1003
  %v1539 = vsel %vm1533, %v1522, %v1005
  %v1540 = vsel %vm1533, %v1523, %v1007
  %v1541 = vsel %vm1533, %v1524, %v1009
  %v1542 = vsel %vm1533, %v1525, %v1011
  %v1543 = vsel %vm1533, %v1526, %v1013
  %v1544 = vsel %vm1533, %v1527, %v1015
  %v1545 = vsel %vm1533, %v1528, %v1017
  %v1546 = vsel %vm1533, %v1529, %v1019
  %v1547 = vsel %vm1533, %v1530, %v1021
  %v1548 = vsel %vm1533, %v1531, %v1023
  %v1549 = vsel %vm1533, %v1532, %v1025
  %vm1550 = vcmask 736256
  %v1551 = vsel %vm1550, %v1534, %v1049
  %v1552 = vsel %vm1550, %v1535, %v1051
  %v1553 = vsel %vm1550, %v1536, %v1053
  %v1554 = vsel %vm1550, %v1537, %v1055
  %v1555 = vsel %vm1550, %v1538, %v1057
  %v1556 = vsel %vm1550, %v1539, %v1059
  %v1557 = vsel %vm1550, %v1540, %v1061
  %v1558 = vsel %vm1550, %v1541, %v1063
  %v1559 = vsel %vm1550, %v1542, %v1065
  %v1560 = vsel %vm1550, %v1543, %v1067
  %v1561 = vsel %vm1550, %v1544, %v1069
  %v1562 = vsel %vm1550, %v1545, %v1071
  %v1563 = vsel %vm1550, %v1546, %v1073
  %v1564 = vsel %vm1550, %v1547, %v1075
  %v1565 = vsel %vm1550, %v1548, %v1077
  %v1566 = vsel %vm1550, %v1549, %v1079
  %vm1567 = vcmask 818176
  %v1568 = vsel %vm1567, %v1551, %v1099
  %v1569 = vsel %vm1567, %v1552, %v1101
  %v1570 = vsel %vm1567, %v1553, %v1103
  %v1571 = vsel %vm1567, %v1554, %v1105
  %v1572 = vsel %vm1567, %v1555, %v1107
  %v1573 = vsel %vm1567, %v1556, %v1109
  %v1574 = vsel %vm1567, %v1557, %v1111
  %v1575 = vsel %vm1567, %v1558, %v1113
  %v1576 = vsel %vm1567, %v1559, %v1115
  %v1577 = vsel %vm1567, %v1560, %v1117
  %v1578 = vsel %vm1567, %v1561, %v1119
  %v1579 = vsel %vm1567, %v1562, %v1121
  %v1580 = vsel %vm1567, %v1563, %v1123
  %v1581 = vsel %vm1567, %v1564, %v1125
  %v1582 = vsel %vm1567, %v1565, %v1127
  %v1583 = vsel %vm1567, %v1566, %v1129
  %vm1584 = vcmask 900096
  %v1585 = vsel %vm1584, %v1568, %v1155
  %v1586 = vsel %vm1584, %v1569, %v1157
  %v1587 = vsel %vm1584, %v1570, %v1159
  %v1588 = vsel %vm1584, %v1571, %v1161
  %v1589 = vsel %vm1584, %v1572, %v1163
  %v1590 = vsel %vm1584, %v1573, %v1165
  %v1591 = vsel %vm1584, %v1574, %v1167
  %v1592 = vsel %vm1584, %v1575, %v1169
  %v1593 = vsel %vm1584, %v1576, %v1171
  %v1594 = vsel %vm1584, %v1577, %v1173
  %v1595 = vsel %vm1584, %v1578, %v1175
  %v1596 = vsel %vm1584, %v1579, %v1177
  %v1597 = vsel %vm1584, %v1580, %v1179
  %v1598 = vsel %vm1584, %v1581, %v1181
  %v1599 = vsel %vm1584, %v1582, %v1183
  %v1600 = vsel %vm1584, %v1583, %v1185
  %vm1601 = vcmask 982016
  %v1602 = vsel %vm1601, %v1585, %v1209
  %v1603 = vsel %vm1601, %v1586, %v1211
  %v1604 = vsel %vm1601, %v1587, %v1213
  %v1605 = vsel %vm1601, %v1588, %v1215
  %v1606 = vsel %vm1601, %v1589, %v1217
  %v1607 = vsel %vm1601, %v1590, %v1219
  %v1608 = vsel %vm1601, %v1591, %v1221
  %v1609 = vsel %vm1601, %v1592, %v1223
  %v1610 = vsel %vm1601, %v1593, %v1225
  %v1611 = vsel %vm1601, %v1594, %v1227
  %v1612 = vsel %vm1601, %v1595, %v1229
  %v1613 = vsel %vm1601, %v1596, %v1231
  %v1614 = vsel %vm1601, %v1597, %v1233
  %v1615 = vsel %vm1601, %v1598, %v1235
  %v1616 = vsel %vm1601, %v1599, %v1237
  %v1617 = vsel %vm1601, %v1600, %v1239
  %vm1618 = vcmask 15360
  %v1619 = vsel %vm1618, %v1209, %v1263
  %v1620 = vsel %vm1618, %v1211, %v1265
  %v1621 = vsel %vm1618, %v1213, %v1267
  %v1622 = vsel %vm1618, %v1215, %v1269
  %v1623 = vsel %vm1618, %v1217, %v1271
  %v1624 = vsel %vm1618, %v1219, %v1273
  %v1625 = vsel %vm1618, %v1221, %v1275
  %v1626 = vsel %vm1618, %v1223, %v1277
  %v1627 = vsel %vm1618, %v1225, %v1279
  %v1628 = vsel %vm1618, %v1227, %v1281
  %v1629 = vsel %vm1618, %v1229, %v1283
  %v1630 = vsel %vm1618, %v1231, %v1285
  %v1631 = vsel %vm1618, %v1233, %v1287
  %v1632 = vsel %vm1618, %v1235, %v1289
  %v1633 = vsel %vm1618, %v1237, %v1291
  %v1634 = vsel %vm1618, %v1239, %v1293
  %vm1635 = vcmask 97280
  %v1636 = vsel %vm1635, %v1619, %v1317
  %v1637 = vsel %vm1635, %v1620, %v1319
  %v1638 = vsel %vm1635, %v1621, %v1321
  %v1639 = vsel %vm1635, %v1622, %v1323
  %v1640 = vsel %vm1635, %v1623, %v1325
  %v1641 = vsel %vm1635, %v1624, %v1327
  %v1642 = vsel %vm1635, %v1625, %v1329
  %v1643 = vsel %vm1635, %v1626, %v1331
  %v1644 = vsel %vm1635, %v1627, %v1333
  %v1645 = vsel %vm1635, %v1628, %v1335
  %v1646 = vsel %vm1635, %v1629, %v1337
  %v1647 = vsel %vm1635, %v1630, %v1339
  %v1648 = vsel %vm1635, %v1631, %v1341
  %v1649 = vsel %vm1635, %v1632, %v1343
  %v1650 = vsel %vm1635, %v1633, %v1345
  %v1651 = vsel %vm1635, %v1634, %v1347
  %vm1652 = vcmask 179200
  %v1653 = vsel %vm1652, %v1636, %v1367
  %v1654 = vsel %vm1652, %v1637, %v1369
  %v1655 = vsel %vm1652, %v1638, %v1371
  %v1656 = vsel %vm1652, %v1639, %v1373
  %v1657 = vsel %vm1652, %v1640, %v1375
  %v1658 = vsel %vm1652, %v1641, %v1377
  %v1659 = vsel %vm1652, %v1642, %v1379
  %v1660 = vsel %vm1652, %v1643, %v1381
  %v1661 = vsel %vm1652, %v1644, %v1383
  %v1662 = vsel %vm1652, %v1645, %v1385
  %v1663 = vsel %vm1652, %v1646, %v1387
  %v1664 = vsel %vm1652, %v1647, %v1389
  %v1665 = vsel %vm1652, %v1648, %v1391
  %v1666 = vsel %vm1652, %v1649, %v1393
  %v1667 = vsel %vm1652, %v1650, %v1395
  %v1668 = vsel %vm1652, %v1651, %v1397
  %v1671 = vrot.slane %v380, 1
  %v1672 = vrot.slane %v381, 1
  %v1673 = vsel %vm440, %v1671, %v1672
  %v1674 = vrot.slane %v404, 1
  %v1675 = vrot.slane %v405, 1
  %v1676 = vsel %vm440, %v1674, %v1675
  %1677 = vrot.lane.b32.xlu0 %v451, 10
  %v1678 = vpop.permute.xlu0 %1677
  %1679 = vrot.lane.b32.xlu0 %v454, 10
  %v1680 = vpop.permute.xlu0 %1679
  %1681 = vrot.lane.b32.xlu0 %v457, 10
  %v1682 = vpop.permute.xlu0 %1681
  %1683 = vrot.lane.b32.xlu0 %v460, 10
  %v1684 = vpop.permute.xlu0 %1683
  %1685 = vrot.lane.b32.xlu0 %v463, 10
  %v1686 = vpop.permute.xlu0 %1685
  %1687 = vrot.lane.b32.xlu0 %v882, 10
  %v1688 = vpop.permute.xlu0 %1687
  %1689 = vrot.lane.b32.xlu0 %v881, 10
  %v1690 = vpop.permute.xlu0 %1689
  %1691 = vrot.lane.b32.xlu0 %v1150, 10
  %v1692 = vpop.permute.xlu0 %1691
  %1693 = vrot.lane.b32.xlu0 %v1149, 10
  %v1694 = vpop.permute.xlu0 %1693
  %1695 = vrot.lane.b32.xlu0 %v1673, 10
  %v1696 = vpop.permute.xlu0 %1695
  %1697 = vrot.lane.b32.xlu0 %v1672, 10
  %v1698 = vpop.permute.xlu0 %1697
  %1699 = vrot.lane.b32.xlu0 %v475, 10
  %v1700 = vpop.permute.xlu0 %1699
  %1701 = vrot.lane.b32.xlu0 %v478, 10
  %v1702 = vpop.permute.xlu0 %1701
  %1703 = vrot.lane.b32.xlu0 %v481, 10
  %v1704 = vpop.permute.xlu0 %1703
  %1705 = vrot.lane.b32.xlu0 %v484, 10
  %v1706 = vpop.permute.xlu0 %1705
  %1707 = vrot.lane.b32.xlu0 %v487, 10
  %v1708 = vpop.permute.xlu0 %1707
  %1709 = vrot.lane.b32.xlu0 %v885, 10
  %v1710 = vpop.permute.xlu0 %1709
  %1711 = vrot.lane.b32.xlu0 %v884, 10
  %v1712 = vpop.permute.xlu0 %1711
  %1713 = vrot.lane.b32.xlu0 %v1153, 10
  %v1714 = vpop.permute.xlu0 %1713
  %1715 = vrot.lane.b32.xlu0 %v1152, 10
  %v1716 = vpop.permute.xlu0 %1715
  %1717 = vrot.lane.b32.xlu0 %v1676, 10
  %v1718 = vpop.permute.xlu0 %1717
  %1719 = vrot.lane.b32.xlu0 %v1675, 10
  %v1720 = vpop.permute.xlu0 %1719
  %v1743 = vrot.slane %v380, 2
  %v1744 = vrot.slane %v381, 2
  %v1745 = vsel %vm537, %v1743, %v1744
  %v1746 = vrot.slane %v404, 2
  %v1747 = vrot.slane %v405, 2
  %v1748 = vsel %vm537, %v1746, %v1747
  %1749 = vrot.lane.b32.xlu0 %v548, 20
  %v1750 = vpop.permute.xlu0 %1749
  %1751 = vrot.lane.b32.xlu0 %v551, 20
  %v1752 = vpop.permute.xlu0 %1751
  %1753 = vrot.lane.b32.xlu0 %v554, 20
  %v1754 = vpop.permute.xlu0 %1753
  %1755 = vrot.lane.b32.xlu0 %v557, 20
  %v1756 = vpop.permute.xlu0 %1755
  %1757 = vrot.lane.b32.xlu0 %v560, 20
  %v1758 = vpop.permute.xlu0 %1757
  %1759 = vrot.lane.b32.xlu0 %v936, 20
  %v1760 = vpop.permute.xlu0 %1759
  %1761 = vrot.lane.b32.xlu0 %v935, 20
  %v1762 = vpop.permute.xlu0 %1761
  %1763 = vrot.lane.b32.xlu0 %v1204, 20
  %v1764 = vpop.permute.xlu0 %1763
  %1765 = vrot.lane.b32.xlu0 %v1203, 20
  %v1766 = vpop.permute.xlu0 %1765
  %1767 = vrot.lane.b32.xlu0 %v1745, 20
  %v1768 = vpop.permute.xlu0 %1767
  %1769 = vrot.lane.b32.xlu0 %v1744, 20
  %v1770 = vpop.permute.xlu0 %1769
  %1771 = vrot.lane.b32.xlu0 %v572, 20
  %v1772 = vpop.permute.xlu0 %1771
  %1773 = vrot.lane.b32.xlu0 %v575, 20
  %v1774 = vpop.permute.xlu0 %1773
  %1775 = vrot.lane.b32.xlu0 %v578, 20
  %v1776 = vpop.permute.xlu0 %1775
  %1777 = vrot.lane.b32.xlu0 %v581, 20
  %v1778 = vpop.permute.xlu0 %1777
  %1779 = vrot.lane.b32.xlu0 %v584, 20
  %v1780 = vpop.permute.xlu0 %1779
  %1781 = vrot.lane.b32.xlu0 %v939, 20
  %v1782 = vpop.permute.xlu0 %1781
  %1783 = vrot.lane.b32.xlu0 %v938, 20
  %v1784 = vpop.permute.xlu0 %1783
  %1785 = vrot.lane.b32.xlu0 %v1207, 20
  %v1786 = vpop.permute.xlu0 %1785
  %1787 = vrot.lane.b32.xlu0 %v1206, 20
  %v1788 = vpop.permute.xlu0 %1787
  %1789 = vrot.lane.b32.xlu0 %v1748, 20
  %v1790 = vpop.permute.xlu0 %1789
  %1791 = vrot.lane.b32.xlu0 %v1747, 20
  %v1792 = vpop.permute.xlu0 %1791
  %v1815 = vrot.slane %v380, 3
  %v1816 = vrot.slane %v381, 3
  %v1817 = vsel %vm634, %v1815, %v1816
  %v1818 = vrot.slane %v404, 3
  %v1819 = vrot.slane %v405, 3
  %v1820 = vsel %vm634, %v1818, %v1819
  %1821 = vrot.lane.b32.xlu0 %v645, 30
  %v1822 = vpop.permute.xlu0 %1821
  %1823 = vrot.lane.b32.xlu0 %v648, 30
  %v1824 = vpop.permute.xlu0 %1823
  %1825 = vrot.lane.b32.xlu0 %v651, 30
  %v1826 = vpop.permute.xlu0 %1825
  %1827 = vrot.lane.b32.xlu0 %v654, 30
  %v1828 = vpop.permute.xlu0 %1827
  %1829 = vrot.lane.b32.xlu0 %v657, 30
  %v1830 = vpop.permute.xlu0 %1829
  %1831 = vrot.lane.b32.xlu0 %v990, 30
  %v1832 = vpop.permute.xlu0 %1831
  %1833 = vrot.lane.b32.xlu0 %v989, 30
  %v1834 = vpop.permute.xlu0 %1833
  %1835 = vrot.lane.b32.xlu0 %v1258, 30
  %v1836 = vpop.permute.xlu0 %1835
  %1837 = vrot.lane.b32.xlu0 %v1257, 30
  %v1838 = vpop.permute.xlu0 %1837
  %1839 = vrot.lane.b32.xlu0 %v1817, 30
  %v1840 = vpop.permute.xlu0 %1839
  %1841 = vrot.lane.b32.xlu0 %v1816, 30
  %v1842 = vpop.permute.xlu0 %1841
  %1843 = vrot.lane.b32.xlu0 %v669, 30
  %v1844 = vpop.permute.xlu0 %1843
  %1845 = vrot.lane.b32.xlu0 %v672, 30
  %v1846 = vpop.permute.xlu0 %1845
  %1847 = vrot.lane.b32.xlu0 %v675, 30
  %v1848 = vpop.permute.xlu0 %1847
  %1849 = vrot.lane.b32.xlu0 %v678, 30
  %v1850 = vpop.permute.xlu0 %1849
  %1851 = vrot.lane.b32.xlu0 %v681, 30
  %v1852 = vpop.permute.xlu0 %1851
  %1853 = vrot.lane.b32.xlu0 %v993, 30
  %v1854 = vpop.permute.xlu0 %1853
  %1855 = vrot.lane.b32.xlu0 %v992, 30
  %v1856 = vpop.permute.xlu0 %1855
  %1857 = vrot.lane.b32.xlu0 %v1261, 30
  %v1858 = vpop.permute.xlu0 %1857
  %1859 = vrot.lane.b32.xlu0 %v1260, 30
  %v1860 = vpop.permute.xlu0 %1859
  %1861 = vrot.lane.b32.xlu0 %v1820, 30
  %v1862 = vpop.permute.xlu0 %1861
  %1863 = vrot.lane.b32.xlu0 %v1819, 30
  %v1864 = vpop.permute.xlu0 %1863
  %v1889 = vrot.slane %v368, 7
  %v1890 = vrot.slane %v370, 7
  %v1891 = vrot.slane %v372, 7
  %v1892 = vrot.slane %v374, 7
  %v1893 = vrot.slane %v376, 7
  %v1894 = vrot.slane %v378, 7
  %v1895 = vrot.slane %v380, 7
  %v1896 = vrot.slane %v382, 7
  %v1897 = vrot.slane %v392, 7
  %v1898 = vrot.slane %v394, 7
  %v1899 = vrot.slane %v396, 7
  %v1900 = vrot.slane %v398, 7
  %v1901 = vrot.slane %v400, 7
  %v1902 = vrot.slane %v402, 7
  %v1903 = vrot.slane %v404, 7
  %v1904 = vrot.slane %v406, 7
  %1905 = vrot.lane.b32.xlu0 %v1889, 40
  %v1906 = vpop.permute.xlu0 %1905
  %1907 = vrot.lane.b32.xlu0 %v1890, 40
  %v1908 = vpop.permute.xlu0 %1907
  %1909 = vrot.lane.b32.xlu0 %v1891, 40
  %v1910 = vpop.permute.xlu0 %1909
  %1911 = vrot.lane.b32.xlu0 %v1892, 40
  %v1912 = vpop.permute.xlu0 %1911
  %1913 = vrot.lane.b32.xlu0 %v1893, 40
  %v1914 = vpop.permute.xlu0 %1913
  %1915 = vrot.lane.b32.xlu0 %v1894, 40
  %v1916 = vpop.permute.xlu0 %1915
  %1917 = vrot.lane.b32.xlu0 %v1895, 40
  %v1918 = vpop.permute.xlu0 %1917
  %1919 = vrot.lane.b32.xlu0 %v1896, 40
  %v1920 = vpop.permute.xlu0 %1919
  %1921 = vrot.lane.b32.xlu0 %v1897, 40
  %v1922 = vpop.permute.xlu0 %1921
  %1923 = vrot.lane.b32.xlu0 %v1898, 40
  %v1924 = vpop.permute.xlu0 %1923
  %1925 = vrot.lane.b32.xlu0 %v1899, 40
  %v1926 = vpop.permute.xlu0 %1925
  %1927 = vrot.lane.b32.xlu0 %v1900, 40
  %v1928 = vpop.permute.xlu0 %1927
  %1929 = vrot.lane.b32.xlu0 %v1901, 40
  %v1930 = vpop.permute.xlu0 %1929
  %1931 = vrot.lane.b32.xlu0 %v1902, 40
  %v1932 = vpop.permute.xlu0 %1931
  %1933 = vrot.lane.b32.xlu0 %v1903, 40
  %v1934 = vpop.permute.xlu0 %1933
  %1935 = vrot.lane.b32.xlu0 %v1904, 40
  %v1936 = vpop.permute.xlu0 %1935
  %1955 = vrot.lane.b32.xlu0 %v369, 50
  %v1956 = vpop.permute.xlu0 %1955
  %1957 = vrot.lane.b32.xlu0 %v371, 50
  %v1958 = vpop.permute.xlu0 %1957
  %1959 = vrot.lane.b32.xlu0 %v373, 50
  %v1960 = vpop.permute.xlu0 %1959
  %1961 = vrot.lane.b32.xlu0 %v375, 50
  %v1962 = vpop.permute.xlu0 %1961
  %1963 = vrot.lane.b32.xlu0 %v377, 50
  %v1964 = vpop.permute.xlu0 %1963
  %1965 = vrot.lane.b32.xlu0 %v378, 50
  %v1966 = vpop.permute.xlu0 %1965
  %1967 = vrot.lane.b32.xlu0 %v379, 50
  %v1968 = vpop.permute.xlu0 %1967
  %1969 = vrot.lane.b32.xlu0 %v380, 50
  %v1970 = vpop.permute.xlu0 %1969
  %1971 = vrot.lane.b32.xlu0 %v381, 50
  %v1972 = vpop.permute.xlu0 %1971
  %1973 = vrot.lane.b32.xlu0 %v382, 50
  %v1974 = vpop.permute.xlu0 %1973
  %1975 = vrot.lane.b32.xlu0 %v383, 50
  %v1976 = vpop.permute.xlu0 %1975
  %1977 = vrot.lane.b32.xlu0 %v393, 50
  %v1978 = vpop.permute.xlu0 %1977
  %1979 = vrot.lane.b32.xlu0 %v395, 50
  %v1980 = vpop.permute.xlu0 %1979
  %1981 = vrot.lane.b32.xlu0 %v397, 50
  %v1982 = vpop.permute.xlu0 %1981
  %1983 = vrot.lane.b32.xlu0 %v399, 50
  %v1984 = vpop.permute.xlu0 %1983
  %1985 = vrot.lane.b32.xlu0 %v401, 50
  %v1986 = vpop.permute.xlu0 %1985
  %1987 = vrot.lane.b32.xlu0 %v402, 50
  %v1988 = vpop.permute.xlu0 %1987
  %1989 = vrot.lane.b32.xlu0 %v403, 50
  %v1990 = vpop.permute.xlu0 %1989
  %1991 = vrot.lane.b32.xlu0 %v404, 50
  %v1992 = vpop.permute.xlu0 %1991
  %1993 = vrot.lane.b32.xlu0 %v405, 50
  %v1994 = vpop.permute.xlu0 %1993
  %1995 = vrot.lane.b32.xlu0 %v406, 50
  %v1996 = vpop.permute.xlu0 %1995
  %1997 = vrot.lane.b32.xlu0 %v407, 50
  %v1998 = vpop.permute.xlu0 %1997
  %v2021 = vrot.slane %v382, 1
  %v2022 = vrot.slane %v383, 1
  %v2023 = vsel %vm440, %v2021, %v2022
  %v2024 = vrot.slane %v406, 1
  %v2025 = vrot.slane %v407, 1
  %v2026 = vsel %vm440, %v2024, %v2025
  %2027 = vrot.lane.b32.xlu0 %v454, 60
  %v2028 = vpop.permute.xlu0 %2027
  %2029 = vrot.lane.b32.xlu0 %v457, 60
  %v2030 = vpop.permute.xlu0 %2029
  %2031 = vrot.lane.b32.xlu0 %v460, 60
  %v2032 = vpop.permute.xlu0 %2031
  %2033 = vrot.lane.b32.xlu0 %v463, 60
  %v2034 = vpop.permute.xlu0 %2033
  %2035 = vrot.lane.b32.xlu0 %v881, 60
  %v2036 = vpop.permute.xlu0 %2035
  %2037 = vrot.lane.b32.xlu0 %v1150, 60
  %v2038 = vpop.permute.xlu0 %2037
  %2039 = vrot.lane.b32.xlu0 %v1149, 60
  %v2040 = vpop.permute.xlu0 %2039
  %2041 = vrot.lane.b32.xlu0 %v1673, 60
  %v2042 = vpop.permute.xlu0 %2041
  %2043 = vrot.lane.b32.xlu0 %v1672, 60
  %v2044 = vpop.permute.xlu0 %2043
  %2045 = vrot.lane.b32.xlu0 %v2023, 60
  %v2046 = vpop.permute.xlu0 %2045
  %2047 = vrot.lane.b32.xlu0 %v2022, 60
  %v2048 = vpop.permute.xlu0 %2047
  %2049 = vrot.lane.b32.xlu0 %v478, 60
  %v2050 = vpop.permute.xlu0 %2049
  %2051 = vrot.lane.b32.xlu0 %v481, 60
  %v2052 = vpop.permute.xlu0 %2051
  %2053 = vrot.lane.b32.xlu0 %v484, 60
  %v2054 = vpop.permute.xlu0 %2053
  %2055 = vrot.lane.b32.xlu0 %v487, 60
  %v2056 = vpop.permute.xlu0 %2055
  %2057 = vrot.lane.b32.xlu0 %v884, 60
  %v2058 = vpop.permute.xlu0 %2057
  %2059 = vrot.lane.b32.xlu0 %v1153, 60
  %v2060 = vpop.permute.xlu0 %2059
  %2061 = vrot.lane.b32.xlu0 %v1152, 60
  %v2062 = vpop.permute.xlu0 %2061
  %2063 = vrot.lane.b32.xlu0 %v1676, 60
  %v2064 = vpop.permute.xlu0 %2063
  %2065 = vrot.lane.b32.xlu0 %v1675, 60
  %v2066 = vpop.permute.xlu0 %2065
  %2067 = vrot.lane.b32.xlu0 %v2026, 60
  %v2068 = vpop.permute.xlu0 %2067
  %2069 = vrot.lane.b32.xlu0 %v2025, 60
  %v2070 = vpop.permute.xlu0 %2069
  %v2093 = vrot.slane %v382, 2
  %v2094 = vrot.slane %v383, 2
  %v2095 = vsel %vm537, %v2093, %v2094
  %v2096 = vrot.slane %v406, 2
  %v2097 = vrot.slane %v407, 2
  %v2098 = vsel %vm537, %v2096, %v2097
  %2099 = vrot.lane.b32.xlu0 %v551, 70
  %v2100 = vpop.permute.xlu0 %2099
  %2101 = vrot.lane.b32.xlu0 %v554, 70
  %v2102 = vpop.permute.xlu0 %2101
  %2103 = vrot.lane.b32.xlu0 %v557, 70
  %v2104 = vpop.permute.xlu0 %2103
  %2105 = vrot.lane.b32.xlu0 %v560, 70
  %v2106 = vpop.permute.xlu0 %2105
  %2107 = vrot.lane.b32.xlu0 %v935, 70
  %v2108 = vpop.permute.xlu0 %2107
  %2109 = vrot.lane.b32.xlu0 %v1204, 70
  %v2110 = vpop.permute.xlu0 %2109
  %2111 = vrot.lane.b32.xlu0 %v1203, 70
  %v2112 = vpop.permute.xlu0 %2111
  %2113 = vrot.lane.b32.xlu0 %v1745, 70
  %v2114 = vpop.permute.xlu0 %2113
  %2115 = vrot.lane.b32.xlu0 %v1744, 70
  %v2116 = vpop.permute.xlu0 %2115
  %2117 = vrot.lane.b32.xlu0 %v2095, 70
  %v2118 = vpop.permute.xlu0 %2117
  %2119 = vrot.lane.b32.xlu0 %v2094, 70
  %v2120 = vpop.permute.xlu0 %2119
  %2121 = vrot.lane.b32.xlu0 %v575, 70
  %v2122 = vpop.permute.xlu0 %2121
  %2123 = vrot.lane.b32.xlu0 %v578, 70
  %v2124 = vpop.permute.xlu0 %2123
  %2125 = vrot.lane.b32.xlu0 %v581, 70
  %v2126 = vpop.permute.xlu0 %2125
  %2127 = vrot.lane.b32.xlu0 %v584, 70
  %v2128 = vpop.permute.xlu0 %2127
  %2129 = vrot.lane.b32.xlu0 %v938, 70
  %v2130 = vpop.permute.xlu0 %2129
  %2131 = vrot.lane.b32.xlu0 %v1207, 70
  %v2132 = vpop.permute.xlu0 %2131
  %2133 = vrot.lane.b32.xlu0 %v1206, 70
  %v2134 = vpop.permute.xlu0 %2133
  %2135 = vrot.lane.b32.xlu0 %v1748, 70
  %v2136 = vpop.permute.xlu0 %2135
  %2137 = vrot.lane.b32.xlu0 %v1747, 70
  %v2138 = vpop.permute.xlu0 %2137
  %2139 = vrot.lane.b32.xlu0 %v2098, 70
  %v2140 = vpop.permute.xlu0 %2139
  %2141 = vrot.lane.b32.xlu0 %v2097, 70
  %v2142 = vpop.permute.xlu0 %2141
  %v2165 = vrot.slane %v382, 3
  %v2166 = vrot.slane %v383, 3
  %v2167 = vsel %vm634, %v2165, %v2166
  %v2168 = vrot.slane %v406, 3
  %v2169 = vrot.slane %v407, 3
  %v2170 = vsel %vm634, %v2168, %v2169
  %2171 = vrot.lane.b32.xlu0 %v648, 80
  %v2172 = vpop.permute.xlu0 %2171
  %2173 = vrot.lane.b32.xlu0 %v651, 80
  %v2174 = vpop.permute.xlu0 %2173
  %2175 = vrot.lane.b32.xlu0 %v654, 80
  %v2176 = vpop.permute.xlu0 %2175
  %2177 = vrot.lane.b32.xlu0 %v657, 80
  %v2178 = vpop.permute.xlu0 %2177
  %2179 = vrot.lane.b32.xlu0 %v989, 80
  %v2180 = vpop.permute.xlu0 %2179
  %2181 = vrot.lane.b32.xlu0 %v1258, 80
  %v2182 = vpop.permute.xlu0 %2181
  %2183 = vrot.lane.b32.xlu0 %v1257, 80
  %v2184 = vpop.permute.xlu0 %2183
  %2185 = vrot.lane.b32.xlu0 %v1817, 80
  %v2186 = vpop.permute.xlu0 %2185
  %2187 = vrot.lane.b32.xlu0 %v1816, 80
  %v2188 = vpop.permute.xlu0 %2187
  %2189 = vrot.lane.b32.xlu0 %v2167, 80
  %v2190 = vpop.permute.xlu0 %2189
  %2191 = vrot.lane.b32.xlu0 %v2166, 80
  %v2192 = vpop.permute.xlu0 %2191
  %2193 = vrot.lane.b32.xlu0 %v672, 80
  %v2194 = vpop.permute.xlu0 %2193
  %2195 = vrot.lane.b32.xlu0 %v675, 80
  %v2196 = vpop.permute.xlu0 %2195
  %2197 = vrot.lane.b32.xlu0 %v678, 80
  %v2198 = vpop.permute.xlu0 %2197
  %2199 = vrot.lane.b32.xlu0 %v681, 80
  %v2200 = vpop.permute.xlu0 %2199
  %2201 = vrot.lane.b32.xlu0 %v992, 80
  %v2202 = vpop.permute.xlu0 %2201
  %2203 = vrot.lane.b32.xlu0 %v1261, 80
  %v2204 = vpop.permute.xlu0 %2203
  %2205 = vrot.lane.b32.xlu0 %v1260, 80
  %v2206 = vpop.permute.xlu0 %2205
  %2207 = vrot.lane.b32.xlu0 %v1820, 80
  %v2208 = vpop.permute.xlu0 %2207
  %2209 = vrot.lane.b32.xlu0 %v1819, 80
  %v2210 = vpop.permute.xlu0 %2209
  %2211 = vrot.lane.b32.xlu0 %v2170, 80
  %v2212 = vpop.permute.xlu0 %2211
  %2213 = vrot.lane.b32.xlu0 %v2169, 80
  %v2214 = vpop.permute.xlu0 %2213
  %v2237 = vsel %vm1414, %v367, %v1678
  %v2238 = vsel %vm1414, %v369, %v1680
  %v2239 = vsel %vm1414, %v371, %v1682
  %v2240 = vsel %vm1414, %v373, %v1684
  %v2241 = vsel %vm1414, %v375, %v1686
  %v2242 = vsel %vm1414, %v376, %v1688
  %v2243 = vsel %vm1414, %v377, %v1690
  %v2244 = vsel %vm1414, %v378, %v1692
  %v2245 = vsel %vm1414, %v379, %v1694
  %v2246 = vsel %vm1414, %v380, %v1696
  %v2247 = vsel %vm1414, %v381, %v1698
  %v2248 = vsel %vm1414, %v391, %v1700
  %v2249 = vsel %vm1414, %v393, %v1702
  %v2250 = vsel %vm1414, %v395, %v1704
  %v2251 = vsel %vm1414, %v397, %v1706
  %v2252 = vsel %vm1414, %v399, %v1708
  %v2253 = vsel %vm1414, %v400, %v1710
  %v2254 = vsel %vm1414, %v401, %v1712
  %v2255 = vsel %vm1414, %v402, %v1714
  %v2256 = vsel %vm1414, %v403, %v1716
  %v2257 = vsel %vm1414, %v404, %v1718
  %v2258 = vsel %vm1414, %v405, %v1720
  %v2259 = vsel %vm1431, %v2237, %v1750
  %v2260 = vsel %vm1431, %v2238, %v1752
  %v2261 = vsel %vm1431, %v2239, %v1754
  %v2262 = vsel %vm1431, %v2240, %v1756
  %v2263 = vsel %vm1431, %v2241, %v1758
  %v2264 = vsel %vm1431, %v2242, %v1760
  %v2265 = vsel %vm1431, %v2243, %v1762
  %v2266 = vsel %vm1431, %v2244, %v1764
  %v2267 = vsel %vm1431, %v2245, %v1766
  %v2268 = vsel %vm1431, %v2246, %v1768
  %v2269 = vsel %vm1431, %v2247, %v1770
  %v2270 = vsel %vm1431, %v2248, %v1772
  %v2271 = vsel %vm1431, %v2249, %v1774
  %v2272 = vsel %vm1431, %v2250, %v1776
  %v2273 = vsel %vm1431, %v2251, %v1778
  %v2274 = vsel %vm1431, %v2252, %v1780
  %v2275 = vsel %vm1431, %v2253, %v1782
  %v2276 = vsel %vm1431, %v2254, %v1784
  %v2277 = vsel %vm1431, %v2255, %v1786
  %v2278 = vsel %vm1431, %v2256, %v1788
  %v2279 = vsel %vm1431, %v2257, %v1790
  %v2280 = vsel %vm1431, %v2258, %v1792
  %v2281 = vsel %vm1448, %v2259, %v1822
  %v2282 = vsel %vm1448, %v2260, %v1824
  %v2283 = vsel %vm1448, %v2261, %v1826
  %v2284 = vsel %vm1448, %v2262, %v1828
  %v2285 = vsel %vm1448, %v2263, %v1830
  %v2286 = vsel %vm1448, %v2264, %v1832
  %v2287 = vsel %vm1448, %v2265, %v1834
  %v2288 = vsel %vm1448, %v2266, %v1836
  %v2289 = vsel %vm1448, %v2267, %v1838
  %v2290 = vsel %vm1448, %v2268, %v1840
  %v2291 = vsel %vm1448, %v2269, %v1842
  %v2292 = vsel %vm1448, %v2270, %v1844
  %v2293 = vsel %vm1448, %v2271, %v1846
  %v2294 = vsel %vm1448, %v2272, %v1848
  %v2295 = vsel %vm1448, %v2273, %v1850
  %v2296 = vsel %vm1448, %v2274, %v1852
  %v2297 = vsel %vm1448, %v2275, %v1854
  %v2298 = vsel %vm1448, %v2276, %v1856
  %v2299 = vsel %vm1448, %v2277, %v1858
  %v2300 = vsel %vm1448, %v2278, %v1860
  %v2301 = vsel %vm1448, %v2279, %v1862
  %v2302 = vsel %vm1448, %v2280, %v1864
  %v2303 = vsel %vm1465, %v1452, %v1906
  %v2304 = vsel %vm1465, %v2281, %v1906
  %v2305 = vsel %vm1465, %v1453, %v1908
  %v2306 = vsel %vm1465, %v2282, %v1908
  %v2307 = vsel %vm1465, %v1454, %v1910
  %v2308 = vsel %vm1465, %v2283, %v1910
  %v2309 = vsel %vm1465, %v1455, %v1912
  %v2310 = vsel %vm1465, %v2284, %v1912
  %v2311 = vsel %vm1465, %v1456, %v1914
  %v2312 = vsel %vm1465, %v2285, %v1914
  %v2313 = vsel %vm1465, %v2286, %v1916
  %v2314 = vsel %vm1465, %v2287, %v1916
  %v2315 = vsel %vm1465, %v2288, %v1918
  %v2316 = vsel %vm1465, %v2289, %v1918
  %v2317 = vsel %vm1465, %v2290, %v1920
  %v2318 = vsel %vm1465, %v2291, %v1920
  %v2319 = vsel %vm1465, %v1460, %v1922
  %v2320 = vsel %vm1465, %v2292, %v1922
  %v2321 = vsel %vm1465, %v1461, %v1924
  %v2322 = vsel %vm1465, %v2293, %v1924
  %v2323 = vsel %vm1465, %v1462, %v1926
  %v2324 = vsel %vm1465, %v2294, %v1926
  %v2325 = vsel %vm1465, %v1463, %v1928
  %v2326 = vsel %vm1465, %v2295, %v1928
  %v2327 = vsel %vm1465, %v1464, %v1930
  %v2328 = vsel %vm1465, %v2296, %v1930
  %v2329 = vsel %vm1465, %v2297, %v1932
  %v2330 = vsel %vm1465, %v2298, %v1932
  %v2331 = vsel %vm1465, %v2299, %v1934
  %v2332 = vsel %vm1465, %v2300, %v1934
  %v2333 = vsel %vm1465, %v2301, %v1936
  %v2334 = vsel %vm1465, %v2302, %v1936
  %v2335 = vsel %vm1482, %v2303, %v837
  %v2336 = vsel %vm1482, %v2304, %v1956
  %v2337 = vsel %vm1482, %v2305, %v839
  %v2338 = vsel %vm1482, %v2306, %v1958
  %v2339 = vsel %vm1482, %v2307, %v841
  %v2340 = vsel %vm1482, %v2308, %v1960
  %v2341 = vsel %vm1482, %v2309, %v843
  %v2342 = vsel %vm1482, %v2310, %v1962
  %v2343 = vsel %vm1482, %v2311, %v845
  %v2344 = vsel %vm1482, %v2312, %v1964
  %v2345 = vsel %vm1482, %v2313, %v1966
  %v2346 = vsel %vm1482, %v2314, %v1968
  %v2347 = vsel %vm1482, %v2315, %v1970
  %v2348 = vsel %vm1482, %v2316, %v1972
  %v2349 = vsel %vm1482, %v2317, %v1974
  %v2350 = vsel %vm1482, %v2318, %v1976
  %v2351 = vsel %vm1482, %v2319, %v853
  %v2352 = vsel %vm1482, %v2320, %v1978
  %v2353 = vsel %vm1482, %v2321, %v855
  %v2354 = vsel %vm1482, %v2322, %v1980
  %v2355 = vsel %vm1482, %v2323, %v857
  %v2356 = vsel %vm1482, %v2324, %v1982
  %v2357 = vsel %vm1482, %v2325, %v859
  %v2358 = vsel %vm1482, %v2326, %v1984
  %v2359 = vsel %vm1482, %v2327, %v861
  %v2360 = vsel %vm1482, %v2328, %v1986
  %v2361 = vsel %vm1482, %v2329, %v1988
  %v2362 = vsel %vm1482, %v2330, %v1990
  %v2363 = vsel %vm1482, %v2331, %v1992
  %v2364 = vsel %vm1482, %v2332, %v1994
  %v2365 = vsel %vm1482, %v2333, %v1996
  %v2366 = vsel %vm1482, %v2334, %v1998
  %v2367 = vsel %vm1499, %v2335, %v893
  %v2368 = vsel %vm1499, %v2336, %v2028
  %v2369 = vsel %vm1499, %v2337, %v895
  %v2370 = vsel %vm1499, %v2338, %v2030
  %v2371 = vsel %vm1499, %v2339, %v897
  %v2372 = vsel %vm1499, %v2340, %v2032
  %v2373 = vsel %vm1499, %v2341, %v899
  %v2374 = vsel %vm1499, %v2342, %v2034
  %v2375 = vsel %vm1499, %v2343, %v901
  %v2376 = vsel %vm1499, %v2344, %v2036
  %v2377 = vsel %vm1499, %v2345, %v2038
  %v2378 = vsel %vm1499, %v2346, %v2040
  %v2379 = vsel %vm1499, %v2347, %v2042
  %v2380 = vsel %vm1499, %v2348, %v2044
  %v2381 = vsel %vm1499, %v2349, %v2046
  %v2382 = vsel %vm1499, %v2350, %v2048
  %v2383 = vsel %vm1499, %v2351, %v909
  %v2384 = vsel %vm1499, %v2352, %v2050
  %v2385 = vsel %vm1499, %v2353, %v911
  %v2386 = vsel %vm1499, %v2354, %v2052
  %v2387 = vsel %vm1499, %v2355, %v913
  %v2388 = vsel %vm1499, %v2356, %v2054
  %v2389 = vsel %vm1499, %v2357, %v915
  %v2390 = vsel %vm1499, %v2358, %v2056
  %v2391 = vsel %vm1499, %v2359, %v917
  %v2392 = vsel %vm1499, %v2360, %v2058
  %v2393 = vsel %vm1499, %v2361, %v2060
  %v2394 = vsel %vm1499, %v2362, %v2062
  %v2395 = vsel %vm1499, %v2363, %v2064
  %v2396 = vsel %vm1499, %v2364, %v2066
  %v2397 = vsel %vm1499, %v2365, %v2068
  %v2398 = vsel %vm1499, %v2366, %v2070
  %v2399 = vsel %vm1516, %v2367, %v947
  %v2400 = vsel %vm1516, %v2368, %v2100
  %v2401 = vsel %vm1516, %v2369, %v949
  %v2402 = vsel %vm1516, %v2370, %v2102
  %v2403 = vsel %vm1516, %v2371, %v951
  %v2404 = vsel %vm1516, %v2372, %v2104
  %v2405 = vsel %vm1516, %v2373, %v953
  %v2406 = vsel %vm1516, %v2374, %v2106
  %v2407 = vsel %vm1516, %v2375, %v955
  %v2408 = vsel %vm1516, %v2376, %v2108
  %v2409 = vsel %vm1516, %v2377, %v2110
  %v2410 = vsel %vm1516, %v2378, %v2112
  %v2411 = vsel %vm1516, %v2379, %v2114
  %v2412 = vsel %vm1516, %v2380, %v2116
  %v2413 = vsel %vm1516, %v2381, %v2118
  %v2414 = vsel %vm1516, %v2382, %v2120
  %v2415 = vsel %vm1516, %v2383, %v963
  %v2416 = vsel %vm1516, %v2384, %v2122
  %v2417 = vsel %vm1516, %v2385, %v965
  %v2418 = vsel %vm1516, %v2386, %v2124
  %v2419 = vsel %vm1516, %v2387, %v967
  %v2420 = vsel %vm1516, %v2388, %v2126
  %v2421 = vsel %vm1516, %v2389, %v969
  %v2422 = vsel %vm1516, %v2390, %v2128
  %v2423 = vsel %vm1516, %v2391, %v971
  %v2424 = vsel %vm1516, %v2392, %v2130
  %v2425 = vsel %vm1516, %v2393, %v2132
  %v2426 = vsel %vm1516, %v2394, %v2134
  %v2427 = vsel %vm1516, %v2395, %v2136
  %v2428 = vsel %vm1516, %v2396, %v2138
  %v2429 = vsel %vm1516, %v2397, %v2140
  %v2430 = vsel %vm1516, %v2398, %v2142
  %v2431 = vsel %vm1533, %v2399, %v1001
  %v2432 = vsel %vm1533, %v2400, %v2172
  %v2433 = vsel %vm1533, %v2401, %v1003
  %v2434 = vsel %vm1533, %v2402, %v2174
  %v2435 = vsel %vm1533, %v2403, %v1005
  %v2436 = vsel %vm1533, %v2404, %v2176
  %v2437 = vsel %vm1533, %v2405, %v1007
  %v2438 = vsel %vm1533, %v2406, %v2178
  %v2439 = vsel %vm1533, %v2407, %v1009
  %v2440 = vsel %vm1533, %v2408, %v2180
  %v2441 = vsel %vm1533, %v2409, %v2182
  %v2442 = vsel %vm1533, %v2410, %v2184
  %v2443 = vsel %vm1533, %v2411, %v2186
  %v2444 = vsel %vm1533, %v2412, %v2188
  %v2445 = vsel %vm1533, %v2413, %v2190
  %v2446 = vsel %vm1533, %v2414, %v2192
  %v2447 = vsel %vm1533, %v2415, %v1017
  %v2448 = vsel %vm1533, %v2416, %v2194
  %v2449 = vsel %vm1533, %v2417, %v1019
  %v2450 = vsel %vm1533, %v2418, %v2196
  %v2451 = vsel %vm1533, %v2419, %v1021
  %v2452 = vsel %vm1533, %v2420, %v2198
  %v2453 = vsel %vm1533, %v2421, %v1023
  %v2454 = vsel %vm1533, %v2422, %v2200
  %v2455 = vsel %vm1533, %v2423, %v1025
  %v2456 = vsel %vm1533, %v2424, %v2202
  %v2457 = vsel %vm1533, %v2425, %v2204
  %v2458 = vsel %vm1533, %v2426, %v2206
  %v2459 = vsel %vm1533, %v2427, %v2208
  %v2460 = vsel %vm1533, %v2428, %v2210
  %v2461 = vsel %vm1533, %v2429, %v2212
  %v2462 = vsel %vm1533, %v2430, %v2214
  %v2495 = vrot.slane %v2431, 1
  %v2496 = vrot.slane %v2432, 1
  %v2497 = vsel %vm440, %v2495, %v2496
  %v2498 = vrot.slane %v2433, 1
  %v2499 = vrot.slane %v2434, 1
  %v2500 = vsel %vm440, %v2498, %v2499
  %v2501 = vrot.slane %v2435, 1
  %v2502 = vrot.slane %v2436, 1
  %v2503 = vsel %vm440, %v2501, %v2502
  %v2504 = vrot.slane %v2437, 1
  %v2505 = vrot.slane %v2438, 1
  %v2506 = vsel %vm440, %v2504, %v2505
  %v2507 = vrot.slane %v2439, 1
  %v2508 = vrot.slane %v2440, 1
  %v2509 = vsel %vm440, %v2507, %v2508
  %v2510 = vrot.slane %v2441, 1
  %v2511 = vrot.slane %v2442, 1
  %v2512 = vsel %vm440, %v2510, %v2511
  %v2513 = vrot.slane %v2443, 1
  %v2514 = vrot.slane %v2444, 1
  %v2515 = vsel %vm440, %v2513, %v2514
  %v2516 = vrot.slane %v2445, 1
  %v2517 = vrot.slane %v2446, 1
  %v2518 = vsel %vm440, %v2516, %v2517
  %v2519 = vrot.slane %v2447, 1
  %v2520 = vrot.slane %v2448, 1
  %v2521 = vsel %vm440, %v2519, %v2520
  %v2522 = vrot.slane %v2449, 1
  %v2523 = vrot.slane %v2450, 1
  %v2524 = vsel %vm440, %v2522, %v2523
  %v2525 = vrot.slane %v2451, 1
  %v2526 = vrot.slane %v2452, 1
  %v2527 = vsel %vm440, %v2525, %v2526
  %v2528 = vrot.slane %v2453, 1
  %v2529 = vrot.slane %v2454, 1
  %v2530 = vsel %vm440, %v2528, %v2529
  %v2531 = vrot.slane %v2455, 1
  %v2532 = vrot.slane %v2456, 1
  %v2533 = vsel %vm440, %v2531, %v2532
  %v2534 = vrot.slane %v2457, 1
  %v2535 = vrot.slane %v2458, 1
  %v2536 = vsel %vm440, %v2534, %v2535
  %v2537 = vrot.slane %v2459, 1
  %v2538 = vrot.slane %v2460, 1
  %v2539 = vsel %vm440, %v2537, %v2538
  %v2540 = vrot.slane %v2461, 1
  %v2541 = vrot.slane %v2462, 1
  %v2542 = vsel %vm440, %v2540, %v2541
  %2543 = vrot.lane.b32.xlu0 %v2497, 32
  %v2544 = vpop.permute.xlu0 %2543
  %2545 = vrot.lane.b32.xlu0 %v2500, 32
  %v2546 = vpop.permute.xlu0 %2545
  %2547 = vrot.lane.b32.xlu0 %v2503, 32
  %v2548 = vpop.permute.xlu0 %2547
  %2549 = vrot.lane.b32.xlu0 %v2506, 32
  %v2550 = vpop.permute.xlu0 %2549
  %2551 = vrot.lane.b32.xlu0 %v2509, 32
  %v2552 = vpop.permute.xlu0 %2551
  %2553 = vrot.lane.b32.xlu0 %v2512, 32
  %v2554 = vpop.permute.xlu0 %2553
  %2555 = vrot.lane.b32.xlu0 %v2515, 32
  %v2556 = vpop.permute.xlu0 %2555
  %2557 = vrot.lane.b32.xlu0 %v2518, 32
  %v2558 = vpop.permute.xlu0 %2557
  %2559 = vrot.lane.b32.xlu0 %v2521, 32
  %v2560 = vpop.permute.xlu0 %2559
  %2561 = vrot.lane.b32.xlu0 %v2524, 32
  %v2562 = vpop.permute.xlu0 %2561
  %2563 = vrot.lane.b32.xlu0 %v2527, 32
  %v2564 = vpop.permute.xlu0 %2563
  %2565 = vrot.lane.b32.xlu0 %v2530, 32
  %v2566 = vpop.permute.xlu0 %2565
  %2567 = vrot.lane.b32.xlu0 %v2533, 32
  %v2568 = vpop.permute.xlu0 %2567
  %2569 = vrot.lane.b32.xlu0 %v2536, 32
  %v2570 = vpop.permute.xlu0 %2569
  %2571 = vrot.lane.b32.xlu0 %v2539, 32
  %v2572 = vpop.permute.xlu0 %2571
  %2573 = vrot.lane.b32.xlu0 %v2542, 32
  %v2574 = vpop.permute.xlu0 %2573
  %vm2591 = vcmask 261120
  %v2592 = vsel %vm2591, %v1653, %v2544
  %v2593 = vsel %vm2591, %v1654, %v2546
  %v2594 = vsel %vm2591, %v1655, %v2548
  %v2595 = vsel %vm2591, %v1656, %v2550
  %v2596 = vsel %vm2591, %v1657, %v2552
  %v2597 = vsel %vm2591, %v1658, %v2554
  %v2598 = vsel %vm2591, %v1659, %v2556
  %v2599 = vsel %vm2591, %v1660, %v2558
  %v2600 = vsel %vm2591, %v1661, %v2560
  %v2601 = vsel %vm2591, %v1662, %v2562
  %v2602 = vsel %vm2591, %v1663, %v2564
  %v2603 = vsel %vm2591, %v1664, %v2566
  %v2604 = vsel %vm2591, %v1665, %v2568
  %v2605 = vsel %vm2591, %v1666, %v2570
  %v2606 = vsel %vm2591, %v1667, %v2572
  %v2607 = vsel %vm2591, %v1668, %v2574
  %v2608 = vpack.c.bf16 %v1603, %v1602
  %v2609 = vpack.c.bf16 %v2593, %v2592
  %v2610 = vpack.c.bf16 %v1605, %v1604
  %v2611 = vpack.c.bf16 %v2595, %v2594
  %v2612 = vpack.c.bf16 %v1607, %v1606
  %v2613 = vpack.c.bf16 %v2597, %v2596
  %v2614 = vpack.c.bf16 %v1609, %v1608
  %v2615 = vpack.c.bf16 %v2599, %v2598
  %v2616 = vpack.c.bf16 %v1611, %v1610
  %v2617 = vpack.c.bf16 %v2601, %v2600
  %v2618 = vpack.c.bf16 %v1613, %v1612
  %v2619 = vpack.c.bf16 %v2603, %v2602
  %v2620 = vpack.c.bf16 %v1615, %v1614
  %v2621 = vpack.c.bf16 %v2605, %v2604
  %v2622 = vpack.c.bf16 %v1617, %v1616
  %v2623 = vpack.c.bf16 %v2607, %v2606
  %v2624 = vld [vmem:[%s4] sm:$0xf]
  %v2625 = vld [vmem:[%s4 + $0x4] sm:$0xf]
  %v2626 = vld [vmem:[%s4 + $0x8] sm:$0xf]
  %v2627 = vld [vmem:[%s4 + $0xc] sm:$0xf]
  %v2628 = vld [vmem:[%s4 + $0x10] sm:$0xf]
  %v2629 = vld [vmem:[%s4 + $0x14] sm:$0xf]
  %v2630 = vld [vmem:[%s4 + $0x18] sm:$0xf]
  %v2631 = vld [vmem:[%s4 + $0x1c] sm:$0xf]
  %v2632 = vld [vmem:[%s4 + $0x20] sm:$0xf]
  %v2633 = vld [vmem:[%s4 + $0x24] sm:$0xf]
  %v2634 = vld [vmem:[%s4 + $0x28] sm:$0xf]
  %v2635 = vld [vmem:[%s4 + $0x2c] sm:$0xf]
  %v2636 = vld [vmem:[%s4 + $0x30] sm:$0xf]
  %v2637 = vld [vmem:[%s4 + $0x34] sm:$0xf]
  %v2638 = vld [vmem:[%s4 + $0x38] sm:$0xf]
  %v2639 = vld [vmem:[%s4 + $0x3c] sm:$0xf]
  %v2640 = vld [vmem:[%s4 + $0x40] sm:$0xf]
  %v2641 = vld [vmem:[%s4 + $0x44] sm:$0xf]
  %v2642 = vld [vmem:[%s4 + $0x48] sm:$0xf]
  %v2643 = vld [vmem:[%s4 + $0x4c] sm:$0xf]
  %v2644 = vld [vmem:[%s4 + $0x50] sm:$0xf]
  %v2645 = vld [vmem:[%s4 + $0x54] sm:$0xf]
  %v2646 = vld [vmem:[%s4 + $0x58] sm:$0xf]
  %v2647 = vld [vmem:[%s4 + $0x5c] sm:$0xf]
  %v2648 = vld [vmem:[%s4 + $0x60] sm:$0xf]
  %v2649 = vld [vmem:[%s4 + $0x64] sm:$0xf]
  %v2650 = vld [vmem:[%s4 + $0x68] sm:$0xf]
  %v2651 = vld [vmem:[%s4 + $0x6c] sm:$0xf]
  %v2652 = vld [vmem:[%s4 + $0x70] sm:$0xf]
  %v2653 = vld [vmem:[%s4 + $0x74] sm:$0xf]
  %v2654 = vld [vmem:[%s4 + $0x78] sm:$0xf]
  %v2655 = vld [vmem:[%s4 + $0x7c] sm:$0x1]
  %v2656 = vld [vmem:[%s5] sm:$0x1]
  %v2658 = vlaneseq
  %v2659 = vshrl.u32 %v2658, 7
  %v2660 = vsub.s32 0, %v2659
  %v2661 = vrot.slane %v2656, %v2660
  %v2695 = vunpack.c.l.b16 %v2624
  %v2696 = vunpack.c.l.b16 %v2625
  %v2697 = vunpack.c.l.b16 %v2626
  %v2698 = vunpack.c.l.b16 %v2627
  %v2699 = vunpack.c.l.b16 %v2628
  %v2700 = vunpack.c.l.b16 %v2629
  %v2701 = vunpack.c.l.b16 %v2630
  %v2702 = vunpack.c.l.b16 %v2631
  %v2703 = vunpack.c.l.b16 %v2632
  %v2704 = vunpack.c.l.b16 %v2633
  %v2705 = vunpack.c.l.b16 %v2634
  %v2706 = vunpack.c.l.b16 %v2635
  %v2707 = vunpack.c.l.b16 %v2636
  %v2708 = vunpack.c.l.b16 %v2637
  %v2709 = vunpack.c.l.b16 %v2638
  %v2710 = vunpack.c.l.b16 %v2639
  %v2711 = vunpack.c.l.b16 %v2640
  %v2712 = vunpack.c.l.b16 %v2641
  %v2713 = vunpack.c.l.b16 %v2642
  %v2714 = vunpack.c.l.b16 %v2643
  %v2715 = vunpack.c.l.b16 %v2644
  %v2716 = vunpack.c.l.b16 %v2645
  %v2717 = vunpack.c.l.b16 %v2646
  %v2718 = vunpack.c.l.b16 %v2647
  %v2719 = vunpack.c.l.b16 %v2648
  %v2720 = vunpack.c.l.b16 %v2649
  %v2721 = vunpack.c.l.b16 %v2650
  %v2722 = vunpack.c.l.b16 %v2651
  %v2723 = vunpack.c.l.b16 %v2652
  %v2724 = vunpack.c.l.b16 %v2653
  %v2725 = vunpack.c.l.b16 %v2654
  %v2726 = vunpack.c.l.b16 %v2655
  %v2727 = vpack.c.b16 %v2696, %v2695
  %v2728 = vpack.c.b16 %v2698, %v2697
  %v2729 = vpack.c.b16 %v2700, %v2699
  %v2730 = vpack.c.b16 %v2702, %v2701
  %v2731 = vpack.c.b16 %v2704, %v2703
  %v2732 = vpack.c.b16 %v2706, %v2705
  %v2733 = vpack.c.b16 %v2708, %v2707
  %v2734 = vpack.c.b16 %v2710, %v2709
  %v2735 = vpack.c.b16 %v2712, %v2711
  %v2736 = vpack.c.b16 %v2714, %v2713
  %v2737 = vpack.c.b16 %v2716, %v2715
  %v2738 = vpack.c.b16 %v2718, %v2717
  %v2739 = vpack.c.b16 %v2720, %v2719
  %v2740 = vpack.c.b16 %v2722, %v2721
  %v2741 = vpack.c.b16 %v2724, %v2723
  %v2742 = vpack.c.b16 %v2726, %v2725
  %vm2758 = vcmask 998400
  %v2760 = vsel %vm2758, %v2609, 0
  %v2763 = vsel %vm2758, %v2611, 0
  %v2766 = vsel %vm2758, %v2613, 0
  %v2769 = vsel %vm2758, %v2615, 0
  %v2772 = vsel %vm2758, %v2617, 0
  %v2775 = vsel %vm2758, %v2619, 0
  %v2778 = vsel %vm2758, %v2621, 0
  %v2781 = vsel %vm2758, %v2623, 0
  %v2784 = vsel %vm634, %v2742, 0
  %2786 = vmatprep.subr.bf16.mxu0 0
  %2787 = vmatpush1.bf16.msra.mxu0 %v2727
  %2788 = vmatprep.subr.bf16.mxu0 0
  %2789 = vmatpush1.bf16.msra.mxu0 %v2728
  %2790 = vmatprep.subr.bf16.mxu0 0
  %2791 = vmatpush1.bf16.msra.mxu0 %v2729
  %2792 = vmatprep.subr.bf16.mxu0 0
  %2793 = vmatpush1.bf16.msra.mxu0 %v2730
  %2794 = vmatprep.subr.bf16.mxu0 0
  %2795 = vmatpush1.bf16.msra.mxu0 %v2731
  %2796 = vmatprep.subr.bf16.mxu0 0
  %2797 = vmatpush1.bf16.msra.mxu0 %v2732
  %2798 = vmatprep.subr.bf16.mxu0 0
  %2799 = vmatpush1.bf16.msra.mxu0 %v2733
  %2800 = vmatprep.subr.bf16.mxu0 0
  %2801 = vmatpush1.bf16.msra.mxu0 %v2734
  %2802 = vmatprep.subr.bf16.mxu0 0
  %2803 = vmatpush1.bf16.msra.mxu0 %v2735
  %2804 = vmatprep.subr.bf16.mxu0 0
  %2805 = vmatpush1.bf16.msra.mxu0 %v2736
  %2806 = vmatprep.subr.bf16.mxu0 0
  %2807 = vmatpush1.bf16.msra.mxu0 %v2737
  %2808 = vmatprep.subr.bf16.mxu0 0
  %2809 = vmatpush1.bf16.msra.mxu0 %v2738
  %2810 = vmatprep.subr.bf16.mxu0 0
  %2811 = vmatpush1.bf16.msra.mxu0 %v2739
  %2812 = vmatprep.subr.bf16.mxu0 0
  %2813 = vmatpush1.bf16.msra.mxu0 %v2740
  %2814 = vmatprep.subr.bf16.mxu0 0
  %2815 = vmatpush1.bf16.msra.mxu0 %v2741
  %2816 = vmatprep.subr.bf16.mxu0 0
  %2817 = vmatpush1.bf16.msra.mxu0 %v2784
  %2818 = vmatprep.mubr.bf16.mxu0 %v2760
  %2819 = vmatmul.mubr.bf16.gmra.mrb[0].mxu0 %v2608
  %v2820 = vpop.f32.mrb[0].mxu0
  %v2821 = vadd.f32 %v2661, %v2820
  %v2822 = vpop.f32.mrb[0].mxu0
  %v2823 = vpop.f32.mrb[0].mxu0
  %v2824 = vadd.f32 %v2661, %v2823
  %v2825 = vpop.f32.mrb[0].mxu0
  %2826 = vmatprep.mubr.bf16.mxu0 %v2763
  %2827 = vmatmul.mubr.bf16.gmra.mrb[0].mxu0 %v2610
  %v2828 = vpop.f32.mrb[0].mxu0
  %v2829 = vadd.f32 %v2661, %v2828
  %v2830 = vpop.f32.mrb[0].mxu0
  %v2831 = vpop.f32.mrb[0].mxu0
  %v2832 = vadd.f32 %v2661, %v2831
  %v2833 = vpop.f32.mrb[0].mxu0
  %2834 = vmatprep.mubr.bf16.mxu0 %v2766
  %2835 = vmatmul.mubr.bf16.gmra.mrb[0].mxu0 %v2612
  %v2836 = vpop.f32.mrb[0].mxu0
  %v2837 = vadd.f32 %v2661, %v2836
  %v2838 = vpop.f32.mrb[0].mxu0
  %v2839 = vpop.f32.mrb[0].mxu0
  %v2840 = vadd.f32 %v2661, %v2839
  %v2841 = vpop.f32.mrb[0].mxu0
  %2842 = vmatprep.mubr.bf16.mxu0 %v2769
  %2843 = vmatmul.mubr.bf16.gmra.mrb[0].mxu0 %v2614
  %v2844 = vpop.f32.mrb[0].mxu0
  %v2845 = vadd.f32 %v2661, %v2844
  %v2846 = vpop.f32.mrb[0].mxu0
  %v2847 = vpop.f32.mrb[0].mxu0
  %v2848 = vadd.f32 %v2661, %v2847
  %v2849 = vpop.f32.mrb[0].mxu0
  %2850 = vmatprep.mubr.bf16.mxu0 %v2772
  %2851 = vmatmul.mubr.bf16.gmra.mrb[0].mxu0 %v2616
  %v2852 = vpop.f32.mrb[0].mxu0
  %v2853 = vadd.f32 %v2661, %v2852
  %v2854 = vpop.f32.mrb[0].mxu0
  %v2855 = vpop.f32.mrb[0].mxu0
  %v2856 = vadd.f32 %v2661, %v2855
  %v2857 = vpop.f32.mrb[0].mxu0
  %2858 = vmatprep.mubr.bf16.mxu0 %v2775
  %2859 = vmatmul.mubr.bf16.gmra.mrb[0].mxu0 %v2618
  %v2860 = vpop.f32.mrb[0].mxu0
  %v2861 = vadd.f32 %v2661, %v2860
  %v2862 = vpop.f32.mrb[0].mxu0
  %v2863 = vpop.f32.mrb[0].mxu0
  %v2864 = vadd.f32 %v2661, %v2863
  %v2865 = vpop.f32.mrb[0].mxu0
  %2866 = vmatprep.mubr.bf16.mxu0 %v2778
  %2867 = vmatmul.mubr.bf16.gmra.mrb[0].mxu0 %v2620
  %v2868 = vpop.f32.mrb[0].mxu0
  %v2869 = vadd.f32 %v2661, %v2868
  %v2870 = vpop.f32.mrb[0].mxu0
  %v2871 = vpop.f32.mrb[0].mxu0
  %v2872 = vadd.f32 %v2661, %v2871
  %v2873 = vpop.f32.mrb[0].mxu0
  %2874 = vmatprep.mubr.bf16.mxu0 %v2781
  %2875 = vmatmul.mubr.bf16.gmra.mrb[0].mxu0 %v2622
  %v2876 = vpop.f32.mrb[0].mxu0
  %v2877 = vadd.f32 %v2661, %v2876
  %v2878 = vpop.f32.mrb[0].mxu0
  %v2879 = vpop.f32.mrb[0].mxu0
  %v2880 = vadd.f32 %v2661, %v2879
  %v2881 = vpop.f32.mrb[0].mxu0
  %2882 = vdwg.mxu0
  %2883 = vst [vmem:[%s6] sm:$0xff] %v2821
  %2884 = vst [vmem:[%s6 + $0x8] sm:$0xff] %v2824
  %2885 = vst [vmem:[%s6 + $0x10] sm:$0xff] %v2829
  %2886 = vst [vmem:[%s6 + $0x18] sm:$0xff] %v2832
  %2887 = vst [vmem:[%s6 + $0x20] sm:$0xff] %v2837
  %2888 = vst [vmem:[%s6 + $0x28] sm:$0xff] %v2840
  %2889 = vst [vmem:[%s6 + $0x30] sm:$0xff] %v2845
  %2890 = vst [vmem:[%s6 + $0x38] sm:$0xff] %v2848
  %2891 = vst [vmem:[%s6 + $0x40] sm:$0xff] %v2853
  %2892 = vst [vmem:[%s6 + $0x48] sm:$0xff] %v2856
  %2893 = vst [vmem:[%s6 + $0x50] sm:$0xff] %v2861
  %2894 = vst [vmem:[%s6 + $0x58] sm:$0xff] %v2864
  %2895 = vst [vmem:[%s6 + $0x60] sm:$0xff] %v2869
  %2896 = vst [vmem:[%s6 + $0x68] sm:$0xff] %v2872
  %2897 = vst [vmem:[%s6 + $0x70] sm:$0xff] %v2877
  %2898 = vst [vmem:[%s6 + $0x78] sm:$0xff] %v2880
  // Predicated region
  $region26: #{cnn_mnist_forward.4} parent=0 // pred_check
    _
  $region27: #{cnn_mnist_forward.4} parent=0 // pred_check_branch
    %2900 = sbr.rel (0) target = $region29
  $region28: #{cnn_mnist_forward.4} parent=0 // pred_region
    _
  $region29: #{cnn_mnist_forward.4} parent=0 // pred_fallthru
    _
  // Predicated region
  $region30: #{cnn_mnist_forward.4} parent=0 // pred_check
    _
  $region31: #{cnn_mnist_forward.4} parent=0 // pred_check_branch
    %2902 = sbr.rel (0) target = $region33
  $region32: #{cnn_mnist_forward.4} parent=0 // pred_region
    _
  $region33: #{cnn_mnist_forward.4} parent=0 // pred_fallthru
    _

// kernel: cnn_mnist_forward.3
$region0: #{cnn_mnist_forward.3}
  #allocation0 [shape = 'u32[]', space=smem, size = 0x4, offset = 0x4, fixed_abs, tag = 'smem constant byte address 0x4 - core index']
  #allocation1 [shape = 'u32[144,128]{1,0:T(1,128)}', space=vmem, size = 0x12000, scoped, tag = 'internal scratch']
  %s0 = inlined_call_operand.vmem [shape: f32[2,28,28,1], index: 0, kind: input, shape index: {}]
  %s1 = inlined_call_operand.vmem [shape: bf16[25,128], index: 1, kind: input, shape index: {}]
  %s2 = inlined_call_operand.vmem [shape: f32[1,128], index: 2, kind: input, shape index: {}]
  %s3 = inlined_call_operand.vmem [shape: f32[1152,128], index: 3, kind: output, shape index: {}]
  %s4 = sld [smem:[#allocation0]]
  $region45: #{cnn_mnist_forward.3} parent=0
    _
  %s6 = ssub.s32 1, %s4
  %s7 = scalar_select 0, %s6, %s4
  loop: start=0, step=1, limit=4
  $region2: #{cnn_mnist_forward.3} parent=0 // loop_pre_header
    _
  $region3: #{cnn_mnist_forward.3} parent=0 // loop_header
    %s9 = sphi 0, %s13
    %p10 = scmp.ge.s32.totalorder %s9, 4
    %s19 = sphi 0, %s21
    %s22 = sphi 0, %s19
    %s23 = sphi 0, %s22
    %s39 = sphi 0, %s23
    %s43 = sphi 0, %s43
    %s45 = sphi 0, %s43
    %s46 = sphi 0, %s45
    %s60 = sphi 0, %s46
    %s64 = sphi 0, %s64
    %s66 = sphi 0, %s64
    %s67 = sphi 0, %s66
    %s81 = sphi 0, %s67
    %s87 = sphi 0, %s89
    %s90 = sphi 0, %s87
    %s91 = sphi 0, %s90
    %s107 = sphi 0, %s91
  $region4: #{cnn_mnist_forward.3} parent=0 // loop_header_branch
    %12 = sbr.rel (%p10) target = $region8
  $region5: #{cnn_mnist_forward.3} parent=0 // loop_body
    %s14 = ssub.s32 %s9, 1
    %s15 = ssub.s32 %s9, 2
    %s16 = sadd.s32 %s9, 1
    %s17 = ssub.s32 %s9, %s16
    %p18 = scmp.eq.s32.totalorder %s17, 0
    %s20 = sadd.s32 %s19, 1
    %s21 = scalar_select %p18, %s19, %s20
    %p24 = pneg %p18
    %p25 = scmp.eq.s32.totalorder %s9, 1
    %p26 = por %p24, %p25
    %p27 = scmp.ne.s32.totalorder %s19, %s22
    %p28 = scmp.eq.s32.totalorder %s9, 0
    %p29 = por %p27, %p28
    %p30 = scmp.ne.s32.totalorder %s19, %s22
    %p31 = scmp.eq.s32.totalorder %s14, 1
    %p32 = por %p30, %p31
    %p33 = scmp.ne.s32.totalorder %s22, %s23
    %p34 = scmp.eq.s32.totalorder %s14, 0
    %p35 = por %p33, %p34
    %p36 = scmp.ne.s32.totalorder %s22, %s23
    %p37 = scmp.eq.s32.totalorder %s15, 1
    %p38 = por %p36, %p37
    %p40 = scmp.ne.s32.totalorder %s23, %s39
    %p41 = scmp.eq.s32.totalorder %s15, 0
    %p42 = por %p40, %p41
    %s44 = sadd.s32 %s43, 1
    %p47 = scmp.eq.s32.totalorder %s9, 1
    %p48 = scmp.ne.s32.totalorder %s43, %s45
    %p49 = scmp.eq.s32.totalorder %s9, 0
    %p50 = por %p48, %p49
    %p51 = scmp.ne.s32.totalorder %s43, %s45
    %p52 = scmp.eq.s32.totalorder %s14, 1
    %p53 = por %p51, %p52
    %p54 = scmp.ne.s32.totalorder %s45, %s46
    %p55 = scmp.eq.s32.totalorder %s14, 0
    %p56 = por %p54, %p55
    %p57 = scmp.ne.s32.totalorder %s45, %s46
    %p58 = scmp.eq.s32.totalorder %s15, 1
    %p59 = por %p57, %p58
    %p61 = scmp.ne.s32.totalorder %s46, %s60
    %p62 = scmp.eq.s32.totalorder %s15, 0
    %p63 = por %p61, %p62
    %s65 = sadd.s32 %s64, 1
    %p68 = scmp.eq.s32.totalorder %s9, 1
    %p69 = scmp.ne.s32.totalorder %s64, %s66
    %p70 = scmp.eq.s32.totalorder %s9, 0
    %p71 = por %p69, %p70
    %p72 = scmp.ne.s32.totalorder %s64, %s66
    %p73 = scmp.eq.s32.totalorder %s14, 1
    %p74 = por %p72, %p73
    %p75 = scmp.ne.s32.totalorder %s66, %s67
    %p76 = scmp.eq.s32.totalorder %s14, 0
    %p77 = por %p75, %p76
    %p78 = scmp.ne.s32.totalorder %s66, %s67
    %p79 = scmp.eq.s32.totalorder %s15, 1
    %p80 = por %p78, %p79
    %p82 = scmp.ne.s32.totalorder %s67, %s81
    %p83 = scmp.eq.s32.totalorder %s15, 0
    %p84 = por %p82, %p83
    %s85 = ssub.s32 %s9, %s16
    %p86 = scmp.eq.s32.totalorder %s85, 0
    %s88 = sadd.s32 %s87, 1
    %s89 = scalar_select %p86, %s87, %s88
    %p92 = pneg %p86
    %p93 = scmp.eq.s32.totalorder %s9, 1
    %p94 = por %p92, %p93
    %p95 = scmp.ne.s32.totalorder %s87, %s90
    %p96 = scmp.eq.s32.totalorder %s9, 0
    %p97 = por %p95, %p96
    %p98 = scmp.ne.s32.totalorder %s87, %s90
    %p99 = scmp.eq.s32.totalorder %s14, 1
    %p100 = por %p98, %p99
    %p101 = scmp.ne.s32.totalorder %s90, %s91
    %p102 = scmp.eq.s32.totalorder %s14, 0
    %p103 = por %p101, %p102
    %p104 = scmp.ne.s32.totalorder %s90, %s91
    %p105 = scmp.eq.s32.totalorder %s15, 1
    %p106 = por %p104, %p105
    %p108 = scmp.ne.s32.totalorder %s91, %s107
    %p109 = scmp.eq.s32.totalorder %s15, 0
    %p110 = por %p108, %p109
    %p111 = scmp.le.s32.totalorder 1, %s9
    %p112 = scmp.lt.s32.totalorder %s9, 3
    %p113 = pnand %p111, %p112
    %p114 = pneg %p113
    // Predicated region
    $region9: #{cnn_mnist_forward.3} parent=5 // pred_check
      _
    $region10: #{cnn_mnist_forward.3} parent=5 // pred_check_branch
      %116 = sbr.rel (%p113) target = $region12
    $region11: #{cnn_mnist_forward.3} parent=5 // pred_region
      %s117 = ssub.s32 %s9, 1
      // Predicated region
      $region13: #{cnn_mnist_forward.3} parent=11 // pred_check
        %p118 = pneg %p56
      $region14: #{cnn_mnist_forward.3} parent=11 // pred_check_branch
        %120 = sbr.rel (%p118) target = $region16
      $region15: #{cnn_mnist_forward.3} parent=11 // pred_region
        _
      $region16: #{cnn_mnist_forward.3} parent=11 // pred_fallthru
        _
      // Predicated region
      $region17: #{cnn_mnist_forward.3} parent=11 // pred_check
        %p121 = pneg %p77
      $region18: #{cnn_mnist_forward.3} parent=11 // pred_check_branch
        %123 = sbr.rel (%p121) target = $region20
      $region19: #{cnn_mnist_forward.3} parent=11 // pred_region
        _
      $region20: #{cnn_mnist_forward.3} parent=11 // pred_fallthru
        _
    $region12: #{cnn_mnist_forward.3} parent=5 // pred_fallthru
      _
    %p124 = scmp.lt.s32.totalorder %s9, 2
    // Predicated region
    $region21: #{cnn_mnist_forward.3} parent=5 // pred_check
      %p125 = pneg %p124
    $region22: #{cnn_mnist_forward.3} parent=5 // pred_check_branch
      %127 = sbr.rel (%p125) target = $region24
    $region23: #{cnn_mnist_forward.3} parent=5 // pred_region
      // Predicated region
      $region25: #{cnn_mnist_forward.3} parent=23 // pred_check
        %p128 = pneg %p29
      $region26: #{cnn_mnist_forward.3} parent=23 // pred_check_branch
        %130 = sbr.rel (%p128) target = $region28
      $region27: #{cnn_mnist_forward.3} parent=23 // pred_region
        %p131 = scmp.lt.s32.totalorder %s9, 1
        %s132 = scalar_select %p131, %s9, 1
        %s133 = smul.addr %s132, 112
        %s134 = smul.addr %s133, 8
        %s135 = scalar_lea.vmem %s0, %s134
      $region28: #{cnn_mnist_forward.3} parent=23 // pred_fallthru
        _
    $region24: #{cnn_mnist_forward.3} parent=5 // pred_fallthru
      _
    %p136 = scmp.le.s32.totalorder 1, %s9
    %p137 = scmp.lt.s32.totalorder %s9, 3
    %p138 = pnand %p136, %p137
    %p139 = pneg %p138
    // Predicated region
    $region29: #{cnn_mnist_forward.3} parent=5 // pred_check
      _
    $region30: #{cnn_mnist_forward.3} parent=5 // pred_check_branch
      %141 = sbr.rel (%p138) target = $region32
    $region31: #{cnn_mnist_forward.3} parent=5 // pred_region
      %s142 = ssub.s32 %s9, 1
      %p143 = scmp.lt.s32.totalorder %s14, 1
      %s144 = scalar_select %p143, %s14, 1
      %s145 = smul.addr %s144, 112
      %s146 = smul.addr %s145, 8
      %s147 = scalar_lea.vmem %s0, %s146
      %p148 = pneg %p35
      %p149 = pneg %p32
      %p150 = pneg %p56
      %p151 = pneg %p53
      %p152 = pneg %p77
      %p153 = pneg %p74
      %p154 = pneg %p103
      %p155 = pneg %p100
      %s156 = smul.u32 72, %s14
      %p157 = scmp.lt.s32.totalorder %s156, 143
      %s158 = scalar_select %p157, %s156, 143
      %s159 = smul.addr %s158, 8
      %s160 = scalar_lea.vmem %s3, %s159
      %p161 = scmp.lt.s32.totalorder %s14, 1
      %s162 = scalar_select %p161, %s14, 1
      %s163 = smul.addr %s162, 112
      %s164 = smul.addr %s163, 8
      %s165 = scalar_lea.vmem %s0, %s164
      %s166 = smul.u32 72, %s14
      %p167 = scmp.lt.s32.totalorder %s166, 143
      %s168 = scalar_select %p167, %s166, 143
      %s169 = smul.addr %s168, 8
      %s170 = scalar_lea.vmem %s3, %s169
      %s171 = smul.u32 72, %s14
      %v173 = vld [vmem:[%s165] sm:$0xff]
      %v174 = vld [vmem:[%s165 + $0x8] sm:$0xff]
      %v175 = vld [vmem:[%s165 + $0x10] sm:$0xff]
      %v176 = vld [vmem:[%s165 + $0x18] sm:$0xf]
      %v177 = vld [vmem:[%s165 + $0x20] sm:$0xff]
      %v178 = vld [vmem:[%s165 + $0x28] sm:$0xff]
      %v179 = vld [vmem:[%s165 + $0x30] sm:$0xff]
      %v180 = vld [vmem:[%s165 + $0x38] sm:$0xf]
      %v181 = vld [vmem:[%s165 + $0x40] sm:$0xff]
      %v182 = vld [vmem:[%s165 + $0x48] sm:$0xff]
      %v183 = vld [vmem:[%s165 + $0x50] sm:$0xff]
      %v184 = vld [vmem:[%s165 + $0x58] sm:$0xf]
      %v185 = vld [vmem:[%s165 + $0x60] sm:$0xff]
      %v186 = vld [vmem:[%s165 + $0x68] sm:$0xff]
      %v187 = vld [vmem:[%s165 + $0x70] sm:$0xff]
      %v188 = vld [vmem:[%s165 + $0x78] sm:$0xf]
      %v189 = vld [vmem:[%s165 + $0x80] sm:$0xff]
      %v190 = vld [vmem:[%s165 + $0x88] sm:$0xff]
      %v191 = vld [vmem:[%s165 + $0x90] sm:$0xff]
      %v192 = vld [vmem:[%s165 + $0x98] sm:$0xf]
      %v193 = vld [vmem:[%s165 + $0xa0] sm:$0xff]
      %v194 = vld [vmem:[%s165 + $0xa8] sm:$0xff]
      %v195 = vld [vmem:[%s165 + $0xb0] sm:$0xff]
      %v196 = vld [vmem:[%s165 + $0xb8] sm:$0xf]
      %v197 = vld [vmem:[%s165 + $0xc0] sm:$0xff]
      %v198 = vld [vmem:[%s165 + $0xc8] sm:$0xff]
      %v199 = vld [vmem:[%s165 + $0xd0] sm:$0xff]
      %v200 = vld [vmem:[%s165 + $0xd8] sm:$0xf]
      %v201 = vld [vmem:[%s165 + $0xe0] sm:$0xff]
      %v202 = vld [vmem:[%s165 + $0xe8] sm:$0xff]
      %v203 = vld [vmem:[%s165 + $0xf0] sm:$0xff]
      %v204 = vld [vmem:[%s165 + $0xf8] sm:$0xf]
      %v205 = vld [vmem:[%s165 + $0x100] sm:$0xff]
      %v206 = vld [vmem:[%s165 + $0x108] sm:$0xff]
      %v207 = vld [vmem:[%s165 + $0x110] sm:$0xff]
      %v208 = vld [vmem:[%s165 + $0x118] sm:$0xf]
      %v209 = vld [vmem:[%s165 + $0x120] sm:$0xff]
      %v210 = vld [vmem:[%s165 + $0x128] sm:$0xff]
      %v211 = vld [vmem:[%s165 + $0x130] sm:$0xff]
      %v212 = vld [vmem:[%s165 + $0x138] sm:$0xf]
      %v213 = vld [vmem:[%s165 + $0x140] sm:$0xff]
      %v214 = vld [vmem:[%s165 + $0x148] sm:$0xff]
      %v215 = vld [vmem:[%s165 + $0x150] sm:$0xff]
      %v216 = vld [vmem:[%s165 + $0x158] sm:$0xf]
      %v217 = vld [vmem:[%s165 + $0x160] sm:$0xff]
      %v218 = vld [vmem:[%s165 + $0x168] sm:$0xff]
      %v219 = vld [vmem:[%s165 + $0x170] sm:$0xff]
      %v220 = vld [vmem:[%s165 + $0x178] sm:$0xf]
      %v221 = vld [vmem:[%s165 + $0x180] sm:$0xff]
      %v222 = vld [vmem:[%s165 + $0x188] sm:$0xff]
      %v223 = vld [vmem:[%s165 + $0x190] sm:$0xff]
      %v224 = vld [vmem:[%s165 + $0x198] sm:$0xf]
      %v225 = vld [vmem:[%s165 + $0x1a0] sm:$0xff]
      %v226 = vld [vmem:[%s165 + $0x1a8] sm:$0xff]
      %v227 = vld [vmem:[%s165 + $0x1b0] sm:$0xff]
      %v228 = vld [vmem:[%s165 + $0x1b8] sm:$0xf]
      %v229 = vld [vmem:[%s165 + $0x1c0] sm:$0xff]
      %v230 = vld [vmem:[%s165 + $0x1c8] sm:$0xff]
      %v231 = vld [vmem:[%s165 + $0x1d0] sm:$0xff]
      %v232 = vld [vmem:[%s165 + $0x1d8] sm:$0xf]
      %v233 = vld [vmem:[%s165 + $0x1e0] sm:$0xff]
      %v234 = vld [vmem:[%s165 + $0x1e8] sm:$0xff]
      %v235 = vld [vmem:[%s165 + $0x1f0] sm:$0xff]
      %v236 = vld [vmem:[%s165 + $0x1f8] sm:$0xf]
      %v237 = vld [vmem:[%s165 + $0x200] sm:$0xff]
      %v238 = vld [vmem:[%s165 + $0x208] sm:$0xff]
      %v239 = vld [vmem:[%s165 + $0x210] sm:$0xff]
      %v240 = vld [vmem:[%s165 + $0x218] sm:$0xf]
      %v241 = vld [vmem:[%s165 + $0x220] sm:$0xff]
      %v242 = vld [vmem:[%s165 + $0x228] sm:$0xff]
      %v243 = vld [vmem:[%s165 + $0x230] sm:$0xff]
      %v244 = vld [vmem:[%s165 + $0x238] sm:$0xf]
      %v245 = vld [vmem:[%s165 + $0x240] sm:$0xff]
      %v246 = vld [vmem:[%s165 + $0x248] sm:$0xff]
      %v247 = vld [vmem:[%s165 + $0x250] sm:$0xff]
      %v248 = vld [vmem:[%s165 + $0x258] sm:$0xf]
      %v249 = vld [vmem:[%s165 + $0x260] sm:$0xff]
      %v250 = vld [vmem:[%s165 + $0x268] sm:$0xff]
      %v251 = vld [vmem:[%s165 + $0x270] sm:$0xff]
      %v252 = vld [vmem:[%s165 + $0x278] sm:$0xf]
      %v253 = vld [vmem:[%s165 + $0x280] sm:$0xff]
      %v254 = vld [vmem:[%s165 + $0x288] sm:$0xff]
      %v255 = vld [vmem:[%s165 + $0x290] sm:$0xff]
      %v256 = vld [vmem:[%s165 + $0x298] sm:$0xf]
      %v257 = vld [vmem:[%s165 + $0x2a0] sm:$0xff]
      %v258 = vld [vmem:[%s165 + $0x2a8] sm:$0xff]
      %v259 = vld [vmem:[%s165 + $0x2b0] sm:$0xff]
      %v260 = vld [vmem:[%s165 + $0x2b8] sm:$0xf]
      %v261 = vld [vmem:[%s165 + $0x2c0] sm:$0xff]
      %v262 = vld [vmem:[%s165 + $0x2c8] sm:$0xff]
      %v263 = vld [vmem:[%s165 + $0x2d0] sm:$0xff]
      %v264 = vld [vmem:[%s165 + $0x2d8] sm:$0xf]
      %v265 = vld [vmem:[%s165 + $0x2e0] sm:$0xff]
      %v266 = vld [vmem:[%s165 + $0x2e8] sm:$0xff]
      %v267 = vld [vmem:[%s165 + $0x2f0] sm:$0xff]
      %v268 = vld [vmem:[%s165 + $0x2f8] sm:$0xf]
      %v269 = vld [vmem:[%s165 + $0x300] sm:$0xff]
      %v270 = vld [vmem:[%s165 + $0x308] sm:$0xff]
      %v271 = vld [vmem:[%s165 + $0x310] sm:$0xff]
      %v272 = vld [vmem:[%s165 + $0x318] sm:$0xf]
      %v273 = vld [vmem:[%s165 + $0x320] sm:$0xff]
      %v274 = vld [vmem:[%s165 + $0x328] sm:$0xff]
      %v275 = vld [vmem:[%s165 + $0x330] sm:$0xff]
      %v276 = vld [vmem:[%s165 + $0x338] sm:$0xf]
      %v277 = vld [vmem:[%s165 + $0x340] sm:$0xff]
      %v278 = vld [vmem:[%s165 + $0x348] sm:$0xff]
      %v279 = vld [vmem:[%s165 + $0x350] sm:$0xff]
      %v280 = vld [vmem:[%s165 + $0x358] sm:$0xf]
      %v281 = vld [vmem:[%s165 + $0x360] sm:$0xff]
      %v282 = vld [vmem:[%s165 + $0x368] sm:$0xff]
      %v283 = vld [vmem:[%s165 + $0x370] sm:$0xff]
      %v284 = vld [vmem:[%s165 + $0x378] sm:$0xf]
      %vm381 = vcmask 1046528
      %v382 = vrot.slane %v173, 1
      %v383 = vrot.slane %v174, 1
      %v384 = vsel %vm381, %v382, %v383
      %v385 = vrot.slane %v175, 1
      %v386 = vsel %vm381, %v383, %v385
      %v387 = vrot.slane %v176, 1
      %v388 = vsel %vm381, %v385, %v387
      %v389 = vrot.slane %v177, 1
      %v390 = vrot.slane %v178, 1
      %v391 = vsel %vm381, %v389, %v390
      %v392 = vrot.slane %v179, 1
      %v393 = vsel %vm381, %v390, %v392
      %v394 = vrot.slane %v180, 1
      %v395 = vsel %vm381, %v392, %v394
      %v396 = vrot.slane %v181, 1
      %v397 = vrot.slane %v182, 1
      %v398 = vsel %vm381, %v396, %v397
      %v399 = vrot.slane %v183, 1
      %v400 = vsel %vm381, %v397, %v399
      %v401 = vrot.slane %v184, 1
      %v402 = vsel %vm381, %v399, %v401
      %v403 = vrot.slane %v185, 1
      %v404 = vrot.slane %v186, 1
      %v405 = vsel %vm381, %v403, %v404
      %v406 = vrot.slane %v187, 1
      %v407 = vsel %vm381, %v404, %v406
      %v408 = vrot.slane %v188, 1
      %v409 = vsel %vm381, %v406, %v408
      %v410 = vrot.slane %v189, 1
      %v411 = vrot.slane %v190, 1
      %v412 = vsel %vm381, %v410, %v411
      %v413 = vrot.slane %v191, 1
      %v414 = vsel %vm381, %v411, %v413
      %v415 = vrot.slane %v192, 1
      %v416 = vsel %vm381, %v413, %v415
      %v417 = vrot.slane %v193, 1
      %v418 = vrot.slane %v194, 1
      %v419 = vsel %vm381, %v417, %v418
      %v420 = vrot.slane %v195, 1
      %v421 = vsel %vm381, %v418, %v420
      %v422 = vrot.slane %v196, 1
      %v423 = vsel %vm381, %v420, %v422
      %v424 = vrot.slane %v197, 1
      %v425 = vrot.slane %v198, 1
      %v426 = vsel %vm381, %v424, %v425
      %v427 = vrot.slane %v199, 1
      %v428 = vsel %vm381, %v425, %v427
      %v429 = vrot.slane %v200, 1
      %v430 = vsel %vm381, %v427, %v429
      %v431 = vrot.slane %v201, 1
      %v432 = vrot.slane %v202, 1
      %v433 = vsel %vm381, %v431, %v432
      %v434 = vrot.slane %v203, 1
      %v435 = vsel %vm381, %v432, %v434
      %v436 = vrot.slane %v204, 1
      %v437 = vsel %vm381, %v434, %v436
      %v438 = vrot.slane %v205, 1
      %v439 = vrot.slane %v206, 1
      %v440 = vsel %vm381, %v438, %v439
      %v441 = vrot.slane %v207, 1
      %v442 = vsel %vm381, %v439, %v441
      %v443 = vrot.slane %v208, 1
      %v444 = vsel %vm381, %v441, %v443
      %v445 = vrot.slane %v209, 1
      %v446 = vrot.slane %v210, 1
      %v447 = vsel %vm381, %v445, %v446
      %v448 = vrot.slane %v211, 1
      %v449 = vsel %vm381, %v446, %v448
      %v450 = vrot.slane %v212, 1
      %v451 = vsel %vm381, %v448, %v450
      %v452 = vrot.slane %v213, 1
      %v453 = vrot.slane %v214, 1
      %v454 = vsel %vm381, %v452, %v453
      %v455 = vrot.slane %v215, 1
      %v456 = vsel %vm381, %v453, %v455
      %v457 = vrot.slane %v216, 1
      %v458 = vsel %vm381, %v455, %v457
      %v459 = vrot.slane %v217, 1
      %v460 = vrot.slane %v218, 1
      %v461 = vsel %vm381, %v459, %v460
      %v462 = vrot.slane %v219, 1
      %v463 = vsel %vm381, %v460, %v462
      %v464 = vrot.slane %v220, 1
      %v465 = vsel %vm381, %v462, %v464
      %v466 = vrot.slane %v221, 1
      %v467 = vrot.slane %v222, 1
      %v468 = vsel %vm381, %v466, %v467
      %v469 = vrot.slane %v223, 1
      %v470 = vsel %vm381, %v467, %v469
      %v471 = vrot.slane %v224, 1
      %v472 = vsel %vm381, %v469, %v471
      %v473 = vrot.slane %v225, 1
      %v474 = vrot.slane %v226, 1
      %v475 = vsel %vm381, %v473, %v474
      %v476 = vrot.slane %v227, 1
      %v477 = vsel %vm381, %v474, %v476
      %v478 = vrot.slane %v228, 1
      %v479 = vsel %vm381, %v476, %v478
      %v480 = vrot.slane %v229, 1
      %v481 = vrot.slane %v230, 1
      %v482 = vsel %vm381, %v480, %v481
      %v483 = vrot.slane %v231, 1
      %v484 = vsel %vm381, %v481, %v483
      %v485 = vrot.slane %v232, 1
      %v486 = vsel %vm381, %v483, %v485
      %v487 = vrot.slane %v233, 1
      %v488 = vrot.slane %v234, 1
      %v489 = vsel %vm381, %v487, %v488
      %v490 = vrot.slane %v235, 1
      %v491 = vsel %vm381, %v488, %v490
      %v492 = vrot.slane %v236, 1
      %v493 = vsel %vm381, %v490, %v492
      %v494 = vrot.slane %v237, 1
      %v495 = vrot.slane %v238, 1
      %v496 = vsel %vm381, %v494, %v495
      %v497 = vrot.slane %v239, 1
      %v498 = vsel %vm381, %v495, %v497
      %v499 = vrot.slane %v240, 1
      %v500 = vsel %vm381, %v497, %v499
      %v501 = vrot.slane %v241, 1
      %v502 = vrot.slane %v242, 1
      %v503 = vsel %vm381, %v501, %v502
      %v504 = vrot.slane %v243, 1
      %v505 = vsel %vm381, %v502, %v504
      %v506 = vrot.slane %v244, 1
      %v507 = vsel %vm381, %v504, %v506
      %v508 = vrot.slane %v245, 1
      %v509 = vrot.slane %v246, 1
      %v510 = vsel %vm381, %v508, %v509
      %v511 = vrot.slane %v247, 1
      %v512 = vsel %vm381, %v509, %v511
      %v513 = vrot.slane %v248, 1
      %v514 = vsel %vm381, %v511, %v513
      %v515 = vrot.slane %v249, 1
      %v516 = vrot.slane %v250, 1
      %v517 = vsel %vm381, %v515, %v516
      %v518 = vrot.slane %v251, 1
      %v519 = vsel %vm381, %v516, %v518
      %v520 = vrot.slane %v252, 1
      %v521 = vsel %vm381, %v518, %v520
      %v522 = vrot.slane %v253, 1
      %v523 = vrot.slane %v254, 1
      %v524 = vsel %vm381, %v522, %v523
      %v525 = vrot.slane %v255, 1
      %v526 = vsel %vm381, %v523, %v525
      %v527 = vrot.slane %v256, 1
      %v528 = vsel %vm381, %v525, %v527
      %v529 = vrot.slane %v257, 1
      %v530 = vrot.slane %v258, 1
      %v531 = vsel %vm381, %v529, %v530
      %v532 = vrot.slane %v259, 1
      %v533 = vsel %vm381, %v530, %v532
      %v534 = vrot.slane %v260, 1
      %v535 = vsel %vm381, %v532, %v534
      %v536 = vrot.slane %v261, 1
      %v537 = vrot.slane %v262, 1
      %v538 = vsel %vm381, %v536, %v537
      %v539 = vrot.slane %v263, 1
      %v540 = vsel %vm381, %v537, %v539
      %v541 = vrot.slane %v264, 1
      %v542 = vsel %vm381, %v539, %v541
      %v543 = vrot.slane %v265, 1
      %v544 = vrot.slane %v266, 1
      %v545 = vsel %vm381, %v543, %v544
      %v546 = vrot.slane %v267, 1
      %v547 = vsel %vm381, %v544, %v546
      %v548 = vrot.slane %v268, 1
      %v549 = vsel %vm381, %v546, %v548
      %550 = vrot.lane.b32.xlu0 %v384, 1
      %v551 = vpop.permute.xlu0 %550
      %552 = vrot.lane.b32.xlu0 %v386, 1
      %v553 = vpop.permute.xlu0 %552
      %554 = vrot.lane.b32.xlu0 %v388, 1
      %v555 = vpop.permute.xlu0 %554
      %556 = vrot.lane.b32.xlu0 %v391, 1
      %v557 = vpop.permute.xlu0 %556
      %558 = vrot.lane.b32.xlu0 %v393, 1
      %v559 = vpop.permute.xlu0 %558
      %560 = vrot.lane.b32.xlu0 %v395, 1
      %v561 = vpop.permute.xlu0 %560
      %562 = vrot.lane.b32.xlu0 %v398, 1
      %v563 = vpop.permute.xlu0 %562
      %564 = vrot.lane.b32.xlu0 %v400, 1
      %v565 = vpop.permute.xlu0 %564
      %566 = vrot.lane.b32.xlu0 %v402, 1
      %v567 = vpop.permute.xlu0 %566
      %568 = vrot.lane.b32.xlu0 %v405, 1
      %v569 = vpop.permute.xlu0 %568
      %570 = vrot.lane.b32.xlu0 %v407, 1
      %v571 = vpop.permute.xlu0 %570
      %572 = vrot.lane.b32.xlu0 %v409, 1
      %v573 = vpop.permute.xlu0 %572
      %574 = vrot.lane.b32.xlu0 %v412, 1
      %v575 = vpop.permute.xlu0 %574
      %576 = vrot.lane.b32.xlu0 %v414, 1
      %v577 = vpop.permute.xlu0 %576
      %578 = vrot.lane.b32.xlu0 %v416, 1
      %v579 = vpop.permute.xlu0 %578
      %580 = vrot.lane.b32.xlu0 %v419, 1
      %v581 = vpop.permute.xlu0 %580
      %582 = vrot.lane.b32.xlu0 %v421, 1
      %v583 = vpop.permute.xlu0 %582
      %584 = vrot.lane.b32.xlu0 %v423, 1
      %v585 = vpop.permute.xlu0 %584
      %586 = vrot.lane.b32.xlu0 %v426, 1
      %v587 = vpop.permute.xlu0 %586
      %588 = vrot.lane.b32.xlu0 %v428, 1
      %v589 = vpop.permute.xlu0 %588
      %590 = vrot.lane.b32.xlu0 %v430, 1
      %v591 = vpop.permute.xlu0 %590
      %592 = vrot.lane.b32.xlu0 %v433, 1
      %v593 = vpop.permute.xlu0 %592
      %594 = vrot.lane.b32.xlu0 %v435, 1
      %v595 = vpop.permute.xlu0 %594
      %596 = vrot.lane.b32.xlu0 %v437, 1
      %v597 = vpop.permute.xlu0 %596
      %598 = vrot.lane.b32.xlu0 %v440, 1
      %v599 = vpop.permute.xlu0 %598
      %600 = vrot.lane.b32.xlu0 %v442, 1
      %v601 = vpop.permute.xlu0 %600
      %602 = vrot.lane.b32.xlu0 %v444, 1
      %v603 = vpop.permute.xlu0 %602
      %604 = vrot.lane.b32.xlu0 %v447, 1
      %v605 = vpop.permute.xlu0 %604
      %606 = vrot.lane.b32.xlu0 %v449, 1
      %v607 = vpop.permute.xlu0 %606
      %608 = vrot.lane.b32.xlu0 %v451, 1
      %v609 = vpop.permute.xlu0 %608
      %610 = vrot.lane.b32.xlu0 %v454, 1
      %v611 = vpop.permute.xlu0 %610
      %612 = vrot.lane.b32.xlu0 %v456, 1
      %v613 = vpop.permute.xlu0 %612
      %614 = vrot.lane.b32.xlu0 %v458, 1
      %v615 = vpop.permute.xlu0 %614
      %616 = vrot.lane.b32.xlu0 %v461, 1
      %v617 = vpop.permute.xlu0 %616
      %618 = vrot.lane.b32.xlu0 %v463, 1
      %v619 = vpop.permute.xlu0 %618
      %620 = vrot.lane.b32.xlu0 %v465, 1
      %v621 = vpop.permute.xlu0 %620
      %622 = vrot.lane.b32.xlu0 %v468, 1
      %v623 = vpop.permute.xlu0 %622
      %624 = vrot.lane.b32.xlu0 %v470, 1
      %v625 = vpop.permute.xlu0 %624
      %626 = vrot.lane.b32.xlu0 %v472, 1
      %v627 = vpop.permute.xlu0 %626
      %628 = vrot.lane.b32.xlu0 %v475, 1
      %v629 = vpop.permute.xlu0 %628
      %630 = vrot.lane.b32.xlu0 %v477, 1
      %v631 = vpop.permute.xlu0 %630
      %632 = vrot.lane.b32.xlu0 %v479, 1
      %v633 = vpop.permute.xlu0 %632
      %634 = vrot.lane.b32.xlu0 %v482, 1
      %v635 = vpop.permute.xlu0 %634
      %636 = vrot.lane.b32.xlu0 %v484, 1
      %v637 = vpop.permute.xlu0 %636
      %638 = vrot.lane.b32.xlu0 %v486, 1
      %v639 = vpop.permute.xlu0 %638
      %640 = vrot.lane.b32.xlu0 %v489, 1
      %v641 = vpop.permute.xlu0 %640
      %642 = vrot.lane.b32.xlu0 %v491, 1
      %v643 = vpop.permute.xlu0 %642
      %644 = vrot.lane.b32.xlu0 %v493, 1
      %v645 = vpop.permute.xlu0 %644
      %646 = vrot.lane.b32.xlu0 %v496, 1
      %v647 = vpop.permute.xlu0 %646
      %648 = vrot.lane.b32.xlu0 %v498, 1
      %v649 = vpop.permute.xlu0 %648
      %650 = vrot.lane.b32.xlu0 %v500, 1
      %v651 = vpop.permute.xlu0 %650
      %652 = vrot.lane.b32.xlu0 %v503, 1
      %v653 = vpop.permute.xlu0 %652
      %654 = vrot.lane.b32.xlu0 %v505, 1
      %v655 = vpop.permute.xlu0 %654
      %656 = vrot.lane.b32.xlu0 %v507, 1
      %v657 = vpop.permute.xlu0 %656
      %658 = vrot.lane.b32.xlu0 %v510, 1
      %v659 = vpop.permute.xlu0 %658
      %660 = vrot.lane.b32.xlu0 %v512, 1
      %v661 = vpop.permute.xlu0 %660
      %662 = vrot.lane.b32.xlu0 %v514, 1
      %v663 = vpop.permute.xlu0 %662
      %664 = vrot.lane.b32.xlu0 %v517, 1
      %v665 = vpop.permute.xlu0 %664
      %666 = vrot.lane.b32.xlu0 %v519, 1
      %v667 = vpop.permute.xlu0 %666
      %668 = vrot.lane.b32.xlu0 %v521, 1
      %v669 = vpop.permute.xlu0 %668
      %670 = vrot.lane.b32.xlu0 %v524, 1
      %v671 = vpop.permute.xlu0 %670
      %672 = vrot.lane.b32.xlu0 %v526, 1
      %v673 = vpop.permute.xlu0 %672
      %674 = vrot.lane.b32.xlu0 %v528, 1
      %v675 = vpop.permute.xlu0 %674
      %676 = vrot.lane.b32.xlu0 %v531, 1
      %v677 = vpop.permute.xlu0 %676
      %678 = vrot.lane.b32.xlu0 %v533, 1
      %v679 = vpop.permute.xlu0 %678
      %680 = vrot.lane.b32.xlu0 %v535, 1
      %v681 = vpop.permute.xlu0 %680
      %682 = vrot.lane.b32.xlu0 %v538, 1
      %v683 = vpop.permute.xlu0 %682
      %684 = vrot.lane.b32.xlu0 %v540, 1
      %v685 = vpop.permute.xlu0 %684
      %686 = vrot.lane.b32.xlu0 %v542, 1
      %v687 = vpop.permute.xlu0 %686
      %688 = vrot.lane.b32.xlu0 %v545, 1
      %v689 = vpop.permute.xlu0 %688
      %690 = vrot.lane.b32.xlu0 %v547, 1
      %v691 = vpop.permute.xlu0 %690
      %692 = vrot.lane.b32.xlu0 %v549, 1
      %v693 = vpop.permute.xlu0 %692
      %vm766 = vcmask 1045504
      %v767 = vrot.slane %v173, 2
      %v768 = vrot.slane %v174, 2
      %v769 = vsel %vm766, %v767, %v768
      %v770 = vrot.slane %v175, 2
      %v771 = vsel %vm766, %v768, %v770
      %v772 = vrot.slane %v176, 2
      %v773 = vsel %vm766, %v770, %v772
      %v774 = vrot.slane %v177, 2
      %v775 = vrot.slane %v178, 2
      %v776 = vsel %vm766, %v774, %v775
      %v777 = vrot.slane %v179, 2
      %v778 = vsel %vm766, %v775, %v777
      %v779 = vrot.slane %v180, 2
      %v780 = vsel %vm766, %v777, %v779
      %v781 = vrot.slane %v181, 2
      %v782 = vrot.slane %v182, 2
      %v783 = vsel %vm766, %v781, %v782
      %v784 = vrot.slane %v183, 2
      %v785 = vsel %vm766, %v782, %v784
      %v786 = vrot.slane %v184, 2
      %v787 = vsel %vm766, %v784, %v786
      %v788 = vrot.slane %v185, 2
      %v789 = vrot.slane %v186, 2
      %v790 = vsel %vm766, %v788, %v789
      %v791 = vrot.slane %v187, 2
      %v792 = vsel %vm766, %v789, %v791
      %v793 = vrot.slane %v188, 2
      %v794 = vsel %vm766, %v791, %v793
      %v795 = vrot.slane %v189, 2
      %v796 = vrot.slane %v190, 2
      %v797 = vsel %vm766, %v795, %v796
      %v798 = vrot.slane %v191, 2
      %v799 = vsel %vm766, %v796, %v798
      %v800 = vrot.slane %v192, 2
      %v801 = vsel %vm766, %v798, %v800
      %v802 = vrot.slane %v193, 2
      %v803 = vrot.slane %v194, 2
      %v804 = vsel %vm766, %v802, %v803
      %v805 = vrot.slane %v195, 2
      %v806 = vsel %vm766, %v803, %v805
      %v807 = vrot.slane %v196, 2
      %v808 = vsel %vm766, %v805, %v807
      %v809 = vrot.slane %v197, 2
      %v810 = vrot.slane %v198, 2
      %v811 = vsel %vm766, %v809, %v810
      %v812 = vrot.slane %v199, 2
      %v813 = vsel %vm766, %v810, %v812
      %v814 = vrot.slane %v200, 2
      %v815 = vsel %vm766, %v812, %v814
      %v816 = vrot.slane %v201, 2
      %v817 = vrot.slane %v202, 2
      %v818 = vsel %vm766, %v816, %v817
      %v819 = vrot.slane %v203, 2
      %v820 = vsel %vm766, %v817, %v819
      %v821 = vrot.slane %v204, 2
      %v822 = vsel %vm766, %v819, %v821
      %v823 = vrot.slane %v205, 2
      %v824 = vrot.slane %v206, 2
      %v825 = vsel %vm766, %v823, %v824
      %v826 = vrot.slane %v207, 2
      %v827 = vsel %vm766, %v824, %v826
      %v828 = vrot.slane %v208, 2
      %v829 = vsel %vm766, %v826, %v828
      %v830 = vrot.slane %v209, 2
      %v831 = vrot.slane %v210, 2
      %v832 = vsel %vm766, %v830, %v831
      %v833 = vrot.slane %v211, 2
      %v834 = vsel %vm766, %v831, %v833
      %v835 = vrot.slane %v212, 2
      %v836 = vsel %vm766, %v833, %v835
      %v837 = vrot.slane %v213, 2
      %v838 = vrot.slane %v214, 2
      %v839 = vsel %vm766, %v837, %v838
      %v840 = vrot.slane %v215, 2
      %v841 = vsel %vm766, %v838, %v840
      %v842 = vrot.slane %v216, 2
      %v843 = vsel %vm766, %v840, %v842
      %v844 = vrot.slane %v217, 2
      %v845 = vrot.slane %v218, 2
      %v846 = vsel %vm766, %v844, %v845
      %v847 = vrot.slane %v219, 2
      %v848 = vsel %vm766, %v845, %v847
      %v849 = vrot.slane %v220, 2
      %v850 = vsel %vm766, %v847, %v849
      %v851 = vrot.slane %v221, 2
      %v852 = vrot.slane %v222, 2
      %v853 = vsel %vm766, %v851, %v852
      %v854 = vrot.slane %v223, 2
      %v855 = vsel %vm766, %v852, %v854
      %v856 = vrot.slane %v224, 2
      %v857 = vsel %vm766, %v854, %v856
      %v858 = vrot.slane %v225, 2
      %v859 = vrot.slane %v226, 2
      %v860 = vsel %vm766, %v858, %v859
      %v861 = vrot.slane %v227, 2
      %v862 = vsel %vm766, %v859, %v861
      %v863 = vrot.slane %v228, 2
      %v864 = vsel %vm766, %v861, %v863
      %v865 = vrot.slane %v229, 2
      %v866 = vrot.slane %v230, 2
      %v867 = vsel %vm766, %v865, %v866
      %v868 = vrot.slane %v231, 2
      %v869 = vsel %vm766, %v866, %v868
      %v870 = vrot.slane %v232, 2
      %v871 = vsel %vm766, %v868, %v870
      %v872 = vrot.slane %v233, 2
      %v873 = vrot.slane %v234, 2
      %v874 = vsel %vm766, %v872, %v873
      %v875 = vrot.slane %v235, 2
      %v876 = vsel %vm766, %v873, %v875
      %v877 = vrot.slane %v236, 2
      %v878 = vsel %vm766, %v875, %v877
      %v879 = vrot.slane %v237, 2
      %v880 = vrot.slane %v238, 2
      %v881 = vsel %vm766, %v879, %v880
      %v882 = vrot.slane %v239, 2
      %v883 = vsel %vm766, %v880, %v882
      %v884 = vrot.slane %v240, 2
      %v885 = vsel %vm766, %v882, %v884
      %v886 = vrot.slane %v241, 2
      %v887 = vrot.slane %v242, 2
      %v888 = vsel %vm766, %v886, %v887
      %v889 = vrot.slane %v243, 2
      %v890 = vsel %vm766, %v887, %v889
      %v891 = vrot.slane %v244, 2
      %v892 = vsel %vm766, %v889, %v891
      %v893 = vrot.slane %v245, 2
      %v894 = vrot.slane %v246, 2
      %v895 = vsel %vm766, %v893, %v894
      %v896 = vrot.slane %v247, 2
      %v897 = vsel %vm766, %v894, %v896
      %v898 = vrot.slane %v248, 2
      %v899 = vsel %vm766, %v896, %v898
      %v900 = vrot.slane %v249, 2
      %v901 = vrot.slane %v250, 2
      %v902 = vsel %vm766, %v900, %v901
      %v903 = vrot.slane %v251, 2
      %v904 = vsel %vm766, %v901, %v903
      %v905 = vrot.slane %v252, 2
      %v906 = vsel %vm766, %v903, %v905
      %v907 = vrot.slane %v253, 2
      %v908 = vrot.slane %v254, 2
      %v909 = vsel %vm766, %v907, %v908
      %v910 = vrot.slane %v255, 2
      %v911 = vsel %vm766, %v908, %v910
      %v912 = vrot.slane %v256, 2
      %v913 = vsel %vm766, %v910, %v912
      %v914 = vrot.slane %v257, 2
      %v915 = vrot.slane %v258, 2
      %v916 = vsel %vm766, %v914, %v915
      %v917 = vrot.slane %v259, 2
      %v918 = vsel %vm766, %v915, %v917
      %v919 = vrot.slane %v260, 2
      %v920 = vsel %vm766, %v917, %v919
      %v921 = vrot.slane %v261, 2
      %v922 = vrot.slane %v262, 2
      %v923 = vsel %vm766, %v921, %v922
      %v924 = vrot.slane %v263, 2
      %v925 = vsel %vm766, %v922, %v924
      %v926 = vrot.slane %v264, 2
      %v927 = vsel %vm766, %v924, %v926
      %v928 = vrot.slane %v265, 2
      %v929 = vrot.slane %v266, 2
      %v930 = vsel %vm766, %v928, %v929
      %v931 = vrot.slane %v267, 2
      %v932 = vsel %vm766, %v929, %v931
      %v933 = vrot.slane %v268, 2
      %v934 = vsel %vm766, %v931, %v933
      %935 = vrot.lane.b32.xlu0 %v769, 2
      %v936 = vpop.permute.xlu0 %935
      %937 = vrot.lane.b32.xlu0 %v771, 2
      %v938 = vpop.permute.xlu0 %937
      %939 = vrot.lane.b32.xlu0 %v773, 2
      %v940 = vpop.permute.xlu0 %939
      %941 = vrot.lane.b32.xlu0 %v776, 2
      %v942 = vpop.permute.xlu0 %941
      %943 = vrot.lane.b32.xlu0 %v778, 2
      %v944 = vpop.permute.xlu0 %943
      %945 = vrot.lane.b32.xlu0 %v780, 2
      %v946 = vpop.permute.xlu0 %945
      %947 = vrot.lane.b32.xlu0 %v783, 2
      %v948 = vpop.permute.xlu0 %947
      %949 = vrot.lane.b32.xlu0 %v785, 2
      %v950 = vpop.permute.xlu0 %949
      %951 = vrot.lane.b32.xlu0 %v787, 2
      %v952 = vpop.permute.xlu0 %951
      %953 = vrot.lane.b32.xlu0 %v790, 2
      %v954 = vpop.permute.xlu0 %953
      %955 = vrot.lane.b32.xlu0 %v792, 2
      %v956 = vpop.permute.xlu0 %955
      %957 = vrot.lane.b32.xlu0 %v794, 2
      %v958 = vpop.permute.xlu0 %957
      %959 = vrot.lane.b32.xlu0 %v797, 2
      %v960 = vpop.permute.xlu0 %959
      %961 = vrot.lane.b32.xlu0 %v799, 2
      %v962 = vpop.permute.xlu0 %961
      %963 = vrot.lane.b32.xlu0 %v801, 2
      %v964 = vpop.permute.xlu0 %963
      %965 = vrot.lane.b32.xlu0 %v804, 2
      %v966 = vpop.permute.xlu0 %965
      %967 = vrot.lane.b32.xlu0 %v806, 2
      %v968 = vpop.permute.xlu0 %967
      %969 = vrot.lane.b32.xlu0 %v808, 2
      %v970 = vpop.permute.xlu0 %969
      %971 = vrot.lane.b32.xlu0 %v811, 2
      %v972 = vpop.permute.xlu0 %971
      %973 = vrot.lane.b32.xlu0 %v813, 2
      %v974 = vpop.permute.xlu0 %973
      %975 = vrot.lane.b32.xlu0 %v815, 2
      %v976 = vpop.permute.xlu0 %975
      %977 = vrot.lane.b32.xlu0 %v818, 2
      %v978 = vpop.permute.xlu0 %977
      %979 = vrot.lane.b32.xlu0 %v820, 2
      %v980 = vpop.permute.xlu0 %979
      %981 = vrot.lane.b32.xlu0 %v822, 2
      %v982 = vpop.permute.xlu0 %981
      %983 = vrot.lane.b32.xlu0 %v825, 2
      %v984 = vpop.permute.xlu0 %983
      %985 = vrot.lane.b32.xlu0 %v827, 2
      %v986 = vpop.permute.xlu0 %985
      %987 = vrot.lane.b32.xlu0 %v829, 2
      %v988 = vpop.permute.xlu0 %987
      %989 = vrot.lane.b32.xlu0 %v832, 2
      %v990 = vpop.permute.xlu0 %989
      %991 = vrot.lane.b32.xlu0 %v834, 2
      %v992 = vpop.permute.xlu0 %991
      %993 = vrot.lane.b32.xlu0 %v836, 2
      %v994 = vpop.permute.xlu0 %993
      %995 = vrot.lane.b32.xlu0 %v839, 2
      %v996 = vpop.permute.xlu0 %995
      %997 = vrot.lane.b32.xlu0 %v841, 2
      %v998 = vpop.permute.xlu0 %997
      %999 = vrot.lane.b32.xlu0 %v843, 2
      %v1000 = vpop.permute.xlu0 %999
      %1001 = vrot.lane.b32.xlu0 %v846, 2
      %v1002 = vpop.permute.xlu0 %1001
      %1003 = vrot.lane.b32.xlu0 %v848, 2
      %v1004 = vpop.permute.xlu0 %1003
      %1005 = vrot.lane.b32.xlu0 %v850, 2
      %v1006 = vpop.permute.xlu0 %1005
      %1007 = vrot.lane.b32.xlu0 %v853, 2
      %v1008 = vpop.permute.xlu0 %1007
      %1009 = vrot.lane.b32.xlu0 %v855, 2
      %v1010 = vpop.permute.xlu0 %1009
      %1011 = vrot.lane.b32.xlu0 %v857, 2
      %v1012 = vpop.permute.xlu0 %1011
      %1013 = vrot.lane.b32.xlu0 %v860, 2
      %v1014 = vpop.permute.xlu0 %1013
      %1015 = vrot.lane.b32.xlu0 %v862, 2
      %v1016 = vpop.permute.xlu0 %1015
      %1017 = vrot.lane.b32.xlu0 %v864, 2
      %v1018 = vpop.permute.xlu0 %1017
      %1019 = vrot.lane.b32.xlu0 %v867, 2
      %v1020 = vpop.permute.xlu0 %1019
      %1021 = vrot.lane.b32.xlu0 %v869, 2
      %v1022 = vpop.permute.xlu0 %1021
      %1023 = vrot.lane.b32.xlu0 %v871, 2
      %v1024 = vpop.permute.xlu0 %1023
      %1025 = vrot.lane.b32.xlu0 %v874, 2
      %v1026 = vpop.permute.xlu0 %1025
      %1027 = vrot.lane.b32.xlu0 %v876, 2
      %v1028 = vpop.permute.xlu0 %1027
      %1029 = vrot.lane.b32.xlu0 %v878, 2
      %v1030 = vpop.permute.xlu0 %1029
      %1031 = vrot.lane.b32.xlu0 %v881, 2
      %v1032 = vpop.permute.xlu0 %1031
      %1033 = vrot.lane.b32.xlu0 %v883, 2
      %v1034 = vpop.permute.xlu0 %1033
      %1035 = vrot.lane.b32.xlu0 %v885, 2
      %v1036 = vpop.permute.xlu0 %1035
      %1037 = vrot.lane.b32.xlu0 %v888, 2
      %v1038 = vpop.permute.xlu0 %1037
      %1039 = vrot.lane.b32.xlu0 %v890, 2
      %v1040 = vpop.permute.xlu0 %1039
      %1041 = vrot.lane.b32.xlu0 %v892, 2
      %v1042 = vpop.permute.xlu0 %1041
      %1043 = vrot.lane.b32.xlu0 %v895, 2
      %v1044 = vpop.permute.xlu0 %1043
      %1045 = vrot.lane.b32.xlu0 %v897, 2
      %v1046 = vpop.permute.xlu0 %1045
      %1047 = vrot.lane.b32.xlu0 %v899, 2
      %v1048 = vpop.permute.xlu0 %1047
      %1049 = vrot.lane.b32.xlu0 %v902, 2
      %v1050 = vpop.permute.xlu0 %1049
      %1051 = vrot.lane.b32.xlu0 %v904, 2
      %v1052 = vpop.permute.xlu0 %1051
      %1053 = vrot.lane.b32.xlu0 %v906, 2
      %v1054 = vpop.permute.xlu0 %1053
      %1055 = vrot.lane.b32.xlu0 %v909, 2
      %v1056 = vpop.permute.xlu0 %1055
      %1057 = vrot.lane.b32.xlu0 %v911, 2
      %v1058 = vpop.permute.xlu0 %1057
      %1059 = vrot.lane.b32.xlu0 %v913, 2
      %v1060 = vpop.permute.xlu0 %1059
      %1061 = vrot.lane.b32.xlu0 %v916, 2
      %v1062 = vpop.permute.xlu0 %1061
      %1063 = vrot.lane.b32.xlu0 %v918, 2
      %v1064 = vpop.permute.xlu0 %1063
      %1065 = vrot.lane.b32.xlu0 %v920, 2
      %v1066 = vpop.permute.xlu0 %1065
      %1067 = vrot.lane.b32.xlu0 %v923, 2
      %v1068 = vpop.permute.xlu0 %1067
      %1069 = vrot.lane.b32.xlu0 %v925, 2
      %v1070 = vpop.permute.xlu0 %1069
      %1071 = vrot.lane.b32.xlu0 %v927, 2
      %v1072 = vpop.permute.xlu0 %1071
      %1073 = vrot.lane.b32.xlu0 %v930, 2
      %v1074 = vpop.permute.xlu0 %1073
      %1075 = vrot.lane.b32.xlu0 %v932, 2
      %v1076 = vpop.permute.xlu0 %1075
      %1077 = vrot.lane.b32.xlu0 %v934, 2
      %v1078 = vpop.permute.xlu0 %1077
      %vm1151 = vcmask 1044480
      %v1152 = vrot.slane %v173, 3
      %v1153 = vrot.slane %v174, 3
      %v1154 = vsel %vm1151, %v1152, %v1153
      %v1155 = vrot.slane %v175, 3
      %v1156 = vsel %vm1151, %v1153, %v1155
      %v1157 = vrot.slane %v176, 3
      %v1158 = vsel %vm1151, %v1155, %v1157
      %v1159 = vrot.slane %v177, 3
      %v1160 = vrot.slane %v178, 3
      %v1161 = vsel %vm1151, %v1159, %v1160
      %v1162 = vrot.slane %v179, 3
      %v1163 = vsel %vm1151, %v1160, %v1162
      %v1164 = vrot.slane %v180, 3
      %v1165 = vsel %vm1151, %v1162, %v1164
      %v1166 = vrot.slane %v181, 3
      %v1167 = vrot.slane %v182, 3
      %v1168 = vsel %vm1151, %v1166, %v1167
      %v1169 = vrot.slane %v183, 3
      %v1170 = vsel %vm1151, %v1167, %v1169
      %v1171 = vrot.slane %v184, 3
      %v1172 = vsel %vm1151, %v1169, %v1171
      %v1173 = vrot.slane %v185, 3
      %v1174 = vrot.slane %v186, 3
      %v1175 = vsel %vm1151, %v1173, %v1174
      %v1176 = vrot.slane %v187, 3
      %v1177 = vsel %vm1151, %v1174, %v1176
      %v1178 = vrot.slane %v188, 3
      %v1179 = vsel %vm1151, %v1176, %v1178
      %v1180 = vrot.slane %v189, 3
      %v1181 = vrot.slane %v190, 3
      %v1182 = vsel %vm1151, %v1180, %v1181
      %v1183 = vrot.slane %v191, 3
      %v1184 = vsel %vm1151, %v1181, %v1183
      %v1185 = vrot.slane %v192, 3
      %v1186 = vsel %vm1151, %v1183, %v1185
      %v1187 = vrot.slane %v193, 3
      %v1188 = vrot.slane %v194, 3
      %v1189 = vsel %vm1151, %v1187, %v1188
      %v1190 = vrot.slane %v195, 3
      %v1191 = vsel %vm1151, %v1188, %v1190
      %v1192 = vrot.slane %v196, 3
      %v1193 = vsel %vm1151, %v1190, %v1192
      %v1194 = vrot.slane %v197, 3
      %v1195 = vrot.slane %v198, 3
      %v1196 = vsel %vm1151, %v1194, %v1195
      %v1197 = vrot.slane %v199, 3
      %v1198 = vsel %vm1151, %v1195, %v1197
      %v1199 = vrot.slane %v200, 3
      %v1200 = vsel %vm1151, %v1197, %v1199
      %v1201 = vrot.slane %v201, 3
      %v1202 = vrot.slane %v202, 3
      %v1203 = vsel %vm1151, %v1201, %v1202
      %v1204 = vrot.slane %v203, 3
      %v1205 = vsel %vm1151, %v1202, %v1204
      %v1206 = vrot.slane %v204, 3
      %v1207 = vsel %vm1151, %v1204, %v1206
      %v1208 = vrot.slane %v205, 3
      %v1209 = vrot.slane %v206, 3
      %v1210 = vsel %vm1151, %v1208, %v1209
      %v1211 = vrot.slane %v207, 3
      %v1212 = vsel %vm1151, %v1209, %v1211
      %v1213 = vrot.slane %v208, 3
      %v1214 = vsel %vm1151, %v1211, %v1213
      %v1215 = vrot.slane %v209, 3
      %v1216 = vrot.slane %v210, 3
      %v1217 = vsel %vm1151, %v1215, %v1216
      %v1218 = vrot.slane %v211, 3
      %v1219 = vsel %vm1151, %v1216, %v1218
      %v1220 = vrot.slane %v212, 3
      %v1221 = vsel %vm1151, %v1218, %v1220
      %v1222 = vrot.slane %v213, 3
      %v1223 = vrot.slane %v214, 3
      %v1224 = vsel %vm1151, %v1222, %v1223
      %v1225 = vrot.slane %v215, 3
      %v1226 = vsel %vm1151, %v1223, %v1225
      %v1227 = vrot.slane %v216, 3
      %v1228 = vsel %vm1151, %v1225, %v1227
      %v1229 = vrot.slane %v217, 3
      %v1230 = vrot.slane %v218, 3
      %v1231 = vsel %vm1151, %v1229, %v1230
      %v1232 = vrot.slane %v219, 3
      %v1233 = vsel %vm1151, %v1230, %v1232
      %v1234 = vrot.slane %v220, 3
      %v1235 = vsel %vm1151, %v1232, %v1234
      %v1236 = vrot.slane %v221, 3
      %v1237 = vrot.slane %v222, 3
      %v1238 = vsel %vm1151, %v1236, %v1237
      %v1239 = vrot.slane %v223, 3
      %v1240 = vsel %vm1151, %v1237, %v1239
      %v1241 = vrot.slane %v224, 3
      %v1242 = vsel %vm1151, %v1239, %v1241
      %v1243 = vrot.slane %v225, 3
      %v1244 = vrot.slane %v226, 3
      %v1245 = vsel %vm1151, %v1243, %v1244
      %v1246 = vrot.slane %v227, 3
      %v1247 = vsel %vm1151, %v1244, %v1246
      %v1248 = vrot.slane %v228, 3
      %v1249 = vsel %vm1151, %v1246, %v1248
      %v1250 = vrot.slane %v229, 3
      %v1251 = vrot.slane %v230, 3
      %v1252 = vsel %vm1151, %v1250, %v1251
      %v1253 = vrot.slane %v231, 3
      %v1254 = vsel %vm1151, %v1251, %v1253
      %v1255 = vrot.slane %v232, 3
      %v1256 = vsel %vm1151, %v1253, %v1255
      %v1257 = vrot.slane %v233, 3
      %v1258 = vrot.slane %v234, 3
      %v1259 = vsel %vm1151, %v1257, %v1258
      %v1260 = vrot.slane %v235, 3
      %v1261 = vsel %vm1151, %v1258, %v1260
      %v1262 = vrot.slane %v236, 3
      %v1263 = vsel %vm1151, %v1260, %v1262
      %v1264 = vrot.slane %v237, 3
      %v1265 = vrot.slane %v238, 3
      %v1266 = vsel %vm1151, %v1264, %v1265
      %v1267 = vrot.slane %v239, 3
      %v1268 = vsel %vm1151, %v1265, %v1267
      %v1269 = vrot.slane %v240, 3
      %v1270 = vsel %vm1151, %v1267, %v1269
      %v1271 = vrot.slane %v241, 3
      %v1272 = vrot.slane %v242, 3
      %v1273 = vsel %vm1151, %v1271, %v1272
      %v1274 = vrot.slane %v243, 3
      %v1275 = vsel %vm1151, %v1272, %v1274
      %v1276 = vrot.slane %v244, 3
      %v1277 = vsel %vm1151, %v1274, %v1276
      %v1278 = vrot.slane %v245, 3
      %v1279 = vrot.slane %v246, 3
      %v1280 = vsel %vm1151, %v1278, %v1279
      %v1281 = vrot.slane %v247, 3
      %v1282 = vsel %vm1151, %v1279, %v1281
      %v1283 = vrot.slane %v248, 3
      %v1284 = vsel %vm1151, %v1281, %v1283
      %v1285 = vrot.slane %v249, 3
      %v1286 = vrot.slane %v250, 3
      %v1287 = vsel %vm1151, %v1285, %v1286
      %v1288 = vrot.slane %v251, 3
      %v1289 = vsel %vm1151, %v1286, %v1288
      %v1290 = vrot.slane %v252, 3
      %v1291 = vsel %vm1151, %v1288, %v1290
      %v1292 = vrot.slane %v253, 3
      %v1293 = vrot.slane %v254, 3
      %v1294 = vsel %vm1151, %v1292, %v1293
      %v1295 = vrot.slane %v255, 3
      %v1296 = vsel %vm1151, %v1293, %v1295
      %v1297 = vrot.slane %v256, 3
      %v1298 = vsel %vm1151, %v1295, %v1297
      %v1299 = vrot.slane %v257, 3
      %v1300 = vrot.slane %v258, 3
      %v1301 = vsel %vm1151, %v1299, %v1300
      %v1302 = vrot.slane %v259, 3
      %v1303 = vsel %vm1151, %v1300, %v1302
      %v1304 = vrot.slane %v260, 3
      %v1305 = vsel %vm1151, %v1302, %v1304
      %v1306 = vrot.slane %v261, 3
      %v1307 = vrot.slane %v262, 3
      %v1308 = vsel %vm1151, %v1306, %v1307
      %v1309 = vrot.slane %v263, 3
      %v1310 = vsel %vm1151, %v1307, %v1309
      %v1311 = vrot.slane %v264, 3
      %v1312 = vsel %vm1151, %v1309, %v1311
      %v1313 = vrot.slane %v265, 3
      %v1314 = vrot.slane %v266, 3
      %v1315 = vsel %vm1151, %v1313, %v1314
      %v1316 = vrot.slane %v267, 3
      %v1317 = vsel %vm1151, %v1314, %v1316
      %v1318 = vrot.slane %v268, 3
      %v1319 = vsel %vm1151, %v1316, %v1318
      %1320 = vrot.lane.b32.xlu0 %v1154, 3
      %v1321 = vpop.permute.xlu0 %1320
      %1322 = vrot.lane.b32.xlu0 %v1156, 3
      %v1323 = vpop.permute.xlu0 %1322
      %1324 = vrot.lane.b32.xlu0 %v1158, 3
      %v1325 = vpop.permute.xlu0 %1324
      %1326 = vrot.lane.b32.xlu0 %v1161, 3
      %v1327 = vpop.permute.xlu0 %1326
      %1328 = vrot.lane.b32.xlu0 %v1163, 3
      %v1329 = vpop.permute.xlu0 %1328
      %1330 = vrot.lane.b32.xlu0 %v1165, 3
      %v1331 = vpop.permute.xlu0 %1330
      %1332 = vrot.lane.b32.xlu0 %v1168, 3
      %v1333 = vpop.permute.xlu0 %1332
      %1334 = vrot.lane.b32.xlu0 %v1170, 3
      %v1335 = vpop.permute.xlu0 %1334
      %1336 = vrot.lane.b32.xlu0 %v1172, 3
      %v1337 = vpop.permute.xlu0 %1336
      %1338 = vrot.lane.b32.xlu0 %v1175, 3
      %v1339 = vpop.permute.xlu0 %1338
      %1340 = vrot.lane.b32.xlu0 %v1177, 3
      %v1341 = vpop.permute.xlu0 %1340
      %1342 = vrot.lane.b32.xlu0 %v1179, 3
      %v1343 = vpop.permute.xlu0 %1342
      %1344 = vrot.lane.b32.xlu0 %v1182, 3
      %v1345 = vpop.permute.xlu0 %1344
      %1346 = vrot.lane.b32.xlu0 %v1184, 3
      %v1347 = vpop.permute.xlu0 %1346
      %1348 = vrot.lane.b32.xlu0 %v1186, 3
      %v1349 = vpop.permute.xlu0 %1348
      %1350 = vrot.lane.b32.xlu0 %v1189, 3
      %v1351 = vpop.permute.xlu0 %1350
      %1352 = vrot.lane.b32.xlu0 %v1191, 3
      %v1353 = vpop.permute.xlu0 %1352
      %1354 = vrot.lane.b32.xlu0 %v1193, 3
      %v1355 = vpop.permute.xlu0 %1354
      %1356 = vrot.lane.b32.xlu0 %v1196, 3
      %v1357 = vpop.permute.xlu0 %1356
      %1358 = vrot.lane.b32.xlu0 %v1198, 3
      %v1359 = vpop.permute.xlu0 %1358
      %1360 = vrot.lane.b32.xlu0 %v1200, 3
      %v1361 = vpop.permute.xlu0 %1360
      %1362 = vrot.lane.b32.xlu0 %v1203, 3
      %v1363 = vpop.permute.xlu0 %1362
      %1364 = vrot.lane.b32.xlu0 %v1205, 3
      %v1365 = vpop.permute.xlu0 %1364
      %1366 = vrot.lane.b32.xlu0 %v1207, 3
      %v1367 = vpop.permute.xlu0 %1366
      %1368 = vrot.lane.b32.xlu0 %v1210, 3
      %v1369 = vpop.permute.xlu0 %1368
      %1370 = vrot.lane.b32.xlu0 %v1212, 3
      %v1371 = vpop.permute.xlu0 %1370
      %1372 = vrot.lane.b32.xlu0 %v1214, 3
      %v1373 = vpop.permute.xlu0 %1372
      %1374 = vrot.lane.b32.xlu0 %v1217, 3
      %v1375 = vpop.permute.xlu0 %1374
      %1376 = vrot.lane.b32.xlu0 %v1219, 3
      %v1377 = vpop.permute.xlu0 %1376
      %1378 = vrot.lane.b32.xlu0 %v1221, 3
      %v1379 = vpop.permute.xlu0 %1378
      %1380 = vrot.lane.b32.xlu0 %v1224, 3
      %v1381 = vpop.permute.xlu0 %1380
      %1382 = vrot.lane.b32.xlu0 %v1226, 3
      %v1383 = vpop.permute.xlu0 %1382
      %1384 = vrot.lane.b32.xlu0 %v1228, 3
      %v1385 = vpop.permute.xlu0 %1384
      %1386 = vrot.lane.b32.xlu0 %v1231, 3
      %v1387 = vpop.permute.xlu0 %1386
      %1388 = vrot.lane.b32.xlu0 %v1233, 3
      %v1389 = vpop.permute.xlu0 %1388
      %1390 = vrot.lane.b32.xlu0 %v1235, 3
      %v1391 = vpop.permute.xlu0 %1390
      %1392 = vrot.lane.b32.xlu0 %v1238, 3
      %v1393 = vpop.permute.xlu0 %1392
      %1394 = vrot.lane.b32.xlu0 %v1240, 3
      %v1395 = vpop.permute.xlu0 %1394
      %1396 = vrot.lane.b32.xlu0 %v1242, 3
      %v1397 = vpop.permute.xlu0 %1396
      %1398 = vrot.lane.b32.xlu0 %v1245, 3
      %v1399 = vpop.permute.xlu0 %1398
      %1400 = vrot.lane.b32.xlu0 %v1247, 3
      %v1401 = vpop.permute.xlu0 %1400
      %1402 = vrot.lane.b32.xlu0 %v1249, 3
      %v1403 = vpop.permute.xlu0 %1402
      %1404 = vrot.lane.b32.xlu0 %v1252, 3
      %v1405 = vpop.permute.xlu0 %1404
      %1406 = vrot.lane.b32.xlu0 %v1254, 3
      %v1407 = vpop.permute.xlu0 %1406
      %1408 = vrot.lane.b32.xlu0 %v1256, 3
      %v1409 = vpop.permute.xlu0 %1408
      %1410 = vrot.lane.b32.xlu0 %v1259, 3
      %v1411 = vpop.permute.xlu0 %1410
      %1412 = vrot.lane.b32.xlu0 %v1261, 3
      %v1413 = vpop.permute.xlu0 %1412
      %1414 = vrot.lane.b32.xlu0 %v1263, 3
      %v1415 = vpop.permute.xlu0 %1414
      %1416 = vrot.lane.b32.xlu0 %v1266, 3
      %v1417 = vpop.permute.xlu0 %1416
      %1418 = vrot.lane.b32.xlu0 %v1268, 3
      %v1419 = vpop.permute.xlu0 %1418
      %1420 = vrot.lane.b32.xlu0 %v1270, 3
      %v1421 = vpop.permute.xlu0 %1420
      %1422 = vrot.lane.b32.xlu0 %v1273, 3
      %v1423 = vpop.permute.xlu0 %1422
      %1424 = vrot.lane.b32.xlu0 %v1275, 3
      %v1425 = vpop.permute.xlu0 %1424
      %1426 = vrot.lane.b32.xlu0 %v1277, 3
      %v1427 = vpop.permute.xlu0 %1426
      %1428 = vrot.lane.b32.xlu0 %v1280, 3
      %v1429 = vpop.permute.xlu0 %1428
      %1430 = vrot.lane.b32.xlu0 %v1282, 3
      %v1431 = vpop.permute.xlu0 %1430
      %1432 = vrot.lane.b32.xlu0 %v1284, 3
      %v1433 = vpop.permute.xlu0 %1432
      %1434 = vrot.lane.b32.xlu0 %v1287, 3
      %v1435 = vpop.permute.xlu0 %1434
      %1436 = vrot.lane.b32.xlu0 %v1289, 3
      %v1437 = vpop.permute.xlu0 %1436
      %1438 = vrot.lane.b32.xlu0 %v1291, 3
      %v1439 = vpop.permute.xlu0 %1438
      %1440 = vrot.lane.b32.xlu0 %v1294, 3
      %v1441 = vpop.permute.xlu0 %1440
      %1442 = vrot.lane.b32.xlu0 %v1296, 3
      %v1443 = vpop.permute.xlu0 %1442
      %1444 = vrot.lane.b32.xlu0 %v1298, 3
      %v1445 = vpop.permute.xlu0 %1444
      %1446 = vrot.lane.b32.xlu0 %v1301, 3
      %v1447 = vpop.permute.xlu0 %1446
      %1448 = vrot.lane.b32.xlu0 %v1303, 3
      %v1449 = vpop.permute.xlu0 %1448
      %1450 = vrot.lane.b32.xlu0 %v1305, 3
      %v1451 = vpop.permute.xlu0 %1450
      %1452 = vrot.lane.b32.xlu0 %v1308, 3
      %v1453 = vpop.permute.xlu0 %1452
      %1454 = vrot.lane.b32.xlu0 %v1310, 3
      %v1455 = vpop.permute.xlu0 %1454
      %1456 = vrot.lane.b32.xlu0 %v1312, 3
      %v1457 = vpop.permute.xlu0 %1456
      %1458 = vrot.lane.b32.xlu0 %v1315, 3
      %v1459 = vpop.permute.xlu0 %1458
      %1460 = vrot.lane.b32.xlu0 %v1317, 3
      %v1461 = vpop.permute.xlu0 %1460
      %1462 = vrot.lane.b32.xlu0 %v1319, 3
      %v1463 = vpop.permute.xlu0 %1462
      %vm1536 = vcmask 1043456
      %v1537 = vrot.slane %v173, 4
      %v1538 = vrot.slane %v174, 4
      %v1539 = vsel %vm1536, %v1537, %v1538
      %v1540 = vrot.slane %v175, 4
      %v1541 = vsel %vm1536, %v1538, %v1540
      %v1542 = vrot.slane %v176, 4
      %v1543 = vsel %vm1536, %v1540, %v1542
      %v1544 = vrot.slane %v177, 4
      %v1545 = vrot.slane %v178, 4
      %v1546 = vsel %vm1536, %v1544, %v1545
      %v1547 = vrot.slane %v179, 4
      %v1548 = vsel %vm1536, %v1545, %v1547
      %v1549 = vrot.slane %v180, 4
      %v1550 = vsel %vm1536, %v1547, %v1549
      %v1551 = vrot.slane %v181, 4
      %v1552 = vrot.slane %v182, 4
      %v1553 = vsel %vm1536, %v1551, %v1552
      %v1554 = vrot.slane %v183, 4
      %v1555 = vsel %vm1536, %v1552, %v1554
      %v1556 = vrot.slane %v184, 4
      %v1557 = vsel %vm1536, %v1554, %v1556
      %v1558 = vrot.slane %v185, 4
      %v1559 = vrot.slane %v186, 4
      %v1560 = vsel %vm1536, %v1558, %v1559
      %v1561 = vrot.slane %v187, 4
      %v1562 = vsel %vm1536, %v1559, %v1561
      %v1563 = vrot.slane %v188, 4
      %v1564 = vsel %vm1536, %v1561, %v1563
      %v1565 = vrot.slane %v189, 4
      %v1566 = vrot.slane %v190, 4
      %v1567 = vsel %vm1536, %v1565, %v1566
      %v1568 = vrot.slane %v191, 4
      %v1569 = vsel %vm1536, %v1566, %v1568
      %v1570 = vrot.slane %v192, 4
      %v1571 = vsel %vm1536, %v1568, %v1570
      %v1572 = vrot.slane %v193, 4
      %v1573 = vrot.slane %v194, 4
      %v1574 = vsel %vm1536, %v1572, %v1573
      %v1575 = vrot.slane %v195, 4
      %v1576 = vsel %vm1536, %v1573, %v1575
      %v1577 = vrot.slane %v196, 4
      %v1578 = vsel %vm1536, %v1575, %v1577
      %v1579 = vrot.slane %v197, 4
      %v1580 = vrot.slane %v198, 4
      %v1581 = vsel %vm1536, %v1579, %v1580
      %v1582 = vrot.slane %v199, 4
      %v1583 = vsel %vm1536, %v1580, %v1582
      %v1584 = vrot.slane %v200, 4
      %v1585 = vsel %vm1536, %v1582, %v1584
      %v1586 = vrot.slane %v201, 4
      %v1587 = vrot.slane %v202, 4
      %v1588 = vsel %vm1536, %v1586, %v1587
      %v1589 = vrot.slane %v203, 4
      %v1590 = vsel %vm1536, %v1587, %v1589
      %v1591 = vrot.slane %v204, 4
      %v1592 = vsel %vm1536, %v1589, %v1591
      %v1593 = vrot.slane %v205, 4
      %v1594 = vrot.slane %v206, 4
      %v1595 = vsel %vm1536, %v1593, %v1594
      %v1596 = vrot.slane %v207, 4
      %v1597 = vsel %vm1536, %v1594, %v1596
      %v1598 = vrot.slane %v208, 4
      %v1599 = vsel %vm1536, %v1596, %v1598
      %v1600 = vrot.slane %v209, 4
      %v1601 = vrot.slane %v210, 4
      %v1602 = vsel %vm1536, %v1600, %v1601
      %v1603 = vrot.slane %v211, 4
      %v1604 = vsel %vm1536, %v1601, %v1603
      %v1605 = vrot.slane %v212, 4
      %v1606 = vsel %vm1536, %v1603, %v1605
      %v1607 = vrot.slane %v213, 4
      %v1608 = vrot.slane %v214, 4
      %v1609 = vsel %vm1536, %v1607, %v1608
      %v1610 = vrot.slane %v215, 4
      %v1611 = vsel %vm1536, %v1608, %v1610
      %v1612 = vrot.slane %v216, 4
      %v1613 = vsel %vm1536, %v1610, %v1612
      %v1614 = vrot.slane %v217, 4
      %v1615 = vrot.slane %v218, 4
      %v1616 = vsel %vm1536, %v1614, %v1615
      %v1617 = vrot.slane %v219, 4
      %v1618 = vsel %vm1536, %v1615, %v1617
      %v1619 = vrot.slane %v220, 4
      %v1620 = vsel %vm1536, %v1617, %v1619
      %v1621 = vrot.slane %v221, 4
      %v1622 = vrot.slane %v222, 4
      %v1623 = vsel %vm1536, %v1621, %v1622
      %v1624 = vrot.slane %v223, 4
      %v1625 = vsel %vm1536, %v1622, %v1624
      %v1626 = vrot.slane %v224, 4
      %v1627 = vsel %vm1536, %v1624, %v1626
      %v1628 = vrot.slane %v225, 4
      %v1629 = vrot.slane %v226, 4
      %v1630 = vsel %vm1536, %v1628, %v1629
      %v1631 = vrot.slane %v227, 4
      %v1632 = vsel %vm1536, %v1629, %v1631
      %v1633 = vrot.slane %v228, 4
      %v1634 = vsel %vm1536, %v1631, %v1633
      %v1635 = vrot.slane %v229, 4
      %v1636 = vrot.slane %v230, 4
      %v1637 = vsel %vm1536, %v1635, %v1636
      %v1638 = vrot.slane %v231, 4
      %v1639 = vsel %vm1536, %v1636, %v1638
      %v1640 = vrot.slane %v232, 4
      %v1641 = vsel %vm1536, %v1638, %v1640
      %v1642 = vrot.slane %v233, 4
      %v1643 = vrot.slane %v234, 4
      %v1644 = vsel %vm1536, %v1642, %v1643
      %v1645 = vrot.slane %v235, 4
      %v1646 = vsel %vm1536, %v1643, %v1645
      %v1647 = vrot.slane %v236, 4
      %v1648 = vsel %vm1536, %v1645, %v1647
      %v1649 = vrot.slane %v237, 4
      %v1650 = vrot.slane %v238, 4
      %v1651 = vsel %vm1536, %v1649, %v1650
      %v1652 = vrot.slane %v239, 4
      %v1653 = vsel %vm1536, %v1650, %v1652
      %v1654 = vrot.slane %v240, 4
      %v1655 = vsel %vm1536, %v1652, %v1654
      %v1656 = vrot.slane %v241, 4
      %v1657 = vrot.slane %v242, 4
      %v1658 = vsel %vm1536, %v1656, %v1657
      %v1659 = vrot.slane %v243, 4
      %v1660 = vsel %vm1536, %v1657, %v1659
      %v1661 = vrot.slane %v244, 4
      %v1662 = vsel %vm1536, %v1659, %v1661
      %v1663 = vrot.slane %v245, 4
      %v1664 = vrot.slane %v246, 4
      %v1665 = vsel %vm1536, %v1663, %v1664
      %v1666 = vrot.slane %v247, 4
      %v1667 = vsel %vm1536, %v1664, %v1666
      %v1668 = vrot.slane %v248, 4
      %v1669 = vsel %vm1536, %v1666, %v1668
      %v1670 = vrot.slane %v249, 4
      %v1671 = vrot.slane %v250, 4
      %v1672 = vsel %vm1536, %v1670, %v1671
      %v1673 = vrot.slane %v251, 4
      %v1674 = vsel %vm1536, %v1671, %v1673
      %v1675 = vrot.slane %v252, 4
      %v1676 = vsel %vm1536, %v1673, %v1675
      %v1677 = vrot.slane %v253, 4
      %v1678 = vrot.slane %v254, 4
      %v1679 = vsel %vm1536, %v1677, %v1678
      %v1680 = vrot.slane %v255, 4
      %v1681 = vsel %vm1536, %v1678, %v1680
      %v1682 = vrot.slane %v256, 4
      %v1683 = vsel %vm1536, %v1680, %v1682
      %v1684 = vrot.slane %v257, 4
      %v1685 = vrot.slane %v258, 4
      %v1686 = vsel %vm1536, %v1684, %v1685
      %v1687 = vrot.slane %v259, 4
      %v1688 = vsel %vm1536, %v1685, %v1687
      %v1689 = vrot.slane %v260, 4
      %v1690 = vsel %vm1536, %v1687, %v1689
      %v1691 = vrot.slane %v261, 4
      %v1692 = vrot.slane %v262, 4
      %v1693 = vsel %vm1536, %v1691, %v1692
      %v1694 = vrot.slane %v263, 4
      %v1695 = vsel %vm1536, %v1692, %v1694
      %v1696 = vrot.slane %v264, 4
      %v1697 = vsel %vm1536, %v1694, %v1696
      %v1698 = vrot.slane %v265, 4
      %v1699 = vrot.slane %v266, 4
      %v1700 = vsel %vm1536, %v1698, %v1699
      %v1701 = vrot.slane %v267, 4
      %v1702 = vsel %vm1536, %v1699, %v1701
      %v1703 = vrot.slane %v268, 4
      %v1704 = vsel %vm1536, %v1701, %v1703
      %1705 = vrot.lane.b32.xlu0 %v1539, 4
      %v1706 = vpop.permute.xlu0 %1705
      %1707 = vrot.lane.b32.xlu0 %v1541, 4
      %v1708 = vpop.permute.xlu0 %1707
      %1709 = vrot.lane.b32.xlu0 %v1543, 4
      %v1710 = vpop.permute.xlu0 %1709
      %1711 = vrot.lane.b32.xlu0 %v1546, 4
      %v1712 = vpop.permute.xlu0 %1711
      %1713 = vrot.lane.b32.xlu0 %v1548, 4
      %v1714 = vpop.permute.xlu0 %1713
      %1715 = vrot.lane.b32.xlu0 %v1550, 4
      %v1716 = vpop.permute.xlu0 %1715
      %1717 = vrot.lane.b32.xlu0 %v1553, 4
      %v1718 = vpop.permute.xlu0 %1717
      %1719 = vrot.lane.b32.xlu0 %v1555, 4
      %v1720 = vpop.permute.xlu0 %1719
      %1721 = vrot.lane.b32.xlu0 %v1557, 4
      %v1722 = vpop.permute.xlu0 %1721
      %1723 = vrot.lane.b32.xlu0 %v1560, 4
      %v1724 = vpop.permute.xlu0 %1723
      %1725 = vrot.lane.b32.xlu0 %v1562, 4
      %v1726 = vpop.permute.xlu0 %1725
      %1727 = vrot.lane.b32.xlu0 %v1564, 4
      %v1728 = vpop.permute.xlu0 %1727
      %1729 = vrot.lane.b32.xlu0 %v1567, 4
      %v1730 = vpop.permute.xlu0 %1729
      %1731 = vrot.lane.b32.xlu0 %v1569, 4
      %v1732 = vpop.permute.xlu0 %1731
      %1733 = vrot.lane.b32.xlu0 %v1571, 4
      %v1734 = vpop.permute.xlu0 %1733
      %1735 = vrot.lane.b32.xlu0 %v1574, 4
      %v1736 = vpop.permute.xlu0 %1735
      %1737 = vrot.lane.b32.xlu0 %v1576, 4
      %v1738 = vpop.permute.xlu0 %1737
      %1739 = vrot.lane.b32.xlu0 %v1578, 4
      %v1740 = vpop.permute.xlu0 %1739
      %1741 = vrot.lane.b32.xlu0 %v1581, 4
      %v1742 = vpop.permute.xlu0 %1741
      %1743 = vrot.lane.b32.xlu0 %v1583, 4
      %v1744 = vpop.permute.xlu0 %1743
      %1745 = vrot.lane.b32.xlu0 %v1585, 4
      %v1746 = vpop.permute.xlu0 %1745
      %1747 = vrot.lane.b32.xlu0 %v1588, 4
      %v1748 = vpop.permute.xlu0 %1747
      %1749 = vrot.lane.b32.xlu0 %v1590, 4
      %v1750 = vpop.permute.xlu0 %1749
      %1751 = vrot.lane.b32.xlu0 %v1592, 4
      %v1752 = vpop.permute.xlu0 %1751
      %1753 = vrot.lane.b32.xlu0 %v1595, 4
      %v1754 = vpop.permute.xlu0 %1753
      %1755 = vrot.lane.b32.xlu0 %v1597, 4
      %v1756 = vpop.permute.xlu0 %1755
      %1757 = vrot.lane.b32.xlu0 %v1599, 4
      %v1758 = vpop.permute.xlu0 %1757
      %1759 = vrot.lane.b32.xlu0 %v1602, 4
      %v1760 = vpop.permute.xlu0 %1759
      %1761 = vrot.lane.b32.xlu0 %v1604, 4
      %v1762 = vpop.permute.xlu0 %1761
      %1763 = vrot.lane.b32.xlu0 %v1606, 4
      %v1764 = vpop.permute.xlu0 %1763
      %1765 = vrot.lane.b32.xlu0 %v1609, 4
      %v1766 = vpop.permute.xlu0 %1765
      %1767 = vrot.lane.b32.xlu0 %v1611, 4
      %v1768 = vpop.permute.xlu0 %1767
      %1769 = vrot.lane.b32.xlu0 %v1613, 4
      %v1770 = vpop.permute.xlu0 %1769
      %1771 = vrot.lane.b32.xlu0 %v1616, 4
      %v1772 = vpop.permute.xlu0 %1771
      %1773 = vrot.lane.b32.xlu0 %v1618, 4
      %v1774 = vpop.permute.xlu0 %1773
      %1775 = vrot.lane.b32.xlu0 %v1620, 4
      %v1776 = vpop.permute.xlu0 %1775
      %1777 = vrot.lane.b32.xlu0 %v1623, 4
      %v1778 = vpop.permute.xlu0 %1777
      %1779 = vrot.lane.b32.xlu0 %v1625, 4
      %v1780 = vpop.permute.xlu0 %1779
      %1781 = vrot.lane.b32.xlu0 %v1627, 4
      %v1782 = vpop.permute.xlu0 %1781
      %1783 = vrot.lane.b32.xlu0 %v1630, 4
      %v1784 = vpop.permute.xlu0 %1783
      %1785 = vrot.lane.b32.xlu0 %v1632, 4
      %v1786 = vpop.permute.xlu0 %1785
      %1787 = vrot.lane.b32.xlu0 %v1634, 4
      %v1788 = vpop.permute.xlu0 %1787
      %1789 = vrot.lane.b32.xlu0 %v1637, 4
      %v1790 = vpop.permute.xlu0 %1789
      %1791 = vrot.lane.b32.xlu0 %v1639, 4
      %v1792 = vpop.permute.xlu0 %1791
      %1793 = vrot.lane.b32.xlu0 %v1641, 4
      %v1794 = vpop.permute.xlu0 %1793
      %1795 = vrot.lane.b32.xlu0 %v1644, 4
      %v1796 = vpop.permute.xlu0 %1795
      %1797 = vrot.lane.b32.xlu0 %v1646, 4
      %v1798 = vpop.permute.xlu0 %1797
      %1799 = vrot.lane.b32.xlu0 %v1648, 4
      %v1800 = vpop.permute.xlu0 %1799
      %1801 = vrot.lane.b32.xlu0 %v1651, 4
      %v1802 = vpop.permute.xlu0 %1801
      %1803 = vrot.lane.b32.xlu0 %v1653, 4
      %v1804 = vpop.permute.xlu0 %1803
      %1805 = vrot.lane.b32.xlu0 %v1655, 4
      %v1806 = vpop.permute.xlu0 %1805
      %1807 = vrot.lane.b32.xlu0 %v1658, 4
      %v1808 = vpop.permute.xlu0 %1807
      %1809 = vrot.lane.b32.xlu0 %v1660, 4
      %v1810 = vpop.permute.xlu0 %1809
      %1811 = vrot.lane.b32.xlu0 %v1662, 4
      %v1812 = vpop.permute.xlu0 %1811
      %1813 = vrot.lane.b32.xlu0 %v1665, 4
      %v1814 = vpop.permute.xlu0 %1813
      %1815 = vrot.lane.b32.xlu0 %v1667, 4
      %v1816 = vpop.permute.xlu0 %1815
      %1817 = vrot.lane.b32.xlu0 %v1669, 4
      %v1818 = vpop.permute.xlu0 %1817
      %1819 = vrot.lane.b32.xlu0 %v1672, 4
      %v1820 = vpop.permute.xlu0 %1819
      %1821 = vrot.lane.b32.xlu0 %v1674, 4
      %v1822 = vpop.permute.xlu0 %1821
      %1823 = vrot.lane.b32.xlu0 %v1676, 4
      %v1824 = vpop.permute.xlu0 %1823
      %1825 = vrot.lane.b32.xlu0 %v1679, 4
      %v1826 = vpop.permute.xlu0 %1825
      %1827 = vrot.lane.b32.xlu0 %v1681, 4
      %v1828 = vpop.permute.xlu0 %1827
      %1829 = vrot.lane.b32.xlu0 %v1683, 4
      %v1830 = vpop.permute.xlu0 %1829
      %1831 = vrot.lane.b32.xlu0 %v1686, 4
      %v1832 = vpop.permute.xlu0 %1831
      %1833 = vrot.lane.b32.xlu0 %v1688, 4
      %v1834 = vpop.permute.xlu0 %1833
      %1835 = vrot.lane.b32.xlu0 %v1690, 4
      %v1836 = vpop.permute.xlu0 %1835
      %1837 = vrot.lane.b32.xlu0 %v1693, 4
      %v1838 = vpop.permute.xlu0 %1837
      %1839 = vrot.lane.b32.xlu0 %v1695, 4
      %v1840 = vpop.permute.xlu0 %1839
      %1841 = vrot.lane.b32.xlu0 %v1697, 4
      %v1842 = vpop.permute.xlu0 %1841
      %1843 = vrot.lane.b32.xlu0 %v1700, 4
      %v1844 = vpop.permute.xlu0 %1843
      %1845 = vrot.lane.b32.xlu0 %v1702, 4
      %v1846 = vpop.permute.xlu0 %1845
      %1847 = vrot.lane.b32.xlu0 %v1704, 4
      %v1848 = vpop.permute.xlu0 %1847
      %1924 = vrot.lane.b32.xlu0 %v177, 5
      %v1925 = vpop.permute.xlu0 %1924
      %1926 = vrot.lane.b32.xlu0 %v178, 5
      %v1927 = vpop.permute.xlu0 %1926
      %1928 = vrot.lane.b32.xlu0 %v179, 5
      %v1929 = vpop.permute.xlu0 %1928
      %1930 = vrot.lane.b32.xlu0 %v181, 5
      %v1931 = vpop.permute.xlu0 %1930
      %1932 = vrot.lane.b32.xlu0 %v182, 5
      %v1933 = vpop.permute.xlu0 %1932
      %1934 = vrot.lane.b32.xlu0 %v183, 5
      %v1935 = vpop.permute.xlu0 %1934
      %1936 = vrot.lane.b32.xlu0 %v185, 5
      %v1937 = vpop.permute.xlu0 %1936
      %1938 = vrot.lane.b32.xlu0 %v186, 5
      %v1939 = vpop.permute.xlu0 %1938
      %1940 = vrot.lane.b32.xlu0 %v187, 5
      %v1941 = vpop.permute.xlu0 %1940
      %1942 = vrot.lane.b32.xlu0 %v189, 5
      %v1943 = vpop.permute.xlu0 %1942
      %1944 = vrot.lane.b32.xlu0 %v190, 5
      %v1945 = vpop.permute.xlu0 %1944
      %1946 = vrot.lane.b32.xlu0 %v191, 5
      %v1947 = vpop.permute.xlu0 %1946
      %1948 = vrot.lane.b32.xlu0 %v193, 5
      %v1949 = vpop.permute.xlu0 %1948
      %1950 = vrot.lane.b32.xlu0 %v194, 5
      %v1951 = vpop.permute.xlu0 %1950
      %1952 = vrot.lane.b32.xlu0 %v195, 5
      %v1953 = vpop.permute.xlu0 %1952
      %1954 = vrot.lane.b32.xlu0 %v197, 5
      %v1955 = vpop.permute.xlu0 %1954
      %1956 = vrot.lane.b32.xlu0 %v198, 5
      %v1957 = vpop.permute.xlu0 %1956
      %1958 = vrot.lane.b32.xlu0 %v199, 5
      %v1959 = vpop.permute.xlu0 %1958
      %1960 = vrot.lane.b32.xlu0 %v201, 5
      %v1961 = vpop.permute.xlu0 %1960
      %1962 = vrot.lane.b32.xlu0 %v202, 5
      %v1963 = vpop.permute.xlu0 %1962
      %1964 = vrot.lane.b32.xlu0 %v203, 5
      %v1965 = vpop.permute.xlu0 %1964
      %1966 = vrot.lane.b32.xlu0 %v205, 5
      %v1967 = vpop.permute.xlu0 %1966
      %1968 = vrot.lane.b32.xlu0 %v206, 5
      %v1969 = vpop.permute.xlu0 %1968
      %1970 = vrot.lane.b32.xlu0 %v207, 5
      %v1971 = vpop.permute.xlu0 %1970
      %1972 = vrot.lane.b32.xlu0 %v209, 5
      %v1973 = vpop.permute.xlu0 %1972
      %1974 = vrot.lane.b32.xlu0 %v210, 5
      %v1975 = vpop.permute.xlu0 %1974
      %1976 = vrot.lane.b32.xlu0 %v211, 5
      %v1977 = vpop.permute.xlu0 %1976
      %1978 = vrot.lane.b32.xlu0 %v213, 5
      %v1979 = vpop.permute.xlu0 %1978
      %1980 = vrot.lane.b32.xlu0 %v214, 5
      %v1981 = vpop.permute.xlu0 %1980
      %1982 = vrot.lane.b32.xlu0 %v215, 5
      %v1983 = vpop.permute.xlu0 %1982
      %1984 = vrot.lane.b32.xlu0 %v217, 5
      %v1985 = vpop.permute.xlu0 %1984
      %1986 = vrot.lane.b32.xlu0 %v218, 5
      %v1987 = vpop.permute.xlu0 %1986
      %1988 = vrot.lane.b32.xlu0 %v219, 5
      %v1989 = vpop.permute.xlu0 %1988
      %1990 = vrot.lane.b32.xlu0 %v221, 5
      %v1991 = vpop.permute.xlu0 %1990
      %1992 = vrot.lane.b32.xlu0 %v222, 5
      %v1993 = vpop.permute.xlu0 %1992
      %1994 = vrot.lane.b32.xlu0 %v223, 5
      %v1995 = vpop.permute.xlu0 %1994
      %1996 = vrot.lane.b32.xlu0 %v225, 5
      %v1997 = vpop.permute.xlu0 %1996
      %1998 = vrot.lane.b32.xlu0 %v226, 5
      %v1999 = vpop.permute.xlu0 %1998
      %2000 = vrot.lane.b32.xlu0 %v227, 5
      %v2001 = vpop.permute.xlu0 %2000
      %2002 = vrot.lane.b32.xlu0 %v229, 5
      %v2003 = vpop.permute.xlu0 %2002
      %2004 = vrot.lane.b32.xlu0 %v230, 5
      %v2005 = vpop.permute.xlu0 %2004
      %2006 = vrot.lane.b32.xlu0 %v231, 5
      %v2007 = vpop.permute.xlu0 %2006
      %2008 = vrot.lane.b32.xlu0 %v233, 5
      %v2009 = vpop.permute.xlu0 %2008
      %2010 = vrot.lane.b32.xlu0 %v234, 5
      %v2011 = vpop.permute.xlu0 %2010
      %2012 = vrot.lane.b32.xlu0 %v235, 5
      %v2013 = vpop.permute.xlu0 %2012
      %2014 = vrot.lane.b32.xlu0 %v237, 5
      %v2015 = vpop.permute.xlu0 %2014
      %2016 = vrot.lane.b32.xlu0 %v238, 5
      %v2017 = vpop.permute.xlu0 %2016
      %2018 = vrot.lane.b32.xlu0 %v239, 5
      %v2019 = vpop.permute.xlu0 %2018
      %2020 = vrot.lane.b32.xlu0 %v241, 5
      %v2021 = vpop.permute.xlu0 %2020
      %2022 = vrot.lane.b32.xlu0 %v242, 5
      %v2023 = vpop.permute.xlu0 %2022
      %2024 = vrot.lane.b32.xlu0 %v243, 5
      %v2025 = vpop.permute.xlu0 %2024
      %2026 = vrot.lane.b32.xlu0 %v245, 5
      %v2027 = vpop.permute.xlu0 %2026
      %2028 = vrot.lane.b32.xlu0 %v246, 5
      %v2029 = vpop.permute.xlu0 %2028
      %2030 = vrot.lane.b32.xlu0 %v247, 5
      %v2031 = vpop.permute.xlu0 %2030
      %2032 = vrot.lane.b32.xlu0 %v249, 5
      %v2033 = vpop.permute.xlu0 %2032
      %2034 = vrot.lane.b32.xlu0 %v250, 5
      %v2035 = vpop.permute.xlu0 %2034
      %2036 = vrot.lane.b32.xlu0 %v251, 5
      %v2037 = vpop.permute.xlu0 %2036
      %2038 = vrot.lane.b32.xlu0 %v253, 5
      %v2039 = vpop.permute.xlu0 %2038
      %2040 = vrot.lane.b32.xlu0 %v254, 5
      %v2041 = vpop.permute.xlu0 %2040
      %2042 = vrot.lane.b32.xlu0 %v255, 5
      %v2043 = vpop.permute.xlu0 %2042
      %2044 = vrot.lane.b32.xlu0 %v257, 5
      %v2045 = vpop.permute.xlu0 %2044
      %2046 = vrot.lane.b32.xlu0 %v258, 5
      %v2047 = vpop.permute.xlu0 %2046
      %2048 = vrot.lane.b32.xlu0 %v259, 5
      %v2049 = vpop.permute.xlu0 %2048
      %2050 = vrot.lane.b32.xlu0 %v261, 5
      %v2051 = vpop.permute.xlu0 %2050
      %2052 = vrot.lane.b32.xlu0 %v262, 5
      %v2053 = vpop.permute.xlu0 %2052
      %2054 = vrot.lane.b32.xlu0 %v263, 5
      %v2055 = vpop.permute.xlu0 %2054
      %2056 = vrot.lane.b32.xlu0 %v265, 5
      %v2057 = vpop.permute.xlu0 %2056
      %2058 = vrot.lane.b32.xlu0 %v266, 5
      %v2059 = vpop.permute.xlu0 %2058
      %2060 = vrot.lane.b32.xlu0 %v267, 5
      %v2061 = vpop.permute.xlu0 %2060
      %2062 = vrot.lane.b32.xlu0 %v269, 5
      %v2063 = vpop.permute.xlu0 %2062
      %2064 = vrot.lane.b32.xlu0 %v270, 5
      %v2065 = vpop.permute.xlu0 %2064
      %2066 = vrot.lane.b32.xlu0 %v271, 5
      %v2067 = vpop.permute.xlu0 %2066
      %v2141 = vrot.slane %v269, 1
      %v2142 = vrot.slane %v270, 1
      %v2143 = vsel %vm381, %v2141, %v2142
      %v2144 = vrot.slane %v271, 1
      %v2145 = vsel %vm381, %v2142, %v2144
      %v2146 = vrot.slane %v272, 1
      %v2147 = vsel %vm381, %v2144, %v2146
      %2148 = vrot.lane.b32.xlu0 %v391, 6
      %v2149 = vpop.permute.xlu0 %2148
      %2150 = vrot.lane.b32.xlu0 %v393, 6
      %v2151 = vpop.permute.xlu0 %2150
      %2152 = vrot.lane.b32.xlu0 %v395, 6
      %v2153 = vpop.permute.xlu0 %2152
      %2154 = vrot.lane.b32.xlu0 %v398, 6
      %v2155 = vpop.permute.xlu0 %2154
      %2156 = vrot.lane.b32.xlu0 %v400, 6
      %v2157 = vpop.permute.xlu0 %2156
      %2158 = vrot.lane.b32.xlu0 %v402, 6
      %v2159 = vpop.permute.xlu0 %2158
      %2160 = vrot.lane.b32.xlu0 %v405, 6
      %v2161 = vpop.permute.xlu0 %2160
      %2162 = vrot.lane.b32.xlu0 %v407, 6
      %v2163 = vpop.permute.xlu0 %2162
      %2164 = vrot.lane.b32.xlu0 %v409, 6
      %v2165 = vpop.permute.xlu0 %2164
      %2166 = vrot.lane.b32.xlu0 %v412, 6
      %v2167 = vpop.permute.xlu0 %2166
      %2168 = vrot.lane.b32.xlu0 %v414, 6
      %v2169 = vpop.permute.xlu0 %2168
      %2170 = vrot.lane.b32.xlu0 %v416, 6
      %v2171 = vpop.permute.xlu0 %2170
      %2172 = vrot.lane.b32.xlu0 %v419, 6
      %v2173 = vpop.permute.xlu0 %2172
      %2174 = vrot.lane.b32.xlu0 %v421, 6
      %v2175 = vpop.permute.xlu0 %2174
      %2176 = vrot.lane.b32.xlu0 %v423, 6
      %v2177 = vpop.permute.xlu0 %2176
      %2178 = vrot.lane.b32.xlu0 %v426, 6
      %v2179 = vpop.permute.xlu0 %2178
      %2180 = vrot.lane.b32.xlu0 %v428, 6
      %v2181 = vpop.permute.xlu0 %2180
      %2182 = vrot.lane.b32.xlu0 %v430, 6
      %v2183 = vpop.permute.xlu0 %2182
      %2184 = vrot.lane.b32.xlu0 %v433, 6
      %v2185 = vpop.permute.xlu0 %2184
      %2186 = vrot.lane.b32.xlu0 %v435, 6
      %v2187 = vpop.permute.xlu0 %2186
      %2188 = vrot.lane.b32.xlu0 %v437, 6
      %v2189 = vpop.permute.xlu0 %2188
      %2190 = vrot.lane.b32.xlu0 %v440, 6
      %v2191 = vpop.permute.xlu0 %2190
      %2192 = vrot.lane.b32.xlu0 %v442, 6
      %v2193 = vpop.permute.xlu0 %2192
      %2194 = vrot.lane.b32.xlu0 %v444, 6
      %v2195 = vpop.permute.xlu0 %2194
      %2196 = vrot.lane.b32.xlu0 %v447, 6
      %v2197 = vpop.permute.xlu0 %2196
      %2198 = vrot.lane.b32.xlu0 %v449, 6
      %v2199 = vpop.permute.xlu0 %2198
      %2200 = vrot.lane.b32.xlu0 %v451, 6
      %v2201 = vpop.permute.xlu0 %2200
      %2202 = vrot.lane.b32.xlu0 %v454, 6
      %v2203 = vpop.permute.xlu0 %2202
      %2204 = vrot.lane.b32.xlu0 %v456, 6
      %v2205 = vpop.permute.xlu0 %2204
      %2206 = vrot.lane.b32.xlu0 %v458, 6
      %v2207 = vpop.permute.xlu0 %2206
      %2208 = vrot.lane.b32.xlu0 %v461, 6
      %v2209 = vpop.permute.xlu0 %2208
      %2210 = vrot.lane.b32.xlu0 %v463, 6
      %v2211 = vpop.permute.xlu0 %2210
      %2212 = vrot.lane.b32.xlu0 %v465, 6
      %v2213 = vpop.permute.xlu0 %2212
      %2214 = vrot.lane.b32.xlu0 %v468, 6
      %v2215 = vpop.permute.xlu0 %2214
      %2216 = vrot.lane.b32.xlu0 %v470, 6
      %v2217 = vpop.permute.xlu0 %2216
      %2218 = vrot.lane.b32.xlu0 %v472, 6
      %v2219 = vpop.permute.xlu0 %2218
      %2220 = vrot.lane.b32.xlu0 %v475, 6
      %v2221 = vpop.permute.xlu0 %2220
      %2222 = vrot.lane.b32.xlu0 %v477, 6
      %v2223 = vpop.permute.xlu0 %2222
      %2224 = vrot.lane.b32.xlu0 %v479, 6
      %v2225 = vpop.permute.xlu0 %2224
      %2226 = vrot.lane.b32.xlu0 %v482, 6
      %v2227 = vpop.permute.xlu0 %2226
      %2228 = vrot.lane.b32.xlu0 %v484, 6
      %v2229 = vpop.permute.xlu0 %2228
      %2230 = vrot.lane.b32.xlu0 %v486, 6
      %v2231 = vpop.permute.xlu0 %2230
      %2232 = vrot.lane.b32.xlu0 %v489, 6
      %v2233 = vpop.permute.xlu0 %2232
      %2234 = vrot.lane.b32.xlu0 %v491, 6
      %v2235 = vpop.permute.xlu0 %2234
      %2236 = vrot.lane.b32.xlu0 %v493, 6
      %v2237 = vpop.permute.xlu0 %2236
      %2238 = vrot.lane.b32.xlu0 %v496, 6
      %v2239 = vpop.permute.xlu0 %2238
      %2240 = vrot.lane.b32.xlu0 %v498, 6
      %v2241 = vpop.permute.xlu0 %2240
      %2242 = vrot.lane.b32.xlu0 %v500, 6
      %v2243 = vpop.permute.xlu0 %2242
      %2244 = vrot.lane.b32.xlu0 %v503, 6
      %v2245 = vpop.permute.xlu0 %2244
      %2246 = vrot.lane.b32.xlu0 %v505, 6
      %v2247 = vpop.permute.xlu0 %2246
      %2248 = vrot.lane.b32.xlu0 %v507, 6
      %v2249 = vpop.permute.xlu0 %2248
      %2250 = vrot.lane.b32.xlu0 %v510, 6
      %v2251 = vpop.permute.xlu0 %2250
      %2252 = vrot.lane.b32.xlu0 %v512, 6
      %v2253 = vpop.permute.xlu0 %2252
      %2254 = vrot.lane.b32.xlu0 %v514, 6
      %v2255 = vpop.permute.xlu0 %2254
      %2256 = vrot.lane.b32.xlu0 %v517, 6
      %v2257 = vpop.permute.xlu0 %2256
      %2258 = vrot.lane.b32.xlu0 %v519, 6
      %v2259 = vpop.permute.xlu0 %2258
      %2260 = vrot.lane.b32.xlu0 %v521, 6
      %v2261 = vpop.permute.xlu0 %2260
      %2262 = vrot.lane.b32.xlu0 %v524, 6
      %v2263 = vpop.permute.xlu0 %2262
      %2264 = vrot.lane.b32.xlu0 %v526, 6
      %v2265 = vpop.permute.xlu0 %2264
      %2266 = vrot.lane.b32.xlu0 %v528, 6
      %v2267 = vpop.permute.xlu0 %2266
      %2268 = vrot.lane.b32.xlu0 %v531, 6
      %v2269 = vpop.permute.xlu0 %2268
      %2270 = vrot.lane.b32.xlu0 %v533, 6
      %v2271 = vpop.permute.xlu0 %2270
      %2272 = vrot.lane.b32.xlu0 %v535, 6
      %v2273 = vpop.permute.xlu0 %2272
      %2274 = vrot.lane.b32.xlu0 %v538, 6
      %v2275 = vpop.permute.xlu0 %2274
      %2276 = vrot.lane.b32.xlu0 %v540, 6
      %v2277 = vpop.permute.xlu0 %2276
      %2278 = vrot.lane.b32.xlu0 %v542, 6
      %v2279 = vpop.permute.xlu0 %2278
      %2280 = vrot.lane.b32.xlu0 %v545, 6
      %v2281 = vpop.permute.xlu0 %2280
      %2282 = vrot.lane.b32.xlu0 %v547, 6
      %v2283 = vpop.permute.xlu0 %2282
      %2284 = vrot.lane.b32.xlu0 %v549, 6
      %v2285 = vpop.permute.xlu0 %2284
      %2286 = vrot.lane.b32.xlu0 %v2143, 6
      %v2287 = vpop.permute.xlu0 %2286
      %2288 = vrot.lane.b32.xlu0 %v2145, 6
      %v2289 = vpop.permute.xlu0 %2288
      %2290 = vrot.lane.b32.xlu0 %v2147, 6
      %v2291 = vpop.permute.xlu0 %2290
      %v2364 = vrot.slane %v269, 2
      %v2365 = vrot.slane %v270, 2
      %v2366 = vsel %vm766, %v2364, %v2365
      %v2367 = vrot.slane %v271, 2
      %v2368 = vsel %vm766, %v2365, %v2367
      %v2369 = vrot.slane %v272, 2
      %v2370 = vsel %vm766, %v2367, %v2369
      %2371 = vrot.lane.b32.xlu0 %v776, 7
      %v2372 = vpop.permute.xlu0 %2371
      %2373 = vrot.lane.b32.xlu0 %v778, 7
      %v2374 = vpop.permute.xlu0 %2373
      %2375 = vrot.lane.b32.xlu0 %v780, 7
      %v2376 = vpop.permute.xlu0 %2375
      %2377 = vrot.lane.b32.xlu0 %v783, 7
      %v2378 = vpop.permute.xlu0 %2377
      %2379 = vrot.lane.b32.xlu0 %v785, 7
      %v2380 = vpop.permute.xlu0 %2379
      %2381 = vrot.lane.b32.xlu0 %v787, 7
      %v2382 = vpop.permute.xlu0 %2381
      %2383 = vrot.lane.b32.xlu0 %v790, 7
      %v2384 = vpop.permute.xlu0 %2383
      %2385 = vrot.lane.b32.xlu0 %v792, 7
      %v2386 = vpop.permute.xlu0 %2385
      %2387 = vrot.lane.b32.xlu0 %v794, 7
      %v2388 = vpop.permute.xlu0 %2387
      %2389 = vrot.lane.b32.xlu0 %v797, 7
      %v2390 = vpop.permute.xlu0 %2389
      %2391 = vrot.lane.b32.xlu0 %v799, 7
      %v2392 = vpop.permute.xlu0 %2391
      %2393 = vrot.lane.b32.xlu0 %v801, 7
      %v2394 = vpop.permute.xlu0 %2393
      %2395 = vrot.lane.b32.xlu0 %v804, 7
      %v2396 = vpop.permute.xlu0 %2395
      %2397 = vrot.lane.b32.xlu0 %v806, 7
      %v2398 = vpop.permute.xlu0 %2397
      %2399 = vrot.lane.b32.xlu0 %v808, 7
      %v2400 = vpop.permute.xlu0 %2399
      %2401 = vrot.lane.b32.xlu0 %v811, 7
      %v2402 = vpop.permute.xlu0 %2401
      %2403 = vrot.lane.b32.xlu0 %v813, 7
      %v2404 = vpop.permute.xlu0 %2403
      %2405 = vrot.lane.b32.xlu0 %v815, 7
      %v2406 = vpop.permute.xlu0 %2405
      %2407 = vrot.lane.b32.xlu0 %v818, 7
      %v2408 = vpop.permute.xlu0 %2407
      %2409 = vrot.lane.b32.xlu0 %v820, 7
      %v2410 = vpop.permute.xlu0 %2409
      %2411 = vrot.lane.b32.xlu0 %v822, 7
      %v2412 = vpop.permute.xlu0 %2411
      %2413 = vrot.lane.b32.xlu0 %v825, 7
      %v2414 = vpop.permute.xlu0 %2413
      %2415 = vrot.lane.b32.xlu0 %v827, 7
      %v2416 = vpop.permute.xlu0 %2415
      %2417 = vrot.lane.b32.xlu0 %v829, 7
      %v2418 = vpop.permute.xlu0 %2417
      %2419 = vrot.lane.b32.xlu0 %v832, 7
      %v2420 = vpop.permute.xlu0 %2419
      %2421 = vrot.lane.b32.xlu0 %v834, 7
      %v2422 = vpop.permute.xlu0 %2421
      %2423 = vrot.lane.b32.xlu0 %v836, 7
      %v2424 = vpop.permute.xlu0 %2423
      %2425 = vrot.lane.b32.xlu0 %v839, 7
      %v2426 = vpop.permute.xlu0 %2425
      %2427 = vrot.lane.b32.xlu0 %v841, 7
      %v2428 = vpop.permute.xlu0 %2427
      %2429 = vrot.lane.b32.xlu0 %v843, 7
      %v2430 = vpop.permute.xlu0 %2429
      %2431 = vrot.lane.b32.xlu0 %v846, 7
      %v2432 = vpop.permute.xlu0 %2431
      %2433 = vrot.lane.b32.xlu0 %v848, 7
      %v2434 = vpop.permute.xlu0 %2433
      %2435 = vrot.lane.b32.xlu0 %v850, 7
      %v2436 = vpop.permute.xlu0 %2435
      %2437 = vrot.lane.b32.xlu0 %v853, 7
      %v2438 = vpop.permute.xlu0 %2437
      %2439 = vrot.lane.b32.xlu0 %v855, 7
      %v2440 = vpop.permute.xlu0 %2439
      %2441 = vrot.lane.b32.xlu0 %v857, 7
      %v2442 = vpop.permute.xlu0 %2441
      %2443 = vrot.lane.b32.xlu0 %v860, 7
      %v2444 = vpop.permute.xlu0 %2443
      %2445 = vrot.lane.b32.xlu0 %v862, 7
      %v2446 = vpop.permute.xlu0 %2445
      %2447 = vrot.lane.b32.xlu0 %v864, 7
      %v2448 = vpop.permute.xlu0 %2447
      %2449 = vrot.lane.b32.xlu0 %v867, 7
      %v2450 = vpop.permute.xlu0 %2449
      %2451 = vrot.lane.b32.xlu0 %v869, 7
      %v2452 = vpop.permute.xlu0 %2451
      %2453 = vrot.lane.b32.xlu0 %v871, 7
      %v2454 = vpop.permute.xlu0 %2453
      %2455 = vrot.lane.b32.xlu0 %v874, 7
      %v2456 = vpop.permute.xlu0 %2455
      %2457 = vrot.lane.b32.xlu0 %v876, 7
      %v2458 = vpop.permute.xlu0 %2457
      %2459 = vrot.lane.b32.xlu0 %v878, 7
      %v2460 = vpop.permute.xlu0 %2459
      %2461 = vrot.lane.b32.xlu0 %v881, 7
      %v2462 = vpop.permute.xlu0 %2461
      %2463 = vrot.lane.b32.xlu0 %v883, 7
      %v2464 = vpop.permute.xlu0 %2463
      %2465 = vrot.lane.b32.xlu0 %v885, 7
      %v2466 = vpop.permute.xlu0 %2465
      %2467 = vrot.lane.b32.xlu0 %v888, 7
      %v2468 = vpop.permute.xlu0 %2467
      %2469 = vrot.lane.b32.xlu0 %v890, 7
      %v2470 = vpop.permute.xlu0 %2469
      %2471 = vrot.lane.b32.xlu0 %v892, 7
      %v2472 = vpop.permute.xlu0 %2471
      %2473 = vrot.lane.b32.xlu0 %v895, 7
      %v2474 = vpop.permute.xlu0 %2473
      %2475 = vrot.lane.b32.xlu0 %v897, 7
      %v2476 = vpop.permute.xlu0 %2475
      %2477 = vrot.lane.b32.xlu0 %v899, 7
      %v2478 = vpop.permute.xlu0 %2477
      %2479 = vrot.lane.b32.xlu0 %v902, 7
      %v2480 = vpop.permute.xlu0 %2479
      %2481 = vrot.lane.b32.xlu0 %v904, 7
      %v2482 = vpop.permute.xlu0 %2481
      %2483 = vrot.lane.b32.xlu0 %v906, 7
      %v2484 = vpop.permute.xlu0 %2483
      %2485 = vrot.lane.b32.xlu0 %v909, 7
      %v2486 = vpop.permute.xlu0 %2485
      %2487 = vrot.lane.b32.xlu0 %v911, 7
      %v2488 = vpop.permute.xlu0 %2487
      %2489 = vrot.lane.b32.xlu0 %v913, 7
      %v2490 = vpop.permute.xlu0 %2489
      %2491 = vrot.lane.b32.xlu0 %v916, 7
      %v2492 = vpop.permute.xlu0 %2491
      %2493 = vrot.lane.b32.xlu0 %v918, 7
      %v2494 = vpop.permute.xlu0 %2493
      %2495 = vrot.lane.b32.xlu0 %v920, 7
      %v2496 = vpop.permute.xlu0 %2495
      %2497 = vrot.lane.b32.xlu0 %v923, 7
      %v2498 = vpop.permute.xlu0 %2497
      %2499 = vrot.lane.b32.xlu0 %v925, 7
      %v2500 = vpop.permute.xlu0 %2499
      %2501 = vrot.lane.b32.xlu0 %v927, 7
      %v2502 = vpop.permute.xlu0 %2501
      %2503 = vrot.lane.b32.xlu0 %v930, 7
      %v2504 = vpop.permute.xlu0 %2503
      %2505 = vrot.lane.b32.xlu0 %v932, 7
      %v2506 = vpop.permute.xlu0 %2505
      %2507 = vrot.lane.b32.xlu0 %v934, 7
      %v2508 = vpop.permute.xlu0 %2507
      %2509 = vrot.lane.b32.xlu0 %v2366, 7
      %v2510 = vpop.permute.xlu0 %2509
      %2511 = vrot.lane.b32.xlu0 %v2368, 7
      %v2512 = vpop.permute.xlu0 %2511
      %2513 = vrot.lane.b32.xlu0 %v2370, 7
      %v2514 = vpop.permute.xlu0 %2513
      %v2587 = vrot.slane %v269, 3
      %v2588 = vrot.slane %v270, 3
      %v2589 = vsel %vm1151, %v2587, %v2588
      %v2590 = vrot.slane %v271, 3
      %v2591 = vsel %vm1151, %v2588, %v2590
      %v2592 = vrot.slane %v272, 3
      %v2593 = vsel %vm1151, %v2590, %v2592
      %2594 = vrot.lane.b32.xlu0 %v1161, 8
      %v2595 = vpop.permute.xlu0 %2594
      %2596 = vrot.lane.b32.xlu0 %v1163, 8
      %v2597 = vpop.permute.xlu0 %2596
      %2598 = vrot.lane.b32.xlu0 %v1165, 8
      %v2599 = vpop.permute.xlu0 %2598
      %2600 = vrot.lane.b32.xlu0 %v1168, 8
      %v2601 = vpop.permute.xlu0 %2600
      %2602 = vrot.lane.b32.xlu0 %v1170, 8
      %v2603 = vpop.permute.xlu0 %2602
      %2604 = vrot.lane.b32.xlu0 %v1172, 8
      %v2605 = vpop.permute.xlu0 %2604
      %2606 = vrot.lane.b32.xlu0 %v1175, 8
      %v2607 = vpop.permute.xlu0 %2606
      %2608 = vrot.lane.b32.xlu0 %v1177, 8
      %v2609 = vpop.permute.xlu0 %2608
      %2610 = vrot.lane.b32.xlu0 %v1179, 8
      %v2611 = vpop.permute.xlu0 %2610
      %2612 = vrot.lane.b32.xlu0 %v1182, 8
      %v2613 = vpop.permute.xlu0 %2612
      %2614 = vrot.lane.b32.xlu0 %v1184, 8
      %v2615 = vpop.permute.xlu0 %2614
      %2616 = vrot.lane.b32.xlu0 %v1186, 8
      %v2617 = vpop.permute.xlu0 %2616
      %2618 = vrot.lane.b32.xlu0 %v1189, 8
      %v2619 = vpop.permute.xlu0 %2618
      %2620 = vrot.lane.b32.xlu0 %v1191, 8
      %v2621 = vpop.permute.xlu0 %2620
      %2622 = vrot.lane.b32.xlu0 %v1193, 8
      %v2623 = vpop.permute.xlu0 %2622
      %2624 = vrot.lane.b32.xlu0 %v1196, 8
      %v2625 = vpop.permute.xlu0 %2624
      %2626 = vrot.lane.b32.xlu0 %v1198, 8
      %v2627 = vpop.permute.xlu0 %2626
      %2628 = vrot.lane.b32.xlu0 %v1200, 8
      %v2629 = vpop.permute.xlu0 %2628
      %2630 = vrot.lane.b32.xlu0 %v1203, 8
      %v2631 = vpop.permute.xlu0 %2630
      %2632 = vrot.lane.b32.xlu0 %v1205, 8
      %v2633 = vpop.permute.xlu0 %2632
      %2634 = vrot.lane.b32.xlu0 %v1207, 8
      %v2635 = vpop.permute.xlu0 %2634
      %2636 = vrot.lane.b32.xlu0 %v1210, 8
      %v2637 = vpop.permute.xlu0 %2636
      %2638 = vrot.lane.b32.xlu0 %v1212, 8
      %v2639 = vpop.permute.xlu0 %2638
      %2640 = vrot.lane.b32.xlu0 %v1214, 8
      %v2641 = vpop.permute.xlu0 %2640
      %2642 = vrot.lane.b32.xlu0 %v1217, 8
      %v2643 = vpop.permute.xlu0 %2642
      %2644 = vrot.lane.b32.xlu0 %v1219, 8
      %v2645 = vpop.permute.xlu0 %2644
      %2646 = vrot.lane.b32.xlu0 %v1221, 8
      %v2647 = vpop.permute.xlu0 %2646
      %2648 = vrot.lane.b32.xlu0 %v1224, 8
      %v2649 = vpop.permute.xlu0 %2648
      %2650 = vrot.lane.b32.xlu0 %v1226, 8
      %v2651 = vpop.permute.xlu0 %2650
      %2652 = vrot.lane.b32.xlu0 %v1228, 8
      %v2653 = vpop.permute.xlu0 %2652
      %2654 = vrot.lane.b32.xlu0 %v1231, 8
      %v2655 = vpop.permute.xlu0 %2654
      %2656 = vrot.lane.b32.xlu0 %v1233, 8
      %v2657 = vpop.permute.xlu0 %2656
      %2658 = vrot.lane.b32.xlu0 %v1235, 8
      %v2659 = vpop.permute.xlu0 %2658
      %2660 = vrot.lane.b32.xlu0 %v1238, 8
      %v2661 = vpop.permute.xlu0 %2660
      %2662 = vrot.lane.b32.xlu0 %v1240, 8
      %v2663 = vpop.permute.xlu0 %2662
      %2664 = vrot.lane.b32.xlu0 %v1242, 8
      %v2665 = vpop.permute.xlu0 %2664
      %2666 = vrot.lane.b32.xlu0 %v1245, 8
      %v2667 = vpop.permute.xlu0 %2666
      %2668 = vrot.lane.b32.xlu0 %v1247, 8
      %v2669 = vpop.permute.xlu0 %2668
      %2670 = vrot.lane.b32.xlu0 %v1249, 8
      %v2671 = vpop.permute.xlu0 %2670
      %2672 = vrot.lane.b32.xlu0 %v1252, 8
      %v2673 = vpop.permute.xlu0 %2672
      %2674 = vrot.lane.b32.xlu0 %v1254, 8
      %v2675 = vpop.permute.xlu0 %2674
      %2676 = vrot.lane.b32.xlu0 %v1256, 8
      %v2677 = vpop.permute.xlu0 %2676
      %2678 = vrot.lane.b32.xlu0 %v1259, 8
      %v2679 = vpop.permute.xlu0 %2678
      %2680 = vrot.lane.b32.xlu0 %v1261, 8
      %v2681 = vpop.permute.xlu0 %2680
      %2682 = vrot.lane.b32.xlu0 %v1263, 8
      %v2683 = vpop.permute.xlu0 %2682
      %2684 = vrot.lane.b32.xlu0 %v1266, 8
      %v2685 = vpop.permute.xlu0 %2684
      %2686 = vrot.lane.b32.xlu0 %v1268, 8
      %v2687 = vpop.permute.xlu0 %2686
      %2688 = vrot.lane.b32.xlu0 %v1270, 8
      %v2689 = vpop.permute.xlu0 %2688
      %2690 = vrot.lane.b32.xlu0 %v1273, 8
      %v2691 = vpop.permute.xlu0 %2690
      %2692 = vrot.lane.b32.xlu0 %v1275, 8
      %v2693 = vpop.permute.xlu0 %2692
      %2694 = vrot.lane.b32.xlu0 %v1277, 8
      %v2695 = vpop.permute.xlu0 %2694
      %2696 = vrot.lane.b32.xlu0 %v1280, 8
      %v2697 = vpop.permute.xlu0 %2696
      %2698 = vrot.lane.b32.xlu0 %v1282, 8
      %v2699 = vpop.permute.xlu0 %2698
      %2700 = vrot.lane.b32.xlu0 %v1284, 8
      %v2701 = vpop.permute.xlu0 %2700
      %2702 = vrot.lane.b32.xlu0 %v1287, 8
      %v2703 = vpop.permute.xlu0 %2702
      %2704 = vrot.lane.b32.xlu0 %v1289, 8
      %v2705 = vpop.permute.xlu0 %2704
      %2706 = vrot.lane.b32.xlu0 %v1291, 8
      %v2707 = vpop.permute.xlu0 %2706
      %2708 = vrot.lane.b32.xlu0 %v1294, 8
      %v2709 = vpop.permute.xlu0 %2708
      %2710 = vrot.lane.b32.xlu0 %v1296, 8
      %v2711 = vpop.permute.xlu0 %2710
      %2712 = vrot.lane.b32.xlu0 %v1298, 8
      %v2713 = vpop.permute.xlu0 %2712
      %2714 = vrot.lane.b32.xlu0 %v1301, 8
      %v2715 = vpop.permute.xlu0 %2714
      %2716 = vrot.lane.b32.xlu0 %v1303, 8
      %v2717 = vpop.permute.xlu0 %2716
      %2718 = vrot.lane.b32.xlu0 %v1305, 8
      %v2719 = vpop.permute.xlu0 %2718
      %2720 = vrot.lane.b32.xlu0 %v1308, 8
      %v2721 = vpop.permute.xlu0 %2720
      %2722 = vrot.lane.b32.xlu0 %v1310, 8
      %v2723 = vpop.permute.xlu0 %2722
      %2724 = vrot.lane.b32.xlu0 %v1312, 8
      %v2725 = vpop.permute.xlu0 %2724
      %2726 = vrot.lane.b32.xlu0 %v1315, 8
      %v2727 = vpop.permute.xlu0 %2726
      %2728 = vrot.lane.b32.xlu0 %v1317, 8
      %v2729 = vpop.permute.xlu0 %2728
      %2730 = vrot.lane.b32.xlu0 %v1319, 8
      %v2731 = vpop.permute.xlu0 %2730
      %2732 = vrot.lane.b32.xlu0 %v2589, 8
      %v2733 = vpop.permute.xlu0 %2732
      %2734 = vrot.lane.b32.xlu0 %v2591, 8
      %v2735 = vpop.permute.xlu0 %2734
      %2736 = vrot.lane.b32.xlu0 %v2593, 8
      %v2737 = vpop.permute.xlu0 %2736
      %v2810 = vrot.slane %v269, 4
      %v2811 = vrot.slane %v270, 4
      %v2812 = vsel %vm1536, %v2810, %v2811
      %v2813 = vrot.slane %v271, 4
      %v2814 = vsel %vm1536, %v2811, %v2813
      %v2815 = vrot.slane %v272, 4
      %v2816 = vsel %vm1536, %v2813, %v2815
      %2817 = vrot.lane.b32.xlu0 %v1546, 9
      %v2818 = vpop.permute.xlu0 %2817
      %2819 = vrot.lane.b32.xlu0 %v1548, 9
      %v2820 = vpop.permute.xlu0 %2819
      %2821 = vrot.lane.b32.xlu0 %v1550, 9
      %v2822 = vpop.permute.xlu0 %2821
      %2823 = vrot.lane.b32.xlu0 %v1553, 9
      %v2824 = vpop.permute.xlu0 %2823
      %2825 = vrot.lane.b32.xlu0 %v1555, 9
      %v2826 = vpop.permute.xlu0 %2825
      %2827 = vrot.lane.b32.xlu0 %v1557, 9
      %v2828 = vpop.permute.xlu0 %2827
      %2829 = vrot.lane.b32.xlu0 %v1560, 9
      %v2830 = vpop.permute.xlu0 %2829
      %2831 = vrot.lane.b32.xlu0 %v1562, 9
      %v2832 = vpop.permute.xlu0 %2831
      %2833 = vrot.lane.b32.xlu0 %v1564, 9
      %v2834 = vpop.permute.xlu0 %2833
      %2835 = vrot.lane.b32.xlu0 %v1567, 9
      %v2836 = vpop.permute.xlu0 %2835
      %2837 = vrot.lane.b32.xlu0 %v1569, 9
      %v2838 = vpop.permute.xlu0 %2837
      %2839 = vrot.lane.b32.xlu0 %v1571, 9
      %v2840 = vpop.permute.xlu0 %2839
      %2841 = vrot.lane.b32.xlu0 %v1574, 9
      %v2842 = vpop.permute.xlu0 %2841
      %2843 = vrot.lane.b32.xlu0 %v1576, 9
      %v2844 = vpop.permute.xlu0 %2843
      %2845 = vrot.lane.b32.xlu0 %v1578, 9
      %v2846 = vpop.permute.xlu0 %2845
      %2847 = vrot.lane.b32.xlu0 %v1581, 9
      %v2848 = vpop.permute.xlu0 %2847
      %2849 = vrot.lane.b32.xlu0 %v1583, 9
      %v2850 = vpop.permute.xlu0 %2849
      %2851 = vrot.lane.b32.xlu0 %v1585, 9
      %v2852 = vpop.permute.xlu0 %2851
      %2853 = vrot.lane.b32.xlu0 %v1588, 9
      %v2854 = vpop.permute.xlu0 %2853
      %2855 = vrot.lane.b32.xlu0 %v1590, 9
      %v2856 = vpop.permute.xlu0 %2855
      %2857 = vrot.lane.b32.xlu0 %v1592, 9
      %v2858 = vpop.permute.xlu0 %2857
      %2859 = vrot.lane.b32.xlu0 %v1595, 9
      %v2860 = vpop.permute.xlu0 %2859
      %2861 = vrot.lane.b32.xlu0 %v1597, 9
      %v2862 = vpop.permute.xlu0 %2861
      %2863 = vrot.lane.b32.xlu0 %v1599, 9
      %v2864 = vpop.permute.xlu0 %2863
      %2865 = vrot.lane.b32.xlu0 %v1602, 9
      %v2866 = vpop.permute.xlu0 %2865
      %2867 = vrot.lane.b32.xlu0 %v1604, 9
      %v2868 = vpop.permute.xlu0 %2867
      %2869 = vrot.lane.b32.xlu0 %v1606, 9
      %v2870 = vpop.permute.xlu0 %2869
      %2871 = vrot.lane.b32.xlu0 %v1609, 9
      %v2872 = vpop.permute.xlu0 %2871
      %2873 = vrot.lane.b32.xlu0 %v1611, 9
      %v2874 = vpop.permute.xlu0 %2873
      %2875 = vrot.lane.b32.xlu0 %v1613, 9
      %v2876 = vpop.permute.xlu0 %2875
      %2877 = vrot.lane.b32.xlu0 %v1616, 9
      %v2878 = vpop.permute.xlu0 %2877
      %2879 = vrot.lane.b32.xlu0 %v1618, 9
      %v2880 = vpop.permute.xlu0 %2879
      %2881 = vrot.lane.b32.xlu0 %v1620, 9
      %v2882 = vpop.permute.xlu0 %2881
      %2883 = vrot.lane.b32.xlu0 %v1623, 9
      %v2884 = vpop.permute.xlu0 %2883
      %2885 = vrot.lane.b32.xlu0 %v1625, 9
      %v2886 = vpop.permute.xlu0 %2885
      %2887 = vrot.lane.b32.xlu0 %v1627, 9
      %v2888 = vpop.permute.xlu0 %2887
      %2889 = vrot.lane.b32.xlu0 %v1630, 9
      %v2890 = vpop.permute.xlu0 %2889
      %2891 = vrot.lane.b32.xlu0 %v1632, 9
      %v2892 = vpop.permute.xlu0 %2891
      %2893 = vrot.lane.b32.xlu0 %v1634, 9
      %v2894 = vpop.permute.xlu0 %2893
      %2895 = vrot.lane.b32.xlu0 %v1637, 9
      %v2896 = vpop.permute.xlu0 %2895
      %2897 = vrot.lane.b32.xlu0 %v1639, 9
      %v2898 = vpop.permute.xlu0 %2897
      %2899 = vrot.lane.b32.xlu0 %v1641, 9
      %v2900 = vpop.permute.xlu0 %2899
      %2901 = vrot.lane.b32.xlu0 %v1644, 9
      %v2902 = vpop.permute.xlu0 %2901
      %2903 = vrot.lane.b32.xlu0 %v1646, 9
      %v2904 = vpop.permute.xlu0 %2903
      %2905 = vrot.lane.b32.xlu0 %v1648, 9
      %v2906 = vpop.permute.xlu0 %2905
      %2907 = vrot.lane.b32.xlu0 %v1651, 9
      %v2908 = vpop.permute.xlu0 %2907
      %2909 = vrot.lane.b32.xlu0 %v1653, 9
      %v2910 = vpop.permute.xlu0 %2909
      %2911 = vrot.lane.b32.xlu0 %v1655, 9
      %v2912 = vpop.permute.xlu0 %2911
      %2913 = vrot.lane.b32.xlu0 %v1658, 9
      %v2914 = vpop.permute.xlu0 %2913
      %2915 = vrot.lane.b32.xlu0 %v1660, 9
      %v2916 = vpop.permute.xlu0 %2915
      %2917 = vrot.lane.b32.xlu0 %v1662, 9
      %v2918 = vpop.permute.xlu0 %2917
      %2919 = vrot.lane.b32.xlu0 %v1665, 9
      %v2920 = vpop.permute.xlu0 %2919
      %2921 = vrot.lane.b32.xlu0 %v1667, 9
      %v2922 = vpop.permute.xlu0 %2921
      %2923 = vrot.lane.b32.xlu0 %v1669, 9
      %v2924 = vpop.permute.xlu0 %2923
      %2925 = vrot.lane.b32.xlu0 %v1672, 9
      %v2926 = vpop.permute.xlu0 %2925
      %2927 = vrot.lane.b32.xlu0 %v1674, 9
      %v2928 = vpop.permute.xlu0 %2927
      %2929 = vrot.lane.b32.xlu0 %v1676, 9
      %v2930 = vpop.permute.xlu0 %2929
      %2931 = vrot.lane.b32.xlu0 %v1679, 9
      %v2932 = vpop.permute.xlu0 %2931
      %2933 = vrot.lane.b32.xlu0 %v1681, 9
      %v2934 = vpop.permute.xlu0 %2933
      %2935 = vrot.lane.b32.xlu0 %v1683, 9
      %v2936 = vpop.permute.xlu0 %2935
      %2937 = vrot.lane.b32.xlu0 %v1686, 9
      %v2938 = vpop.permute.xlu0 %2937
      %2939 = vrot.lane.b32.xlu0 %v1688, 9
      %v2940 = vpop.permute.xlu0 %2939
      %2941 = vrot.lane.b32.xlu0 %v1690, 9
      %v2942 = vpop.permute.xlu0 %2941
      %2943 = vrot.lane.b32.xlu0 %v1693, 9
      %v2944 = vpop.permute.xlu0 %2943
      %2945 = vrot.lane.b32.xlu0 %v1695, 9
      %v2946 = vpop.permute.xlu0 %2945
      %2947 = vrot.lane.b32.xlu0 %v1697, 9
      %v2948 = vpop.permute.xlu0 %2947
      %2949 = vrot.lane.b32.xlu0 %v1700, 9
      %v2950 = vpop.permute.xlu0 %2949
      %2951 = vrot.lane.b32.xlu0 %v1702, 9
      %v2952 = vpop.permute.xlu0 %2951
      %2953 = vrot.lane.b32.xlu0 %v1704, 9
      %v2954 = vpop.permute.xlu0 %2953
      %2955 = vrot.lane.b32.xlu0 %v2812, 9
      %v2956 = vpop.permute.xlu0 %2955
      %2957 = vrot.lane.b32.xlu0 %v2814, 9
      %v2958 = vpop.permute.xlu0 %2957
      %2959 = vrot.lane.b32.xlu0 %v2816, 9
      %v2960 = vpop.permute.xlu0 %2959
      %3036 = vrot.lane.b32.xlu0 %v181, 10
      %v3037 = vpop.permute.xlu0 %3036
      %3038 = vrot.lane.b32.xlu0 %v182, 10
      %v3039 = vpop.permute.xlu0 %3038
      %3040 = vrot.lane.b32.xlu0 %v183, 10
      %v3041 = vpop.permute.xlu0 %3040
      %3042 = vrot.lane.b32.xlu0 %v185, 10
      %v3043 = vpop.permute.xlu0 %3042
      %3044 = vrot.lane.b32.xlu0 %v186, 10
      %v3045 = vpop.permute.xlu0 %3044
      %3046 = vrot.lane.b32.xlu0 %v187, 10
      %v3047 = vpop.permute.xlu0 %3046
      %3048 = vrot.lane.b32.xlu0 %v189, 10
      %v3049 = vpop.permute.xlu0 %3048
      %3050 = vrot.lane.b32.xlu0 %v190, 10
      %v3051 = vpop.permute.xlu0 %3050
      %3052 = vrot.lane.b32.xlu0 %v191, 10
      %v3053 = vpop.permute.xlu0 %3052
      %3054 = vrot.lane.b32.xlu0 %v193, 10
      %v3055 = vpop.permute.xlu0 %3054
      %3056 = vrot.lane.b32.xlu0 %v194, 10
      %v3057 = vpop.permute.xlu0 %3056
      %3058 = vrot.lane.b32.xlu0 %v195, 10
      %v3059 = vpop.permute.xlu0 %3058
      %3060 = vrot.lane.b32.xlu0 %v197, 10
      %v3061 = vpop.permute.xlu0 %3060
      %3062 = vrot.lane.b32.xlu0 %v198, 10
      %v3063 = vpop.permute.xlu0 %3062
      %3064 = vrot.lane.b32.xlu0 %v199, 10
      %v3065 = vpop.permute.xlu0 %3064
      %3066 = vrot.lane.b32.xlu0 %v201, 10
      %v3067 = vpop.permute.xlu0 %3066
      %3068 = vrot.lane.b32.xlu0 %v202, 10
      %v3069 = vpop.permute.xlu0 %3068
      %3070 = vrot.lane.b32.xlu0 %v203, 10
      %v3071 = vpop.permute.xlu0 %3070
      %3072 = vrot.lane.b32.xlu0 %v205, 10
      %v3073 = vpop.permute.xlu0 %3072
      %3074 = vrot.lane.b32.xlu0 %v206, 10
      %v3075 = vpop.permute.xlu0 %3074
      %3076 = vrot.lane.b32.xlu0 %v207, 10
      %v3077 = vpop.permute.xlu0 %3076
      %3078 = vrot.lane.b32.xlu0 %v209, 10
      %v3079 = vpop.permute.xlu0 %3078
      %3080 = vrot.lane.b32.xlu0 %v210, 10
      %v3081 = vpop.permute.xlu0 %3080
      %3082 = vrot.lane.b32.xlu0 %v211, 10
      %v3083 = vpop.permute.xlu0 %3082
      %3084 = vrot.lane.b32.xlu0 %v213, 10
      %v3085 = vpop.permute.xlu0 %3084
      %3086 = vrot.lane.b32.xlu0 %v214, 10
      %v3087 = vpop.permute.xlu0 %3086
      %3088 = vrot.lane.b32.xlu0 %v215, 10
      %v3089 = vpop.permute.xlu0 %3088
      %3090 = vrot.lane.b32.xlu0 %v217, 10
      %v3091 = vpop.permute.xlu0 %3090
      %3092 = vrot.lane.b32.xlu0 %v218, 10
      %v3093 = vpop.permute.xlu0 %3092
      %3094 = vrot.lane.b32.xlu0 %v219, 10
      %v3095 = vpop.permute.xlu0 %3094
      %3096 = vrot.lane.b32.xlu0 %v221, 10
      %v3097 = vpop.permute.xlu0 %3096
      %3098 = vrot.lane.b32.xlu0 %v222, 10
      %v3099 = vpop.permute.xlu0 %3098
      %3100 = vrot.lane.b32.xlu0 %v223, 10
      %v3101 = vpop.permute.xlu0 %3100
      %3102 = vrot.lane.b32.xlu0 %v225, 10
      %v3103 = vpop.permute.xlu0 %3102
      %3104 = vrot.lane.b32.xlu0 %v226, 10
      %v3105 = vpop.permute.xlu0 %3104
      %3106 = vrot.lane.b32.xlu0 %v227, 10
      %v3107 = vpop.permute.xlu0 %3106
      %3108 = vrot.lane.b32.xlu0 %v229, 10
      %v3109 = vpop.permute.xlu0 %3108
      %3110 = vrot.lane.b32.xlu0 %v230, 10
      %v3111 = vpop.permute.xlu0 %3110
      %3112 = vrot.lane.b32.xlu0 %v231, 10
      %v3113 = vpop.permute.xlu0 %3112
      %3114 = vrot.lane.b32.xlu0 %v233, 10
      %v3115 = vpop.permute.xlu0 %3114
      %3116 = vrot.lane.b32.xlu0 %v234, 10
      %v3117 = vpop.permute.xlu0 %3116
      %3118 = vrot.lane.b32.xlu0 %v235, 10
      %v3119 = vpop.permute.xlu0 %3118
      %3120 = vrot.lane.b32.xlu0 %v237, 10
      %v3121 = vpop.permute.xlu0 %3120
      %3122 = vrot.lane.b32.xlu0 %v238, 10
      %v3123 = vpop.permute.xlu0 %3122
      %3124 = vrot.lane.b32.xlu0 %v239, 10
      %v3125 = vpop.permute.xlu0 %3124
      %3126 = vrot.lane.b32.xlu0 %v241, 10
      %v3127 = vpop.permute.xlu0 %3126
      %3128 = vrot.lane.b32.xlu0 %v242, 10
      %v3129 = vpop.permute.xlu0 %3128
      %3130 = vrot.lane.b32.xlu0 %v243, 10
      %v3131 = vpop.permute.xlu0 %3130
      %3132 = vrot.lane.b32.xlu0 %v245, 10
      %v3133 = vpop.permute.xlu0 %3132
      %3134 = vrot.lane.b32.xlu0 %v246, 10
      %v3135 = vpop.permute.xlu0 %3134
      %3136 = vrot.lane.b32.xlu0 %v247, 10
      %v3137 = vpop.permute.xlu0 %3136
      %3138 = vrot.lane.b32.xlu0 %v249, 10
      %v3139 = vpop.permute.xlu0 %3138
      %3140 = vrot.lane.b32.xlu0 %v250, 10
      %v3141 = vpop.permute.xlu0 %3140
      %3142 = vrot.lane.b32.xlu0 %v251, 10
      %v3143 = vpop.permute.xlu0 %3142
      %3144 = vrot.lane.b32.xlu0 %v253, 10
      %v3145 = vpop.permute.xlu0 %3144
      %3146 = vrot.lane.b32.xlu0 %v254, 10
      %v3147 = vpop.permute.xlu0 %3146
      %3148 = vrot.lane.b32.xlu0 %v255, 10
      %v3149 = vpop.permute.xlu0 %3148
      %3150 = vrot.lane.b32.xlu0 %v257, 10
      %v3151 = vpop.permute.xlu0 %3150
      %3152 = vrot.lane.b32.xlu0 %v258, 10
      %v3153 = vpop.permute.xlu0 %3152
      %3154 = vrot.lane.b32.xlu0 %v259, 10
      %v3155 = vpop.permute.xlu0 %3154
      %3156 = vrot.lane.b32.xlu0 %v261, 10
      %v3157 = vpop.permute.xlu0 %3156
      %3158 = vrot.lane.b32.xlu0 %v262, 10
      %v3159 = vpop.permute.xlu0 %3158
      %3160 = vrot.lane.b32.xlu0 %v263, 10
      %v3161 = vpop.permute.xlu0 %3160
      %3162 = vrot.lane.b32.xlu0 %v265, 10
      %v3163 = vpop.permute.xlu0 %3162
      %3164 = vrot.lane.b32.xlu0 %v266, 10
      %v3165 = vpop.permute.xlu0 %3164
      %3166 = vrot.lane.b32.xlu0 %v267, 10
      %v3167 = vpop.permute.xlu0 %3166
      %3168 = vrot.lane.b32.xlu0 %v269, 10
      %v3169 = vpop.permute.xlu0 %3168
      %3170 = vrot.lane.b32.xlu0 %v270, 10
      %v3171 = vpop.permute.xlu0 %3170
      %3172 = vrot.lane.b32.xlu0 %v271, 10
      %v3173 = vpop.permute.xlu0 %3172
      %3174 = vrot.lane.b32.xlu0 %v273, 10
      %v3175 = vpop.permute.xlu0 %3174
      %3176 = vrot.lane.b32.xlu0 %v274, 10
      %v3177 = vpop.permute.xlu0 %3176
      %3178 = vrot.lane.b32.xlu0 %v275, 10
      %v3179 = vpop.permute.xlu0 %3178
      %v3253 = vrot.slane %v273, 1
      %v3254 = vrot.slane %v274, 1
      %v3255 = vsel %vm381, %v3253, %v3254
      %v3256 = vrot.slane %v275, 1
      %v3257 = vsel %vm381, %v3254, %v3256
      %v3258 = vrot.slane %v276, 1
      %v3259 = vsel %vm381, %v3256, %v3258
      %3260 = vrot.lane.b32.xlu0 %v398, 11
      %v3261 = vpop.permute.xlu0 %3260
      %3262 = vrot.lane.b32.xlu0 %v400, 11
      %v3263 = vpop.permute.xlu0 %3262
      %3264 = vrot.lane.b32.xlu0 %v402, 11
      %v3265 = vpop.permute.xlu0 %3264
      %3266 = vrot.lane.b32.xlu0 %v405, 11
      %v3267 = vpop.permute.xlu0 %3266
      %3268 = vrot.lane.b32.xlu0 %v407, 11
      %v3269 = vpop.permute.xlu0 %3268
      %3270 = vrot.lane.b32.xlu0 %v409, 11
      %v3271 = vpop.permute.xlu0 %3270
      %3272 = vrot.lane.b32.xlu0 %v412, 11
      %v3273 = vpop.permute.xlu0 %3272
      %3274 = vrot.lane.b32.xlu0 %v414, 11
      %v3275 = vpop.permute.xlu0 %3274
      %3276 = vrot.lane.b32.xlu0 %v416, 11
      %v3277 = vpop.permute.xlu0 %3276
      %3278 = vrot.lane.b32.xlu0 %v419, 11
      %v3279 = vpop.permute.xlu0 %3278
      %3280 = vrot.lane.b32.xlu0 %v421, 11
      %v3281 = vpop.permute.xlu0 %3280
      %3282 = vrot.lane.b32.xlu0 %v423, 11
      %v3283 = vpop.permute.xlu0 %3282
      %3284 = vrot.lane.b32.xlu0 %v426, 11
      %v3285 = vpop.permute.xlu0 %3284
      %3286 = vrot.lane.b32.xlu0 %v428, 11
      %v3287 = vpop.permute.xlu0 %3286
      %3288 = vrot.lane.b32.xlu0 %v430, 11
      %v3289 = vpop.permute.xlu0 %3288
      %3290 = vrot.lane.b32.xlu0 %v433, 11
      %v3291 = vpop.permute.xlu0 %3290
      %3292 = vrot.lane.b32.xlu0 %v435, 11
      %v3293 = vpop.permute.xlu0 %3292
      %3294 = vrot.lane.b32.xlu0 %v437, 11
      %v3295 = vpop.permute.xlu0 %3294
      %3296 = vrot.lane.b32.xlu0 %v440, 11
      %v3297 = vpop.permute.xlu0 %3296
      %3298 = vrot.lane.b32.xlu0 %v442, 11
      %v3299 = vpop.permute.xlu0 %3298
      %3300 = vrot.lane.b32.xlu0 %v444, 11
      %v3301 = vpop.permute.xlu0 %3300
      %3302 = vrot.lane.b32.xlu0 %v447, 11
      %v3303 = vpop.permute.xlu0 %3302
      %3304 = vrot.lane.b32.xlu0 %v449, 11
      %v3305 = vpop.permute.xlu0 %3304
      %3306 = vrot.lane.b32.xlu0 %v451, 11
      %v3307 = vpop.permute.xlu0 %3306
      %3308 = vrot.lane.b32.xlu0 %v454, 11
      %v3309 = vpop.permute.xlu0 %3308
      %3310 = vrot.lane.b32.xlu0 %v456, 11
      %v3311 = vpop.permute.xlu0 %3310
      %3312 = vrot.lane.b32.xlu0 %v458, 11
      %v3313 = vpop.permute.xlu0 %3312
      %3314 = vrot.lane.b32.xlu0 %v461, 11
      %v3315 = vpop.permute.xlu0 %3314
      %3316 = vrot.lane.b32.xlu0 %v463, 11
      %v3317 = vpop.permute.xlu0 %3316
      %3318 = vrot.lane.b32.xlu0 %v465, 11
      %v3319 = vpop.permute.xlu0 %3318
      %3320 = vrot.lane.b32.xlu0 %v468, 11
      %v3321 = vpop.permute.xlu0 %3320
      %3322 = vrot.lane.b32.xlu0 %v470, 11
      %v3323 = vpop.permute.xlu0 %3322
      %3324 = vrot.lane.b32.xlu0 %v472, 11
      %v3325 = vpop.permute.xlu0 %3324
      %3326 = vrot.lane.b32.xlu0 %v475, 11
      %v3327 = vpop.permute.xlu0 %3326
      %3328 = vrot.lane.b32.xlu0 %v477, 11
      %v3329 = vpop.permute.xlu0 %3328
      %3330 = vrot.lane.b32.xlu0 %v479, 11
      %v3331 = vpop.permute.xlu0 %3330
      %3332 = vrot.lane.b32.xlu0 %v482, 11
      %v3333 = vpop.permute.xlu0 %3332
      %3334 = vrot.lane.b32.xlu0 %v484, 11
      %v3335 = vpop.permute.xlu0 %3334
      %3336 = vrot.lane.b32.xlu0 %v486, 11
      %v3337 = vpop.permute.xlu0 %3336
      %3338 = vrot.lane.b32.xlu0 %v489, 11
      %v3339 = vpop.permute.xlu0 %3338
      %3340 = vrot.lane.b32.xlu0 %v491, 11
      %v3341 = vpop.permute.xlu0 %3340
      %3342 = vrot.lane.b32.xlu0 %v493, 11
      %v3343 = vpop.permute.xlu0 %3342
      %3344 = vrot.lane.b32.xlu0 %v496, 11
      %v3345 = vpop.permute.xlu0 %3344
      %3346 = vrot.lane.b32.xlu0 %v498, 11
      %v3347 = vpop.permute.xlu0 %3346
      %3348 = vrot.lane.b32.xlu0 %v500, 11
      %v3349 = vpop.permute.xlu0 %3348
      %3350 = vrot.lane.b32.xlu0 %v503, 11
      %v3351 = vpop.permute.xlu0 %3350
      %3352 = vrot.lane.b32.xlu0 %v505, 11
      %v3353 = vpop.permute.xlu0 %3352
      %3354 = vrot.lane.b32.xlu0 %v507, 11
      %v3355 = vpop.permute.xlu0 %3354
      %3356 = vrot.lane.b32.xlu0 %v510, 11
      %v3357 = vpop.permute.xlu0 %3356
      %3358 = vrot.lane.b32.xlu0 %v512, 11
      %v3359 = vpop.permute.xlu0 %3358
      %3360 = vrot.lane.b32.xlu0 %v514, 11
      %v3361 = vpop.permute.xlu0 %3360
      %3362 = vrot.lane.b32.xlu0 %v517, 11
      %v3363 = vpop.permute.xlu0 %3362
      %3364 = vrot.lane.b32.xlu0 %v519, 11
      %v3365 = vpop.permute.xlu0 %3364
      %3366 = vrot.lane.b32.xlu0 %v521, 11
      %v3367 = vpop.permute.xlu0 %3366
      %3368 = vrot.lane.b32.xlu0 %v524, 11
      %v3369 = vpop.permute.xlu0 %3368
      %3370 = vrot.lane.b32.xlu0 %v526, 11
      %v3371 = vpop.permute.xlu0 %3370
      %3372 = vrot.lane.b32.xlu0 %v528, 11
      %v3373 = vpop.permute.xlu0 %3372
      %3374 = vrot.lane.b32.xlu0 %v531, 11
      %v3375 = vpop.permute.xlu0 %3374
      %3376 = vrot.lane.b32.xlu0 %v533, 11
      %v3377 = vpop.permute.xlu0 %3376
      %3378 = vrot.lane.b32.xlu0 %v535, 11
      %v3379 = vpop.permute.xlu0 %3378
      %3380 = vrot.lane.b32.xlu0 %v538, 11
      %v3381 = vpop.permute.xlu0 %3380
      %3382 = vrot.lane.b32.xlu0 %v540, 11
      %v3383 = vpop.permute.xlu0 %3382
      %3384 = vrot.lane.b32.xlu0 %v542, 11
      %v3385 = vpop.permute.xlu0 %3384
      %3386 = vrot.lane.b32.xlu0 %v545, 11
      %v3387 = vpop.permute.xlu0 %3386
      %3388 = vrot.lane.b32.xlu0 %v547, 11
      %v3389 = vpop.permute.xlu0 %3388
      %3390 = vrot.lane.b32.xlu0 %v549, 11
      %v3391 = vpop.permute.xlu0 %3390
      %3392 = vrot.lane.b32.xlu0 %v2143, 11
      %v3393 = vpop.permute.xlu0 %3392
      %3394 = vrot.lane.b32.xlu0 %v2145, 11
      %v3395 = vpop.permute.xlu0 %3394
      %3396 = vrot.lane.b32.xlu0 %v2147, 11
      %v3397 = vpop.permute.xlu0 %3396
      %3398 = vrot.lane.b32.xlu0 %v3255, 11
      %v3399 = vpop.permute.xlu0 %3398
      %3400 = vrot.lane.b32.xlu0 %v3257, 11
      %v3401 = vpop.permute.xlu0 %3400
      %3402 = vrot.lane.b32.xlu0 %v3259, 11
      %v3403 = vpop.permute.xlu0 %3402
      %v3476 = vrot.slane %v273, 2
      %v3477 = vrot.slane %v274, 2
      %v3478 = vsel %vm766, %v3476, %v3477
      %v3479 = vrot.slane %v275, 2
      %v3480 = vsel %vm766, %v3477, %v3479
      %v3481 = vrot.slane %v276, 2
      %v3482 = vsel %vm766, %v3479, %v3481
      %3483 = vrot.lane.b32.xlu0 %v783, 12
      %v3484 = vpop.permute.xlu0 %3483
      %3485 = vrot.lane.b32.xlu0 %v785, 12
      %v3486 = vpop.permute.xlu0 %3485
      %3487 = vrot.lane.b32.xlu0 %v787, 12
      %v3488 = vpop.permute.xlu0 %3487
      %3489 = vrot.lane.b32.xlu0 %v790, 12
      %v3490 = vpop.permute.xlu0 %3489
      %3491 = vrot.lane.b32.xlu0 %v792, 12
      %v3492 = vpop.permute.xlu0 %3491
      %3493 = vrot.lane.b32.xlu0 %v794, 12
      %v3494 = vpop.permute.xlu0 %3493
      %3495 = vrot.lane.b32.xlu0 %v797, 12
      %v3496 = vpop.permute.xlu0 %3495
      %3497 = vrot.lane.b32.xlu0 %v799, 12
      %v3498 = vpop.permute.xlu0 %3497
      %3499 = vrot.lane.b32.xlu0 %v801, 12
      %v3500 = vpop.permute.xlu0 %3499
      %3501 = vrot.lane.b32.xlu0 %v804, 12
      %v3502 = vpop.permute.xlu0 %3501
      %3503 = vrot.lane.b32.xlu0 %v806, 12
      %v3504 = vpop.permute.xlu0 %3503
      %3505 = vrot.lane.b32.xlu0 %v808, 12
      %v3506 = vpop.permute.xlu0 %3505
      %3507 = vrot.lane.b32.xlu0 %v811, 12
      %v3508 = vpop.permute.xlu0 %3507
      %3509 = vrot.lane.b32.xlu0 %v813, 12
      %v3510 = vpop.permute.xlu0 %3509
      %3511 = vrot.lane.b32.xlu0 %v815, 12
      %v3512 = vpop.permute.xlu0 %3511
      %3513 = vrot.lane.b32.xlu0 %v818, 12
      %v3514 = vpop.permute.xlu0 %3513
      %3515 = vrot.lane.b32.xlu0 %v820, 12
      %v3516 = vpop.permute.xlu0 %3515
      %3517 = vrot.lane.b32.xlu0 %v822, 12
      %v3518 = vpop.permute.xlu0 %3517
      %3519 = vrot.lane.b32.xlu0 %v825, 12
      %v3520 = vpop.permute.xlu0 %3519
      %3521 = vrot.lane.b32.xlu0 %v827, 12
      %v3522 = vpop.permute.xlu0 %3521
      %3523 = vrot.lane.b32.xlu0 %v829, 12
      %v3524 = vpop.permute.xlu0 %3523
      %3525 = vrot.lane.b32.xlu0 %v832, 12
      %v3526 = vpop.permute.xlu0 %3525
      %3527 = vrot.lane.b32.xlu0 %v834, 12
      %v3528 = vpop.permute.xlu0 %3527
      %3529 = vrot.lane.b32.xlu0 %v836, 12
      %v3530 = vpop.permute.xlu0 %3529
      %3531 = vrot.lane.b32.xlu0 %v839, 12
      %v3532 = vpop.permute.xlu0 %3531
      %3533 = vrot.lane.b32.xlu0 %v841, 12
      %v3534 = vpop.permute.xlu0 %3533
      %3535 = vrot.lane.b32.xlu0 %v843, 12
      %v3536 = vpop.permute.xlu0 %3535
      %3537 = vrot.lane.b32.xlu0 %v846, 12
      %v3538 = vpop.permute.xlu0 %3537
      %3539 = vrot.lane.b32.xlu0 %v848, 12
      %v3540 = vpop.permute.xlu0 %3539
      %3541 = vrot.lane.b32.xlu0 %v850, 12
      %v3542 = vpop.permute.xlu0 %3541
      %3543 = vrot.lane.b32.xlu0 %v853, 12
      %v3544 = vpop.permute.xlu0 %3543
      %3545 = vrot.lane.b32.xlu0 %v855, 12
      %v3546 = vpop.permute.xlu0 %3545
      %3547 = vrot.lane.b32.xlu0 %v857, 12
      %v3548 = vpop.permute.xlu0 %3547
      %3549 = vrot.lane.b32.xlu0 %v860, 12
      %v3550 = vpop.permute.xlu0 %3549
      %3551 = vrot.lane.b32.xlu0 %v862, 12
      %v3552 = vpop.permute.xlu0 %3551
      %3553 = vrot.lane.b32.xlu0 %v864, 12
      %v3554 = vpop.permute.xlu0 %3553
      %3555 = vrot.lane.b32.xlu0 %v867, 12
      %v3556 = vpop.permute.xlu0 %3555
      %3557 = vrot.lane.b32.xlu0 %v869, 12
      %v3558 = vpop.permute.xlu0 %3557
      %3559 = vrot.lane.b32.xlu0 %v871, 12
      %v3560 = vpop.permute.xlu0 %3559
      %3561 = vrot.lane.b32.xlu0 %v874, 12
      %v3562 = vpop.permute.xlu0 %3561
      %3563 = vrot.lane.b32.xlu0 %v876, 12
      %v3564 = vpop.permute.xlu0 %3563
      %3565 = vrot.lane.b32.xlu0 %v878, 12
      %v3566 = vpop.permute.xlu0 %3565
      %3567 = vrot.lane.b32.xlu0 %v881, 12
      %v3568 = vpop.permute.xlu0 %3567
      %3569 = vrot.lane.b32.xlu0 %v883, 12
      %v3570 = vpop.permute.xlu0 %3569
      %3571 = vrot.lane.b32.xlu0 %v885, 12
      %v3572 = vpop.permute.xlu0 %3571
      %3573 = vrot.lane.b32.xlu0 %v888, 12
      %v3574 = vpop.permute.xlu0 %3573
      %3575 = vrot.lane.b32.xlu0 %v890, 12
      %v3576 = vpop.permute.xlu0 %3575
      %3577 = vrot.lane.b32.xlu0 %v892, 12
      %v3578 = vpop.permute.xlu0 %3577
      %3579 = vrot.lane.b32.xlu0 %v895, 12
      %v3580 = vpop.permute.xlu0 %3579
      %3581 = vrot.lane.b32.xlu0 %v897, 12
      %v3582 = vpop.permute.xlu0 %3581
      %3583 = vrot.lane.b32.xlu0 %v899, 12
      %v3584 = vpop.permute.xlu0 %3583
      %3585 = vrot.lane.b32.xlu0 %v902, 12
      %v3586 = vpop.permute.xlu0 %3585
      %3587 = vrot.lane.b32.xlu0 %v904, 12
      %v3588 = vpop.permute.xlu0 %3587
      %3589 = vrot.lane.b32.xlu0 %v906, 12
      %v3590 = vpop.permute.xlu0 %3589
      %3591 = vrot.lane.b32.xlu0 %v909, 12
      %v3592 = vpop.permute.xlu0 %3591
      %3593 = vrot.lane.b32.xlu0 %v911, 12
      %v3594 = vpop.permute.xlu0 %3593
      %3595 = vrot.lane.b32.xlu0 %v913, 12
      %v3596 = vpop.permute.xlu0 %3595
      %3597 = vrot.lane.b32.xlu0 %v916, 12
      %v3598 = vpop.permute.xlu0 %3597
      %3599 = vrot.lane.b32.xlu0 %v918, 12
      %v3600 = vpop.permute.xlu0 %3599
      %3601 = vrot.lane.b32.xlu0 %v920, 12
      %v3602 = vpop.permute.xlu0 %3601
      %3603 = vrot.lane.b32.xlu0 %v923, 12
      %v3604 = vpop.permute.xlu0 %3603
      %3605 = vrot.lane.b32.xlu0 %v925, 12
      %v3606 = vpop.permute.xlu0 %3605
      %3607 = vrot.lane.b32.xlu0 %v927, 12
      %v3608 = vpop.permute.xlu0 %3607
      %3609 = vrot.lane.b32.xlu0 %v930, 12
      %v3610 = vpop.permute.xlu0 %3609
      %3611 = vrot.lane.b32.xlu0 %v932, 12
      %v3612 = vpop.permute.xlu0 %3611
      %3613 = vrot.lane.b32.xlu0 %v934, 12
      %v3614 = vpop.permute.xlu0 %3613
      %3615 = vrot.lane.b32.xlu0 %v2366, 12
      %v3616 = vpop.permute.xlu0 %3615
      %3617 = vrot.lane.b32.xlu0 %v2368, 12
      %v3618 = vpop.permute.xlu0 %3617
      %3619 = vrot.lane.b32.xlu0 %v2370, 12
      %v3620 = vpop.permute.xlu0 %3619
      %3621 = vrot.lane.b32.xlu0 %v3478, 12
      %v3622 = vpop.permute.xlu0 %3621
      %3623 = vrot.lane.b32.xlu0 %v3480, 12
      %v3624 = vpop.permute.xlu0 %3623
      %3625 = vrot.lane.b32.xlu0 %v3482, 12
      %v3626 = vpop.permute.xlu0 %3625
      %v3699 = vrot.slane %v273, 3
      %v3700 = vrot.slane %v274, 3
      %v3701 = vsel %vm1151, %v3699, %v3700
      %v3702 = vrot.slane %v275, 3
      %v3703 = vsel %vm1151, %v3700, %v3702
      %v3704 = vrot.slane %v276, 3
      %v3705 = vsel %vm1151, %v3702, %v3704
      %3706 = vrot.lane.b32.xlu0 %v1168, 13
      %v3707 = vpop.permute.xlu0 %3706
      %3708 = vrot.lane.b32.xlu0 %v1170, 13
      %v3709 = vpop.permute.xlu0 %3708
      %3710 = vrot.lane.b32.xlu0 %v1172, 13
      %v3711 = vpop.permute.xlu0 %3710
      %3712 = vrot.lane.b32.xlu0 %v1175, 13
      %v3713 = vpop.permute.xlu0 %3712
      %3714 = vrot.lane.b32.xlu0 %v1177, 13
      %v3715 = vpop.permute.xlu0 %3714
      %3716 = vrot.lane.b32.xlu0 %v1179, 13
      %v3717 = vpop.permute.xlu0 %3716
      %3718 = vrot.lane.b32.xlu0 %v1182, 13
      %v3719 = vpop.permute.xlu0 %3718
      %3720 = vrot.lane.b32.xlu0 %v1184, 13
      %v3721 = vpop.permute.xlu0 %3720
      %3722 = vrot.lane.b32.xlu0 %v1186, 13
      %v3723 = vpop.permute.xlu0 %3722
      %3724 = vrot.lane.b32.xlu0 %v1189, 13
      %v3725 = vpop.permute.xlu0 %3724
      %3726 = vrot.lane.b32.xlu0 %v1191, 13
      %v3727 = vpop.permute.xlu0 %3726
      %3728 = vrot.lane.b32.xlu0 %v1193, 13
      %v3729 = vpop.permute.xlu0 %3728
      %3730 = vrot.lane.b32.xlu0 %v1196, 13
      %v3731 = vpop.permute.xlu0 %3730
      %3732 = vrot.lane.b32.xlu0 %v1198, 13
      %v3733 = vpop.permute.xlu0 %3732
      %3734 = vrot.lane.b32.xlu0 %v1200, 13
      %v3735 = vpop.permute.xlu0 %3734
      %3736 = vrot.lane.b32.xlu0 %v1203, 13
      %v3737 = vpop.permute.xlu0 %3736
      %3738 = vrot.lane.b32.xlu0 %v1205, 13
      %v3739 = vpop.permute.xlu0 %3738
      %3740 = vrot.lane.b32.xlu0 %v1207, 13
      %v3741 = vpop.permute.xlu0 %3740
      %3742 = vrot.lane.b32.xlu0 %v1210, 13
      %v3743 = vpop.permute.xlu0 %3742
      %3744 = vrot.lane.b32.xlu0 %v1212, 13
      %v3745 = vpop.permute.xlu0 %3744
      %3746 = vrot.lane.b32.xlu0 %v1214, 13
      %v3747 = vpop.permute.xlu0 %3746
      %3748 = vrot.lane.b32.xlu0 %v1217, 13
      %v3749 = vpop.permute.xlu0 %3748
      %3750 = vrot.lane.b32.xlu0 %v1219, 13
      %v3751 = vpop.permute.xlu0 %3750
      %3752 = vrot.lane.b32.xlu0 %v1221, 13
      %v3753 = vpop.permute.xlu0 %3752
      %3754 = vrot.lane.b32.xlu0 %v1224, 13
      %v3755 = vpop.permute.xlu0 %3754
      %3756 = vrot.lane.b32.xlu0 %v1226, 13
      %v3757 = vpop.permute.xlu0 %3756
      %3758 = vrot.lane.b32.xlu0 %v1228, 13
      %v3759 = vpop.permute.xlu0 %3758
      %3760 = vrot.lane.b32.xlu0 %v1231, 13
      %v3761 = vpop.permute.xlu0 %3760
      %3762 = vrot.lane.b32.xlu0 %v1233, 13
      %v3763 = vpop.permute.xlu0 %3762
      %3764 = vrot.lane.b32.xlu0 %v1235, 13
      %v3765 = vpop.permute.xlu0 %3764
      %3766 = vrot.lane.b32.xlu0 %v1238, 13
      %v3767 = vpop.permute.xlu0 %3766
      %3768 = vrot.lane.b32.xlu0 %v1240, 13
      %v3769 = vpop.permute.xlu0 %3768
      %3770 = vrot.lane.b32.xlu0 %v1242, 13
      %v3771 = vpop.permute.xlu0 %3770
      %3772 = vrot.lane.b32.xlu0 %v1245, 13
      %v3773 = vpop.permute.xlu0 %3772
      %3774 = vrot.lane.b32.xlu0 %v1247, 13
      %v3775 = vpop.permute.xlu0 %3774
      %3776 = vrot.lane.b32.xlu0 %v1249, 13
      %v3777 = vpop.permute.xlu0 %3776
      %3778 = vrot.lane.b32.xlu0 %v1252, 13
      %v3779 = vpop.permute.xlu0 %3778
      %3780 = vrot.lane.b32.xlu0 %v1254, 13
      %v3781 = vpop.permute.xlu0 %3780
      %3782 = vrot.lane.b32.xlu0 %v1256, 13
      %v3783 = vpop.permute.xlu0 %3782
      %3784 = vrot.lane.b32.xlu0 %v1259, 13
      %v3785 = vpop.permute.xlu0 %3784
      %3786 = vrot.lane.b32.xlu0 %v1261, 13
      %v3787 = vpop.permute.xlu0 %3786
      %3788 = vrot.lane.b32.xlu0 %v1263, 13
      %v3789 = vpop.permute.xlu0 %3788
      %3790 = vrot.lane.b32.xlu0 %v1266, 13
      %v3791 = vpop.permute.xlu0 %3790
      %3792 = vrot.lane.b32.xlu0 %v1268, 13
      %v3793 = vpop.permute.xlu0 %3792
      %3794 = vrot.lane.b32.xlu0 %v1270, 13
      %v3795 = vpop.permute.xlu0 %3794
      %3796 = vrot.lane.b32.xlu0 %v1273, 13
      %v3797 = vpop.permute.xlu0 %3796
      %3798 = vrot.lane.b32.xlu0 %v1275, 13
      %v3799 = vpop.permute.xlu0 %3798
      %3800 = vrot.lane.b32.xlu0 %v1277, 13
      %v3801 = vpop.permute.xlu0 %3800
      %3802 = vrot.lane.b32.xlu0 %v1280, 13
      %v3803 = vpop.permute.xlu0 %3802
      %3804 = vrot.lane.b32.xlu0 %v1282, 13
      %v3805 = vpop.permute.xlu0 %3804
      %3806 = vrot.lane.b32.xlu0 %v1284, 13
      %v3807 = vpop.permute.xlu0 %3806
      %3808 = vrot.lane.b32.xlu0 %v1287, 13
      %v3809 = vpop.permute.xlu0 %3808
      %3810 = vrot.lane.b32.xlu0 %v1289, 13
      %v3811 = vpop.permute.xlu0 %3810
      %3812 = vrot.lane.b32.xlu0 %v1291, 13
      %v3813 = vpop.permute.xlu0 %3812
      %3814 = vrot.lane.b32.xlu0 %v1294, 13
      %v3815 = vpop.permute.xlu0 %3814
      %3816 = vrot.lane.b32.xlu0 %v1296, 13
      %v3817 = vpop.permute.xlu0 %3816
      %3818 = vrot.lane.b32.xlu0 %v1298, 13
      %v3819 = vpop.permute.xlu0 %3818
      %3820 = vrot.lane.b32.xlu0 %v1301, 13
      %v3821 = vpop.permute.xlu0 %3820
      %3822 = vrot.lane.b32.xlu0 %v1303, 13
      %v3823 = vpop.permute.xlu0 %3822
      %3824 = vrot.lane.b32.xlu0 %v1305, 13
      %v3825 = vpop.permute.xlu0 %3824
      %3826 = vrot.lane.b32.xlu0 %v1308, 13
      %v3827 = vpop.permute.xlu0 %3826
      %3828 = vrot.lane.b32.xlu0 %v1310, 13
      %v3829 = vpop.permute.xlu0 %3828
      %3830 = vrot.lane.b32.xlu0 %v1312, 13
      %v3831 = vpop.permute.xlu0 %3830
      %3832 = vrot.lane.b32.xlu0 %v1315, 13
      %v3833 = vpop.permute.xlu0 %3832
      %3834 = vrot.lane.b32.xlu0 %v1317, 13
      %v3835 = vpop.permute.xlu0 %3834
      %3836 = vrot.lane.b32.xlu0 %v1319, 13
      %v3837 = vpop.permute.xlu0 %3836
      %3838 = vrot.lane.b32.xlu0 %v2589, 13
      %v3839 = vpop.permute.xlu0 %3838
      %3840 = vrot.lane.b32.xlu0 %v2591, 13
      %v3841 = vpop.permute.xlu0 %3840
      %3842 = vrot.lane.b32.xlu0 %v2593, 13
      %v3843 = vpop.permute.xlu0 %3842
      %3844 = vrot.lane.b32.xlu0 %v3701, 13
      %v3845 = vpop.permute.xlu0 %3844
      %3846 = vrot.lane.b32.xlu0 %v3703, 13
      %v3847 = vpop.permute.xlu0 %3846
      %3848 = vrot.lane.b32.xlu0 %v3705, 13
      %v3849 = vpop.permute.xlu0 %3848
      %v3922 = vrot.slane %v273, 4
      %v3923 = vrot.slane %v274, 4
      %v3924 = vsel %vm1536, %v3922, %v3923
      %v3925 = vrot.slane %v275, 4
      %v3926 = vsel %vm1536, %v3923, %v3925
      %v3927 = vrot.slane %v276, 4
      %v3928 = vsel %vm1536, %v3925, %v3927
      %3929 = vrot.lane.b32.xlu0 %v1553, 14
      %v3930 = vpop.permute.xlu0 %3929
      %3931 = vrot.lane.b32.xlu0 %v1555, 14
      %v3932 = vpop.permute.xlu0 %3931
      %3933 = vrot.lane.b32.xlu0 %v1557, 14
      %v3934 = vpop.permute.xlu0 %3933
      %3935 = vrot.lane.b32.xlu0 %v1560, 14
      %v3936 = vpop.permute.xlu0 %3935
      %3937 = vrot.lane.b32.xlu0 %v1562, 14
      %v3938 = vpop.permute.xlu0 %3937
      %3939 = vrot.lane.b32.xlu0 %v1564, 14
      %v3940 = vpop.permute.xlu0 %3939
      %3941 = vrot.lane.b32.xlu0 %v1567, 14
      %v3942 = vpop.permute.xlu0 %3941
      %3943 = vrot.lane.b32.xlu0 %v1569, 14
      %v3944 = vpop.permute.xlu0 %3943
      %3945 = vrot.lane.b32.xlu0 %v1571, 14
      %v3946 = vpop.permute.xlu0 %3945
      %3947 = vrot.lane.b32.xlu0 %v1574, 14
      %v3948 = vpop.permute.xlu0 %3947
      %3949 = vrot.lane.b32.xlu0 %v1576, 14
      %v3950 = vpop.permute.xlu0 %3949
      %3951 = vrot.lane.b32.xlu0 %v1578, 14
      %v3952 = vpop.permute.xlu0 %3951
      %3953 = vrot.lane.b32.xlu0 %v1581, 14
      %v3954 = vpop.permute.xlu0 %3953
      %3955 = vrot.lane.b32.xlu0 %v1583, 14
      %v3956 = vpop.permute.xlu0 %3955
      %3957 = vrot.lane.b32.xlu0 %v1585, 14
      %v3958 = vpop.permute.xlu0 %3957
      %3959 = vrot.lane.b32.xlu0 %v1588, 14
      %v3960 = vpop.permute.xlu0 %3959
      %3961 = vrot.lane.b32.xlu0 %v1590, 14
      %v3962 = vpop.permute.xlu0 %3961
      %3963 = vrot.lane.b32.xlu0 %v1592, 14
      %v3964 = vpop.permute.xlu0 %3963
      %3965 = vrot.lane.b32.xlu0 %v1595, 14
      %v3966 = vpop.permute.xlu0 %3965
      %3967 = vrot.lane.b32.xlu0 %v1597, 14
      %v3968 = vpop.permute.xlu0 %3967
      %3969 = vrot.lane.b32.xlu0 %v1599, 14
      %v3970 = vpop.permute.xlu0 %3969
      %3971 = vrot.lane.b32.xlu0 %v1602, 14
      %v3972 = vpop.permute.xlu0 %3971
      %3973 = vrot.lane.b32.xlu0 %v1604, 14
      %v3974 = vpop.permute.xlu0 %3973
      %3975 = vrot.lane.b32.xlu0 %v1606, 14
      %v3976 = vpop.permute.xlu0 %3975
      %3977 = vrot.lane.b32.xlu0 %v1609, 14
      %v3978 = vpop.permute.xlu0 %3977
      %3979 = vrot.lane.b32.xlu0 %v1611, 14
      %v3980 = vpop.permute.xlu0 %3979
      %3981 = vrot.lane.b32.xlu0 %v1613, 14
      %v3982 = vpop.permute.xlu0 %3981
      %3983 = vrot.lane.b32.xlu0 %v1616, 14
      %v3984 = vpop.permute.xlu0 %3983
      %3985 = vrot.lane.b32.xlu0 %v1618, 14
      %v3986 = vpop.permute.xlu0 %3985
      %3987 = vrot.lane.b32.xlu0 %v1620, 14
      %v3988 = vpop.permute.xlu0 %3987
      %3989 = vrot.lane.b32.xlu0 %v1623, 14
      %v3990 = vpop.permute.xlu0 %3989
      %3991 = vrot.lane.b32.xlu0 %v1625, 14
      %v3992 = vpop.permute.xlu0 %3991
      %3993 = vrot.lane.b32.xlu0 %v1627, 14
      %v3994 = vpop.permute.xlu0 %3993
      %3995 = vrot.lane.b32.xlu0 %v1630, 14
      %v3996 = vpop.permute.xlu0 %3995
      %3997 = vrot.lane.b32.xlu0 %v1632, 14
      %v3998 = vpop.permute.xlu0 %3997
      %3999 = vrot.lane.b32.xlu0 %v1634, 14
      %v4000 = vpop.permute.xlu0 %3999
      %4001 = vrot.lane.b32.xlu0 %v1637, 14
      %v4002 = vpop.permute.xlu0 %4001
      %4003 = vrot.lane.b32.xlu0 %v1639, 14
      %v4004 = vpop.permute.xlu0 %4003
      %4005 = vrot.lane.b32.xlu0 %v1641, 14
      %v4006 = vpop.permute.xlu0 %4005
      %4007 = vrot.lane.b32.xlu0 %v1644, 14
      %v4008 = vpop.permute.xlu0 %4007
      %4009 = vrot.lane.b32.xlu0 %v1646, 14
      %v4010 = vpop.permute.xlu0 %4009
      %4011 = vrot.lane.b32.xlu0 %v1648, 14
      %v4012 = vpop.permute.xlu0 %4011
      %4013 = vrot.lane.b32.xlu0 %v1651, 14
      %v4014 = vpop.permute.xlu0 %4013
      %4015 = vrot.lane.b32.xlu0 %v1653, 14
      %v4016 = vpop.permute.xlu0 %4015
      %4017 = vrot.lane.b32.xlu0 %v1655, 14
      %v4018 = vpop.permute.xlu0 %4017
      %4019 = vrot.lane.b32.xlu0 %v1658, 14
      %v4020 = vpop.permute.xlu0 %4019
      %4021 = vrot.lane.b32.xlu0 %v1660, 14
      %v4022 = vpop.permute.xlu0 %4021
      %4023 = vrot.lane.b32.xlu0 %v1662, 14
      %v4024 = vpop.permute.xlu0 %4023
      %4025 = vrot.lane.b32.xlu0 %v1665, 14
      %v4026 = vpop.permute.xlu0 %4025
      %4027 = vrot.lane.b32.xlu0 %v1667, 14
      %v4028 = vpop.permute.xlu0 %4027
      %4029 = vrot.lane.b32.xlu0 %v1669, 14
      %v4030 = vpop.permute.xlu0 %4029
      %4031 = vrot.lane.b32.xlu0 %v1672, 14
      %v4032 = vpop.permute.xlu0 %4031
      %4033 = vrot.lane.b32.xlu0 %v1674, 14
      %v4034 = vpop.permute.xlu0 %4033
      %4035 = vrot.lane.b32.xlu0 %v1676, 14
      %v4036 = vpop.permute.xlu0 %4035
      %4037 = vrot.lane.b32.xlu0 %v1679, 14
      %v4038 = vpop.permute.xlu0 %4037
      %4039 = vrot.lane.b32.xlu0 %v1681, 14
      %v4040 = vpop.permute.xlu0 %4039
      %4041 = vrot.lane.b32.xlu0 %v1683, 14
      %v4042 = vpop.permute.xlu0 %4041
      %4043 = vrot.lane.b32.xlu0 %v1686, 14
      %v4044 = vpop.permute.xlu0 %4043
      %4045 = vrot.lane.b32.xlu0 %v1688, 14
      %v4046 = vpop.permute.xlu0 %4045
      %4047 = vrot.lane.b32.xlu0 %v1690, 14
      %v4048 = vpop.permute.xlu0 %4047
      %4049 = vrot.lane.b32.xlu0 %v1693, 14
      %v4050 = vpop.permute.xlu0 %4049
      %4051 = vrot.lane.b32.xlu0 %v1695, 14
      %v4052 = vpop.permute.xlu0 %4051
      %4053 = vrot.lane.b32.xlu0 %v1697, 14
      %v4054 = vpop.permute.xlu0 %4053
      %4055 = vrot.lane.b32.xlu0 %v1700, 14
      %v4056 = vpop.permute.xlu0 %4055
      %4057 = vrot.lane.b32.xlu0 %v1702, 14
      %v4058 = vpop.permute.xlu0 %4057
      %4059 = vrot.lane.b32.xlu0 %v1704, 14
      %v4060 = vpop.permute.xlu0 %4059
      %4061 = vrot.lane.b32.xlu0 %v2812, 14
      %v4062 = vpop.permute.xlu0 %4061
      %4063 = vrot.lane.b32.xlu0 %v2814, 14
      %v4064 = vpop.permute.xlu0 %4063
      %4065 = vrot.lane.b32.xlu0 %v2816, 14
      %v4066 = vpop.permute.xlu0 %4065
      %4067 = vrot.lane.b32.xlu0 %v3924, 14
      %v4068 = vpop.permute.xlu0 %4067
      %4069 = vrot.lane.b32.xlu0 %v3926, 14
      %v4070 = vpop.permute.xlu0 %4069
      %4071 = vrot.lane.b32.xlu0 %v3928, 14
      %v4072 = vpop.permute.xlu0 %4071
      %4148 = vrot.lane.b32.xlu0 %v185, 15
      %v4149 = vpop.permute.xlu0 %4148
      %4150 = vrot.lane.b32.xlu0 %v186, 15
      %v4151 = vpop.permute.xlu0 %4150
      %4152 = vrot.lane.b32.xlu0 %v187, 15
      %v4153 = vpop.permute.xlu0 %4152
      %4154 = vrot.lane.b32.xlu0 %v189, 15
      %v4155 = vpop.permute.xlu0 %4154
      %4156 = vrot.lane.b32.xlu0 %v190, 15
      %v4157 = vpop.permute.xlu0 %4156
      %4158 = vrot.lane.b32.xlu0 %v191, 15
      %v4159 = vpop.permute.xlu0 %4158
      %4160 = vrot.lane.b32.xlu0 %v193, 15
      %v4161 = vpop.permute.xlu0 %4160
      %4162 = vrot.lane.b32.xlu0 %v194, 15
      %v4163 = vpop.permute.xlu0 %4162
      %4164 = vrot.lane.b32.xlu0 %v195, 15
      %v4165 = vpop.permute.xlu0 %4164
      %4166 = vrot.lane.b32.xlu0 %v197, 15
      %v4167 = vpop.permute.xlu0 %4166
      %4168 = vrot.lane.b32.xlu0 %v198, 15
      %v4169 = vpop.permute.xlu0 %4168
      %4170 = vrot.lane.b32.xlu0 %v199, 15
      %v4171 = vpop.permute.xlu0 %4170
      %4172 = vrot.lane.b32.xlu0 %v201, 15
      %v4173 = vpop.permute.xlu0 %4172
      %4174 = vrot.lane.b32.xlu0 %v202, 15
      %v4175 = vpop.permute.xlu0 %4174
      %4176 = vrot.lane.b32.xlu0 %v203, 15
      %v4177 = vpop.permute.xlu0 %4176
      %4178 = vrot.lane.b32.xlu0 %v205, 15
      %v4179 = vpop.permute.xlu0 %4178
      %4180 = vrot.lane.b32.xlu0 %v206, 15
      %v4181 = vpop.permute.xlu0 %4180
      %4182 = vrot.lane.b32.xlu0 %v207, 15
      %v4183 = vpop.permute.xlu0 %4182
      %4184 = vrot.lane.b32.xlu0 %v209, 15
      %v4185 = vpop.permute.xlu0 %4184
      %4186 = vrot.lane.b32.xlu0 %v210, 15
      %v4187 = vpop.permute.xlu0 %4186
      %4188 = vrot.lane.b32.xlu0 %v211, 15
      %v4189 = vpop.permute.xlu0 %4188
      %4190 = vrot.lane.b32.xlu0 %v213, 15
      %v4191 = vpop.permute.xlu0 %4190
      %4192 = vrot.lane.b32.xlu0 %v214, 15
      %v4193 = vpop.permute.xlu0 %4192
      %4194 = vrot.lane.b32.xlu0 %v215, 15
      %v4195 = vpop.permute.xlu0 %4194
      %4196 = vrot.lane.b32.xlu0 %v217, 15
      %v4197 = vpop.permute.xlu0 %4196
      %4198 = vrot.lane.b32.xlu0 %v218, 15
      %v4199 = vpop.permute.xlu0 %4198
      %4200 = vrot.lane.b32.xlu0 %v219, 15
      %v4201 = vpop.permute.xlu0 %4200
      %4202 = vrot.lane.b32.xlu0 %v221, 15
      %v4203 = vpop.permute.xlu0 %4202
      %4204 = vrot.lane.b32.xlu0 %v222, 15
      %v4205 = vpop.permute.xlu0 %4204
      %4206 = vrot.lane.b32.xlu0 %v223, 15
      %v4207 = vpop.permute.xlu0 %4206
      %4208 = vrot.lane.b32.xlu0 %v225, 15
      %v4209 = vpop.permute.xlu0 %4208
      %4210 = vrot.lane.b32.xlu0 %v226, 15
      %v4211 = vpop.permute.xlu0 %4210
      %4212 = vrot.lane.b32.xlu0 %v227, 15
      %v4213 = vpop.permute.xlu0 %4212
      %4214 = vrot.lane.b32.xlu0 %v229, 15
      %v4215 = vpop.permute.xlu0 %4214
      %4216 = vrot.lane.b32.xlu0 %v230, 15
      %v4217 = vpop.permute.xlu0 %4216
      %4218 = vrot.lane.b32.xlu0 %v231, 15
      %v4219 = vpop.permute.xlu0 %4218
      %4220 = vrot.lane.b32.xlu0 %v233, 15
      %v4221 = vpop.permute.xlu0 %4220
      %4222 = vrot.lane.b32.xlu0 %v234, 15
      %v4223 = vpop.permute.xlu0 %4222
      %4224 = vrot.lane.b32.xlu0 %v235, 15
      %v4225 = vpop.permute.xlu0 %4224
      %4226 = vrot.lane.b32.xlu0 %v237, 15
      %v4227 = vpop.permute.xlu0 %4226
      %4228 = vrot.lane.b32.xlu0 %v238, 15
      %v4229 = vpop.permute.xlu0 %4228
      %4230 = vrot.lane.b32.xlu0 %v239, 15
      %v4231 = vpop.permute.xlu0 %4230
      %4232 = vrot.lane.b32.xlu0 %v241, 15
      %v4233 = vpop.permute.xlu0 %4232
      %4234 = vrot.lane.b32.xlu0 %v242, 15
      %v4235 = vpop.permute.xlu0 %4234
      %4236 = vrot.lane.b32.xlu0 %v243, 15
      %v4237 = vpop.permute.xlu0 %4236
      %4238 = vrot.lane.b32.xlu0 %v245, 15
      %v4239 = vpop.permute.xlu0 %4238
      %4240 = vrot.lane.b32.xlu0 %v246, 15
      %v4241 = vpop.permute.xlu0 %4240
      %4242 = vrot.lane.b32.xlu0 %v247, 15
      %v4243 = vpop.permute.xlu0 %4242
      %4244 = vrot.lane.b32.xlu0 %v249, 15
      %v4245 = vpop.permute.xlu0 %4244
      %4246 = vrot.lane.b32.xlu0 %v250, 15
      %v4247 = vpop.permute.xlu0 %4246
      %4248 = vrot.lane.b32.xlu0 %v251, 15
      %v4249 = vpop.permute.xlu0 %4248
      %4250 = vrot.lane.b32.xlu0 %v253, 15
      %v4251 = vpop.permute.xlu0 %4250
      %4252 = vrot.lane.b32.xlu0 %v254, 15
      %v4253 = vpop.permute.xlu0 %4252
      %4254 = vrot.lane.b32.xlu0 %v255, 15
      %v4255 = vpop.permute.xlu0 %4254
      %4256 = vrot.lane.b32.xlu0 %v257, 15
      %v4257 = vpop.permute.xlu0 %4256
      %4258 = vrot.lane.b32.xlu0 %v258, 15
      %v4259 = vpop.permute.xlu0 %4258
      %4260 = vrot.lane.b32.xlu0 %v259, 15
      %v4261 = vpop.permute.xlu0 %4260
      %4262 = vrot.lane.b32.xlu0 %v261, 15
      %v4263 = vpop.permute.xlu0 %4262
      %4264 = vrot.lane.b32.xlu0 %v262, 15
      %v4265 = vpop.permute.xlu0 %4264
      %4266 = vrot.lane.b32.xlu0 %v263, 15
      %v4267 = vpop.permute.xlu0 %4266
      %4268 = vrot.lane.b32.xlu0 %v265, 15
      %v4269 = vpop.permute.xlu0 %4268
      %4270 = vrot.lane.b32.xlu0 %v266, 15
      %v4271 = vpop.permute.xlu0 %4270
      %4272 = vrot.lane.b32.xlu0 %v267, 15
      %v4273 = vpop.permute.xlu0 %4272
      %4274 = vrot.lane.b32.xlu0 %v269, 15
      %v4275 = vpop.permute.xlu0 %4274
      %4276 = vrot.lane.b32.xlu0 %v270, 15
      %v4277 = vpop.permute.xlu0 %4276
      %4278 = vrot.lane.b32.xlu0 %v271, 15
      %v4279 = vpop.permute.xlu0 %4278
      %4280 = vrot.lane.b32.xlu0 %v273, 15
      %v4281 = vpop.permute.xlu0 %4280
      %4282 = vrot.lane.b32.xlu0 %v274, 15
      %v4283 = vpop.permute.xlu0 %4282
      %4284 = vrot.lane.b32.xlu0 %v275, 15
      %v4285 = vpop.permute.xlu0 %4284
      %4286 = vrot.lane.b32.xlu0 %v277, 15
      %v4287 = vpop.permute.xlu0 %4286
      %4288 = vrot.lane.b32.xlu0 %v278, 15
      %v4289 = vpop.permute.xlu0 %4288
      %4290 = vrot.lane.b32.xlu0 %v279, 15
      %v4291 = vpop.permute.xlu0 %4290
      %vm4364 = vcmask 7168
      %v4365 = vsel %vm4364, %v173, %v551
      %v4366 = vsel %vm4364, %v174, %v553
      %v4367 = vsel %vm4364, %v175, %v555
      %v4368 = vsel %vm4364, %v177, %v557
      %v4369 = vsel %vm4364, %v178, %v559
      %v4370 = vsel %vm4364, %v179, %v561
      %v4371 = vsel %vm4364, %v181, %v563
      %v4372 = vsel %vm4364, %v182, %v565
      %v4373 = vsel %vm4364, %v183, %v567
      %v4374 = vsel %vm4364, %v185, %v569
      %v4375 = vsel %vm4364, %v186, %v571
      %v4376 = vsel %vm4364, %v187, %v573
      %v4377 = vsel %vm4364, %v189, %v575
      %v4378 = vsel %vm4364, %v190, %v577
      %v4379 = vsel %vm4364, %v191, %v579
      %v4380 = vsel %vm4364, %v193, %v581
      %v4381 = vsel %vm4364, %v194, %v583
      %v4382 = vsel %vm4364, %v195, %v585
      %v4383 = vsel %vm4364, %v197, %v587
      %v4384 = vsel %vm4364, %v198, %v589
      %v4385 = vsel %vm4364, %v199, %v591
      %v4386 = vsel %vm4364, %v201, %v593
      %v4387 = vsel %vm4364, %v202, %v595
      %v4388 = vsel %vm4364, %v203, %v597
      %v4389 = vsel %vm4364, %v205, %v599
      %v4390 = vsel %vm4364, %v206, %v601
      %v4391 = vsel %vm4364, %v207, %v603
      %v4392 = vsel %vm4364, %v209, %v605
      %v4393 = vsel %vm4364, %v210, %v607
      %v4394 = vsel %vm4364, %v211, %v609
      %v4395 = vsel %vm4364, %v213, %v611
      %v4396 = vsel %vm4364, %v214, %v613
      %v4397 = vsel %vm4364, %v215, %v615
      %v4398 = vsel %vm4364, %v217, %v617
      %v4399 = vsel %vm4364, %v218, %v619
      %v4400 = vsel %vm4364, %v219, %v621
      %v4401 = vsel %vm4364, %v221, %v623
      %v4402 = vsel %vm4364, %v222, %v625
      %v4403 = vsel %vm4364, %v223, %v627
      %v4404 = vsel %vm4364, %v225, %v629
      %v4405 = vsel %vm4364, %v226, %v631
      %v4406 = vsel %vm4364, %v227, %v633
      %v4407 = vsel %vm4364, %v229, %v635
      %v4408 = vsel %vm4364, %v230, %v637
      %v4409 = vsel %vm4364, %v231, %v639
      %v4410 = vsel %vm4364, %v233, %v641
      %v4411 = vsel %vm4364, %v234, %v643
      %v4412 = vsel %vm4364, %v235, %v645
      %v4413 = vsel %vm4364, %v237, %v647
      %v4414 = vsel %vm4364, %v238, %v649
      %v4415 = vsel %vm4364, %v239, %v651
      %v4416 = vsel %vm4364, %v241, %v653
      %v4417 = vsel %vm4364, %v242, %v655
      %v4418 = vsel %vm4364, %v243, %v657
      %v4419 = vsel %vm4364, %v245, %v659
      %v4420 = vsel %vm4364, %v246, %v661
      %v4421 = vsel %vm4364, %v247, %v663
      %v4422 = vsel %vm4364, %v249, %v665
      %v4423 = vsel %vm4364, %v250, %v667
      %v4424 = vsel %vm4364, %v251, %v669
      %v4425 = vsel %vm4364, %v253, %v671
      %v4426 = vsel %vm4364, %v254, %v673
      %v4427 = vsel %vm4364, %v255, %v675
      %v4428 = vsel %vm4364, %v257, %v677
      %v4429 = vsel %vm4364, %v258, %v679
      %v4430 = vsel %vm4364, %v259, %v681
      %v4431 = vsel %vm4364, %v261, %v683
      %v4432 = vsel %vm4364, %v262, %v685
      %v4433 = vsel %vm4364, %v263, %v687
      %v4434 = vsel %vm4364, %v265, %v689
      %v4435 = vsel %vm4364, %v266, %v691
      %v4436 = vsel %vm4364, %v267, %v693
      %vm4437 = vcmask 15360
      %v4438 = vsel %vm4437, %v4365, %v936
      %v4439 = vsel %vm4437, %v4366, %v938
      %v4440 = vsel %vm4437, %v4367, %v940
      %v4441 = vsel %vm4437, %v4368, %v942
      %v4442 = vsel %vm4437, %v4369, %v944
      %v4443 = vsel %vm4437, %v4370, %v946
      %v4444 = vsel %vm4437, %v4371, %v948
      %v4445 = vsel %vm4437, %v4372, %v950
      %v4446 = vsel %vm4437, %v4373, %v952
      %v4447 = vsel %vm4437, %v4374, %v954
      %v4448 = vsel %vm4437, %v4375, %v956
      %v4449 = vsel %vm4437, %v4376, %v958
      %v4450 = vsel %vm4437, %v4377, %v960
      %v4451 = vsel %vm4437, %v4378, %v962
      %v4452 = vsel %vm4437, %v4379, %v964
      %v4453 = vsel %vm4437, %v4380, %v966
      %v4454 = vsel %vm4437, %v4381, %v968
      %v4455 = vsel %vm4437, %v4382, %v970
      %v4456 = vsel %vm4437, %v4383, %v972
      %v4457 = vsel %vm4437, %v4384, %v974
      %v4458 = vsel %vm4437, %v4385, %v976
      %v4459 = vsel %vm4437, %v4386, %v978
      %v4460 = vsel %vm4437, %v4387, %v980
      %v4461 = vsel %vm4437, %v4388, %v982
      %v4462 = vsel %vm4437, %v4389, %v984
      %v4463 = vsel %vm4437, %v4390, %v986
      %v4464 = vsel %vm4437, %v4391, %v988
      %v4465 = vsel %vm4437, %v4392, %v990
      %v4466 = vsel %vm4437, %v4393, %v992
      %v4467 = vsel %vm4437, %v4394, %v994
      %v4468 = vsel %vm4437, %v4395, %v996
      %v4469 = vsel %vm4437, %v4396, %v998
      %v4470 = vsel %vm4437, %v4397, %v1000
      %v4471 = vsel %vm4437, %v4398, %v1002
      %v4472 = vsel %vm4437, %v4399, %v1004
      %v4473 = vsel %vm4437, %v4400, %v1006
      %v4474 = vsel %vm4437, %v4401, %v1008
      %v4475 = vsel %vm4437, %v4402, %v1010
      %v4476 = vsel %vm4437, %v4403, %v1012
      %v4477 = vsel %vm4437, %v4404, %v1014
      %v4478 = vsel %vm4437, %v4405, %v1016
      %v4479 = vsel %vm4437, %v4406, %v1018
      %v4480 = vsel %vm4437, %v4407, %v1020
      %v4481 = vsel %vm4437, %v4408, %v1022
      %v4482 = vsel %vm4437, %v4409, %v1024
      %v4483 = vsel %vm4437, %v4410, %v1026
      %v4484 = vsel %vm4437, %v4411, %v1028
      %v4485 = vsel %vm4437, %v4412, %v1030
      %v4486 = vsel %vm4437, %v4413, %v1032
      %v4487 = vsel %vm4437, %v4414, %v1034
      %v4488 = vsel %vm4437, %v4415, %v1036
      %v4489 = vsel %vm4437, %v4416, %v1038
      %v4490 = vsel %vm4437, %v4417, %v1040
      %v4491 = vsel %vm4437, %v4418, %v1042
      %v4492 = vsel %vm4437, %v4419, %v1044
      %v4493 = vsel %vm4437, %v4420, %v1046
      %v4494 = vsel %vm4437, %v4421, %v1048
      %v4495 = vsel %vm4437, %v4422, %v1050
      %v4496 = vsel %vm4437, %v4423, %v1052
      %v4497 = vsel %vm4437, %v4424, %v1054
      %v4498 = vsel %vm4437, %v4425, %v1056
      %v4499 = vsel %vm4437, %v4426, %v1058
      %v4500 = vsel %vm4437, %v4427, %v1060
      %v4501 = vsel %vm4437, %v4428, %v1062
      %v4502 = vsel %vm4437, %v4429, %v1064
      %v4503 = vsel %vm4437, %v4430, %v1066
      %v4504 = vsel %vm4437, %v4431, %v1068
      %v4505 = vsel %vm4437, %v4432, %v1070
      %v4506 = vsel %vm4437, %v4433, %v1072
      %v4507 = vsel %vm4437, %v4434, %v1074
      %v4508 = vsel %vm4437, %v4435, %v1076
      %v4509 = vsel %vm4437, %v4436, %v1078
      %vm4510 = vcmask 23552
      %v4511 = vsel %vm4510, %v4438, %v1321
      %v4512 = vsel %vm4510, %v4439, %v1323
      %v4513 = vsel %vm4510, %v4440, %v1325
      %v4514 = vsel %vm4510, %v4441, %v1327
      %v4515 = vsel %vm4510, %v4442, %v1329
      %v4516 = vsel %vm4510, %v4443, %v1331
      %v4517 = vsel %vm4510, %v4444, %v1333
      %v4518 = vsel %vm4510, %v4445, %v1335
      %v4519 = vsel %vm4510, %v4446, %v1337
      %v4520 = vsel %vm4510, %v4447, %v1339
      %v4521 = vsel %vm4510, %v4448, %v1341
      %v4522 = vsel %vm4510, %v4449, %v1343
      %v4523 = vsel %vm4510, %v4450, %v1345
      %v4524 = vsel %vm4510, %v4451, %v1347
      %v4525 = vsel %vm4510, %v4452, %v1349
      %v4526 = vsel %vm4510, %v4453, %v1351
      %v4527 = vsel %vm4510, %v4454, %v1353
      %v4528 = vsel %vm4510, %v4455, %v1355
      %v4529 = vsel %vm4510, %v4456, %v1357
      %v4530 = vsel %vm4510, %v4457, %v1359
      %v4531 = vsel %vm4510, %v4458, %v1361
      %v4532 = vsel %vm4510, %v4459, %v1363
      %v4533 = vsel %vm4510, %v4460, %v1365
      %v4534 = vsel %vm4510, %v4461, %v1367
      %v4535 = vsel %vm4510, %v4462, %v1369
      %v4536 = vsel %vm4510, %v4463, %v1371
      %v4537 = vsel %vm4510, %v4464, %v1373
      %v4538 = vsel %vm4510, %v4465, %v1375
      %v4539 = vsel %vm4510, %v4466, %v1377
      %v4540 = vsel %vm4510, %v4467, %v1379
      %v4541 = vsel %vm4510, %v4468, %v1381
      %v4542 = vsel %vm4510, %v4469, %v1383
      %v4543 = vsel %vm4510, %v4470, %v1385
      %v4544 = vsel %vm4510, %v4471, %v1387
      %v4545 = vsel %vm4510, %v4472, %v1389
      %v4546 = vsel %vm4510, %v4473, %v1391
      %v4547 = vsel %vm4510, %v4474, %v1393
      %v4548 = vsel %vm4510, %v4475, %v1395
      %v4549 = vsel %vm4510, %v4476, %v1397
      %v4550 = vsel %vm4510, %v4477, %v1399
      %v4551 = vsel %vm4510, %v4478, %v1401
      %v4552 = vsel %vm4510, %v4479, %v1403
      %v4553 = vsel %vm4510, %v4480, %v1405
      %v4554 = vsel %vm4510, %v4481, %v1407
      %v4555 = vsel %vm4510, %v4482, %v1409
      %v4556 = vsel %vm4510, %v4483, %v1411
      %v4557 = vsel %vm4510, %v4484, %v1413
      %v4558 = vsel %vm4510, %v4485, %v1415
      %v4559 = vsel %vm4510, %v4486, %v1417
      %v4560 = vsel %vm4510, %v4487, %v1419
      %v4561 = vsel %vm4510, %v4488, %v1421
      %v4562 = vsel %vm4510, %v4489, %v1423
      %v4563 = vsel %vm4510, %v4490, %v1425
      %v4564 = vsel %vm4510, %v4491, %v1427
      %v4565 = vsel %vm4510, %v4492, %v1429
      %v4566 = vsel %vm4510, %v4493, %v1431
      %v4567 = vsel %vm4510, %v4494, %v1433
      %v4568 = vsel %vm4510, %v4495, %v1435
      %v4569 = vsel %vm4510, %v4496, %v1437
      %v4570 = vsel %vm4510, %v4497, %v1439
      %v4571 = vsel %vm4510, %v4498, %v1441
      %v4572 = vsel %vm4510, %v4499, %v1443
      %v4573 = vsel %vm4510, %v4500, %v1445
      %v4574 = vsel %vm4510, %v4501, %v1447
      %v4575 = vsel %vm4510, %v4502, %v1449
      %v4576 = vsel %vm4510, %v4503, %v1451
      %v4577 = vsel %vm4510, %v4504, %v1453
      %v4578 = vsel %vm4510, %v4505, %v1455
      %v4579 = vsel %vm4510, %v4506, %v1457
      %v4580 = vsel %vm4510, %v4507, %v1459
      %v4581 = vsel %vm4510, %v4508, %v1461
      %v4582 = vsel %vm4510, %v4509, %v1463
      %vm4583 = vcmask 31744
      %v4584 = vsel %vm4583, %v4511, %v1706
      %v4585 = vsel %vm4583, %v4512, %v1708
      %v4586 = vsel %vm4583, %v4513, %v1710
      %v4587 = vsel %vm4583, %v4514, %v1712
      %v4588 = vsel %vm4583, %v4515, %v1714
      %v4589 = vsel %vm4583, %v4516, %v1716
      %v4590 = vsel %vm4583, %v4517, %v1718
      %v4591 = vsel %vm4583, %v4518, %v1720
      %v4592 = vsel %vm4583, %v4519, %v1722
      %v4593 = vsel %vm4583, %v4520, %v1724
      %v4594 = vsel %vm4583, %v4521, %v1726
      %v4595 = vsel %vm4583, %v4522, %v1728
      %v4596 = vsel %vm4583, %v4523, %v1730
      %v4597 = vsel %vm4583, %v4524, %v1732
      %v4598 = vsel %vm4583, %v4525, %v1734
      %v4599 = vsel %vm4583, %v4526, %v1736
      %v4600 = vsel %vm4583, %v4527, %v1738
      %v4601 = vsel %vm4583, %v4528, %v1740
      %v4602 = vsel %vm4583, %v4529, %v1742
      %v4603 = vsel %vm4583, %v4530, %v1744
      %v4604 = vsel %vm4583, %v4531, %v1746
      %v4605 = vsel %vm4583, %v4532, %v1748
      %v4606 = vsel %vm4583, %v4533, %v1750
      %v4607 = vsel %vm4583, %v4534, %v1752
      %v4608 = vsel %vm4583, %v4535, %v1754
      %v4609 = vsel %vm4583, %v4536, %v1756
      %v4610 = vsel %vm4583, %v4537, %v1758
      %v4611 = vsel %vm4583, %v4538, %v1760
      %v4612 = vsel %vm4583, %v4539, %v1762
      %v4613 = vsel %vm4583, %v4540, %v1764
      %v4614 = vsel %vm4583, %v4541, %v1766
      %v4615 = vsel %vm4583, %v4542, %v1768
      %v4616 = vsel %vm4583, %v4543, %v1770
      %v4617 = vsel %vm4583, %v4544, %v1772
      %v4618 = vsel %vm4583, %v4545, %v1774
      %v4619 = vsel %vm4583, %v4546, %v1776
      %v4620 = vsel %vm4583, %v4547, %v1778
      %v4621 = vsel %vm4583, %v4548, %v1780
      %v4622 = vsel %vm4583, %v4549, %v1782
      %v4623 = vsel %vm4583, %v4550, %v1784
      %v4624 = vsel %vm4583, %v4551, %v1786
      %v4625 = vsel %vm4583, %v4552, %v1788
      %v4626 = vsel %vm4583, %v4553, %v1790
      %v4627 = vsel %vm4583, %v4554, %v1792
      %v4628 = vsel %vm4583, %v4555, %v1794
      %v4629 = vsel %vm4583, %v4556, %v1796
      %v4630 = vsel %vm4583, %v4557, %v1798
      %v4631 = vsel %vm4583, %v4558, %v1800
      %v4632 = vsel %vm4583, %v4559, %v1802
      %v4633 = vsel %vm4583, %v4560, %v1804
      %v4634 = vsel %vm4583, %v4561, %v1806
      %v4635 = vsel %vm4583, %v4562, %v1808
      %v4636 = vsel %vm4583, %v4563, %v1810
      %v4637 = vsel %vm4583, %v4564, %v1812
      %v4638 = vsel %vm4583, %v4565, %v1814
      %v4639 = vsel %vm4583, %v4566, %v1816
      %v4640 = vsel %vm4583, %v4567, %v1818
      %v4641 = vsel %vm4583, %v4568, %v1820
      %v4642 = vsel %vm4583, %v4569, %v1822
      %v4643 = vsel %vm4583, %v4570, %v1824
      %v4644 = vsel %vm4583, %v4571, %v1826
      %v4645 = vsel %vm4583, %v4572, %v1828
      %v4646 = vsel %vm4583, %v4573, %v1830
      %v4647 = vsel %vm4583, %v4574, %v1832
      %v4648 = vsel %vm4583, %v4575, %v1834
      %v4649 = vsel %vm4583, %v4576, %v1836
      %v4650 = vsel %vm4583, %v4577, %v1838
      %v4651 = vsel %vm4583, %v4578, %v1840
      %v4652 = vsel %vm4583, %v4579, %v1842
      %v4653 = vsel %vm4583, %v4580, %v1844
      %v4654 = vsel %vm4583, %v4581, %v1846
      %v4655 = vsel %vm4583, %v4582, %v1848
      %vm4656 = vcmask 39936
      %v4657 = vsel %vm4656, %v4584, %v1925
      %v4658 = vsel %vm4656, %v4585, %v1927
      %v4659 = vsel %vm4656, %v4586, %v1929
      %v4660 = vsel %vm4656, %v4587, %v1931
      %v4661 = vsel %vm4656, %v4588, %v1933
      %v4662 = vsel %vm4656, %v4589, %v1935
      %v4663 = vsel %vm4656, %v4590, %v1937
      %v4664 = vsel %vm4656, %v4591, %v1939
      %v4665 = vsel %vm4656, %v4592, %v1941
      %v4666 = vsel %vm4656, %v4593, %v1943
      %v4667 = vsel %vm4656, %v4594, %v1945
      %v4668 = vsel %vm4656, %v4595, %v1947
      %v4669 = vsel %vm4656, %v4596, %v1949
      %v4670 = vsel %vm4656, %v4597, %v1951
      %v4671 = vsel %vm4656, %v4598, %v1953
      %v4672 = vsel %vm4656, %v4599, %v1955
      %v4673 = vsel %vm4656, %v4600, %v1957
      %v4674 = vsel %vm4656, %v4601, %v1959
      %v4675 = vsel %vm4656, %v4602, %v1961
      %v4676 = vsel %vm4656, %v4603, %v1963
      %v4677 = vsel %vm4656, %v4604, %v1965
      %v4678 = vsel %vm4656, %v4605, %v1967
      %v4679 = vsel %vm4656, %v4606, %v1969
      %v4680 = vsel %vm4656, %v4607, %v1971
      %v4681 = vsel %vm4656, %v4608, %v1973
      %v4682 = vsel %vm4656, %v4609, %v1975
      %v4683 = vsel %vm4656, %v4610, %v1977
      %v4684 = vsel %vm4656, %v4611, %v1979
      %v4685 = vsel %vm4656, %v4612, %v1981
      %v4686 = vsel %vm4656, %v4613, %v1983
      %v4687 = vsel %vm4656, %v4614, %v1985
      %v4688 = vsel %vm4656, %v4615, %v1987
      %v4689 = vsel %vm4656, %v4616, %v1989
      %v4690 = vsel %vm4656, %v4617, %v1991
      %v4691 = vsel %vm4656, %v4618, %v1993
      %v4692 = vsel %vm4656, %v4619, %v1995
      %v4693 = vsel %vm4656, %v4620, %v1997
      %v4694 = vsel %vm4656, %v4621, %v1999
      %v4695 = vsel %vm4656, %v4622, %v2001
      %v4696 = vsel %vm4656, %v4623, %v2003
      %v4697 = vsel %vm4656, %v4624, %v2005
      %v4698 = vsel %vm4656, %v4625, %v2007
      %v4699 = vsel %vm4656, %v4626, %v2009
      %v4700 = vsel %vm4656, %v4627, %v2011
      %v4701 = vsel %vm4656, %v4628, %v2013
      %v4702 = vsel %vm4656, %v4629, %v2015
      %v4703 = vsel %vm4656, %v4630, %v2017
      %v4704 = vsel %vm4656, %v4631, %v2019
      %v4705 = vsel %vm4656, %v4632, %v2021
      %v4706 = vsel %vm4656, %v4633, %v2023
      %v4707 = vsel %vm4656, %v4634, %v2025
      %v4708 = vsel %vm4656, %v4635, %v2027
      %v4709 = vsel %vm4656, %v4636, %v2029
      %v4710 = vsel %vm4656, %v4637, %v2031
      %v4711 = vsel %vm4656, %v4638, %v2033
      %v4712 = vsel %vm4656, %v4639, %v2035
      %v4713 = vsel %vm4656, %v4640, %v2037
      %v4714 = vsel %vm4656, %v4641, %v2039
      %v4715 = vsel %vm4656, %v4642, %v2041
      %v4716 = vsel %vm4656, %v4643, %v2043
      %v4717 = vsel %vm4656, %v4644, %v2045
      %v4718 = vsel %vm4656, %v4645, %v2047
      %v4719 = vsel %vm4656, %v4646, %v2049
      %v4720 = vsel %vm4656, %v4647, %v2051
      %v4721 = vsel %vm4656, %v4648, %v2053
      %v4722 = vsel %vm4656, %v4649, %v2055
      %v4723 = vsel %vm4656, %v4650, %v2057
      %v4724 = vsel %vm4656, %v4651, %v2059
      %v4725 = vsel %vm4656, %v4652, %v2061
      %v4726 = vsel %vm4656, %v4653, %v2063
      %v4727 = vsel %vm4656, %v4654, %v2065
      %v4728 = vsel %vm4656, %v4655, %v2067
      %vm4729 = vcmask 48128
      %v4730 = vsel %vm4729, %v4657, %v2149
      %v4731 = vsel %vm4729, %v4658, %v2151
      %v4732 = vsel %vm4729, %v4659, %v2153
      %v4733 = vsel %vm4729, %v4660, %v2155
      %v4734 = vsel %vm4729, %v4661, %v2157
      %v4735 = vsel %vm4729, %v4662, %v2159
      %v4736 = vsel %vm4729, %v4663, %v2161
      %v4737 = vsel %vm4729, %v4664, %v2163
      %v4738 = vsel %vm4729, %v4665, %v2165
      %v4739 = vsel %vm4729, %v4666, %v2167
      %v4740 = vsel %vm4729, %v4667, %v2169
      %v4741 = vsel %vm4729, %v4668, %v2171
      %v4742 = vsel %vm4729, %v4669, %v2173
      %v4743 = vsel %vm4729, %v4670, %v2175
      %v4744 = vsel %vm4729, %v4671, %v2177
      %v4745 = vsel %vm4729, %v4672, %v2179
      %v4746 = vsel %vm4729, %v4673, %v2181
      %v4747 = vsel %vm4729, %v4674, %v2183
      %v4748 = vsel %vm4729, %v4675, %v2185
      %v4749 = vsel %vm4729, %v4676, %v2187
      %v4750 = vsel %vm4729, %v4677, %v2189
      %v4751 = vsel %vm4729, %v4678, %v2191
      %v4752 = vsel %vm4729, %v4679, %v2193
      %v4753 = vsel %vm4729, %v4680, %v2195
      %v4754 = vsel %vm4729, %v4681, %v2197
      %v4755 = vsel %vm4729, %v4682, %v2199
      %v4756 = vsel %vm4729, %v4683, %v2201
      %v4757 = vsel %vm4729, %v4684, %v2203
      %v4758 = vsel %vm4729, %v4685, %v2205
      %v4759 = vsel %vm4729, %v4686, %v2207
      %v4760 = vsel %vm4729, %v4687, %v2209
      %v4761 = vsel %vm4729, %v4688, %v2211
      %v4762 = vsel %vm4729, %v4689, %v2213
      %v4763 = vsel %vm4729, %v4690, %v2215
      %v4764 = vsel %vm4729, %v4691, %v2217
      %v4765 = vsel %vm4729, %v4692, %v2219
      %v4766 = vsel %vm4729, %v4693, %v2221
      %v4767 = vsel %vm4729, %v4694, %v2223
      %v4768 = vsel %vm4729, %v4695, %v2225
      %v4769 = vsel %vm4729, %v4696, %v2227
      %v4770 = vsel %vm4729, %v4697, %v2229
      %v4771 = vsel %vm4729, %v4698, %v2231
      %v4772 = vsel %vm4729, %v4699, %v2233
      %v4773 = vsel %vm4729, %v4700, %v2235
      %v4774 = vsel %vm4729, %v4701, %v2237
      %v4775 = vsel %vm4729, %v4702, %v2239
      %v4776 = vsel %vm4729, %v4703, %v2241
      %v4777 = vsel %vm4729, %v4704, %v2243
      %v4778 = vsel %vm4729, %v4705, %v2245
      %v4779 = vsel %vm4729, %v4706, %v2247
      %v4780 = vsel %vm4729, %v4707, %v2249
      %v4781 = vsel %vm4729, %v4708, %v2251
      %v4782 = vsel %vm4729, %v4709, %v2253
      %v4783 = vsel %vm4729, %v4710, %v2255
      %v4784 = vsel %vm4729, %v4711, %v2257
      %v4785 = vsel %vm4729, %v4712, %v2259
      %v4786 = vsel %vm4729, %v4713, %v2261
      %v4787 = vsel %vm4729, %v4714, %v2263
      %v4788 = vsel %vm4729, %v4715, %v2265
      %v4789 = vsel %vm4729, %v4716, %v2267
      %v4790 = vsel %vm4729, %v4717, %v2269
      %v4791 = vsel %vm4729, %v4718, %v2271
      %v4792 = vsel %vm4729, %v4719, %v2273
      %v4793 = vsel %vm4729, %v4720, %v2275
      %v4794 = vsel %vm4729, %v4721, %v2277
      %v4795 = vsel %vm4729, %v4722, %v2279
      %v4796 = vsel %vm4729, %v4723, %v2281
      %v4797 = vsel %vm4729, %v4724, %v2283
      %v4798 = vsel %vm4729, %v4725, %v2285
      %v4799 = vsel %vm4729, %v4726, %v2287
      %v4800 = vsel %vm4729, %v4727, %v2289
      %v4801 = vsel %vm4729, %v4728, %v2291
      %vm4802 = vcmask 56320
      %v4803 = vsel %vm4802, %v4730, %v2372
      %v4804 = vsel %vm4802, %v4731, %v2374
      %v4805 = vsel %vm4802, %v4732, %v2376
      %v4806 = vsel %vm4802, %v4733, %v2378
      %v4807 = vsel %vm4802, %v4734, %v2380
      %v4808 = vsel %vm4802, %v4735, %v2382
      %v4809 = vsel %vm4802, %v4736, %v2384
      %v4810 = vsel %vm4802, %v4737, %v2386
      %v4811 = vsel %vm4802, %v4738, %v2388
      %v4812 = vsel %vm4802, %v4739, %v2390
      %v4813 = vsel %vm4802, %v4740, %v2392
      %v4814 = vsel %vm4802, %v4741, %v2394
      %v4815 = vsel %vm4802, %v4742, %v2396
      %v4816 = vsel %vm4802, %v4743, %v2398
      %v4817 = vsel %vm4802, %v4744, %v2400
      %v4818 = vsel %vm4802, %v4745, %v2402
      %v4819 = vsel %vm4802, %v4746, %v2404
      %v4820 = vsel %vm4802, %v4747, %v2406
      %v4821 = vsel %vm4802, %v4748, %v2408
      %v4822 = vsel %vm4802, %v4749, %v2410
      %v4823 = vsel %vm4802, %v4750, %v2412
      %v4824 = vsel %vm4802, %v4751, %v2414
      %v4825 = vsel %vm4802, %v4752, %v2416
      %v4826 = vsel %vm4802, %v4753, %v2418
      %v4827 = vsel %vm4802, %v4754, %v2420
      %v4828 = vsel %vm4802, %v4755, %v2422
      %v4829 = vsel %vm4802, %v4756, %v2424
      %v4830 = vsel %vm4802, %v4757, %v2426
      %v4831 = vsel %vm4802, %v4758, %v2428
      %v4832 = vsel %vm4802, %v4759, %v2430
      %v4833 = vsel %vm4802, %v4760, %v2432
      %v4834 = vsel %vm4802, %v4761, %v2434
      %v4835 = vsel %vm4802, %v4762, %v2436
      %v4836 = vsel %vm4802, %v4763, %v2438
      %v4837 = vsel %vm4802, %v4764, %v2440
      %v4838 = vsel %vm4802, %v4765, %v2442
      %v4839 = vsel %vm4802, %v4766, %v2444
      %v4840 = vsel %vm4802, %v4767, %v2446
      %v4841 = vsel %vm4802, %v4768, %v2448
      %v4842 = vsel %vm4802, %v4769, %v2450
      %v4843 = vsel %vm4802, %v4770, %v2452
      %v4844 = vsel %vm4802, %v4771, %v2454
      %v4845 = vsel %vm4802, %v4772, %v2456
      %v4846 = vsel %vm4802, %v4773, %v2458
      %v4847 = vsel %vm4802, %v4774, %v2460
      %v4848 = vsel %vm4802, %v4775, %v2462
      %v4849 = vsel %vm4802, %v4776, %v2464
      %v4850 = vsel %vm4802, %v4777, %v2466
      %v4851 = vsel %vm4802, %v4778, %v2468
      %v4852 = vsel %vm4802, %v4779, %v2470
      %v4853 = vsel %vm4802, %v4780, %v2472
      %v4854 = vsel %vm4802, %v4781, %v2474
      %v4855 = vsel %vm4802, %v4782, %v2476
      %v4856 = vsel %vm4802, %v4783, %v2478
      %v4857 = vsel %vm4802, %v4784, %v2480
      %v4858 = vsel %vm4802, %v4785, %v2482
      %v4859 = vsel %vm4802, %v4786, %v2484
      %v4860 = vsel %vm4802, %v4787, %v2486
      %v4861 = vsel %vm4802, %v4788, %v2488
      %v4862 = vsel %vm4802, %v4789, %v2490
      %v4863 = vsel %vm4802, %v4790, %v2492
      %v4864 = vsel %vm4802, %v4791, %v2494
      %v4865 = vsel %vm4802, %v4792, %v2496
      %v4866 = vsel %vm4802, %v4793, %v2498
      %v4867 = vsel %vm4802, %v4794, %v2500
      %v4868 = vsel %vm4802, %v4795, %v2502
      %v4869 = vsel %vm4802, %v4796, %v2504
      %v4870 = vsel %vm4802, %v4797, %v2506
      %v4871 = vsel %vm4802, %v4798, %v2508
      %v4872 = vsel %vm4802, %v4799, %v2510
      %v4873 = vsel %vm4802, %v4800, %v2512
      %v4874 = vsel %vm4802, %v4801, %v2514
      %vm4875 = vcmask 64512
      %v4876 = vsel %vm4875, %v4803, %v2595
      %v4877 = vsel %vm4875, %v4804, %v2597
      %v4878 = vsel %vm4875, %v4805, %v2599
      %v4879 = vsel %vm4875, %v4806, %v2601
      %v4880 = vsel %vm4875, %v4807, %v2603
      %v4881 = vsel %vm4875, %v4808, %v2605
      %v4882 = vsel %vm4875, %v4809, %v2607
      %v4883 = vsel %vm4875, %v4810, %v2609
      %v4884 = vsel %vm4875, %v4811, %v2611
      %v4885 = vsel %vm4875, %v4812, %v2613
      %v4886 = vsel %vm4875, %v4813, %v2615
      %v4887 = vsel %vm4875, %v4814, %v2617
      %v4888 = vsel %vm4875, %v4815, %v2619
      %v4889 = vsel %vm4875, %v4816, %v2621
      %v4890 = vsel %vm4875, %v4817, %v2623
      %v4891 = vsel %vm4875, %v4818, %v2625
      %v4892 = vsel %vm4875, %v4819, %v2627
      %v4893 = vsel %vm4875, %v4820, %v2629
      %v4894 = vsel %vm4875, %v4821, %v2631
      %v4895 = vsel %vm4875, %v4822, %v2633
      %v4896 = vsel %vm4875, %v4823, %v2635
      %v4897 = vsel %vm4875, %v4824, %v2637
      %v4898 = vsel %vm4875, %v4825, %v2639
      %v4899 = vsel %vm4875, %v4826, %v2641
      %v4900 = vsel %vm4875, %v4827, %v2643
      %v4901 = vsel %vm4875, %v4828, %v2645
      %v4902 = vsel %vm4875, %v4829, %v2647
      %v4903 = vsel %vm4875, %v4830, %v2649
      %v4904 = vsel %vm4875, %v4831, %v2651
      %v4905 = vsel %vm4875, %v4832, %v2653
      %v4906 = vsel %vm4875, %v4833, %v2655
      %v4907 = vsel %vm4875, %v4834, %v2657
      %v4908 = vsel %vm4875, %v4835, %v2659
      %v4909 = vsel %vm4875, %v4836, %v2661
      %v4910 = vsel %vm4875, %v4837, %v2663
      %v4911 = vsel %vm4875, %v4838, %v2665
      %v4912 = vsel %vm4875, %v4839, %v2667
      %v4913 = vsel %vm4875, %v4840, %v2669
      %v4914 = vsel %vm4875, %v4841, %v2671
      %v4915 = vsel %vm4875, %v4842, %v2673
      %v4916 = vsel %vm4875, %v4843, %v2675
      %v4917 = vsel %vm4875, %v4844, %v2677
      %v4918 = vsel %vm4875, %v4845, %v2679
      %v4919 = vsel %vm4875, %v4846, %v2681
      %v4920 = vsel %vm4875, %v4847, %v2683
      %v4921 = vsel %vm4875, %v4848, %v2685
      %v4922 = vsel %vm4875, %v4849, %v2687
      %v4923 = vsel %vm4875, %v4850, %v2689
      %v4924 = vsel %vm4875, %v4851, %v2691
      %v4925 = vsel %vm4875, %v4852, %v2693
      %v4926 = vsel %vm4875, %v4853, %v2695
      %v4927 = vsel %vm4875, %v4854, %v2697
      %v4928 = vsel %vm4875, %v4855, %v2699
      %v4929 = vsel %vm4875, %v4856, %v2701
      %v4930 = vsel %vm4875, %v4857, %v2703
      %v4931 = vsel %vm4875, %v4858, %v2705
      %v4932 = vsel %vm4875, %v4859, %v2707
      %v4933 = vsel %vm4875, %v4860, %v2709
      %v4934 = vsel %vm4875, %v4861, %v2711
      %v4935 = vsel %vm4875, %v4862, %v2713
      %v4936 = vsel %vm4875, %v4863, %v2715
      %v4937 = vsel %vm4875, %v4864, %v2717
      %v4938 = vsel %vm4875, %v4865, %v2719
      %v4939 = vsel %vm4875, %v4866, %v2721
      %v4940 = vsel %vm4875, %v4867, %v2723
      %v4941 = vsel %vm4875, %v4868, %v2725
      %v4942 = vsel %vm4875, %v4869, %v2727
      %v4943 = vsel %vm4875, %v4870, %v2729
      %v4944 = vsel %vm4875, %v4871, %v2731
      %v4945 = vsel %vm4875, %v4872, %v2733
      %v4946 = vsel %vm4875, %v4873, %v2735
      %v4947 = vsel %vm4875, %v4874, %v2737
      %vm4948 = vcmask 72704
      %v4949 = vsel %vm4948, %v4876, %v2818
      %v4950 = vsel %vm4948, %v4877, %v2820
      %v4951 = vsel %vm4948, %v4878, %v2822
      %v4952 = vsel %vm4948, %v4879, %v2824
      %v4953 = vsel %vm4948, %v4880, %v2826
      %v4954 = vsel %vm4948, %v4881, %v2828
      %v4955 = vsel %vm4948, %v4882, %v2830
      %v4956 = vsel %vm4948, %v4883, %v2832
      %v4957 = vsel %vm4948, %v4884, %v2834
      %v4958 = vsel %vm4948, %v4885, %v2836
      %v4959 = vsel %vm4948, %v4886, %v2838
      %v4960 = vsel %vm4948, %v4887, %v2840
      %v4961 = vsel %vm4948, %v4888, %v2842
      %v4962 = vsel %vm4948, %v4889, %v2844
      %v4963 = vsel %vm4948, %v4890, %v2846
      %v4964 = vsel %vm4948, %v4891, %v2848
      %v4965 = vsel %vm4948, %v4892, %v2850
      %v4966 = vsel %vm4948, %v4893, %v2852
      %v4967 = vsel %vm4948, %v4894, %v2854
      %v4968 = vsel %vm4948, %v4895, %v2856
      %v4969 = vsel %vm4948, %v4896, %v2858
      %v4970 = vsel %vm4948, %v4897, %v2860
      %v4971 = vsel %vm4948, %v4898, %v2862
      %v4972 = vsel %vm4948, %v4899, %v2864
      %v4973 = vsel %vm4948, %v4900, %v2866
      %v4974 = vsel %vm4948, %v4901, %v2868
      %v4975 = vsel %vm4948, %v4902, %v2870
      %v4976 = vsel %vm4948, %v4903, %v2872
      %v4977 = vsel %vm4948, %v4904, %v2874
      %v4978 = vsel %vm4948, %v4905, %v2876
      %v4979 = vsel %vm4948, %v4906, %v2878
      %v4980 = vsel %vm4948, %v4907, %v2880
      %v4981 = vsel %vm4948, %v4908, %v2882
      %v4982 = vsel %vm4948, %v4909, %v2884
      %v4983 = vsel %vm4948, %v4910, %v2886
      %v4984 = vsel %vm4948, %v4911, %v2888
      %v4985 = vsel %vm4948, %v4912, %v2890
      %v4986 = vsel %vm4948, %v4913, %v2892
      %v4987 = vsel %vm4948, %v4914, %v2894
      %v4988 = vsel %vm4948, %v4915, %v2896
      %v4989 = vsel %vm4948, %v4916, %v2898
      %v4990 = vsel %vm4948, %v4917, %v2900
      %v4991 = vsel %vm4948, %v4918, %v2902
      %v4992 = vsel %vm4948, %v4919, %v2904
      %v4993 = vsel %vm4948, %v4920, %v2906
      %v4994 = vsel %vm4948, %v4921, %v2908
      %v4995 = vsel %vm4948, %v4922, %v2910
      %v4996 = vsel %vm4948, %v4923, %v2912
      %v4997 = vsel %vm4948, %v4924, %v2914
      %v4998 = vsel %vm4948, %v4925, %v2916
      %v4999 = vsel %vm4948, %v4926, %v2918
      %v5000 = vsel %vm4948, %v4927, %v2920
      %v5001 = vsel %vm4948, %v4928, %v2922
      %v5002 = vsel %vm4948, %v4929, %v2924
      %v5003 = vsel %vm4948, %v4930, %v2926
      %v5004 = vsel %vm4948, %v4931, %v2928
      %v5005 = vsel %vm4948, %v4932, %v2930
      %v5006 = vsel %vm4948, %v4933, %v2932
      %v5007 = vsel %vm4948, %v4934, %v2934
      %v5008 = vsel %vm4948, %v4935, %v2936
      %v5009 = vsel %vm4948, %v4936, %v2938
      %v5010 = vsel %vm4948, %v4937, %v2940
      %v5011 = vsel %vm4948, %v4938, %v2942
      %v5012 = vsel %vm4948, %v4939, %v2944
      %v5013 = vsel %vm4948, %v4940, %v2946
      %v5014 = vsel %vm4948, %v4941, %v2948
      %v5015 = vsel %vm4948, %v4942, %v2950
      %v5016 = vsel %vm4948, %v4943, %v2952
      %v5017 = vsel %vm4948, %v4944, %v2954
      %v5018 = vsel %vm4948, %v4945, %v2956
      %v5019 = vsel %vm4948, %v4946, %v2958
      %v5020 = vsel %vm4948, %v4947, %v2960
      %vm5021 = vcmask 80896
      %v5022 = vsel %vm5021, %v4949, %v3037
      %v5023 = vsel %vm5021, %v4950, %v3039
      %v5024 = vsel %vm5021, %v4951, %v3041
      %v5025 = vsel %vm5021, %v4952, %v3043
      %v5026 = vsel %vm5021, %v4953, %v3045
      %v5027 = vsel %vm5021, %v4954, %v3047
      %v5028 = vsel %vm5021, %v4955, %v3049
      %v5029 = vsel %vm5021, %v4956, %v3051
      %v5030 = vsel %vm5021, %v4957, %v3053
      %v5031 = vsel %vm5021, %v4958, %v3055
      %v5032 = vsel %vm5021, %v4959, %v3057
      %v5033 = vsel %vm5021, %v4960, %v3059
      %v5034 = vsel %vm5021, %v4961, %v3061
      %v5035 = vsel %vm5021, %v4962, %v3063
      %v5036 = vsel %vm5021, %v4963, %v3065
      %v5037 = vsel %vm5021, %v4964, %v3067
      %v5038 = vsel %vm5021, %v4965, %v3069
      %v5039 = vsel %vm5021, %v4966, %v3071
      %v5040 = vsel %vm5021, %v4967, %v3073
      %v5041 = vsel %vm5021, %v4968, %v3075
      %v5042 = vsel %vm5021, %v4969, %v3077
      %v5043 = vsel %vm5021, %v4970, %v3079
      %v5044 = vsel %vm5021, %v4971, %v3081
      %v5045 = vsel %vm5021, %v4972, %v3083
      %v5046 = vsel %vm5021, %v4973, %v3085
      %v5047 = vsel %vm5021, %v4974, %v3087
      %v5048 = vsel %vm5021, %v4975, %v3089
      %v5049 = vsel %vm5021, %v4976, %v3091
      %v5050 = vsel %vm5021, %v4977, %v3093
      %v5051 = vsel %vm5021, %v4978, %v3095
      %v5052 = vsel %vm5021, %v4979, %v3097
      %v5053 = vsel %vm5021, %v4980, %v3099
      %v5054 = vsel %vm5021, %v4981, %v3101
      %v5055 = vsel %vm5021, %v4982, %v3103
      %v5056 = vsel %vm5021, %v4983, %v3105
      %v5057 = vsel %vm5021, %v4984, %v3107
      %v5058 = vsel %vm5021, %v4985, %v3109
      %v5059 = vsel %vm5021, %v4986, %v3111
      %v5060 = vsel %vm5021, %v4987, %v3113
      %v5061 = vsel %vm5021, %v4988, %v3115
      %v5062 = vsel %vm5021, %v4989, %v3117
      %v5063 = vsel %vm5021, %v4990, %v3119
      %v5064 = vsel %vm5021, %v4991, %v3121
      %v5065 = vsel %vm5021, %v4992, %v3123
      %v5066 = vsel %vm5021, %v4993, %v3125
      %v5067 = vsel %vm5021, %v4994, %v3127
      %v5068 = vsel %vm5021, %v4995, %v3129
      %v5069 = vsel %vm5021, %v4996, %v3131
      %v5070 = vsel %vm5021, %v4997, %v3133
      %v5071 = vsel %vm5021, %v4998, %v3135
      %v5072 = vsel %vm5021, %v4999, %v3137
      %v5073 = vsel %vm5021, %v5000, %v3139
      %v5074 = vsel %vm5021, %v5001, %v3141
      %v5075 = vsel %vm5021, %v5002, %v3143
      %v5076 = vsel %vm5021, %v5003, %v3145
      %v5077 = vsel %vm5021, %v5004, %v3147
      %v5078 = vsel %vm5021, %v5005, %v3149
      %v5079 = vsel %vm5021, %v5006, %v3151
      %v5080 = vsel %vm5021, %v5007, %v3153
      %v5081 = vsel %vm5021, %v5008, %v3155
      %v5082 = vsel %vm5021, %v5009, %v3157
      %v5083 = vsel %vm5021, %v5010, %v3159
      %v5084 = vsel %vm5021, %v5011, %v3161
      %v5085 = vsel %vm5021, %v5012, %v3163
      %v5086 = vsel %vm5021, %v5013, %v3165
      %v5087 = vsel %vm5021, %v5014, %v3167
      %v5088 = vsel %vm5021, %v5015, %v3169
      %v5089 = vsel %vm5021, %v5016, %v3171
      %v5090 = vsel %vm5021, %v5017, %v3173
      %v5091 = vsel %vm5021, %v5018, %v3175
      %v5092 = vsel %vm5021, %v5019, %v3177
      %v5093 = vsel %vm5021, %v5020, %v3179
      %vm5094 = vcmask 89088
      %v5095 = vsel %vm5094, %v5022, %v3261
      %v5096 = vsel %vm5094, %v5023, %v3263
      %v5097 = vsel %vm5094, %v5024, %v3265
      %v5098 = vsel %vm5094, %v5025, %v3267
      %v5099 = vsel %vm5094, %v5026, %v3269
      %v5100 = vsel %vm5094, %v5027, %v3271
      %v5101 = vsel %vm5094, %v5028, %v3273
      %v5102 = vsel %vm5094, %v5029, %v3275
      %v5103 = vsel %vm5094, %v5030, %v3277
      %v5104 = vsel %vm5094, %v5031, %v3279
      %v5105 = vsel %vm5094, %v5032, %v3281
      %v5106 = vsel %vm5094, %v5033, %v3283
      %v5107 = vsel %vm5094, %v5034, %v3285
      %v5108 = vsel %vm5094, %v5035, %v3287
      %v5109 = vsel %vm5094, %v5036, %v3289
      %v5110 = vsel %vm5094, %v5037, %v3291
      %v5111 = vsel %vm5094, %v5038, %v3293
      %v5112 = vsel %vm5094, %v5039, %v3295
      %v5113 = vsel %vm5094, %v5040, %v3297
      %v5114 = vsel %vm5094, %v5041, %v3299
      %v5115 = vsel %vm5094, %v5042, %v3301
      %v5116 = vsel %vm5094, %v5043, %v3303
      %v5117 = vsel %vm5094, %v5044, %v3305
      %v5118 = vsel %vm5094, %v5045, %v3307
      %v5119 = vsel %vm5094, %v5046, %v3309
      %v5120 = vsel %vm5094, %v5047, %v3311
      %v5121 = vsel %vm5094, %v5048, %v3313
      %v5122 = vsel %vm5094, %v5049, %v3315
      %v5123 = vsel %vm5094, %v5050, %v3317
      %v5124 = vsel %vm5094, %v5051, %v3319
      %v5125 = vsel %vm5094, %v5052, %v3321
      %v5126 = vsel %vm5094, %v5053, %v3323
      %v5127 = vsel %vm5094, %v5054, %v3325
      %v5128 = vsel %vm5094, %v5055, %v3327
      %v5129 = vsel %vm5094, %v5056, %v3329
      %v5130 = vsel %vm5094, %v5057, %v3331
      %v5131 = vsel %vm5094, %v5058, %v3333
      %v5132 = vsel %vm5094, %v5059, %v3335
      %v5133 = vsel %vm5094, %v5060, %v3337
      %v5134 = vsel %vm5094, %v5061, %v3339
      %v5135 = vsel %vm5094, %v5062, %v3341
      %v5136 = vsel %vm5094, %v5063, %v3343
      %v5137 = vsel %vm5094, %v5064, %v3345
      %v5138 = vsel %vm5094, %v5065, %v3347
      %v5139 = vsel %vm5094, %v5066, %v3349
      %v5140 = vsel %vm5094, %v5067, %v3351
      %v5141 = vsel %vm5094, %v5068, %v3353
      %v5142 = vsel %vm5094, %v5069, %v3355
      %v5143 = vsel %vm5094, %v5070, %v3357
      %v5144 = vsel %vm5094, %v5071, %v3359
      %v5145 = vsel %vm5094, %v5072, %v3361
      %v5146 = vsel %vm5094, %v5073, %v3363
      %v5147 = vsel %vm5094, %v5074, %v3365
      %v5148 = vsel %vm5094, %v5075, %v3367
      %v5149 = vsel %vm5094, %v5076, %v3369
      %v5150 = vsel %vm5094, %v5077, %v3371
      %v5151 = vsel %vm5094, %v5078, %v3373
      %v5152 = vsel %vm5094, %v5079, %v3375
      %v5153 = vsel %vm5094, %v5080, %v3377
      %v5154 = vsel %vm5094, %v5081, %v3379
      %v5155 = vsel %vm5094, %v5082, %v3381
      %v5156 = vsel %vm5094, %v5083, %v3383
      %v5157 = vsel %vm5094, %v5084, %v3385
      %v5158 = vsel %vm5094, %v5085, %v3387
      %v5159 = vsel %vm5094, %v5086, %v3389
      %v5160 = vsel %vm5094, %v5087, %v3391
      %v5161 = vsel %vm5094, %v5088, %v3393
      %v5162 = vsel %vm5094, %v5089, %v3395
      %v5163 = vsel %vm5094, %v5090, %v3397
      %v5164 = vsel %vm5094, %v5091, %v3399
      %v5165 = vsel %vm5094, %v5092, %v3401
      %v5166 = vsel %vm5094, %v5093, %v3403
      %vm5167 = vcmask 97280
      %v5168 = vsel %vm5167, %v5095, %v3484
      %v5169 = vsel %vm5167, %v5096, %v3486
      %v5170 = vsel %vm5167, %v5097, %v3488
      %v5171 = vsel %vm5167, %v5098, %v3490
      %v5172 = vsel %vm5167, %v5099, %v3492
      %v5173 = vsel %vm5167, %v5100, %v3494
      %v5174 = vsel %vm5167, %v5101, %v3496
      %v5175 = vsel %vm5167, %v5102, %v3498
      %v5176 = vsel %vm5167, %v5103, %v3500
      %v5177 = vsel %vm5167, %v5104, %v3502
      %v5178 = vsel %vm5167, %v5105, %v3504
      %v5179 = vsel %vm5167, %v5106, %v3506
      %v5180 = vsel %vm5167, %v5107, %v3508
      %v5181 = vsel %vm5167, %v5108, %v3510
      %v5182 = vsel %vm5167, %v5109, %v3512
      %v5183 = vsel %vm5167, %v5110, %v3514
      %v5184 = vsel %vm5167, %v5111, %v3516
      %v5185 = vsel %vm5167, %v5112, %v3518
      %v5186 = vsel %vm5167, %v5113, %v3520
      %v5187 = vsel %vm5167, %v5114, %v3522
      %v5188 = vsel %vm5167, %v5115, %v3524
      %v5189 = vsel %vm5167, %v5116, %v3526
      %v5190 = vsel %vm5167, %v5117, %v3528
      %v5191 = vsel %vm5167, %v5118, %v3530
      %v5192 = vsel %vm5167, %v5119, %v3532
      %v5193 = vsel %vm5167, %v5120, %v3534
      %v5194 = vsel %vm5167, %v5121, %v3536
      %v5195 = vsel %vm5167, %v5122, %v3538
      %v5196 = vsel %vm5167, %v5123, %v3540
      %v5197 = vsel %vm5167, %v5124, %v3542
      %v5198 = vsel %vm5167, %v5125, %v3544
      %v5199 = vsel %vm5167, %v5126, %v3546
      %v5200 = vsel %vm5167, %v5127, %v3548
      %v5201 = vsel %vm5167, %v5128, %v3550
      %v5202 = vsel %vm5167, %v5129, %v3552
      %v5203 = vsel %vm5167, %v5130, %v3554
      %v5204 = vsel %vm5167, %v5131, %v3556
      %v5205 = vsel %vm5167, %v5132, %v3558
      %v5206 = vsel %vm5167, %v5133, %v3560
      %v5207 = vsel %vm5167, %v5134, %v3562
      %v5208 = vsel %vm5167, %v5135, %v3564
      %v5209 = vsel %vm5167, %v5136, %v3566
      %v5210 = vsel %vm5167, %v5137, %v3568
      %v5211 = vsel %vm5167, %v5138, %v3570
      %v5212 = vsel %vm5167, %v5139, %v3572
      %v5213 = vsel %vm5167, %v5140, %v3574
      %v5214 = vsel %vm5167, %v5141, %v3576
      %v5215 = vsel %vm5167, %v5142, %v3578
      %v5216 = vsel %vm5167, %v5143, %v3580
      %v5217 = vsel %vm5167, %v5144, %v3582
      %v5218 = vsel %vm5167, %v5145, %v3584
      %v5219 = vsel %vm5167, %v5146, %v3586
      %v5220 = vsel %vm5167, %v5147, %v3588
      %v5221 = vsel %vm5167, %v5148, %v3590
      %v5222 = vsel %vm5167, %v5149, %v3592
      %v5223 = vsel %vm5167, %v5150, %v3594
      %v5224 = vsel %vm5167, %v5151, %v3596
      %v5225 = vsel %vm5167, %v5152, %v3598
      %v5226 = vsel %vm5167, %v5153, %v3600
      %v5227 = vsel %vm5167, %v5154, %v3602
      %v5228 = vsel %vm5167, %v5155, %v3604
      %v5229 = vsel %vm5167, %v5156, %v3606
      %v5230 = vsel %vm5167, %v5157, %v3608
      %v5231 = vsel %vm5167, %v5158, %v3610
      %v5232 = vsel %vm5167, %v5159, %v3612
      %v5233 = vsel %vm5167, %v5160, %v3614
      %v5234 = vsel %vm5167, %v5161, %v3616
      %v5235 = vsel %vm5167, %v5162, %v3618
      %v5236 = vsel %vm5167, %v5163, %v3620
      %v5237 = vsel %vm5167, %v5164, %v3622
      %v5238 = vsel %vm5167, %v5165, %v3624
      %v5239 = vsel %vm5167, %v5166, %v3626
      %vm5240 = vcmask 105472
      %v5241 = vsel %vm5240, %v5168, %v3707
      %v5242 = vsel %vm5240, %v5169, %v3709
      %v5243 = vsel %vm5240, %v5170, %v3711
      %v5244 = vsel %vm5240, %v5171, %v3713
      %v5245 = vsel %vm5240, %v5172, %v3715
      %v5246 = vsel %vm5240, %v5173, %v3717
      %v5247 = vsel %vm5240, %v5174, %v3719
      %v5248 = vsel %vm5240, %v5175, %v3721
      %v5249 = vsel %vm5240, %v5176, %v3723
      %v5250 = vsel %vm5240, %v5177, %v3725
      %v5251 = vsel %vm5240, %v5178, %v3727
      %v5252 = vsel %vm5240, %v5179, %v3729
      %v5253 = vsel %vm5240, %v5180, %v3731
      %v5254 = vsel %vm5240, %v5181, %v3733
      %v5255 = vsel %vm5240, %v5182, %v3735
      %v5256 = vsel %vm5240, %v5183, %v3737
      %v5257 = vsel %vm5240, %v5184, %v3739
      %v5258 = vsel %vm5240, %v5185, %v3741
      %v5259 = vsel %vm5240, %v5186, %v3743
      %v5260 = vsel %vm5240, %v5187, %v3745
      %v5261 = vsel %vm5240, %v5188, %v3747
      %v5262 = vsel %vm5240, %v5189, %v3749
      %v5263 = vsel %vm5240, %v5190, %v3751
      %v5264 = vsel %vm5240, %v5191, %v3753
      %v5265 = vsel %vm5240, %v5192, %v3755
      %v5266 = vsel %vm5240, %v5193, %v3757
      %v5267 = vsel %vm5240, %v5194, %v3759
      %v5268 = vsel %vm5240, %v5195, %v3761
      %v5269 = vsel %vm5240, %v5196, %v3763
      %v5270 = vsel %vm5240, %v5197, %v3765
      %v5271 = vsel %vm5240, %v5198, %v3767
      %v5272 = vsel %vm5240, %v5199, %v3769
      %v5273 = vsel %vm5240, %v5200, %v3771
      %v5274 = vsel %vm5240, %v5201, %v3773
      %v5275 = vsel %vm5240, %v5202, %v3775
      %v5276 = vsel %vm5240, %v5203, %v3777
      %v5277 = vsel %vm5240, %v5204, %v3779
      %v5278 = vsel %vm5240, %v5205, %v3781
      %v5279 = vsel %vm5240, %v5206, %v3783
      %v5280 = vsel %vm5240, %v5207, %v3785
      %v5281 = vsel %vm5240, %v5208, %v3787
      %v5282 = vsel %vm5240, %v5209, %v3789
      %v5283 = vsel %vm5240, %v5210, %v3791
      %v5284 = vsel %vm5240, %v5211, %v3793
      %v5285 = vsel %vm5240, %v5212, %v3795
      %v5286 = vsel %vm5240, %v5213, %v3797
      %v5287 = vsel %vm5240, %v5214, %v3799
      %v5288 = vsel %vm5240, %v5215, %v3801
      %v5289 = vsel %vm5240, %v5216, %v3803
      %v5290 = vsel %vm5240, %v5217, %v3805
      %v5291 = vsel %vm5240, %v5218, %v3807
      %v5292 = vsel %vm5240, %v5219, %v3809
      %v5293 = vsel %vm5240, %v5220, %v3811
      %v5294 = vsel %vm5240, %v5221, %v3813
      %v5295 = vsel %vm5240, %v5222, %v3815
      %v5296 = vsel %vm5240, %v5223, %v3817
      %v5297 = vsel %vm5240, %v5224, %v3819
      %v5298 = vsel %vm5240, %v5225, %v3821
      %v5299 = vsel %vm5240, %v5226, %v3823
      %v5300 = vsel %vm5240, %v5227, %v3825
      %v5301 = vsel %vm5240, %v5228, %v3827
      %v5302 = vsel %vm5240, %v5229, %v3829
      %v5303 = vsel %vm5240, %v5230, %v3831
      %v5304 = vsel %vm5240, %v5231, %v3833
      %v5305 = vsel %vm5240, %v5232, %v3835
      %v5306 = vsel %vm5240, %v5233, %v3837
      %v5307 = vsel %vm5240, %v5234, %v3839
      %v5308 = vsel %vm5240, %v5235, %v3841
      %v5309 = vsel %vm5240, %v5236, %v3843
      %v5310 = vsel %vm5240, %v5237, %v3845
      %v5311 = vsel %vm5240, %v5238, %v3847
      %v5312 = vsel %vm5240, %v5239, %v3849
      %vm5313 = vcmask 113664
      %v5314 = vsel %vm5313, %v5241, %v3930
      %v5315 = vsel %vm5313, %v5242, %v3932
      %v5316 = vsel %vm5313, %v5243, %v3934
      %v5317 = vsel %vm5313, %v5244, %v3936
      %v5318 = vsel %vm5313, %v5245, %v3938
      %v5319 = vsel %vm5313, %v5246, %v3940
      %v5320 = vsel %vm5313, %v5247, %v3942
      %v5321 = vsel %vm5313, %v5248, %v3944
      %v5322 = vsel %vm5313, %v5249, %v3946
      %v5323 = vsel %vm5313, %v5250, %v3948
      %v5324 = vsel %vm5313, %v5251, %v3950
      %v5325 = vsel %vm5313, %v5252, %v3952
      %v5326 = vsel %vm5313, %v5253, %v3954
      %v5327 = vsel %vm5313, %v5254, %v3956
      %v5328 = vsel %vm5313, %v5255, %v3958
      %v5329 = vsel %vm5313, %v5256, %v3960
      %v5330 = vsel %vm5313, %v5257, %v3962
      %v5331 = vsel %vm5313, %v5258, %v3964
      %v5332 = vsel %vm5313, %v5259, %v3966
      %v5333 = vsel %vm5313, %v5260, %v3968
      %v5334 = vsel %vm5313, %v5261, %v3970
      %v5335 = vsel %vm5313, %v5262, %v3972
      %v5336 = vsel %vm5313, %v5263, %v3974
      %v5337 = vsel %vm5313, %v5264, %v3976
      %v5338 = vsel %vm5313, %v5265, %v3978
      %v5339 = vsel %vm5313, %v5266, %v3980
      %v5340 = vsel %vm5313, %v5267, %v3982
      %v5341 = vsel %vm5313, %v5268, %v3984
      %v5342 = vsel %vm5313, %v5269, %v3986
      %v5343 = vsel %vm5313, %v5270, %v3988
      %v5344 = vsel %vm5313, %v5271, %v3990
      %v5345 = vsel %vm5313, %v5272, %v3992
      %v5346 = vsel %vm5313, %v5273, %v3994
      %v5347 = vsel %vm5313, %v5274, %v3996
      %v5348 = vsel %vm5313, %v5275, %v3998
      %v5349 = vsel %vm5313, %v5276, %v4000
      %v5350 = vsel %vm5313, %v5277, %v4002
      %v5351 = vsel %vm5313, %v5278, %v4004
      %v5352 = vsel %vm5313, %v5279, %v4006
      %v5353 = vsel %vm5313, %v5280, %v4008
      %v5354 = vsel %vm5313, %v5281, %v4010
      %v5355 = vsel %vm5313, %v5282, %v4012
      %v5356 = vsel %vm5313, %v5283, %v4014
      %v5357 = vsel %vm5313, %v5284, %v4016
      %v5358 = vsel %vm5313, %v5285, %v4018
      %v5359 = vsel %vm5313, %v5286, %v4020
      %v5360 = vsel %vm5313, %v5287, %v4022
      %v5361 = vsel %vm5313, %v5288, %v4024
      %v5362 = vsel %vm5313, %v5289, %v4026
      %v5363 = vsel %vm5313, %v5290, %v4028
      %v5364 = vsel %vm5313, %v5291, %v4030
      %v5365 = vsel %vm5313, %v5292, %v4032
      %v5366 = vsel %vm5313, %v5293, %v4034
      %v5367 = vsel %vm5313, %v5294, %v4036
      %v5368 = vsel %vm5313, %v5295, %v4038
      %v5369 = vsel %vm5313, %v5296, %v4040
      %v5370 = vsel %vm5313, %v5297, %v4042
      %v5371 = vsel %vm5313, %v5298, %v4044
      %v5372 = vsel %vm5313, %v5299, %v4046
      %v5373 = vsel %vm5313, %v5300, %v4048
      %v5374 = vsel %vm5313, %v5301, %v4050
      %v5375 = vsel %vm5313, %v5302, %v4052
      %v5376 = vsel %vm5313, %v5303, %v4054
      %v5377 = vsel %vm5313, %v5304, %v4056
      %v5378 = vsel %vm5313, %v5305, %v4058
      %v5379 = vsel %vm5313, %v5306, %v4060
      %v5380 = vsel %vm5313, %v5307, %v4062
      %v5381 = vsel %vm5313, %v5308, %v4064
      %v5382 = vsel %vm5313, %v5309, %v4066
      %v5383 = vsel %vm5313, %v5310, %v4068
      %v5384 = vsel %vm5313, %v5311, %v4070
      %v5385 = vsel %vm5313, %v5312, %v4072
      %vm5386 = vcmask 121856
      %v5387 = vsel %vm5386, %v5314, %v4149
      %v5388 = vsel %vm5386, %v5315, %v4151
      %v5389 = vsel %vm5386, %v5316, %v4153
      %v5390 = vsel %vm5386, %v5317, %v4155
      %v5391 = vsel %vm5386, %v5318, %v4157
      %v5392 = vsel %vm5386, %v5319, %v4159
      %v5393 = vsel %vm5386, %v5320, %v4161
      %v5394 = vsel %vm5386, %v5321, %v4163
      %v5395 = vsel %vm5386, %v5322, %v4165
      %v5396 = vsel %vm5386, %v5323, %v4167
      %v5397 = vsel %vm5386, %v5324, %v4169
      %v5398 = vsel %vm5386, %v5325, %v4171
      %v5399 = vsel %vm5386, %v5326, %v4173
      %v5400 = vsel %vm5386, %v5327, %v4175
      %v5401 = vsel %vm5386, %v5328, %v4177
      %v5402 = vsel %vm5386, %v5329, %v4179
      %v5403 = vsel %vm5386, %v5330, %v4181
      %v5404 = vsel %vm5386, %v5331, %v4183
      %v5405 = vsel %vm5386, %v5332, %v4185
      %v5406 = vsel %vm5386, %v5333, %v4187
      %v5407 = vsel %vm5386, %v5334, %v4189
      %v5408 = vsel %vm5386, %v5335, %v4191
      %v5409 = vsel %vm5386, %v5336, %v4193
      %v5410 = vsel %vm5386, %v5337, %v4195
      %v5411 = vsel %vm5386, %v5338, %v4197
      %v5412 = vsel %vm5386, %v5339, %v4199
      %v5413 = vsel %vm5386, %v5340, %v4201
      %v5414 = vsel %vm5386, %v5341, %v4203
      %v5415 = vsel %vm5386, %v5342, %v4205
      %v5416 = vsel %vm5386, %v5343, %v4207
      %v5417 = vsel %vm5386, %v5344, %v4209
      %v5418 = vsel %vm5386, %v5345, %v4211
      %v5419 = vsel %vm5386, %v5346, %v4213
      %v5420 = vsel %vm5386, %v5347, %v4215
      %v5421 = vsel %vm5386, %v5348, %v4217
      %v5422 = vsel %vm5386, %v5349, %v4219
      %v5423 = vsel %vm5386, %v5350, %v4221
      %v5424 = vsel %vm5386, %v5351, %v4223
      %v5425 = vsel %vm5386, %v5352, %v4225
      %v5426 = vsel %vm5386, %v5353, %v4227
      %v5427 = vsel %vm5386, %v5354, %v4229
      %v5428 = vsel %vm5386, %v5355, %v4231
      %v5429 = vsel %vm5386, %v5356, %v4233
      %v5430 = vsel %vm5386, %v5357, %v4235
      %v5431 = vsel %vm5386, %v5358, %v4237
      %v5432 = vsel %vm5386, %v5359, %v4239
      %v5433 = vsel %vm5386, %v5360, %v4241
      %v5434 = vsel %vm5386, %v5361, %v4243
      %v5435 = vsel %vm5386, %v5362, %v4245
      %v5436 = vsel %vm5386, %v5363, %v4247
      %v5437 = vsel %vm5386, %v5364, %v4249
      %v5438 = vsel %vm5386, %v5365, %v4251
      %v5439 = vsel %vm5386, %v5366, %v4253
      %v5440 = vsel %vm5386, %v5367, %v4255
      %v5441 = vsel %vm5386, %v5368, %v4257
      %v5442 = vsel %vm5386, %v5369, %v4259
      %v5443 = vsel %vm5386, %v5370, %v4261
      %v5444 = vsel %vm5386, %v5371, %v4263
      %v5445 = vsel %vm5386, %v5372, %v4265
      %v5446 = vsel %vm5386, %v5373, %v4267
      %v5447 = vsel %vm5386, %v5374, %v4269
      %v5448 = vsel %vm5386, %v5375, %v4271
      %v5449 = vsel %vm5386, %v5376, %v4273
      %v5450 = vsel %vm5386, %v5377, %v4275
      %v5451 = vsel %vm5386, %v5378, %v4277
      %v5452 = vsel %vm5386, %v5379, %v4279
      %v5453 = vsel %vm5386, %v5380, %v4281
      %v5454 = vsel %vm5386, %v5381, %v4283
      %v5455 = vsel %vm5386, %v5382, %v4285
      %v5456 = vsel %vm5386, %v5383, %v4287
      %v5457 = vsel %vm5386, %v5384, %v4289
      %v5458 = vsel %vm5386, %v5385, %v4291
      %v5460 = vrot.slane %v277, 1
      %v5461 = vrot.slane %v278, 1
      %v5462 = vsel %vm381, %v5460, %v5461
      %v5463 = vrot.slane %v279, 1
      %v5464 = vsel %vm381, %v5461, %v5463
      %v5465 = vrot.slane %v280, 1
      %v5466 = vsel %vm381, %v5463, %v5465
      %5467 = vrot.lane.b32.xlu0 %v408, 1
      %v5468 = vpop.permute.xlu0 %5467
      %5469 = vrot.lane.b32.xlu0 %v415, 1
      %v5470 = vpop.permute.xlu0 %5469
      %5471 = vrot.lane.b32.xlu0 %v422, 1
      %v5472 = vpop.permute.xlu0 %5471
      %5473 = vrot.lane.b32.xlu0 %v429, 1
      %v5474 = vpop.permute.xlu0 %5473
      %5475 = vrot.lane.b32.xlu0 %v436, 1
      %v5476 = vpop.permute.xlu0 %5475
      %5477 = vrot.lane.b32.xlu0 %v443, 1
      %v5478 = vpop.permute.xlu0 %5477
      %5479 = vrot.lane.b32.xlu0 %v450, 1
      %v5480 = vpop.permute.xlu0 %5479
      %5481 = vrot.lane.b32.xlu0 %v457, 1
      %v5482 = vpop.permute.xlu0 %5481
      %5483 = vrot.lane.b32.xlu0 %v464, 1
      %v5484 = vpop.permute.xlu0 %5483
      %5485 = vrot.lane.b32.xlu0 %v471, 1
      %v5486 = vpop.permute.xlu0 %5485
      %5487 = vrot.lane.b32.xlu0 %v478, 1
      %v5488 = vpop.permute.xlu0 %5487
      %5489 = vrot.lane.b32.xlu0 %v485, 1
      %v5490 = vpop.permute.xlu0 %5489
      %5491 = vrot.lane.b32.xlu0 %v492, 1
      %v5492 = vpop.permute.xlu0 %5491
      %5493 = vrot.lane.b32.xlu0 %v499, 1
      %v5494 = vpop.permute.xlu0 %5493
      %5495 = vrot.lane.b32.xlu0 %v506, 1
      %v5496 = vpop.permute.xlu0 %5495
      %5497 = vrot.lane.b32.xlu0 %v513, 1
      %v5498 = vpop.permute.xlu0 %5497
      %5499 = vrot.lane.b32.xlu0 %v520, 1
      %v5500 = vpop.permute.xlu0 %5499
      %5501 = vrot.lane.b32.xlu0 %v527, 1
      %v5502 = vpop.permute.xlu0 %5501
      %5503 = vrot.lane.b32.xlu0 %v534, 1
      %v5504 = vpop.permute.xlu0 %5503
      %5505 = vrot.lane.b32.xlu0 %v541, 1
      %v5506 = vpop.permute.xlu0 %5505
      %5507 = vrot.lane.b32.xlu0 %v548, 1
      %v5508 = vpop.permute.xlu0 %5507
      %5509 = vrot.lane.b32.xlu0 %v2143, 1
      %v5510 = vpop.permute.xlu0 %5509
      %5511 = vrot.lane.b32.xlu0 %v2145, 1
      %v5512 = vpop.permute.xlu0 %5511
      %5513 = vrot.lane.b32.xlu0 %v2147, 1
      %v5514 = vpop.permute.xlu0 %5513
      %5515 = vrot.lane.b32.xlu0 %v2146, 1
      %v5516 = vpop.permute.xlu0 %5515
      %5517 = vrot.lane.b32.xlu0 %v3255, 1
      %v5518 = vpop.permute.xlu0 %5517
      %5519 = vrot.lane.b32.xlu0 %v3257, 1
      %v5520 = vpop.permute.xlu0 %5519
      %5521 = vrot.lane.b32.xlu0 %v3259, 1
      %v5522 = vpop.permute.xlu0 %5521
      %5523 = vrot.lane.b32.xlu0 %v3258, 1
      %v5524 = vpop.permute.xlu0 %5523
      %5525 = vrot.lane.b32.xlu0 %v5462, 1
      %v5526 = vpop.permute.xlu0 %5525
      %5527 = vrot.lane.b32.xlu0 %v5464, 1
      %v5528 = vpop.permute.xlu0 %5527
      %5529 = vrot.lane.b32.xlu0 %v5466, 1
      %v5530 = vpop.permute.xlu0 %5529
      %5531 = vrot.lane.b32.xlu0 %v5465, 1
      %v5532 = vpop.permute.xlu0 %5531
      %v5566 = vrot.slane %v277, 2
      %v5567 = vrot.slane %v278, 2
      %v5568 = vsel %vm766, %v5566, %v5567
      %v5569 = vrot.slane %v279, 2
      %v5570 = vsel %vm766, %v5567, %v5569
      %v5571 = vrot.slane %v280, 2
      %v5572 = vsel %vm766, %v5569, %v5571
      %5573 = vrot.lane.b32.xlu0 %v793, 2
      %v5574 = vpop.permute.xlu0 %5573
      %5575 = vrot.lane.b32.xlu0 %v800, 2
      %v5576 = vpop.permute.xlu0 %5575
      %5577 = vrot.lane.b32.xlu0 %v807, 2
      %v5578 = vpop.permute.xlu0 %5577
      %5579 = vrot.lane.b32.xlu0 %v814, 2
      %v5580 = vpop.permute.xlu0 %5579
      %5581 = vrot.lane.b32.xlu0 %v821, 2
      %v5582 = vpop.permute.xlu0 %5581
      %5583 = vrot.lane.b32.xlu0 %v828, 2
      %v5584 = vpop.permute.xlu0 %5583
      %5585 = vrot.lane.b32.xlu0 %v835, 2
      %v5586 = vpop.permute.xlu0 %5585
      %5587 = vrot.lane.b32.xlu0 %v842, 2
      %v5588 = vpop.permute.xlu0 %5587
      %5589 = vrot.lane.b32.xlu0 %v849, 2
      %v5590 = vpop.permute.xlu0 %5589
      %5591 = vrot.lane.b32.xlu0 %v856, 2
      %v5592 = vpop.permute.xlu0 %5591
      %5593 = vrot.lane.b32.xlu0 %v863, 2
      %v5594 = vpop.permute.xlu0 %5593
      %5595 = vrot.lane.b32.xlu0 %v870, 2
      %v5596 = vpop.permute.xlu0 %5595
      %5597 = vrot.lane.b32.xlu0 %v877, 2
      %v5598 = vpop.permute.xlu0 %5597
      %5599 = vrot.lane.b32.xlu0 %v884, 2
      %v5600 = vpop.permute.xlu0 %5599
      %5601 = vrot.lane.b32.xlu0 %v891, 2
      %v5602 = vpop.permute.xlu0 %5601
      %5603 = vrot.lane.b32.xlu0 %v898, 2
      %v5604 = vpop.permute.xlu0 %5603
      %5605 = vrot.lane.b32.xlu0 %v905, 2
      %v5606 = vpop.permute.xlu0 %5605
      %5607 = vrot.lane.b32.xlu0 %v912, 2
      %v5608 = vpop.permute.xlu0 %5607
      %5609 = vrot.lane.b32.xlu0 %v919, 2
      %v5610 = vpop.permute.xlu0 %5609
      %5611 = vrot.lane.b32.xlu0 %v926, 2
      %v5612 = vpop.permute.xlu0 %5611
      %5613 = vrot.lane.b32.xlu0 %v933, 2
      %v5614 = vpop.permute.xlu0 %5613
      %5615 = vrot.lane.b32.xlu0 %v2366, 2
      %v5616 = vpop.permute.xlu0 %5615
      %5617 = vrot.lane.b32.xlu0 %v2368, 2
      %v5618 = vpop.permute.xlu0 %5617
      %5619 = vrot.lane.b32.xlu0 %v2370, 2
      %v5620 = vpop.permute.xlu0 %5619
      %5621 = vrot.lane.b32.xlu0 %v2369, 2
      %v5622 = vpop.permute.xlu0 %5621
      %5623 = vrot.lane.b32.xlu0 %v3478, 2
      %v5624 = vpop.permute.xlu0 %5623
      %5625 = vrot.lane.b32.xlu0 %v3480, 2
      %v5626 = vpop.permute.xlu0 %5625
      %5627 = vrot.lane.b32.xlu0 %v3482, 2
      %v5628 = vpop.permute.xlu0 %5627
      %5629 = vrot.lane.b32.xlu0 %v3481, 2
      %v5630 = vpop.permute.xlu0 %5629
      %5631 = vrot.lane.b32.xlu0 %v5568, 2
      %v5632 = vpop.permute.xlu0 %5631
      %5633 = vrot.lane.b32.xlu0 %v5570, 2
      %v5634 = vpop.permute.xlu0 %5633
      %5635 = vrot.lane.b32.xlu0 %v5572, 2
      %v5636 = vpop.permute.xlu0 %5635
      %5637 = vrot.lane.b32.xlu0 %v5571, 2
      %v5638 = vpop.permute.xlu0 %5637
      %v5672 = vrot.slane %v277, 3
      %v5673 = vrot.slane %v278, 3
      %v5674 = vsel %vm1151, %v5672, %v5673
      %v5675 = vrot.slane %v279, 3
      %v5676 = vsel %vm1151, %v5673, %v5675
      %v5677 = vrot.slane %v280, 3
      %v5678 = vsel %vm1151, %v5675, %v5677
      %5679 = vrot.lane.b32.xlu0 %v1178, 3
      %v5680 = vpop.permute.xlu0 %5679
      %5681 = vrot.lane.b32.xlu0 %v1185, 3
      %v5682 = vpop.permute.xlu0 %5681
      %5683 = vrot.lane.b32.xlu0 %v1192, 3
      %v5684 = vpop.permute.xlu0 %5683
      %5685 = vrot.lane.b32.xlu0 %v1199, 3
      %v5686 = vpop.permute.xlu0 %5685
      %5687 = vrot.lane.b32.xlu0 %v1206, 3
      %v5688 = vpop.permute.xlu0 %5687
      %5689 = vrot.lane.b32.xlu0 %v1213, 3
      %v5690 = vpop.permute.xlu0 %5689
      %5691 = vrot.lane.b32.xlu0 %v1220, 3
      %v5692 = vpop.permute.xlu0 %5691
      %5693 = vrot.lane.b32.xlu0 %v1227, 3
      %v5694 = vpop.permute.xlu0 %5693
      %5695 = vrot.lane.b32.xlu0 %v1234, 3
      %v5696 = vpop.permute.xlu0 %5695
      %5697 = vrot.lane.b32.xlu0 %v1241, 3
      %v5698 = vpop.permute.xlu0 %5697
      %5699 = vrot.lane.b32.xlu0 %v1248, 3
      %v5700 = vpop.permute.xlu0 %5699
      %5701 = vrot.lane.b32.xlu0 %v1255, 3
      %v5702 = vpop.permute.xlu0 %5701
      %5703 = vrot.lane.b32.xlu0 %v1262, 3
      %v5704 = vpop.permute.xlu0 %5703
      %5705 = vrot.lane.b32.xlu0 %v1269, 3
      %v5706 = vpop.permute.xlu0 %5705
      %5707 = vrot.lane.b32.xlu0 %v1276, 3
      %v5708 = vpop.permute.xlu0 %5707
      %5709 = vrot.lane.b32.xlu0 %v1283, 3
      %v5710 = vpop.permute.xlu0 %5709
      %5711 = vrot.lane.b32.xlu0 %v1290, 3
      %v5712 = vpop.permute.xlu0 %5711
      %5713 = vrot.lane.b32.xlu0 %v1297, 3
      %v5714 = vpop.permute.xlu0 %5713
      %5715 = vrot.lane.b32.xlu0 %v1304, 3
      %v5716 = vpop.permute.xlu0 %5715
      %5717 = vrot.lane.b32.xlu0 %v1311, 3
      %v5718 = vpop.permute.xlu0 %5717
      %5719 = vrot.lane.b32.xlu0 %v1318, 3
      %v5720 = vpop.permute.xlu0 %5719
      %5721 = vrot.lane.b32.xlu0 %v2589, 3
      %v5722 = vpop.permute.xlu0 %5721
      %5723 = vrot.lane.b32.xlu0 %v2591, 3
      %v5724 = vpop.permute.xlu0 %5723
      %5725 = vrot.lane.b32.xlu0 %v2593, 3
      %v5726 = vpop.permute.xlu0 %5725
      %5727 = vrot.lane.b32.xlu0 %v2592, 3
      %v5728 = vpop.permute.xlu0 %5727
      %5729 = vrot.lane.b32.xlu0 %v3701, 3
      %v5730 = vpop.permute.xlu0 %5729
      %5731 = vrot.lane.b32.xlu0 %v3703, 3
      %v5732 = vpop.permute.xlu0 %5731
      %5733 = vrot.lane.b32.xlu0 %v3705, 3
      %v5734 = vpop.permute.xlu0 %5733
      %5735 = vrot.lane.b32.xlu0 %v3704, 3
      %v5736 = vpop.permute.xlu0 %5735
      %5737 = vrot.lane.b32.xlu0 %v5674, 3
      %v5738 = vpop.permute.xlu0 %5737
      %5739 = vrot.lane.b32.xlu0 %v5676, 3
      %v5740 = vpop.permute.xlu0 %5739
      %5741 = vrot.lane.b32.xlu0 %v5678, 3
      %v5742 = vpop.permute.xlu0 %5741
      %5743 = vrot.lane.b32.xlu0 %v5677, 3
      %v5744 = vpop.permute.xlu0 %5743
      %vm5781 = vcmask 1040384
      %v5782 = vrot.slane %v189, 7
      %v5783 = vrot.slane %v190, 7
      %v5784 = vsel %vm5781, %v5782, %v5783
      %v5785 = vrot.slane %v191, 7
      %v5786 = vsel %vm5781, %v5783, %v5785
      %v5787 = vrot.slane %v193, 7
      %v5788 = vrot.slane %v194, 7
      %v5789 = vsel %vm5781, %v5787, %v5788
      %v5790 = vrot.slane %v195, 7
      %v5791 = vsel %vm5781, %v5788, %v5790
      %v5792 = vrot.slane %v197, 7
      %v5793 = vrot.slane %v198, 7
      %v5794 = vsel %vm5781, %v5792, %v5793
      %v5795 = vrot.slane %v199, 7
      %v5796 = vsel %vm5781, %v5793, %v5795
      %v5797 = vrot.slane %v201, 7
      %v5798 = vrot.slane %v202, 7
      %v5799 = vsel %vm5781, %v5797, %v5798
      %v5800 = vrot.slane %v203, 7
      %v5801 = vsel %vm5781, %v5798, %v5800
      %v5802 = vrot.slane %v205, 7
      %v5803 = vrot.slane %v206, 7
      %v5804 = vsel %vm5781, %v5802, %v5803
      %v5805 = vrot.slane %v207, 7
      %v5806 = vsel %vm5781, %v5803, %v5805
      %v5807 = vrot.slane %v209, 7
      %v5808 = vrot.slane %v210, 7
      %v5809 = vsel %vm5781, %v5807, %v5808
      %v5810 = vrot.slane %v211, 7
      %v5811 = vsel %vm5781, %v5808, %v5810
      %v5812 = vrot.slane %v213, 7
      %v5813 = vrot.slane %v214, 7
      %v5814 = vsel %vm5781, %v5812, %v5813
      %v5815 = vrot.slane %v215, 7
      %v5816 = vsel %vm5781, %v5813, %v5815
      %v5817 = vrot.slane %v217, 7
      %v5818 = vrot.slane %v218, 7
      %v5819 = vsel %vm5781, %v5817, %v5818
      %v5820 = vrot.slane %v219, 7
      %v5821 = vsel %vm5781, %v5818, %v5820
      %v5822 = vrot.slane %v221, 7
      %v5823 = vrot.slane %v222, 7
      %v5824 = vsel %vm5781, %v5822, %v5823
      %v5825 = vrot.slane %v223, 7
      %v5826 = vsel %vm5781, %v5823, %v5825
      %v5827 = vrot.slane %v225, 7
      %v5828 = vrot.slane %v226, 7
      %v5829 = vsel %vm5781, %v5827, %v5828
      %v5830 = vrot.slane %v227, 7
      %v5831 = vsel %vm5781, %v5828, %v5830
      %v5832 = vrot.slane %v229, 7
      %v5833 = vrot.slane %v230, 7
      %v5834 = vsel %vm5781, %v5832, %v5833
      %v5835 = vrot.slane %v231, 7
      %v5836 = vsel %vm5781, %v5833, %v5835
      %v5837 = vrot.slane %v233, 7
      %v5838 = vrot.slane %v234, 7
      %v5839 = vsel %vm5781, %v5837, %v5838
      %v5840 = vrot.slane %v235, 7
      %v5841 = vsel %vm5781, %v5838, %v5840
      %v5842 = vrot.slane %v237, 7
      %v5843 = vrot.slane %v238, 7
      %v5844 = vsel %vm5781, %v5842, %v5843
      %v5845 = vrot.slane %v239, 7
      %v5846 = vsel %vm5781, %v5843, %v5845
      %v5847 = vrot.slane %v241, 7
      %v5848 = vrot.slane %v242, 7
      %v5849 = vsel %vm5781, %v5847, %v5848
      %v5850 = vrot.slane %v243, 7
      %v5851 = vsel %vm5781, %v5848, %v5850
      %v5852 = vrot.slane %v245, 7
      %v5853 = vrot.slane %v246, 7
      %v5854 = vsel %vm5781, %v5852, %v5853
      %v5855 = vrot.slane %v247, 7
      %v5856 = vsel %vm5781, %v5853, %v5855
      %v5857 = vrot.slane %v249, 7
      %v5858 = vrot.slane %v250, 7
      %v5859 = vsel %vm5781, %v5857, %v5858
      %v5860 = vrot.slane %v251, 7
      %v5861 = vsel %vm5781, %v5858, %v5860
      %v5862 = vrot.slane %v253, 7
      %v5863 = vrot.slane %v254, 7
      %v5864 = vsel %vm5781, %v5862, %v5863
      %v5865 = vrot.slane %v255, 7
      %v5866 = vsel %vm5781, %v5863, %v5865
      %v5867 = vrot.slane %v257, 7
      %v5868 = vrot.slane %v258, 7
      %v5869 = vsel %vm5781, %v5867, %v5868
      %v5870 = vrot.slane %v259, 7
      %v5871 = vsel %vm5781, %v5868, %v5870
      %v5872 = vrot.slane %v261, 7
      %v5873 = vrot.slane %v262, 7
      %v5874 = vsel %vm5781, %v5872, %v5873
      %v5875 = vrot.slane %v263, 7
      %v5876 = vsel %vm5781, %v5873, %v5875
      %v5877 = vrot.slane %v265, 7
      %v5878 = vrot.slane %v266, 7
      %v5879 = vsel %vm5781, %v5877, %v5878
      %v5880 = vrot.slane %v267, 7
      %v5881 = vsel %vm5781, %v5878, %v5880
      %v5882 = vrot.slane %v269, 7
      %v5883 = vrot.slane %v270, 7
      %v5884 = vsel %vm5781, %v5882, %v5883
      %v5885 = vrot.slane %v271, 7
      %v5886 = vsel %vm5781, %v5883, %v5885
      %v5887 = vrot.slane %v273, 7
      %v5888 = vrot.slane %v274, 7
      %v5889 = vsel %vm5781, %v5887, %v5888
      %v5890 = vrot.slane %v275, 7
      %v5891 = vsel %vm5781, %v5888, %v5890
      %v5892 = vrot.slane %v277, 7
      %v5893 = vrot.slane %v278, 7
      %v5894 = vsel %vm5781, %v5892, %v5893
      %v5895 = vrot.slane %v279, 7
      %v5896 = vsel %vm5781, %v5893, %v5895
      %v5897 = vrot.slane %v281, 7
      %v5898 = vrot.slane %v282, 7
      %v5899 = vsel %vm5781, %v5897, %v5898
      %v5900 = vrot.slane %v283, 7
      %v5901 = vsel %vm5781, %v5898, %v5900
      %5902 = vrot.lane.b32.xlu0 %v5782, 4
      %v5903 = vpop.permute.xlu0 %5902
      %5904 = vrot.lane.b32.xlu0 %v5784, 4
      %v5905 = vpop.permute.xlu0 %5904
      %5906 = vrot.lane.b32.xlu0 %v5786, 4
      %v5907 = vpop.permute.xlu0 %5906
      %5908 = vrot.lane.b32.xlu0 %v5785, 4
      %v5909 = vpop.permute.xlu0 %5908
      %5910 = vrot.lane.b32.xlu0 %v5787, 4
      %v5911 = vpop.permute.xlu0 %5910
      %5912 = vrot.lane.b32.xlu0 %v5789, 4
      %v5913 = vpop.permute.xlu0 %5912
      %5914 = vrot.lane.b32.xlu0 %v5791, 4
      %v5915 = vpop.permute.xlu0 %5914
      %5916 = vrot.lane.b32.xlu0 %v5790, 4
      %v5917 = vpop.permute.xlu0 %5916
      %5918 = vrot.lane.b32.xlu0 %v5792, 4
      %v5919 = vpop.permute.xlu0 %5918
      %5920 = vrot.lane.b32.xlu0 %v5794, 4
      %v5921 = vpop.permute.xlu0 %5920
      %5922 = vrot.lane.b32.xlu0 %v5796, 4
      %v5923 = vpop.permute.xlu0 %5922
      %5924 = vrot.lane.b32.xlu0 %v5795, 4
      %v5925 = vpop.permute.xlu0 %5924
      %5926 = vrot.lane.b32.xlu0 %v5797, 4
      %v5927 = vpop.permute.xlu0 %5926
      %5928 = vrot.lane.b32.xlu0 %v5799, 4
      %v5929 = vpop.permute.xlu0 %5928
      %5930 = vrot.lane.b32.xlu0 %v5801, 4
      %v5931 = vpop.permute.xlu0 %5930
      %5932 = vrot.lane.b32.xlu0 %v5800, 4
      %v5933 = vpop.permute.xlu0 %5932
      %5934 = vrot.lane.b32.xlu0 %v5802, 4
      %v5935 = vpop.permute.xlu0 %5934
      %5936 = vrot.lane.b32.xlu0 %v5804, 4
      %v5937 = vpop.permute.xlu0 %5936
      %5938 = vrot.lane.b32.xlu0 %v5806, 4
      %v5939 = vpop.permute.xlu0 %5938
      %5940 = vrot.lane.b32.xlu0 %v5805, 4
      %v5941 = vpop.permute.xlu0 %5940
      %5942 = vrot.lane.b32.xlu0 %v5807, 4
      %v5943 = vpop.permute.xlu0 %5942
      %5944 = vrot.lane.b32.xlu0 %v5809, 4
      %v5945 = vpop.permute.xlu0 %5944
      %5946 = vrot.lane.b32.xlu0 %v5811, 4
      %v5947 = vpop.permute.xlu0 %5946
      %5948 = vrot.lane.b32.xlu0 %v5810, 4
      %v5949 = vpop.permute.xlu0 %5948
      %5950 = vrot.lane.b32.xlu0 %v5812, 4
      %v5951 = vpop.permute.xlu0 %5950
      %5952 = vrot.lane.b32.xlu0 %v5814, 4
      %v5953 = vpop.permute.xlu0 %5952
      %5954 = vrot.lane.b32.xlu0 %v5816, 4
      %v5955 = vpop.permute.xlu0 %5954
      %5956 = vrot.lane.b32.xlu0 %v5815, 4
      %v5957 = vpop.permute.xlu0 %5956
      %5958 = vrot.lane.b32.xlu0 %v5817, 4
      %v5959 = vpop.permute.xlu0 %5958
      %5960 = vrot.lane.b32.xlu0 %v5819, 4
      %v5961 = vpop.permute.xlu0 %5960
      %5962 = vrot.lane.b32.xlu0 %v5821, 4
      %v5963 = vpop.permute.xlu0 %5962
      %5964 = vrot.lane.b32.xlu0 %v5820, 4
      %v5965 = vpop.permute.xlu0 %5964
      %5966 = vrot.lane.b32.xlu0 %v5822, 4
      %v5967 = vpop.permute.xlu0 %5966
      %5968 = vrot.lane.b32.xlu0 %v5824, 4
      %v5969 = vpop.permute.xlu0 %5968
      %5970 = vrot.lane.b32.xlu0 %v5826, 4
      %v5971 = vpop.permute.xlu0 %5970
      %5972 = vrot.lane.b32.xlu0 %v5825, 4
      %v5973 = vpop.permute.xlu0 %5972
      %5974 = vrot.lane.b32.xlu0 %v5827, 4
      %v5975 = vpop.permute.xlu0 %5974
      %5976 = vrot.lane.b32.xlu0 %v5829, 4
      %v5977 = vpop.permute.xlu0 %5976
      %5978 = vrot.lane.b32.xlu0 %v5831, 4
      %v5979 = vpop.permute.xlu0 %5978
      %5980 = vrot.lane.b32.xlu0 %v5830, 4
      %v5981 = vpop.permute.xlu0 %5980
      %5982 = vrot.lane.b32.xlu0 %v5832, 4
      %v5983 = vpop.permute.xlu0 %5982
      %5984 = vrot.lane.b32.xlu0 %v5834, 4
      %v5985 = vpop.permute.xlu0 %5984
      %5986 = vrot.lane.b32.xlu0 %v5836, 4
      %v5987 = vpop.permute.xlu0 %5986
      %5988 = vrot.lane.b32.xlu0 %v5835, 4
      %v5989 = vpop.permute.xlu0 %5988
      %5990 = vrot.lane.b32.xlu0 %v5837, 4
      %v5991 = vpop.permute.xlu0 %5990
      %5992 = vrot.lane.b32.xlu0 %v5839, 4
      %v5993 = vpop.permute.xlu0 %5992
      %5994 = vrot.lane.b32.xlu0 %v5841, 4
      %v5995 = vpop.permute.xlu0 %5994
      %5996 = vrot.lane.b32.xlu0 %v5840, 4
      %v5997 = vpop.permute.xlu0 %5996
      %5998 = vrot.lane.b32.xlu0 %v5842, 4
      %v5999 = vpop.permute.xlu0 %5998
      %6000 = vrot.lane.b32.xlu0 %v5844, 4
      %v6001 = vpop.permute.xlu0 %6000
      %6002 = vrot.lane.b32.xlu0 %v5846, 4
      %v6003 = vpop.permute.xlu0 %6002
      %6004 = vrot.lane.b32.xlu0 %v5845, 4
      %v6005 = vpop.permute.xlu0 %6004
      %6006 = vrot.lane.b32.xlu0 %v5847, 4
      %v6007 = vpop.permute.xlu0 %6006
      %6008 = vrot.lane.b32.xlu0 %v5849, 4
      %v6009 = vpop.permute.xlu0 %6008
      %6010 = vrot.lane.b32.xlu0 %v5851, 4
      %v6011 = vpop.permute.xlu0 %6010
      %6012 = vrot.lane.b32.xlu0 %v5850, 4
      %v6013 = vpop.permute.xlu0 %6012
      %6014 = vrot.lane.b32.xlu0 %v5852, 4
      %v6015 = vpop.permute.xlu0 %6014
      %6016 = vrot.lane.b32.xlu0 %v5854, 4
      %v6017 = vpop.permute.xlu0 %6016
      %6018 = vrot.lane.b32.xlu0 %v5856, 4
      %v6019 = vpop.permute.xlu0 %6018
      %6020 = vrot.lane.b32.xlu0 %v5855, 4
      %v6021 = vpop.permute.xlu0 %6020
      %6022 = vrot.lane.b32.xlu0 %v5857, 4
      %v6023 = vpop.permute.xlu0 %6022
      %6024 = vrot.lane.b32.xlu0 %v5859, 4
      %v6025 = vpop.permute.xlu0 %6024
      %6026 = vrot.lane.b32.xlu0 %v5861, 4
      %v6027 = vpop.permute.xlu0 %6026
      %6028 = vrot.lane.b32.xlu0 %v5860, 4
      %v6029 = vpop.permute.xlu0 %6028
      %6030 = vrot.lane.b32.xlu0 %v5862, 4
      %v6031 = vpop.permute.xlu0 %6030
      %6032 = vrot.lane.b32.xlu0 %v5864, 4
      %v6033 = vpop.permute.xlu0 %6032
      %6034 = vrot.lane.b32.xlu0 %v5866, 4
      %v6035 = vpop.permute.xlu0 %6034
      %6036 = vrot.lane.b32.xlu0 %v5865, 4
      %v6037 = vpop.permute.xlu0 %6036
      %6038 = vrot.lane.b32.xlu0 %v5867, 4
      %v6039 = vpop.permute.xlu0 %6038
      %6040 = vrot.lane.b32.xlu0 %v5869, 4
      %v6041 = vpop.permute.xlu0 %6040
      %6042 = vrot.lane.b32.xlu0 %v5871, 4
      %v6043 = vpop.permute.xlu0 %6042
      %6044 = vrot.lane.b32.xlu0 %v5870, 4
      %v6045 = vpop.permute.xlu0 %6044
      %6046 = vrot.lane.b32.xlu0 %v5872, 4
      %v6047 = vpop.permute.xlu0 %6046
      %6048 = vrot.lane.b32.xlu0 %v5874, 4
      %v6049 = vpop.permute.xlu0 %6048
      %6050 = vrot.lane.b32.xlu0 %v5876, 4
      %v6051 = vpop.permute.xlu0 %6050
      %6052 = vrot.lane.b32.xlu0 %v5875, 4
      %v6053 = vpop.permute.xlu0 %6052
      %6054 = vrot.lane.b32.xlu0 %v5877, 4
      %v6055 = vpop.permute.xlu0 %6054
      %6056 = vrot.lane.b32.xlu0 %v5879, 4
      %v6057 = vpop.permute.xlu0 %6056
      %6058 = vrot.lane.b32.xlu0 %v5881, 4
      %v6059 = vpop.permute.xlu0 %6058
      %6060 = vrot.lane.b32.xlu0 %v5880, 4
      %v6061 = vpop.permute.xlu0 %6060
      %6062 = vrot.lane.b32.xlu0 %v5882, 4
      %v6063 = vpop.permute.xlu0 %6062
      %6064 = vrot.lane.b32.xlu0 %v5884, 4
      %v6065 = vpop.permute.xlu0 %6064
      %6066 = vrot.lane.b32.xlu0 %v5886, 4
      %v6067 = vpop.permute.xlu0 %6066
      %6068 = vrot.lane.b32.xlu0 %v5885, 4
      %v6069 = vpop.permute.xlu0 %6068
      %6070 = vrot.lane.b32.xlu0 %v5887, 4
      %v6071 = vpop.permute.xlu0 %6070
      %6072 = vrot.lane.b32.xlu0 %v5889, 4
      %v6073 = vpop.permute.xlu0 %6072
      %6074 = vrot.lane.b32.xlu0 %v5891, 4
      %v6075 = vpop.permute.xlu0 %6074
      %6076 = vrot.lane.b32.xlu0 %v5890, 4
      %v6077 = vpop.permute.xlu0 %6076
      %6078 = vrot.lane.b32.xlu0 %v5892, 4
      %v6079 = vpop.permute.xlu0 %6078
      %6080 = vrot.lane.b32.xlu0 %v5894, 4
      %v6081 = vpop.permute.xlu0 %6080
      %6082 = vrot.lane.b32.xlu0 %v5896, 4
      %v6083 = vpop.permute.xlu0 %6082
      %6084 = vrot.lane.b32.xlu0 %v5895, 4
      %v6085 = vpop.permute.xlu0 %6084
      %6086 = vrot.lane.b32.xlu0 %v5897, 4
      %v6087 = vpop.permute.xlu0 %6086
      %6088 = vrot.lane.b32.xlu0 %v5899, 4
      %v6089 = vpop.permute.xlu0 %6088
      %6090 = vrot.lane.b32.xlu0 %v5901, 4
      %v6091 = vpop.permute.xlu0 %6090
      %6092 = vrot.lane.b32.xlu0 %v5900, 4
      %v6093 = vpop.permute.xlu0 %6092
      %6191 = vrot.lane.b32.xlu0 %v192, 5
      %v6192 = vpop.permute.xlu0 %6191
      %6193 = vrot.lane.b32.xlu0 %v196, 5
      %v6194 = vpop.permute.xlu0 %6193
      %6195 = vrot.lane.b32.xlu0 %v200, 5
      %v6196 = vpop.permute.xlu0 %6195
      %6197 = vrot.lane.b32.xlu0 %v204, 5
      %v6198 = vpop.permute.xlu0 %6197
      %6199 = vrot.lane.b32.xlu0 %v208, 5
      %v6200 = vpop.permute.xlu0 %6199
      %6201 = vrot.lane.b32.xlu0 %v212, 5
      %v6202 = vpop.permute.xlu0 %6201
      %6203 = vrot.lane.b32.xlu0 %v216, 5
      %v6204 = vpop.permute.xlu0 %6203
      %6205 = vrot.lane.b32.xlu0 %v220, 5
      %v6206 = vpop.permute.xlu0 %6205
      %6207 = vrot.lane.b32.xlu0 %v224, 5
      %v6208 = vpop.permute.xlu0 %6207
      %6209 = vrot.lane.b32.xlu0 %v228, 5
      %v6210 = vpop.permute.xlu0 %6209
      %6211 = vrot.lane.b32.xlu0 %v232, 5
      %v6212 = vpop.permute.xlu0 %6211
      %6213 = vrot.lane.b32.xlu0 %v236, 5
      %v6214 = vpop.permute.xlu0 %6213
      %6215 = vrot.lane.b32.xlu0 %v240, 5
      %v6216 = vpop.permute.xlu0 %6215
      %6217 = vrot.lane.b32.xlu0 %v244, 5
      %v6218 = vpop.permute.xlu0 %6217
      %6219 = vrot.lane.b32.xlu0 %v248, 5
      %v6220 = vpop.permute.xlu0 %6219
      %6221 = vrot.lane.b32.xlu0 %v252, 5
      %v6222 = vpop.permute.xlu0 %6221
      %6223 = vrot.lane.b32.xlu0 %v256, 5
      %v6224 = vpop.permute.xlu0 %6223
      %6225 = vrot.lane.b32.xlu0 %v260, 5
      %v6226 = vpop.permute.xlu0 %6225
      %6227 = vrot.lane.b32.xlu0 %v264, 5
      %v6228 = vpop.permute.xlu0 %6227
      %6229 = vrot.lane.b32.xlu0 %v268, 5
      %v6230 = vpop.permute.xlu0 %6229
      %6231 = vrot.lane.b32.xlu0 %v272, 5
      %v6232 = vpop.permute.xlu0 %6231
      %6233 = vrot.lane.b32.xlu0 %v273, 5
      %v6234 = vpop.permute.xlu0 %6233
      %6235 = vrot.lane.b32.xlu0 %v274, 5
      %v6236 = vpop.permute.xlu0 %6235
      %6237 = vrot.lane.b32.xlu0 %v275, 5
      %v6238 = vpop.permute.xlu0 %6237
      %6239 = vrot.lane.b32.xlu0 %v276, 5
      %v6240 = vpop.permute.xlu0 %6239
      %6241 = vrot.lane.b32.xlu0 %v277, 5
      %v6242 = vpop.permute.xlu0 %6241
      %6243 = vrot.lane.b32.xlu0 %v278, 5
      %v6244 = vpop.permute.xlu0 %6243
      %6245 = vrot.lane.b32.xlu0 %v279, 5
      %v6246 = vpop.permute.xlu0 %6245
      %6247 = vrot.lane.b32.xlu0 %v280, 5
      %v6248 = vpop.permute.xlu0 %6247
      %6249 = vrot.lane.b32.xlu0 %v281, 5
      %v6250 = vpop.permute.xlu0 %6249
      %6251 = vrot.lane.b32.xlu0 %v282, 5
      %v6252 = vpop.permute.xlu0 %6251
      %6253 = vrot.lane.b32.xlu0 %v283, 5
      %v6254 = vpop.permute.xlu0 %6253
      %6255 = vrot.lane.b32.xlu0 %v284, 5
      %v6256 = vpop.permute.xlu0 %6255
      %v6290 = vrot.slane %v281, 1
      %v6291 = vrot.slane %v282, 1
      %v6292 = vsel %vm381, %v6290, %v6291
      %v6293 = vrot.slane %v283, 1
      %v6294 = vsel %vm381, %v6291, %v6293
      %v6295 = vrot.slane %v284, 1
      %v6296 = vsel %vm381, %v6293, %v6295
      %6297 = vrot.lane.b32.xlu0 %v415, 6
      %v6298 = vpop.permute.xlu0 %6297
      %6299 = vrot.lane.b32.xlu0 %v422, 6
      %v6300 = vpop.permute.xlu0 %6299
      %6301 = vrot.lane.b32.xlu0 %v429, 6
      %v6302 = vpop.permute.xlu0 %6301
      %6303 = vrot.lane.b32.xlu0 %v436, 6
      %v6304 = vpop.permute.xlu0 %6303
      %6305 = vrot.lane.b32.xlu0 %v443, 6
      %v6306 = vpop.permute.xlu0 %6305
      %6307 = vrot.lane.b32.xlu0 %v450, 6
      %v6308 = vpop.permute.xlu0 %6307
      %6309 = vrot.lane.b32.xlu0 %v457, 6
      %v6310 = vpop.permute.xlu0 %6309
      %6311 = vrot.lane.b32.xlu0 %v464, 6
      %v6312 = vpop.permute.xlu0 %6311
      %6313 = vrot.lane.b32.xlu0 %v471, 6
      %v6314 = vpop.permute.xlu0 %6313
      %6315 = vrot.lane.b32.xlu0 %v478, 6
      %v6316 = vpop.permute.xlu0 %6315
      %6317 = vrot.lane.b32.xlu0 %v485, 6
      %v6318 = vpop.permute.xlu0 %6317
      %6319 = vrot.lane.b32.xlu0 %v492, 6
      %v6320 = vpop.permute.xlu0 %6319
      %6321 = vrot.lane.b32.xlu0 %v499, 6
      %v6322 = vpop.permute.xlu0 %6321
      %6323 = vrot.lane.b32.xlu0 %v506, 6
      %v6324 = vpop.permute.xlu0 %6323
      %6325 = vrot.lane.b32.xlu0 %v513, 6
      %v6326 = vpop.permute.xlu0 %6325
      %6327 = vrot.lane.b32.xlu0 %v520, 6
      %v6328 = vpop.permute.xlu0 %6327
      %6329 = vrot.lane.b32.xlu0 %v527, 6
      %v6330 = vpop.permute.xlu0 %6329
      %6331 = vrot.lane.b32.xlu0 %v534, 6
      %v6332 = vpop.permute.xlu0 %6331
      %6333 = vrot.lane.b32.xlu0 %v541, 6
      %v6334 = vpop.permute.xlu0 %6333
      %6335 = vrot.lane.b32.xlu0 %v548, 6
      %v6336 = vpop.permute.xlu0 %6335
      %6337 = vrot.lane.b32.xlu0 %v2146, 6
      %v6338 = vpop.permute.xlu0 %6337
      %6339 = vrot.lane.b32.xlu0 %v3255, 6
      %v6340 = vpop.permute.xlu0 %6339
      %6341 = vrot.lane.b32.xlu0 %v3257, 6
      %v6342 = vpop.permute.xlu0 %6341
      %6343 = vrot.lane.b32.xlu0 %v3259, 6
      %v6344 = vpop.permute.xlu0 %6343
      %6345 = vrot.lane.b32.xlu0 %v3258, 6
      %v6346 = vpop.permute.xlu0 %6345
      %6347 = vrot.lane.b32.xlu0 %v5462, 6
      %v6348 = vpop.permute.xlu0 %6347
      %6349 = vrot.lane.b32.xlu0 %v5464, 6
      %v6350 = vpop.permute.xlu0 %6349
      %6351 = vrot.lane.b32.xlu0 %v5466, 6
      %v6352 = vpop.permute.xlu0 %6351
      %6353 = vrot.lane.b32.xlu0 %v5465, 6
      %v6354 = vpop.permute.xlu0 %6353
      %6355 = vrot.lane.b32.xlu0 %v6292, 6
      %v6356 = vpop.permute.xlu0 %6355
      %6357 = vrot.lane.b32.xlu0 %v6294, 6
      %v6358 = vpop.permute.xlu0 %6357
      %6359 = vrot.lane.b32.xlu0 %v6296, 6
      %v6360 = vpop.permute.xlu0 %6359
      %6361 = vrot.lane.b32.xlu0 %v6295, 6
      %v6362 = vpop.permute.xlu0 %6361
      %v6396 = vrot.slane %v281, 2
      %v6397 = vrot.slane %v282, 2
      %v6398 = vsel %vm766, %v6396, %v6397
      %v6399 = vrot.slane %v283, 2
      %v6400 = vsel %vm766, %v6397, %v6399
      %v6401 = vrot.slane %v284, 2
      %v6402 = vsel %vm766, %v6399, %v6401
      %6403 = vrot.lane.b32.xlu0 %v800, 7
      %v6404 = vpop.permute.xlu0 %6403
      %6405 = vrot.lane.b32.xlu0 %v807, 7
      %v6406 = vpop.permute.xlu0 %6405
      %6407 = vrot.lane.b32.xlu0 %v814, 7
      %v6408 = vpop.permute.xlu0 %6407
      %6409 = vrot.lane.b32.xlu0 %v821, 7
      %v6410 = vpop.permute.xlu0 %6409
      %6411 = vrot.lane.b32.xlu0 %v828, 7
      %v6412 = vpop.permute.xlu0 %6411
      %6413 = vrot.lane.b32.xlu0 %v835, 7
      %v6414 = vpop.permute.xlu0 %6413
      %6415 = vrot.lane.b32.xlu0 %v842, 7
      %v6416 = vpop.permute.xlu0 %6415
      %6417 = vrot.lane.b32.xlu0 %v849, 7
      %v6418 = vpop.permute.xlu0 %6417
      %6419 = vrot.lane.b32.xlu0 %v856, 7
      %v6420 = vpop.permute.xlu0 %6419
      %6421 = vrot.lane.b32.xlu0 %v863, 7
      %v6422 = vpop.permute.xlu0 %6421
      %6423 = vrot.lane.b32.xlu0 %v870, 7
      %v6424 = vpop.permute.xlu0 %6423
      %6425 = vrot.lane.b32.xlu0 %v877, 7
      %v6426 = vpop.permute.xlu0 %6425
      %6427 = vrot.lane.b32.xlu0 %v884, 7
      %v6428 = vpop.permute.xlu0 %6427
      %6429 = vrot.lane.b32.xlu0 %v891, 7
      %v6430 = vpop.permute.xlu0 %6429
      %6431 = vrot.lane.b32.xlu0 %v898, 7
      %v6432 = vpop.permute.xlu0 %6431
      %6433 = vrot.lane.b32.xlu0 %v905, 7
      %v6434 = vpop.permute.xlu0 %6433
      %6435 = vrot.lane.b32.xlu0 %v912, 7
      %v6436 = vpop.permute.xlu0 %6435
      %6437 = vrot.lane.b32.xlu0 %v919, 7
      %v6438 = vpop.permute.xlu0 %6437
      %6439 = vrot.lane.b32.xlu0 %v926, 7
      %v6440 = vpop.permute.xlu0 %6439
      %6441 = vrot.lane.b32.xlu0 %v933, 7
      %v6442 = vpop.permute.xlu0 %6441
      %6443 = vrot.lane.b32.xlu0 %v2369, 7
      %v6444 = vpop.permute.xlu0 %6443
      %6445 = vrot.lane.b32.xlu0 %v3478, 7
      %v6446 = vpop.permute.xlu0 %6445
      %6447 = vrot.lane.b32.xlu0 %v3480, 7
      %v6448 = vpop.permute.xlu0 %6447
      %6449 = vrot.lane.b32.xlu0 %v3482, 7
      %v6450 = vpop.permute.xlu0 %6449
      %6451 = vrot.lane.b32.xlu0 %v3481, 7
      %v6452 = vpop.permute.xlu0 %6451
      %6453 = vrot.lane.b32.xlu0 %v5568, 7
      %v6454 = vpop.permute.xlu0 %6453
      %6455 = vrot.lane.b32.xlu0 %v5570, 7
      %v6456 = vpop.permute.xlu0 %6455
      %6457 = vrot.lane.b32.xlu0 %v5572, 7
      %v6458 = vpop.permute.xlu0 %6457
      %6459 = vrot.lane.b32.xlu0 %v5571, 7
      %v6460 = vpop.permute.xlu0 %6459
      %6461 = vrot.lane.b32.xlu0 %v6398, 7
      %v6462 = vpop.permute.xlu0 %6461
      %6463 = vrot.lane.b32.xlu0 %v6400, 7
      %v6464 = vpop.permute.xlu0 %6463
      %6465 = vrot.lane.b32.xlu0 %v6402, 7
      %v6466 = vpop.permute.xlu0 %6465
      %6467 = vrot.lane.b32.xlu0 %v6401, 7
      %v6468 = vpop.permute.xlu0 %6467
      %v6502 = vrot.slane %v281, 3
      %v6503 = vrot.slane %v282, 3
      %v6504 = vsel %vm1151, %v6502, %v6503
      %v6505 = vrot.slane %v283, 3
      %v6506 = vsel %vm1151, %v6503, %v6505
      %v6507 = vrot.slane %v284, 3
      %v6508 = vsel %vm1151, %v6505, %v6507
      %6509 = vrot.lane.b32.xlu0 %v1185, 8
      %v6510 = vpop.permute.xlu0 %6509
      %6511 = vrot.lane.b32.xlu0 %v1192, 8
      %v6512 = vpop.permute.xlu0 %6511
      %6513 = vrot.lane.b32.xlu0 %v1199, 8
      %v6514 = vpop.permute.xlu0 %6513
      %6515 = vrot.lane.b32.xlu0 %v1206, 8
      %v6516 = vpop.permute.xlu0 %6515
      %6517 = vrot.lane.b32.xlu0 %v1213, 8
      %v6518 = vpop.permute.xlu0 %6517
      %6519 = vrot.lane.b32.xlu0 %v1220, 8
      %v6520 = vpop.permute.xlu0 %6519
      %6521 = vrot.lane.b32.xlu0 %v1227, 8
      %v6522 = vpop.permute.xlu0 %6521
      %6523 = vrot.lane.b32.xlu0 %v1234, 8
      %v6524 = vpop.permute.xlu0 %6523
      %6525 = vrot.lane.b32.xlu0 %v1241, 8
      %v6526 = vpop.permute.xlu0 %6525
      %6527 = vrot.lane.b32.xlu0 %v1248, 8
      %v6528 = vpop.permute.xlu0 %6527
      %6529 = vrot.lane.b32.xlu0 %v1255, 8
      %v6530 = vpop.permute.xlu0 %6529
      %6531 = vrot.lane.b32.xlu0 %v1262, 8
      %v6532 = vpop.permute.xlu0 %6531
      %6533 = vrot.lane.b32.xlu0 %v1269, 8
      %v6534 = vpop.permute.xlu0 %6533
      %6535 = vrot.lane.b32.xlu0 %v1276, 8
      %v6536 = vpop.permute.xlu0 %6535
      %6537 = vrot.lane.b32.xlu0 %v1283, 8
      %v6538 = vpop.permute.xlu0 %6537
      %6539 = vrot.lane.b32.xlu0 %v1290, 8
      %v6540 = vpop.permute.xlu0 %6539
      %6541 = vrot.lane.b32.xlu0 %v1297, 8
      %v6542 = vpop.permute.xlu0 %6541
      %6543 = vrot.lane.b32.xlu0 %v1304, 8
      %v6544 = vpop.permute.xlu0 %6543
      %6545 = vrot.lane.b32.xlu0 %v1311, 8
      %v6546 = vpop.permute.xlu0 %6545
      %6547 = vrot.lane.b32.xlu0 %v1318, 8
      %v6548 = vpop.permute.xlu0 %6547
      %6549 = vrot.lane.b32.xlu0 %v2592, 8
      %v6550 = vpop.permute.xlu0 %6549
      %6551 = vrot.lane.b32.xlu0 %v3701, 8
      %v6552 = vpop.permute.xlu0 %6551
      %6553 = vrot.lane.b32.xlu0 %v3703, 8
      %v6554 = vpop.permute.xlu0 %6553
      %6555 = vrot.lane.b32.xlu0 %v3705, 8
      %v6556 = vpop.permute.xlu0 %6555
      %6557 = vrot.lane.b32.xlu0 %v3704, 8
      %v6558 = vpop.permute.xlu0 %6557
      %6559 = vrot.lane.b32.xlu0 %v5674, 8
      %v6560 = vpop.permute.xlu0 %6559
      %6561 = vrot.lane.b32.xlu0 %v5676, 8
      %v6562 = vpop.permute.xlu0 %6561
      %6563 = vrot.lane.b32.xlu0 %v5678, 8
      %v6564 = vpop.permute.xlu0 %6563
      %6565 = vrot.lane.b32.xlu0 %v5677, 8
      %v6566 = vpop.permute.xlu0 %6565
      %6567 = vrot.lane.b32.xlu0 %v6504, 8
      %v6568 = vpop.permute.xlu0 %6567
      %6569 = vrot.lane.b32.xlu0 %v6506, 8
      %v6570 = vpop.permute.xlu0 %6569
      %6571 = vrot.lane.b32.xlu0 %v6508, 8
      %v6572 = vpop.permute.xlu0 %6571
      %6573 = vrot.lane.b32.xlu0 %v6507, 8
      %v6574 = vpop.permute.xlu0 %6573
      %v6608 = vsel %vm4364, %v188, %v5468
      %v6609 = vsel %vm4364, %v192, %v5470
      %v6610 = vsel %vm4364, %v196, %v5472
      %v6611 = vsel %vm4364, %v200, %v5474
      %v6612 = vsel %vm4364, %v204, %v5476
      %v6613 = vsel %vm4364, %v208, %v5478
      %v6614 = vsel %vm4364, %v212, %v5480
      %v6615 = vsel %vm4364, %v216, %v5482
      %v6616 = vsel %vm4364, %v220, %v5484
      %v6617 = vsel %vm4364, %v224, %v5486
      %v6618 = vsel %vm4364, %v228, %v5488
      %v6619 = vsel %vm4364, %v232, %v5490
      %v6620 = vsel %vm4364, %v236, %v5492
      %v6621 = vsel %vm4364, %v240, %v5494
      %v6622 = vsel %vm4364, %v244, %v5496
      %v6623 = vsel %vm4364, %v248, %v5498
      %v6624 = vsel %vm4364, %v252, %v5500
      %v6625 = vsel %vm4364, %v256, %v5502
      %v6626 = vsel %vm4364, %v260, %v5504
      %v6627 = vsel %vm4364, %v264, %v5506
      %v6628 = vsel %vm4364, %v268, %v5508
      %v6629 = vsel %vm4364, %v269, %v5510
      %v6630 = vsel %vm4364, %v270, %v5512
      %v6631 = vsel %vm4364, %v271, %v5514
      %v6632 = vsel %vm4364, %v272, %v5516
      %v6633 = vsel %vm4364, %v273, %v5518
      %v6634 = vsel %vm4364, %v274, %v5520
      %v6635 = vsel %vm4364, %v275, %v5522
      %v6636 = vsel %vm4364, %v276, %v5524
      %v6637 = vsel %vm4364, %v277, %v5526
      %v6638 = vsel %vm4364, %v278, %v5528
      %v6639 = vsel %vm4364, %v279, %v5530
      %v6640 = vsel %vm4364, %v280, %v5532
      %v6641 = vsel %vm4437, %v6608, %v5574
      %v6642 = vsel %vm4437, %v6609, %v5576
      %v6643 = vsel %vm4437, %v6610, %v5578
      %v6644 = vsel %vm4437, %v6611, %v5580
      %v6645 = vsel %vm4437, %v6612, %v5582
      %v6646 = vsel %vm4437, %v6613, %v5584
      %v6647 = vsel %vm4437, %v6614, %v5586
      %v6648 = vsel %vm4437, %v6615, %v5588
      %v6649 = vsel %vm4437, %v6616, %v5590
      %v6650 = vsel %vm4437, %v6617, %v5592
      %v6651 = vsel %vm4437, %v6618, %v5594
      %v6652 = vsel %vm4437, %v6619, %v5596
      %v6653 = vsel %vm4437, %v6620, %v5598
      %v6654 = vsel %vm4437, %v6621, %v5600
      %v6655 = vsel %vm4437, %v6622, %v5602
      %v6656 = vsel %vm4437, %v6623, %v5604
      %v6657 = vsel %vm4437, %v6624, %v5606
      %v6658 = vsel %vm4437, %v6625, %v5608
      %v6659 = vsel %vm4437, %v6626, %v5610
      %v6660 = vsel %vm4437, %v6627, %v5612
      %v6661 = vsel %vm4437, %v6628, %v5614
      %v6662 = vsel %vm4437, %v6629, %v5616
      %v6663 = vsel %vm4437, %v6630, %v5618
      %v6664 = vsel %vm4437, %v6631, %v5620
      %v6665 = vsel %vm4437, %v6632, %v5622
      %v6666 = vsel %vm4437, %v6633, %v5624
      %v6667 = vsel %vm4437, %v6634, %v5626
      %v6668 = vsel %vm4437, %v6635, %v5628
      %v6669 = vsel %vm4437, %v6636, %v5630
      %v6670 = vsel %vm4437, %v6637, %v5632
      %v6671 = vsel %vm4437, %v6638, %v5634
      %v6672 = vsel %vm4437, %v6639, %v5636
      %v6673 = vsel %vm4437, %v6640, %v5638
      %v6674 = vsel %vm4510, %v6641, %v5680
      %v6675 = vsel %vm4510, %v6642, %v5682
      %v6676 = vsel %vm4510, %v6643, %v5684
      %v6677 = vsel %vm4510, %v6644, %v5686
      %v6678 = vsel %vm4510, %v6645, %v5688
      %v6679 = vsel %vm4510, %v6646, %v5690
      %v6680 = vsel %vm4510, %v6647, %v5692
      %v6681 = vsel %vm4510, %v6648, %v5694
      %v6682 = vsel %vm4510, %v6649, %v5696
      %v6683 = vsel %vm4510, %v6650, %v5698
      %v6684 = vsel %vm4510, %v6651, %v5700
      %v6685 = vsel %vm4510, %v6652, %v5702
      %v6686 = vsel %vm4510, %v6653, %v5704
      %v6687 = vsel %vm4510, %v6654, %v5706
      %v6688 = vsel %vm4510, %v6655, %v5708
      %v6689 = vsel %vm4510, %v6656, %v5710
      %v6690 = vsel %vm4510, %v6657, %v5712
      %v6691 = vsel %vm4510, %v6658, %v5714
      %v6692 = vsel %vm4510, %v6659, %v5716
      %v6693 = vsel %vm4510, %v6660, %v5718
      %v6694 = vsel %vm4510, %v6661, %v5720
      %v6695 = vsel %vm4510, %v6662, %v5722
      %v6696 = vsel %vm4510, %v6663, %v5724
      %v6697 = vsel %vm4510, %v6664, %v5726
      %v6698 = vsel %vm4510, %v6665, %v5728
      %v6699 = vsel %vm4510, %v6666, %v5730
      %v6700 = vsel %vm4510, %v6667, %v5732
      %v6701 = vsel %vm4510, %v6668, %v5734
      %v6702 = vsel %vm4510, %v6669, %v5736
      %v6703 = vsel %vm4510, %v6670, %v5738
      %v6704 = vsel %vm4510, %v6671, %v5740
      %v6705 = vsel %vm4510, %v6672, %v5742
      %v6706 = vsel %vm4510, %v6673, %v5744
      %v6707 = vsel %vm4583, %v4520, %v5903
      %v6708 = vsel %vm4583, %v4521, %v5905
      %v6709 = vsel %vm4583, %v4522, %v5907
      %v6710 = vsel %vm4583, %v6674, %v5909
      %v6711 = vsel %vm4583, %v4523, %v5911
      %v6712 = vsel %vm4583, %v4524, %v5913
      %v6713 = vsel %vm4583, %v4525, %v5915
      %v6714 = vsel %vm4583, %v6675, %v5917
      %v6715 = vsel %vm4583, %v4526, %v5919
      %v6716 = vsel %vm4583, %v4527, %v5921
      %v6717 = vsel %vm4583, %v4528, %v5923
      %v6718 = vsel %vm4583, %v6676, %v5925
      %v6719 = vsel %vm4583, %v4529, %v5927
      %v6720 = vsel %vm4583, %v4530, %v5929
      %v6721 = vsel %vm4583, %v4531, %v5931
      %v6722 = vsel %vm4583, %v6677, %v5933
      %v6723 = vsel %vm4583, %v4532, %v5935
      %v6724 = vsel %vm4583, %v4533, %v5937
      %v6725 = vsel %vm4583, %v4534, %v5939
      %v6726 = vsel %vm4583, %v6678, %v5941
      %v6727 = vsel %vm4583, %v4535, %v5943
      %v6728 = vsel %vm4583, %v4536, %v5945
      %v6729 = vsel %vm4583, %v4537, %v5947
      %v6730 = vsel %vm4583, %v6679, %v5949
      %v6731 = vsel %vm4583, %v4538, %v5951
      %v6732 = vsel %vm4583, %v4539, %v5953
      %v6733 = vsel %vm4583, %v4540, %v5955
      %v6734 = vsel %vm4583, %v6680, %v5957
      %v6735 = vsel %vm4583, %v4541, %v5959
      %v6736 = vsel %vm4583, %v4542, %v5961
      %v6737 = vsel %vm4583, %v4543, %v5963
      %v6738 = vsel %vm4583, %v6681, %v5965
      %v6739 = vsel %vm4583, %v4544, %v5967
      %v6740 = vsel %vm4583, %v4545, %v5969
      %v6741 = vsel %vm4583, %v4546, %v5971
      %v6742 = vsel %vm4583, %v6682, %v5973
      %v6743 = vsel %vm4583, %v4547, %v5975
      %v6744 = vsel %vm4583, %v4548, %v5977
      %v6745 = vsel %vm4583, %v4549, %v5979
      %v6746 = vsel %vm4583, %v6683, %v5981
      %v6747 = vsel %vm4583, %v4550, %v5983
      %v6748 = vsel %vm4583, %v4551, %v5985
      %v6749 = vsel %vm4583, %v4552, %v5987
      %v6750 = vsel %vm4583, %v6684, %v5989
      %v6751 = vsel %vm4583, %v4553, %v5991
      %v6752 = vsel %vm4583, %v4554, %v5993
      %v6753 = vsel %vm4583, %v4555, %v5995
      %v6754 = vsel %vm4583, %v6685, %v5997
      %v6755 = vsel %vm4583, %v4556, %v5999
      %v6756 = vsel %vm4583, %v4557, %v6001
      %v6757 = vsel %vm4583, %v4558, %v6003
      %v6758 = vsel %vm4583, %v6686, %v6005
      %v6759 = vsel %vm4583, %v4559, %v6007
      %v6760 = vsel %vm4583, %v4560, %v6009
      %v6761 = vsel %vm4583, %v4561, %v6011
      %v6762 = vsel %vm4583, %v6687, %v6013
      %v6763 = vsel %vm4583, %v4562, %v6015
      %v6764 = vsel %vm4583, %v4563, %v6017
      %v6765 = vsel %vm4583, %v4564, %v6019
      %v6766 = vsel %vm4583, %v6688, %v6021
      %v6767 = vsel %vm4583, %v4565, %v6023
      %v6768 = vsel %vm4583, %v4566, %v6025
      %v6769 = vsel %vm4583, %v4567, %v6027
      %v6770 = vsel %vm4583, %v6689, %v6029
      %v6771 = vsel %vm4583, %v4568, %v6031
      %v6772 = vsel %vm4583, %v4569, %v6033
      %v6773 = vsel %vm4583, %v4570, %v6035
      %v6774 = vsel %vm4583, %v6690, %v6037
      %v6775 = vsel %vm4583, %v4571, %v6039
      %v6776 = vsel %vm4583, %v4572, %v6041
      %v6777 = vsel %vm4583, %v4573, %v6043
      %v6778 = vsel %vm4583, %v6691, %v6045
      %v6779 = vsel %vm4583, %v4574, %v6047
      %v6780 = vsel %vm4583, %v4575, %v6049
      %v6781 = vsel %vm4583, %v4576, %v6051
      %v6782 = vsel %vm4583, %v6692, %v6053
      %v6783 = vsel %vm4583, %v4577, %v6055
      %v6784 = vsel %vm4583, %v4578, %v6057
      %v6785 = vsel %vm4583, %v4579, %v6059
      %v6786 = vsel %vm4583, %v6693, %v6061
      %v6787 = vsel %vm4583, %v4580, %v6063
      %v6788 = vsel %vm4583, %v4581, %v6065
      %v6789 = vsel %vm4583, %v4582, %v6067
      %v6790 = vsel %vm4583, %v6694, %v6069
      %v6791 = vsel %vm4583, %v6695, %v6071
      %v6792 = vsel %vm4583, %v6696, %v6073
      %v6793 = vsel %vm4583, %v6697, %v6075
      %v6794 = vsel %vm4583, %v6698, %v6077
      %v6795 = vsel %vm4583, %v6699, %v6079
      %v6796 = vsel %vm4583, %v6700, %v6081
      %v6797 = vsel %vm4583, %v6701, %v6083
      %v6798 = vsel %vm4583, %v6702, %v6085
      %v6799 = vsel %vm4583, %v6703, %v6087
      %v6800 = vsel %vm4583, %v6704, %v6089
      %v6801 = vsel %vm4583, %v6705, %v6091
      %v6802 = vsel %vm4583, %v6706, %v6093
      %v6803 = vsel %vm4656, %v6707, %v1943
      %v6804 = vsel %vm4656, %v6708, %v1945
      %v6805 = vsel %vm4656, %v6709, %v1947
      %v6806 = vsel %vm4656, %v6710, %v6192
      %v6807 = vsel %vm4656, %v6711, %v1949
      %v6808 = vsel %vm4656, %v6712, %v1951
      %v6809 = vsel %vm4656, %v6713, %v1953
      %v6810 = vsel %vm4656, %v6714, %v6194
      %v6811 = vsel %vm4656, %v6715, %v1955
      %v6812 = vsel %vm4656, %v6716, %v1957
      %v6813 = vsel %vm4656, %v6717, %v1959
      %v6814 = vsel %vm4656, %v6718, %v6196
      %v6815 = vsel %vm4656, %v6719, %v1961
      %v6816 = vsel %vm4656, %v6720, %v1963
      %v6817 = vsel %vm4656, %v6721, %v1965
      %v6818 = vsel %vm4656, %v6722, %v6198
      %v6819 = vsel %vm4656, %v6723, %v1967
      %v6820 = vsel %vm4656, %v6724, %v1969
      %v6821 = vsel %vm4656, %v6725, %v1971
      %v6822 = vsel %vm4656, %v6726, %v6200
      %v6823 = vsel %vm4656, %v6727, %v1973
      %v6824 = vsel %vm4656, %v6728, %v1975
      %v6825 = vsel %vm4656, %v6729, %v1977
      %v6826 = vsel %vm4656, %v6730, %v6202
      %v6827 = vsel %vm4656, %v6731, %v1979
      %v6828 = vsel %vm4656, %v6732, %v1981
      %v6829 = vsel %vm4656, %v6733, %v1983
      %v6830 = vsel %vm4656, %v6734, %v6204
      %v6831 = vsel %vm4656, %v6735, %v1985
      %v6832 = vsel %vm4656, %v6736, %v1987
      %v6833 = vsel %vm4656, %v6737, %v1989
      %v6834 = vsel %vm4656, %v6738, %v6206
      %v6835 = vsel %vm4656, %v6739, %v1991
      %v6836 = vsel %vm4656, %v6740, %v1993
      %v6837 = vsel %vm4656, %v6741, %v1995
      %v6838 = vsel %vm4656, %v6742, %v6208
      %v6839 = vsel %vm4656, %v6743, %v1997
      %v6840 = vsel %vm4656, %v6744, %v1999
      %v6841 = vsel %vm4656, %v6745, %v2001
      %v6842 = vsel %vm4656, %v6746, %v6210
      %v6843 = vsel %vm4656, %v6747, %v2003
      %v6844 = vsel %vm4656, %v6748, %v2005
      %v6845 = vsel %vm4656, %v6749, %v2007
      %v6846 = vsel %vm4656, %v6750, %v6212
      %v6847 = vsel %vm4656, %v6751, %v2009
      %v6848 = vsel %vm4656, %v6752, %v2011
      %v6849 = vsel %vm4656, %v6753, %v2013
      %v6850 = vsel %vm4656, %v6754, %v6214
      %v6851 = vsel %vm4656, %v6755, %v2015
      %v6852 = vsel %vm4656, %v6756, %v2017
      %v6853 = vsel %vm4656, %v6757, %v2019
      %v6854 = vsel %vm4656, %v6758, %v6216
      %v6855 = vsel %vm4656, %v6759, %v2021
      %v6856 = vsel %vm4656, %v6760, %v2023
      %v6857 = vsel %vm4656, %v6761, %v2025
      %v6858 = vsel %vm4656, %v6762, %v6218
      %v6859 = vsel %vm4656, %v6763, %v2027
      %v6860 = vsel %vm4656, %v6764, %v2029
      %v6861 = vsel %vm4656, %v6765, %v2031
      %v6862 = vsel %vm4656, %v6766, %v6220
      %v6863 = vsel %vm4656, %v6767, %v2033
      %v6864 = vsel %vm4656, %v6768, %v2035
      %v6865 = vsel %vm4656, %v6769, %v2037
      %v6866 = vsel %vm4656, %v6770, %v6222
      %v6867 = vsel %vm4656, %v6771, %v2039
      %v6868 = vsel %vm4656, %v6772, %v2041
      %v6869 = vsel %vm4656, %v6773, %v2043
      %v6870 = vsel %vm4656, %v6774, %v6224
      %v6871 = vsel %vm4656, %v6775, %v2045
      %v6872 = vsel %vm4656, %v6776, %v2047
      %v6873 = vsel %vm4656, %v6777, %v2049
      %v6874 = vsel %vm4656, %v6778, %v6226
      %v6875 = vsel %vm4656, %v6779, %v2051
      %v6876 = vsel %vm4656, %v6780, %v2053
      %v6877 = vsel %vm4656, %v6781, %v2055
      %v6878 = vsel %vm4656, %v6782, %v6228
      %v6879 = vsel %vm4656, %v6783, %v2057
      %v6880 = vsel %vm4656, %v6784, %v2059
      %v6881 = vsel %vm4656, %v6785, %v2061
      %v6882 = vsel %vm4656, %v6786, %v6230
      %v6883 = vsel %vm4656, %v6787, %v2063
      %v6884 = vsel %vm4656, %v6788, %v2065
      %v6885 = vsel %vm4656, %v6789, %v2067
      %v6886 = vsel %vm4656, %v6790, %v6232
      %v6887 = vsel %vm4656, %v6791, %v6234
      %v6888 = vsel %vm4656, %v6792, %v6236
      %v6889 = vsel %vm4656, %v6793, %v6238
      %v6890 = vsel %vm4656, %v6794, %v6240
      %v6891 = vsel %vm4656, %v6795, %v6242
      %v6892 = vsel %vm4656, %v6796, %v6244
      %v6893 = vsel %vm4656, %v6797, %v6246
      %v6894 = vsel %vm4656, %v6798, %v6248
      %v6895 = vsel %vm4656, %v6799, %v6250
      %v6896 = vsel %vm4656, %v6800, %v6252
      %v6897 = vsel %vm4656, %v6801, %v6254
      %v6898 = vsel %vm4656, %v6802, %v6256
      %v6899 = vsel %vm4729, %v6803, %v2167
      %v6900 = vsel %vm4729, %v6804, %v2169
      %v6901 = vsel %vm4729, %v6805, %v2171
      %v6902 = vsel %vm4729, %v6806, %v6298
      %v6903 = vsel %vm4729, %v6807, %v2173
      %v6904 = vsel %vm4729, %v6808, %v2175
      %v6905 = vsel %vm4729, %v6809, %v2177
      %v6906 = vsel %vm4729, %v6810, %v6300
      %v6907 = vsel %vm4729, %v6811, %v2179
      %v6908 = vsel %vm4729, %v6812, %v2181
      %v6909 = vsel %vm4729, %v6813, %v2183
      %v6910 = vsel %vm4729, %v6814, %v6302
      %v6911 = vsel %vm4729, %v6815, %v2185
      %v6912 = vsel %vm4729, %v6816, %v2187
      %v6913 = vsel %vm4729, %v6817, %v2189
      %v6914 = vsel %vm4729, %v6818, %v6304
      %v6915 = vsel %vm4729, %v6819, %v2191
      %v6916 = vsel %vm4729, %v6820, %v2193
      %v6917 = vsel %vm4729, %v6821, %v2195
      %v6918 = vsel %vm4729, %v6822, %v6306
      %v6919 = vsel %vm4729, %v6823, %v2197
      %v6920 = vsel %vm4729, %v6824, %v2199
      %v6921 = vsel %vm4729, %v6825, %v2201
      %v6922 = vsel %vm4729, %v6826, %v6308
      %v6923 = vsel %vm4729, %v6827, %v2203
      %v6924 = vsel %vm4729, %v6828, %v2205
      %v6925 = vsel %vm4729, %v6829, %v2207
      %v6926 = vsel %vm4729, %v6830, %v6310
      %v6927 = vsel %vm4729, %v6831, %v2209
      %v6928 = vsel %vm4729, %v6832, %v2211
      %v6929 = vsel %vm4729, %v6833, %v2213
      %v6930 = vsel %vm4729, %v6834, %v6312
      %v6931 = vsel %vm4729, %v6835, %v2215
      %v6932 = vsel %vm4729, %v6836, %v2217
      %v6933 = vsel %vm4729, %v6837, %v2219
      %v6934 = vsel %vm4729, %v6838, %v6314
      %v6935 = vsel %vm4729, %v6839, %v2221
      %v6936 = vsel %vm4729, %v6840, %v2223
      %v6937 = vsel %vm4729, %v6841, %v2225
      %v6938 = vsel %vm4729, %v6842, %v6316
      %v6939 = vsel %vm4729, %v6843, %v2227
      %v6940 = vsel %vm4729, %v6844, %v2229
      %v6941 = vsel %vm4729, %v6845, %v2231
      %v6942 = vsel %vm4729, %v6846, %v6318
      %v6943 = vsel %vm4729, %v6847, %v2233
      %v6944 = vsel %vm4729, %v6848, %v2235
      %v6945 = vsel %vm4729, %v6849, %v2237
      %v6946 = vsel %vm4729, %v6850, %v6320
      %v6947 = vsel %vm4729, %v6851, %v2239
      %v6948 = vsel %vm4729, %v6852, %v2241
      %v6949 = vsel %vm4729, %v6853, %v2243
      %v6950 = vsel %vm4729, %v6854, %v6322
      %v6951 = vsel %vm4729, %v6855, %v2245
      %v6952 = vsel %vm4729, %v6856, %v2247
      %v6953 = vsel %vm4729, %v6857, %v2249
      %v6954 = vsel %vm4729, %v6858, %v6324
      %v6955 = vsel %vm4729, %v6859, %v2251
      %v6956 = vsel %vm4729, %v6860, %v2253
      %v6957 = vsel %vm4729, %v6861, %v2255
      %v6958 = vsel %vm4729, %v6862, %v6326
      %v6959 = vsel %vm4729, %v6863, %v2257
      %v6960 = vsel %vm4729, %v6864, %v2259
      %v6961 = vsel %vm4729, %v6865, %v2261
      %v6962 = vsel %vm4729, %v6866, %v6328
      %v6963 = vsel %vm4729, %v6867, %v2263
      %v6964 = vsel %vm4729, %v6868, %v2265
      %v6965 = vsel %vm4729, %v6869, %v2267
      %v6966 = vsel %vm4729, %v6870, %v6330
      %v6967 = vsel %vm4729, %v6871, %v2269
      %v6968 = vsel %vm4729, %v6872, %v2271
      %v6969 = vsel %vm4729, %v6873, %v2273
      %v6970 = vsel %vm4729, %v6874, %v6332
      %v6971 = vsel %vm4729, %v6875, %v2275
      %v6972 = vsel %vm4729, %v6876, %v2277
      %v6973 = vsel %vm4729, %v6877, %v2279
      %v6974 = vsel %vm4729, %v6878, %v6334
      %v6975 = vsel %vm4729, %v6879, %v2281
      %v6976 = vsel %vm4729, %v6880, %v2283
      %v6977 = vsel %vm4729, %v6881, %v2285
      %v6978 = vsel %vm4729, %v6882, %v6336
      %v6979 = vsel %vm4729, %v6883, %v2287
      %v6980 = vsel %vm4729, %v6884, %v2289
      %v6981 = vsel %vm4729, %v6885, %v2291
      %v6982 = vsel %vm4729, %v6886, %v6338
      %v6983 = vsel %vm4729, %v6887, %v6340
      %v6984 = vsel %vm4729, %v6888, %v6342
      %v6985 = vsel %vm4729, %v6889, %v6344
      %v6986 = vsel %vm4729, %v6890, %v6346
      %v6987 = vsel %vm4729, %v6891, %v6348
      %v6988 = vsel %vm4729, %v6892, %v6350
      %v6989 = vsel %vm4729, %v6893, %v6352
      %v6990 = vsel %vm4729, %v6894, %v6354
      %v6991 = vsel %vm4729, %v6895, %v6356
      %v6992 = vsel %vm4729, %v6896, %v6358
      %v6993 = vsel %vm4729, %v6897, %v6360
      %v6994 = vsel %vm4729, %v6898, %v6362
      %v6995 = vsel %vm4802, %v6899, %v2390
      %v6996 = vsel %vm4802, %v6900, %v2392
      %v6997 = vsel %vm4802, %v6901, %v2394
      %v6998 = vsel %vm4802, %v6902, %v6404
      %v6999 = vsel %vm4802, %v6903, %v2396
      %v7000 = vsel %vm4802, %v6904, %v2398
      %v7001 = vsel %vm4802, %v6905, %v2400
      %v7002 = vsel %vm4802, %v6906, %v6406
      %v7003 = vsel %vm4802, %v6907, %v2402
      %v7004 = vsel %vm4802, %v6908, %v2404
      %v7005 = vsel %vm4802, %v6909, %v2406
      %v7006 = vsel %vm4802, %v6910, %v6408
      %v7007 = vsel %vm4802, %v6911, %v2408
      %v7008 = vsel %vm4802, %v6912, %v2410
      %v7009 = vsel %vm4802, %v6913, %v2412
      %v7010 = vsel %vm4802, %v6914, %v6410
      %v7011 = vsel %vm4802, %v6915, %v2414
      %v7012 = vsel %vm4802, %v6916, %v2416
      %v7013 = vsel %vm4802, %v6917, %v2418
      %v7014 = vsel %vm4802, %v6918, %v6412
      %v7015 = vsel %vm4802, %v6919, %v2420
      %v7016 = vsel %vm4802, %v6920, %v2422
      %v7017 = vsel %vm4802, %v6921, %v2424
      %v7018 = vsel %vm4802, %v6922, %v6414
      %v7019 = vsel %vm4802, %v6923, %v2426
      %v7020 = vsel %vm4802, %v6924, %v2428
      %v7021 = vsel %vm4802, %v6925, %v2430
      %v7022 = vsel %vm4802, %v6926, %v6416
      %v7023 = vsel %vm4802, %v6927, %v2432
      %v7024 = vsel %vm4802, %v6928, %v2434
      %v7025 = vsel %vm4802, %v6929, %v2436
      %v7026 = vsel %vm4802, %v6930, %v6418
      %v7027 = vsel %vm4802, %v6931, %v2438
      %v7028 = vsel %vm4802, %v6932, %v2440
      %v7029 = vsel %vm4802, %v6933, %v2442
      %v7030 = vsel %vm4802, %v6934, %v6420
      %v7031 = vsel %vm4802, %v6935, %v2444
      %v7032 = vsel %vm4802, %v6936, %v2446
      %v7033 = vsel %vm4802, %v6937, %v2448
      %v7034 = vsel %vm4802, %v6938, %v6422
      %v7035 = vsel %vm4802, %v6939, %v2450
      %v7036 = vsel %vm4802, %v6940, %v2452
      %v7037 = vsel %vm4802, %v6941, %v2454
      %v7038 = vsel %vm4802, %v6942, %v6424
      %v7039 = vsel %vm4802, %v6943, %v2456
      %v7040 = vsel %vm4802, %v6944, %v2458
      %v7041 = vsel %vm4802, %v6945, %v2460
      %v7042 = vsel %vm4802, %v6946, %v6426
      %v7043 = vsel %vm4802, %v6947, %v2462
      %v7044 = vsel %vm4802, %v6948, %v2464
      %v7045 = vsel %vm4802, %v6949, %v2466
      %v7046 = vsel %vm4802, %v6950, %v6428
      %v7047 = vsel %vm4802, %v6951, %v2468
      %v7048 = vsel %vm4802, %v6952, %v2470
      %v7049 = vsel %vm4802, %v6953, %v2472
      %v7050 = vsel %vm4802, %v6954, %v6430
      %v7051 = vsel %vm4802, %v6955, %v2474
      %v7052 = vsel %vm4802, %v6956, %v2476
      %v7053 = vsel %vm4802, %v6957, %v2478
      %v7054 = vsel %vm4802, %v6958, %v6432
      %v7055 = vsel %vm4802, %v6959, %v2480
      %v7056 = vsel %vm4802, %v6960, %v2482
      %v7057 = vsel %vm4802, %v6961, %v2484
      %v7058 = vsel %vm4802, %v6962, %v6434
      %v7059 = vsel %vm4802, %v6963, %v2486
      %v7060 = vsel %vm4802, %v6964, %v2488
      %v7061 = vsel %vm4802, %v6965, %v2490
      %v7062 = vsel %vm4802, %v6966, %v6436
      %v7063 = vsel %vm4802, %v6967, %v2492
      %v7064 = vsel %vm4802, %v6968, %v2494
      %v7065 = vsel %vm4802, %v6969, %v2496
      %v7066 = vsel %vm4802, %v6970, %v6438
      %v7067 = vsel %vm4802, %v6971, %v2498
      %v7068 = vsel %vm4802, %v6972, %v2500
      %v7069 = vsel %vm4802, %v6973, %v2502
      %v7070 = vsel %vm4802, %v6974, %v6440
      %v7071 = vsel %vm4802, %v6975, %v2504
      %v7072 = vsel %vm4802, %v6976, %v2506
      %v7073 = vsel %vm4802, %v6977, %v2508
      %v7074 = vsel %vm4802, %v6978, %v6442
      %v7075 = vsel %vm4802, %v6979, %v2510
      %v7076 = vsel %vm4802, %v6980, %v2512
      %v7077 = vsel %vm4802, %v6981, %v2514
      %v7078 = vsel %vm4802, %v6982, %v6444
      %v7079 = vsel %vm4802, %v6983, %v6446
      %v7080 = vsel %vm4802, %v6984, %v6448
      %v7081 = vsel %vm4802, %v6985, %v6450
      %v7082 = vsel %vm4802, %v6986, %v6452
      %v7083 = vsel %vm4802, %v6987, %v6454
      %v7084 = vsel %vm4802, %v6988, %v6456
      %v7085 = vsel %vm4802, %v6989, %v6458
      %v7086 = vsel %vm4802, %v6990, %v6460
      %v7087 = vsel %vm4802, %v6991, %v6462
      %v7088 = vsel %vm4802, %v6992, %v6464
      %v7089 = vsel %vm4802, %v6993, %v6466
      %v7090 = vsel %vm4802, %v6994, %v6468
      %v7091 = vsel %vm4875, %v6995, %v2613
      %v7092 = vsel %vm4875, %v6996, %v2615
      %v7093 = vsel %vm4875, %v6997, %v2617
      %v7094 = vsel %vm4875, %v6998, %v6510
      %v7095 = vsel %vm4875, %v6999, %v2619
      %v7096 = vsel %vm4875, %v7000, %v2621
      %v7097 = vsel %vm4875, %v7001, %v2623
      %v7098 = vsel %vm4875, %v7002, %v6512
      %v7099 = vsel %vm4875, %v7003, %v2625
      %v7100 = vsel %vm4875, %v7004, %v2627
      %v7101 = vsel %vm4875, %v7005, %v2629
      %v7102 = vsel %vm4875, %v7006, %v6514
      %v7103 = vsel %vm4875, %v7007, %v2631
      %v7104 = vsel %vm4875, %v7008, %v2633
      %v7105 = vsel %vm4875, %v7009, %v2635
      %v7106 = vsel %vm4875, %v7010, %v6516
      %v7107 = vsel %vm4875, %v7011, %v2637
      %v7108 = vsel %vm4875, %v7012, %v2639
      %v7109 = vsel %vm4875, %v7013, %v2641
      %v7110 = vsel %vm4875, %v7014, %v6518
      %v7111 = vsel %vm4875, %v7015, %v2643
      %v7112 = vsel %vm4875, %v7016, %v2645
      %v7113 = vsel %vm4875, %v7017, %v2647
      %v7114 = vsel %vm4875, %v7018, %v6520
      %v7115 = vsel %vm4875, %v7019, %v2649
      %v7116 = vsel %vm4875, %v7020, %v2651
      %v7117 = vsel %vm4875, %v7021, %v2653
      %v7118 = vsel %vm4875, %v7022, %v6522
      %v7119 = vsel %vm4875, %v7023, %v2655
      %v7120 = vsel %vm4875, %v7024, %v2657
      %v7121 = vsel %vm4875, %v7025, %v2659
      %v7122 = vsel %vm4875, %v7026, %v6524
      %v7123 = vsel %vm4875, %v7027, %v2661
      %v7124 = vsel %vm4875, %v7028, %v2663
      %v7125 = vsel %vm4875, %v7029, %v2665
      %v7126 = vsel %vm4875, %v7030, %v6526
      %v7127 = vsel %vm4875, %v7031, %v2667
      %v7128 = vsel %vm4875, %v7032, %v2669
      %v7129 = vsel %vm4875, %v7033, %v2671
      %v7130 = vsel %vm4875, %v7034, %v6528
      %v7131 = vsel %vm4875, %v7035, %v2673
      %v7132 = vsel %vm4875, %v7036, %v2675
      %v7133 = vsel %vm4875, %v7037, %v2677
      %v7134 = vsel %vm4875, %v7038, %v6530
      %v7135 = vsel %vm4875, %v7039, %v2679
      %v7136 = vsel %vm4875, %v7040, %v2681
      %v7137 = vsel %vm4875, %v7041, %v2683
      %v7138 = vsel %vm4875, %v7042, %v6532
      %v7139 = vsel %vm4875, %v7043, %v2685
      %v7140 = vsel %vm4875, %v7044, %v2687
      %v7141 = vsel %vm4875, %v7045, %v2689
      %v7142 = vsel %vm4875, %v7046, %v6534
      %v7143 = vsel %vm4875, %v7047, %v2691
      %v7144 = vsel %vm4875, %v7048, %v2693
      %v7145 = vsel %vm4875, %v7049, %v2695
      %v7146 = vsel %vm4875, %v7050, %v6536
      %v7147 = vsel %vm4875, %v7051, %v2697
      %v7148 = vsel %vm4875, %v7052, %v2699
      %v7149 = vsel %vm4875, %v7053, %v2701
      %v7150 = vsel %vm4875, %v7054, %v6538
      %v7151 = vsel %vm4875, %v7055, %v2703
      %v7152 = vsel %vm4875, %v7056, %v2705
      %v7153 = vsel %vm4875, %v7057, %v2707
      %v7154 = vsel %vm4875, %v7058, %v6540
      %v7155 = vsel %vm4875, %v7059, %v2709
      %v7156 = vsel %vm4875, %v7060, %v2711
      %v7157 = vsel %vm4875, %v7061, %v2713
      %v7158 = vsel %vm4875, %v7062, %v6542
      %v7159 = vsel %vm4875, %v7063, %v2715
      %v7160 = vsel %vm4875, %v7064, %v2717
      %v7161 = vsel %vm4875, %v7065, %v2719
      %v7162 = vsel %vm4875, %v7066, %v6544
      %v7163 = vsel %vm4875, %v7067, %v2721
      %v7164 = vsel %vm4875, %v7068, %v2723
      %v7165 = vsel %vm4875, %v7069, %v2725
      %v7166 = vsel %vm4875, %v7070, %v6546
      %v7167 = vsel %vm4875, %v7071, %v2727
      %v7168 = vsel %vm4875, %v7072, %v2729
      %v7169 = vsel %vm4875, %v7073, %v2731
      %v7170 = vsel %vm4875, %v7074, %v6548
      %v7171 = vsel %vm4875, %v7075, %v2733
      %v7172 = vsel %vm4875, %v7076, %v2735
      %v7173 = vsel %vm4875, %v7077, %v2737
      %v7174 = vsel %vm4875, %v7078, %v6550
      %v7175 = vsel %vm4875, %v7079, %v6552
      %v7176 = vsel %vm4875, %v7080, %v6554
      %v7177 = vsel %vm4875, %v7081, %v6556
      %v7178 = vsel %vm4875, %v7082, %v6558
      %v7179 = vsel %vm4875, %v7083, %v6560
      %v7180 = vsel %vm4875, %v7084, %v6562
      %v7181 = vsel %vm4875, %v7085, %v6564
      %v7182 = vsel %vm4875, %v7086, %v6566
      %v7183 = vsel %vm4875, %v7087, %v6568
      %v7184 = vsel %vm4875, %v7088, %v6570
      %v7185 = vsel %vm4875, %v7089, %v6572
      %v7186 = vsel %vm4875, %v7090, %v6574
      %v7283 = vrot.slane %v7091, 1
      %v7284 = vrot.slane %v7092, 1
      %v7285 = vsel %vm381, %v7283, %v7284
      %v7286 = vrot.slane %v7093, 1
      %v7287 = vsel %vm381, %v7284, %v7286
      %v7288 = vrot.slane %v7094, 1
      %v7289 = vsel %vm381, %v7286, %v7288
      %v7290 = vrot.slane %v7095, 1
      %v7291 = vrot.slane %v7096, 1
      %v7292 = vsel %vm381, %v7290, %v7291
      %v7293 = vrot.slane %v7097, 1
      %v7294 = vsel %vm381, %v7291, %v7293
      %v7295 = vrot.slane %v7098, 1
      %v7296 = vsel %vm381, %v7293, %v7295
      %v7297 = vrot.slane %v7099, 1
      %v7298 = vrot.slane %v7100, 1
      %v7299 = vsel %vm381, %v7297, %v7298
      %v7300 = vrot.slane %v7101, 1
      %v7301 = vsel %vm381, %v7298, %v7300
      %v7302 = vrot.slane %v7102, 1
      %v7303 = vsel %vm381, %v7300, %v7302
      %v7304 = vrot.slane %v7103, 1
      %v7305 = vrot.slane %v7104, 1
      %v7306 = vsel %vm381, %v7304, %v7305
      %v7307 = vrot.slane %v7105, 1
      %v7308 = vsel %vm381, %v7305, %v7307
      %v7309 = vrot.slane %v7106, 1
      %v7310 = vsel %vm381, %v7307, %v7309
      %v7311 = vrot.slane %v7107, 1
      %v7312 = vrot.slane %v7108, 1
      %v7313 = vsel %vm381, %v7311, %v7312
      %v7314 = vrot.slane %v7109, 1
      %v7315 = vsel %vm381, %v7312, %v7314
      %v7316 = vrot.slane %v7110, 1
      %v7317 = vsel %vm381, %v7314, %v7316
      %v7318 = vrot.slane %v7111, 1
      %v7319 = vrot.slane %v7112, 1
      %v7320 = vsel %vm381, %v7318, %v7319
      %v7321 = vrot.slane %v7113, 1
      %v7322 = vsel %vm381, %v7319, %v7321
      %v7323 = vrot.slane %v7114, 1
      %v7324 = vsel %vm381, %v7321, %v7323
      %v7325 = vrot.slane %v7115, 1
      %v7326 = vrot.slane %v7116, 1
      %v7327 = vsel %vm381, %v7325, %v7326
      %v7328 = vrot.slane %v7117, 1
      %v7329 = vsel %vm381, %v7326, %v7328
      %v7330 = vrot.slane %v7118, 1
      %v7331 = vsel %vm381, %v7328, %v7330
      %v7332 = vrot.slane %v7119, 1
      %v7333 = vrot.slane %v7120, 1
      %v7334 = vsel %vm381, %v7332, %v7333
      %v7335 = vrot.slane %v7121, 1
      %v7336 = vsel %vm381, %v7333, %v7335
      %v7337 = vrot.slane %v7122, 1
      %v7338 = vsel %vm381, %v7335, %v7337
      %v7339 = vrot.slane %v7123, 1
      %v7340 = vrot.slane %v7124, 1
      %v7341 = vsel %vm381, %v7339, %v7340
      %v7342 = vrot.slane %v7125, 1
      %v7343 = vsel %vm381, %v7340, %v7342
      %v7344 = vrot.slane %v7126, 1
      %v7345 = vsel %vm381, %v7342, %v7344
      %v7346 = vrot.slane %v7127, 1
      %v7347 = vrot.slane %v7128, 1
      %v7348 = vsel %vm381, %v7346, %v7347
      %v7349 = vrot.slane %v7129, 1
      %v7350 = vsel %vm381, %v7347, %v7349
      %v7351 = vrot.slane %v7130, 1
      %v7352 = vsel %vm381, %v7349, %v7351
      %v7353 = vrot.slane %v7131, 1
      %v7354 = vrot.slane %v7132, 1
      %v7355 = vsel %vm381, %v7353, %v7354
      %v7356 = vrot.slane %v7133, 1
      %v7357 = vsel %vm381, %v7354, %v7356
      %v7358 = vrot.slane %v7134, 1
      %v7359 = vsel %vm381, %v7356, %v7358
      %v7360 = vrot.slane %v7135, 1
      %v7361 = vrot.slane %v7136, 1
      %v7362 = vsel %vm381, %v7360, %v7361
      %v7363 = vrot.slane %v7137, 1
      %v7364 = vsel %vm381, %v7361, %v7363
      %v7365 = vrot.slane %v7138, 1
      %v7366 = vsel %vm381, %v7363, %v7365
      %v7367 = vrot.slane %v7139, 1
      %v7368 = vrot.slane %v7140, 1
      %v7369 = vsel %vm381, %v7367, %v7368
      %v7370 = vrot.slane %v7141, 1
      %v7371 = vsel %vm381, %v7368, %v7370
      %v7372 = vrot.slane %v7142, 1
      %v7373 = vsel %vm381, %v7370, %v7372
      %v7374 = vrot.slane %v7143, 1
      %v7375 = vrot.slane %v7144, 1
      %v7376 = vsel %vm381, %v7374, %v7375
      %v7377 = vrot.slane %v7145, 1
      %v7378 = vsel %vm381, %v7375, %v7377
      %v7379 = vrot.slane %v7146, 1
      %v7380 = vsel %vm381, %v7377, %v7379
      %v7381 = vrot.slane %v7147, 1
      %v7382 = vrot.slane %v7148, 1
      %v7383 = vsel %vm381, %v7381, %v7382
      %v7384 = vrot.slane %v7149, 1
      %v7385 = vsel %vm381, %v7382, %v7384
      %v7386 = vrot.slane %v7150, 1
      %v7387 = vsel %vm381, %v7384, %v7386
      %v7388 = vrot.slane %v7151, 1
      %v7389 = vrot.slane %v7152, 1
      %v7390 = vsel %vm381, %v7388, %v7389
      %v7391 = vrot.slane %v7153, 1
      %v7392 = vsel %vm381, %v7389, %v7391
      %v7393 = vrot.slane %v7154, 1
      %v7394 = vsel %vm381, %v7391, %v7393
      %v7395 = vrot.slane %v7155, 1
      %v7396 = vrot.slane %v7156, 1
      %v7397 = vsel %vm381, %v7395, %v7396
      %v7398 = vrot.slane %v7157, 1
      %v7399 = vsel %vm381, %v7396, %v7398
      %v7400 = vrot.slane %v7158, 1
      %v7401 = vsel %vm381, %v7398, %v7400
      %v7402 = vrot.slane %v7159, 1
      %v7403 = vrot.slane %v7160, 1
      %v7404 = vsel %vm381, %v7402, %v7403
      %v7405 = vrot.slane %v7161, 1
      %v7406 = vsel %vm381, %v7403, %v7405
      %v7407 = vrot.slane %v7162, 1
      %v7408 = vsel %vm381, %v7405, %v7407
      %v7409 = vrot.slane %v7163, 1
      %v7410 = vrot.slane %v7164, 1
      %v7411 = vsel %vm381, %v7409, %v7410
      %v7412 = vrot.slane %v7165, 1
      %v7413 = vsel %vm381, %v7410, %v7412
      %v7414 = vrot.slane %v7166, 1
      %v7415 = vsel %vm381, %v7412, %v7414
      %v7416 = vrot.slane %v7167, 1
      %v7417 = vrot.slane %v7168, 1
      %v7418 = vsel %vm381, %v7416, %v7417
      %v7419 = vrot.slane %v7169, 1
      %v7420 = vsel %vm381, %v7417, %v7419
      %v7421 = vrot.slane %v7170, 1
      %v7422 = vsel %vm381, %v7419, %v7421
      %v7423 = vrot.slane %v7171, 1
      %v7424 = vrot.slane %v7172, 1
      %v7425 = vsel %vm381, %v7423, %v7424
      %v7426 = vrot.slane %v7173, 1
      %v7427 = vsel %vm381, %v7424, %v7426
      %v7428 = vrot.slane %v7174, 1
      %v7429 = vsel %vm381, %v7426, %v7428
      %v7430 = vrot.slane %v7175, 1
      %v7431 = vrot.slane %v7176, 1
      %v7432 = vsel %vm381, %v7430, %v7431
      %v7433 = vrot.slane %v7177, 1
      %v7434 = vsel %vm381, %v7431, %v7433
      %v7435 = vrot.slane %v7178, 1
      %v7436 = vsel %vm381, %v7433, %v7435
      %v7437 = vrot.slane %v7179, 1
      %v7438 = vrot.slane %v7180, 1
      %v7439 = vsel %vm381, %v7437, %v7438
      %v7440 = vrot.slane %v7181, 1
      %v7441 = vsel %vm381, %v7438, %v7440
      %v7442 = vrot.slane %v7182, 1
      %v7443 = vsel %vm381, %v7440, %v7442
      %v7444 = vrot.slane %v7183, 1
      %v7445 = vrot.slane %v7184, 1
      %v7446 = vsel %vm381, %v7444, %v7445
      %v7447 = vrot.slane %v7185, 1
      %v7448 = vsel %vm381, %v7445, %v7447
      %v7449 = vrot.slane %v7186, 1
      %v7450 = vsel %vm381, %v7447, %v7449
      %7451 = vrot.lane.b32.xlu0 %v7285, 16
      %v7452 = vpop.permute.xlu0 %7451
      %7453 = vrot.lane.b32.xlu0 %v7287, 16
      %v7454 = vpop.permute.xlu0 %7453
      %7455 = vrot.lane.b32.xlu0 %v7289, 16
      %v7456 = vpop.permute.xlu0 %7455
      %7457 = vrot.lane.b32.xlu0 %v7292, 16
      %v7458 = vpop.permute.xlu0 %7457
      %7459 = vrot.lane.b32.xlu0 %v7294, 16
      %v7460 = vpop.permute.xlu0 %7459
      %7461 = vrot.lane.b32.xlu0 %v7296, 16
      %v7462 = vpop.permute.xlu0 %7461
      %7463 = vrot.lane.b32.xlu0 %v7299, 16
      %v7464 = vpop.permute.xlu0 %7463
      %7465 = vrot.lane.b32.xlu0 %v7301, 16
      %v7466 = vpop.permute.xlu0 %7465
      %7467 = vrot.lane.b32.xlu0 %v7303, 16
      %v7468 = vpop.permute.xlu0 %7467
      %7469 = vrot.lane.b32.xlu0 %v7306, 16
      %v7470 = vpop.permute.xlu0 %7469
      %7471 = vrot.lane.b32.xlu0 %v7308, 16
      %v7472 = vpop.permute.xlu0 %7471
      %7473 = vrot.lane.b32.xlu0 %v7310, 16
      %v7474 = vpop.permute.xlu0 %7473
      %7475 = vrot.lane.b32.xlu0 %v7313, 16
      %v7476 = vpop.permute.xlu0 %7475
      %7477 = vrot.lane.b32.xlu0 %v7315, 16
      %v7478 = vpop.permute.xlu0 %7477
      %7479 = vrot.lane.b32.xlu0 %v7317, 16
      %v7480 = vpop.permute.xlu0 %7479
      %7481 = vrot.lane.b32.xlu0 %v7320, 16
      %v7482 = vpop.permute.xlu0 %7481
      %7483 = vrot.lane.b32.xlu0 %v7322, 16
      %v7484 = vpop.permute.xlu0 %7483
      %7485 = vrot.lane.b32.xlu0 %v7324, 16
      %v7486 = vpop.permute.xlu0 %7485
      %7487 = vrot.lane.b32.xlu0 %v7327, 16
      %v7488 = vpop.permute.xlu0 %7487
      %7489 = vrot.lane.b32.xlu0 %v7329, 16
      %v7490 = vpop.permute.xlu0 %7489
      %7491 = vrot.lane.b32.xlu0 %v7331, 16
      %v7492 = vpop.permute.xlu0 %7491
      %7493 = vrot.lane.b32.xlu0 %v7334, 16
      %v7494 = vpop.permute.xlu0 %7493
      %7495 = vrot.lane.b32.xlu0 %v7336, 16
      %v7496 = vpop.permute.xlu0 %7495
      %7497 = vrot.lane.b32.xlu0 %v7338, 16
      %v7498 = vpop.permute.xlu0 %7497
      %7499 = vrot.lane.b32.xlu0 %v7341, 16
      %v7500 = vpop.permute.xlu0 %7499
      %7501 = vrot.lane.b32.xlu0 %v7343, 16
      %v7502 = vpop.permute.xlu0 %7501
      %7503 = vrot.lane.b32.xlu0 %v7345, 16
      %v7504 = vpop.permute.xlu0 %7503
      %7505 = vrot.lane.b32.xlu0 %v7348, 16
      %v7506 = vpop.permute.xlu0 %7505
      %7507 = vrot.lane.b32.xlu0 %v7350, 16
      %v7508 = vpop.permute.xlu0 %7507
      %7509 = vrot.lane.b32.xlu0 %v7352, 16
      %v7510 = vpop.permute.xlu0 %7509
      %7511 = vrot.lane.b32.xlu0 %v7355, 16
      %v7512 = vpop.permute.xlu0 %7511
      %7513 = vrot.lane.b32.xlu0 %v7357, 16
      %v7514 = vpop.permute.xlu0 %7513
      %7515 = vrot.lane.b32.xlu0 %v7359, 16
      %v7516 = vpop.permute.xlu0 %7515
      %7517 = vrot.lane.b32.xlu0 %v7362, 16
      %v7518 = vpop.permute.xlu0 %7517
      %7519 = vrot.lane.b32.xlu0 %v7364, 16
      %v7520 = vpop.permute.xlu0 %7519
      %7521 = vrot.lane.b32.xlu0 %v7366, 16
      %v7522 = vpop.permute.xlu0 %7521
      %7523 = vrot.lane.b32.xlu0 %v7369, 16
      %v7524 = vpop.permute.xlu0 %7523
      %7525 = vrot.lane.b32.xlu0 %v7371, 16
      %v7526 = vpop.permute.xlu0 %7525
      %7527 = vrot.lane.b32.xlu0 %v7373, 16
      %v7528 = vpop.permute.xlu0 %7527
      %7529 = vrot.lane.b32.xlu0 %v7376, 16
      %v7530 = vpop.permute.xlu0 %7529
      %7531 = vrot.lane.b32.xlu0 %v7378, 16
      %v7532 = vpop.permute.xlu0 %7531
      %7533 = vrot.lane.b32.xlu0 %v7380, 16
      %v7534 = vpop.permute.xlu0 %7533
      %7535 = vrot.lane.b32.xlu0 %v7383, 16
      %v7536 = vpop.permute.xlu0 %7535
      %7537 = vrot.lane.b32.xlu0 %v7385, 16
      %v7538 = vpop.permute.xlu0 %7537
      %7539 = vrot.lane.b32.xlu0 %v7387, 16
      %v7540 = vpop.permute.xlu0 %7539
      %7541 = vrot.lane.b32.xlu0 %v7390, 16
      %v7542 = vpop.permute.xlu0 %7541
      %7543 = vrot.lane.b32.xlu0 %v7392, 16
      %v7544 = vpop.permute.xlu0 %7543
      %7545 = vrot.lane.b32.xlu0 %v7394, 16
      %v7546 = vpop.permute.xlu0 %7545
      %7547 = vrot.lane.b32.xlu0 %v7397, 16
      %v7548 = vpop.permute.xlu0 %7547
      %7549 = vrot.lane.b32.xlu0 %v7399, 16
      %v7550 = vpop.permute.xlu0 %7549
      %7551 = vrot.lane.b32.xlu0 %v7401, 16
      %v7552 = vpop.permute.xlu0 %7551
      %7553 = vrot.lane.b32.xlu0 %v7404, 16
      %v7554 = vpop.permute.xlu0 %7553
      %7555 = vrot.lane.b32.xlu0 %v7406, 16
      %v7556 = vpop.permute.xlu0 %7555
      %7557 = vrot.lane.b32.xlu0 %v7408, 16
      %v7558 = vpop.permute.xlu0 %7557
      %7559 = vrot.lane.b32.xlu0 %v7411, 16
      %v7560 = vpop.permute.xlu0 %7559
      %7561 = vrot.lane.b32.xlu0 %v7413, 16
      %v7562 = vpop.permute.xlu0 %7561
      %7563 = vrot.lane.b32.xlu0 %v7415, 16
      %v7564 = vpop.permute.xlu0 %7563
      %7565 = vrot.lane.b32.xlu0 %v7418, 16
      %v7566 = vpop.permute.xlu0 %7565
      %7567 = vrot.lane.b32.xlu0 %v7420, 16
      %v7568 = vpop.permute.xlu0 %7567
      %7569 = vrot.lane.b32.xlu0 %v7422, 16
      %v7570 = vpop.permute.xlu0 %7569
      %7571 = vrot.lane.b32.xlu0 %v7425, 16
      %v7572 = vpop.permute.xlu0 %7571
      %7573 = vrot.lane.b32.xlu0 %v7427, 16
      %v7574 = vpop.permute.xlu0 %7573
      %7575 = vrot.lane.b32.xlu0 %v7429, 16
      %v7576 = vpop.permute.xlu0 %7575
      %7577 = vrot.lane.b32.xlu0 %v7432, 16
      %v7578 = vpop.permute.xlu0 %7577
      %7579 = vrot.lane.b32.xlu0 %v7434, 16
      %v7580 = vpop.permute.xlu0 %7579
      %7581 = vrot.lane.b32.xlu0 %v7436, 16
      %v7582 = vpop.permute.xlu0 %7581
      %7583 = vrot.lane.b32.xlu0 %v7439, 16
      %v7584 = vpop.permute.xlu0 %7583
      %7585 = vrot.lane.b32.xlu0 %v7441, 16
      %v7586 = vpop.permute.xlu0 %7585
      %7587 = vrot.lane.b32.xlu0 %v7443, 16
      %v7588 = vpop.permute.xlu0 %7587
      %7589 = vrot.lane.b32.xlu0 %v7446, 16
      %v7590 = vpop.permute.xlu0 %7589
      %7591 = vrot.lane.b32.xlu0 %v7448, 16
      %v7592 = vpop.permute.xlu0 %7591
      %7593 = vrot.lane.b32.xlu0 %v7450, 16
      %v7594 = vpop.permute.xlu0 %7593
      %vm7667 = vcmask 130048
      %v7668 = vsel %vm7667, %v5387, %v7452
      %v7669 = vsel %vm7667, %v5388, %v7454
      %v7670 = vsel %vm7667, %v5389, %v7456
      %v7671 = vsel %vm7667, %v5390, %v7458
      %v7672 = vsel %vm7667, %v5391, %v7460
      %v7673 = vsel %vm7667, %v5392, %v7462
      %v7674 = vsel %vm7667, %v5393, %v7464
      %v7675 = vsel %vm7667, %v5394, %v7466
      %v7676 = vsel %vm7667, %v5395, %v7468
      %v7677 = vsel %vm7667, %v5396, %v7470
      %v7678 = vsel %vm7667, %v5397, %v7472
      %v7679 = vsel %vm7667, %v5398, %v7474
      %v7680 = vsel %vm7667, %v5399, %v7476
      %v7681 = vsel %vm7667, %v5400, %v7478
      %v7682 = vsel %vm7667, %v5401, %v7480
      %v7683 = vsel %vm7667, %v5402, %v7482
      %v7684 = vsel %vm7667, %v5403, %v7484
      %v7685 = vsel %vm7667, %v5404, %v7486
      %v7686 = vsel %vm7667, %v5405, %v7488
      %v7687 = vsel %vm7667, %v5406, %v7490
      %v7688 = vsel %vm7667, %v5407, %v7492
      %v7689 = vsel %vm7667, %v5408, %v7494
      %v7690 = vsel %vm7667, %v5409, %v7496
      %v7691 = vsel %vm7667, %v5410, %v7498
      %v7692 = vsel %vm7667, %v5411, %v7500
      %v7693 = vsel %vm7667, %v5412, %v7502
      %v7694 = vsel %vm7667, %v5413, %v7504
      %v7695 = vsel %vm7667, %v5414, %v7506
      %v7696 = vsel %vm7667, %v5415, %v7508
      %v7697 = vsel %vm7667, %v5416, %v7510
      %v7698 = vsel %vm7667, %v5417, %v7512
      %v7699 = vsel %vm7667, %v5418, %v7514
      %v7700 = vsel %vm7667, %v5419, %v7516
      %v7701 = vsel %vm7667, %v5420, %v7518
      %v7702 = vsel %vm7667, %v5421, %v7520
      %v7703 = vsel %vm7667, %v5422, %v7522
      %v7704 = vsel %vm7667, %v5423, %v7524
      %v7705 = vsel %vm7667, %v5424, %v7526
      %v7706 = vsel %vm7667, %v5425, %v7528
      %v7707 = vsel %vm7667, %v5426, %v7530
      %v7708 = vsel %vm7667, %v5427, %v7532
      %v7709 = vsel %vm7667, %v5428, %v7534
      %v7710 = vsel %vm7667, %v5429, %v7536
      %v7711 = vsel %vm7667, %v5430, %v7538
      %v7712 = vsel %vm7667, %v5431, %v7540
      %v7713 = vsel %vm7667, %v5432, %v7542
      %v7714 = vsel %vm7667, %v5433, %v7544
      %v7715 = vsel %vm7667, %v5434, %v7546
      %v7716 = vsel %vm7667, %v5435, %v7548
      %v7717 = vsel %vm7667, %v5436, %v7550
      %v7718 = vsel %vm7667, %v5437, %v7552
      %v7719 = vsel %vm7667, %v5438, %v7554
      %v7720 = vsel %vm7667, %v5439, %v7556
      %v7721 = vsel %vm7667, %v5440, %v7558
      %v7722 = vsel %vm7667, %v5441, %v7560
      %v7723 = vsel %vm7667, %v5442, %v7562
      %v7724 = vsel %vm7667, %v5443, %v7564
      %v7725 = vsel %vm7667, %v5444, %v7566
      %v7726 = vsel %vm7667, %v5445, %v7568
      %v7727 = vsel %vm7667, %v5446, %v7570
      %v7728 = vsel %vm7667, %v5447, %v7572
      %v7729 = vsel %vm7667, %v5448, %v7574
      %v7730 = vsel %vm7667, %v5449, %v7576
      %v7731 = vsel %vm7667, %v5450, %v7578
      %v7732 = vsel %vm7667, %v5451, %v7580
      %v7733 = vsel %vm7667, %v5452, %v7582
      %v7734 = vsel %vm7667, %v5453, %v7584
      %v7735 = vsel %vm7667, %v5454, %v7586
      %v7736 = vsel %vm7667, %v5455, %v7588
      %v7737 = vsel %vm7667, %v5456, %v7590
      %v7738 = vsel %vm7667, %v5457, %v7592
      %v7739 = vsel %vm7667, %v5458, %v7594
      %v7740 = vpack.c.bf16 %v7669, %v7668
      %v7741 = vpack.c.bf16 %v7671, %v7670
      %v7742 = vpack.c.bf16 %v7673, %v7672
      %v7743 = vpack.c.bf16 %v7675, %v7674
      %v7744 = vpack.c.bf16 %v7677, %v7676
      %v7745 = vpack.c.bf16 %v7679, %v7678
      %v7746 = vpack.c.bf16 %v7681, %v7680
      %v7747 = vpack.c.bf16 %v7683, %v7682
      %v7748 = vpack.c.bf16 %v7685, %v7684
      %v7749 = vpack.c.bf16 %v7687, %v7686
      %v7750 = vpack.c.bf16 %v7689, %v7688
      %v7751 = vpack.c.bf16 %v7691, %v7690
      %v7752 = vpack.c.bf16 %v7693, %v7692
      %v7753 = vpack.c.bf16 %v7695, %v7694
      %v7754 = vpack.c.bf16 %v7697, %v7696
      %v7755 = vpack.c.bf16 %v7699, %v7698
      %v7756 = vpack.c.bf16 %v7701, %v7700
      %v7757 = vpack.c.bf16 %v7703, %v7702
      %v7758 = vpack.c.bf16 %v7705, %v7704
      %v7759 = vpack.c.bf16 %v7707, %v7706
      %v7760 = vpack.c.bf16 %v7709, %v7708
      %v7761 = vpack.c.bf16 %v7711, %v7710
      %v7762 = vpack.c.bf16 %v7713, %v7712
      %v7763 = vpack.c.bf16 %v7715, %v7714
      %v7764 = vpack.c.bf16 %v7717, %v7716
      %v7765 = vpack.c.bf16 %v7719, %v7718
      %v7766 = vpack.c.bf16 %v7721, %v7720
      %v7767 = vpack.c.bf16 %v7723, %v7722
      %v7768 = vpack.c.bf16 %v7725, %v7724
      %v7769 = vpack.c.bf16 %v7727, %v7726
      %v7770 = vpack.c.bf16 %v7729, %v7728
      %v7771 = vpack.c.bf16 %v7731, %v7730
      %v7772 = vpack.c.bf16 %v7733, %v7732
      %v7773 = vpack.c.bf16 %v7735, %v7734
      %v7774 = vpack.c.bf16 %v7737, %v7736
      %v7775 = vpack.c.bf16 %v7739, %v7738
      %v7776 = vld [vmem:[%s1] sm:$0xf]
      %v7777 = vld [vmem:[%s1 + $0x4] sm:$0xf]
      %v7778 = vld [vmem:[%s1 + $0x8] sm:$0xf]
      %v7779 = vld [vmem:[%s1 + $0xc] sm:$0x1]
      %v7780 = vld [vmem:[%s2] sm:$0x1]
      %v7782 = vlaneseq
      %v7783 = vshrl.u32 %v7782, 7
      %v7784 = vsub.s32 0, %v7783
      %v7785 = vrot.slane %v7780, %v7784
      %v7791 = vunpack.c.l.b16 %v7776
      %v7792 = vunpack.c.l.b16 %v7777
      %v7793 = vunpack.c.l.b16 %v7778
      %v7794 = vunpack.c.l.b16 %v7779
      %v7795 = vpack.c.b16 %v7792, %v7791
      %v7796 = vpack.c.b16 %v7794, %v7793
      %vm7798 = vcmask 203776
      %v7800 = vsel %vm7798, %v7740, 0
      %v7803 = vsel %vm7798, %v7741, 0
      %v7806 = vsel %vm7798, %v7742, 0
      %v7809 = vsel %vm7798, %v7743, 0
      %v7812 = vsel %vm7798, %v7744, 0
      %v7815 = vsel %vm7798, %v7745, 0
      %v7818 = vsel %vm7798, %v7746, 0
      %v7821 = vsel %vm7798, %v7747, 0
      %v7824 = vsel %vm7798, %v7748, 0
      %v7827 = vsel %vm7798, %v7749, 0
      %v7830 = vsel %vm7798, %v7750, 0
      %v7833 = vsel %vm7798, %v7751, 0
      %v7836 = vsel %vm7798, %v7752, 0
      %v7839 = vsel %vm7798, %v7753, 0
      %v7842 = vsel %vm7798, %v7754, 0
      %v7845 = vsel %vm7798, %v7755, 0
      %v7848 = vsel %vm7798, %v7756, 0
      %v7851 = vsel %vm7798, %v7757, 0
      %v7854 = vsel %vm7798, %v7758, 0
      %v7857 = vsel %vm7798, %v7759, 0
      %v7860 = vsel %vm7798, %v7760, 0
      %v7863 = vsel %vm7798, %v7761, 0
      %v7866 = vsel %vm7798, %v7762, 0
      %v7869 = vsel %vm7798, %v7763, 0
      %v7872 = vsel %vm7798, %v7764, 0
      %v7875 = vsel %vm7798, %v7765, 0
      %v7878 = vsel %vm7798, %v7766, 0
      %v7881 = vsel %vm7798, %v7767, 0
      %v7884 = vsel %vm7798, %v7768, 0
      %v7887 = vsel %vm7798, %v7769, 0
      %v7890 = vsel %vm7798, %v7770, 0
      %v7893 = vsel %vm7798, %v7771, 0
      %v7896 = vsel %vm7798, %v7772, 0
      %v7899 = vsel %vm7798, %v7773, 0
      %v7902 = vsel %vm7798, %v7774, 0
      %v7905 = vsel %vm7798, %v7775, 0
      %v7907 = vsel %vm1536, 4294967295, 65535
      %v7908 = vsel %vm1151, %v7907, 0
      %v7910 = vand.u32 %v7796, %v7908
      %7912 = vmatprep.subr.bf16.mxu0 0
      %7913 = vmatpush1.bf16.msra.mxu0 %v7795
      %7914 = vmatprep.subr.bf16.mxu0 0
      %7915 = vmatpush1.bf16.msra.mxu0 %v7910
      %7916 = vmatprep.subr.bf16.mxu0 0
      %7917 = vmatpush1.bf16.msra.mxu0 0
      %7918 = vmatprep.subr.bf16.mxu0 0
      %7919 = vmatpush1.bf16.msra.mxu0 0
      %7920 = vmatprep.subr.bf16.mxu0 0
      %7921 = vmatpush1.bf16.msra.mxu0 0
      %7922 = vmatprep.subr.bf16.mxu0 0
      %7923 = vmatpush1.bf16.msra.mxu0 0
      %7924 = vmatprep.subr.bf16.mxu0 0
      %7925 = vmatpush1.bf16.msra.mxu0 0
      %7926 = vmatprep.subr.bf16.mxu0 0
      %7927 = vmatpush1.bf16.msra.mxu0 0
      %7928 = vmatprep.subr.bf16.mxu0 0
      %7929 = vmatpush1.bf16.msra.mxu0 0
      %7930 = vmatprep.subr.bf16.mxu0 0
      %7931 = vmatpush1.bf16.msra.mxu0 0
      %7932 = vmatprep.subr.bf16.mxu0 0
      %7933 = vmatpush1.bf16.msra.mxu0 0
      %7934 = vmatprep.subr.bf16.mxu0 0
      %7935 = vmatpush1.bf16.msra.mxu0 0
      %7936 = vmatprep.subr.bf16.mxu0 0
      %7937 = vmatpush1.bf16.msra.mxu0 0
      %7938 = vmatprep.subr.bf16.mxu0 0
      %7939 = vmatpush1.bf16.msra.mxu0 0
      %7940 = vmatprep.subr.bf16.mxu0 0
      %7941 = vmatpush1.bf16.msra.mxu0 0
      %7942 = vmatprep.subr.bf16.mxu0 0
      %7943 = vmatpush1.bf16.msra.mxu0 0
      %7944 = vmatprep.mubr.bf16.mxu0 0
      %7945 = vmatmul.mubr.bf16.gmra.mrb[0].mxu0 %v7800
      %v7946 = vpop.f32.mrb[0].mxu0
      %v7947 = vadd.f32 %v7785, %v7946
      %v7948 = vpop.f32.mrb[0].mxu0
      %v7949 = vpop.f32.mrb[0].mxu0
      %v7950 = vadd.f32 %v7785, %v7949
      %v7951 = vpop.f32.mrb[0].mxu0
      %7952 = vmatprep.mubr.bf16.mxu0 0
      %7953 = vmatmul.mubr.bf16.gmra.mrb[0].mxu0 %v7803
      %v7954 = vpop.f32.mrb[0].mxu0
      %v7955 = vadd.f32 %v7785, %v7954
      %v7956 = vpop.f32.mrb[0].mxu0
      %v7957 = vpop.f32.mrb[0].mxu0
      %v7958 = vadd.f32 %v7785, %v7957
      %v7959 = vpop.f32.mrb[0].mxu0
      %7960 = vmatprep.mubr.bf16.mxu0 0
      %7961 = vmatmul.mubr.bf16.gmra.mrb[0].mxu0 %v7806
      %v7962 = vpop.f32.mrb[0].mxu0
      %v7963 = vadd.f32 %v7785, %v7962
      %v7964 = vpop.f32.mrb[0].mxu0
      %v7965 = vpop.f32.mrb[0].mxu0
      %v7966 = vadd.f32 %v7785, %v7965
      %v7967 = vpop.f32.mrb[0].mxu0
      %7968 = vmatprep.mubr.bf16.mxu0 0
      %7969 = vmatmul.mubr.bf16.gmra.mrb[0].mxu0 %v7809
      %v7970 = vpop.f32.mrb[0].mxu0
      %v7971 = vadd.f32 %v7785, %v7970
      %v7972 = vpop.f32.mrb[0].mxu0
      %v7973 = vpop.f32.mrb[0].mxu0
      %v7974 = vadd.f32 %v7785, %v7973
      %v7975 = vpop.f32.mrb[0].mxu0
      %7976 = vmatprep.mubr.bf16.mxu0 0
      %7977 = vmatmul.mubr.bf16.gmra.mrb[0].mxu0 %v7812
      %v7978 = vpop.f32.mrb[0].mxu0
      %v7979 = vadd.f32 %v7785, %v7978
      %v7980 = vpop.f32.mrb[0].mxu0
      %v7981 = vpop.f32.mrb[0].mxu0
      %v7982 = vadd.f32 %v7785, %v7981
      %v7983 = vpop.f32.mrb[0].mxu0
      %7984 = vmatprep.mubr.bf16.mxu0 0
      %7985 = vmatmul.mubr.bf16.gmra.mrb[0].mxu0 %v7815
      %v7986 = vpop.f32.mrb[0].mxu0
      %v7987 = vadd.f32 %v7785, %v7986
      %v7988 = vpop.f32.mrb[0].mxu0
      %v7989 = vpop.f32.mrb[0].mxu0
      %v7990 = vadd.f32 %v7785, %v7989
      %v7991 = vpop.f32.mrb[0].mxu0
      %7992 = vmatprep.mubr.bf16.mxu0 0
      %7993 = vmatmul.mubr.bf16.gmra.mrb[0].mxu0 %v7818
      %v7994 = vpop.f32.mrb[0].mxu0
      %v7995 = vadd.f32 %v7785, %v7994
      %v7996 = vpop.f32.mrb[0].mxu0
      %v7997 = vpop.f32.mrb[0].mxu0
      %v7998 = vadd.f32 %v7785, %v7997
      %v7999 = vpop.f32.mrb[0].mxu0
      %8000 = vmatprep.mubr.bf16.mxu0 0
      %8001 = vmatmul.mubr.bf16.gmra.mrb[0].mxu0 %v7821
      %v8002 = vpop.f32.mrb[0].mxu0
      %v8003 = vadd.f32 %v7785, %v8002
      %v8004 = vpop.f32.mrb[0].mxu0
      %v8005 = vpop.f32.mrb[0].mxu0
      %v8006 = vadd.f32 %v7785, %v8005
      %v8007 = vpop.f32.mrb[0].mxu0
      %8008 = vmatprep.mubr.bf16.mxu0 0
      %8009 = vmatmul.mubr.bf16.gmra.mrb[0].mxu0 %v7824
      %v8010 = vpop.f32.mrb[0].mxu0
      %v8011 = vadd.f32 %v7785, %v8010
      %v8012 = vpop.f32.mrb[0].mxu0
      %v8013 = vpop.f32.mrb[0].mxu0
      %v8014 = vadd.f32 %v7785, %v8013
      %v8015 = vpop.f32.mrb[0].mxu0
      %8016 = vmatprep.mubr.bf16.mxu0 0
      %8017 = vmatmul.mubr.bf16.gmra.mrb[0].mxu0 %v7827
      %v8018 = vpop.f32.mrb[0].mxu0
      %v8019 = vadd.f32 %v7785, %v8018
      %v8020 = vpop.f32.mrb[0].mxu0
      %v8021 = vpop.f32.mrb[0].mxu0
      %v8022 = vadd.f32 %v7785, %v8021
      %v8023 = vpop.f32.mrb[0].mxu0
      %8024 = vmatprep.mubr.bf16.mxu0 0
      %8025 = vmatmul.mubr.bf16.gmra.mrb[0].mxu0 %v7830
      %v8026 = vpop.f32.mrb[0].mxu0
      %v8027 = vadd.f32 %v7785, %v8026
      %v8028 = vpop.f32.mrb[0].mxu0
      %v8029 = vpop.f32.mrb[0].mxu0
      %v8030 = vadd.f32 %v7785, %v8029
      %v8031 = vpop.f32.mrb[0].mxu0
      %8032 = vmatprep.mubr.bf16.mxu0 0
      %8033 = vmatmul.mubr.bf16.gmra.mrb[0].mxu0 %v7833
      %v8034 = vpop.f32.mrb[0].mxu0
      %v8035 = vadd.f32 %v7785, %v8034
      %v8036 = vpop.f32.mrb[0].mxu0
      %v8037 = vpop.f32.mrb[0].mxu0
      %v8038 = vadd.f32 %v7785, %v8037
      %v8039 = vpop.f32.mrb[0].mxu0
      %8040 = vmatprep.mubr.bf16.mxu0 0
      %8041 = vmatmul.mubr.bf16.gmra.mrb[0].mxu0 %v7836
      %v8042 = vpop.f32.mrb[0].mxu0
      %v8043 = vadd.f32 %v7785, %v8042
      %v8044 = vpop.f32.mrb[0].mxu0
      %v8045 = vpop.f32.mrb[0].mxu0
      %v8046 = vadd.f32 %v7785, %v8045
      %v8047 = vpop.f32.mrb[0].mxu0
      %8048 = vmatprep.mubr.bf16.mxu0 0
      %8049 = vmatmul.mubr.bf16.gmra.mrb[0].mxu0 %v7839
      %v8050 = vpop.f32.mrb[0].mxu0
      %v8051 = vadd.f32 %v7785, %v8050
      %v8052 = vpop.f32.mrb[0].mxu0
      %v8053 = vpop.f32.mrb[0].mxu0
      %v8054 = vadd.f32 %v7785, %v8053
      %v8055 = vpop.f32.mrb[0].mxu0
      %8056 = vmatprep.mubr.bf16.mxu0 0
      %8057 = vmatmul.mubr.bf16.gmra.mrb[0].mxu0 %v7842
      %v8058 = vpop.f32.mrb[0].mxu0
      %v8059 = vadd.f32 %v7785, %v8058
      %v8060 = vpop.f32.mrb[0].mxu0
      %v8061 = vpop.f32.mrb[0].mxu0
      %v8062 = vadd.f32 %v7785, %v8061
      %v8063 = vpop.f32.mrb[0].mxu0
      %8064 = vmatprep.mubr.bf16.mxu0 0
      %8065 = vmatmul.mubr.bf16.gmra.mrb[0].mxu0 %v7845
      %v8066 = vpop.f32.mrb[0].mxu0
      %v8067 = vadd.f32 %v7785, %v8066
      %v8068 = vpop.f32.mrb[0].mxu0
      %v8069 = vpop.f32.mrb[0].mxu0
      %v8070 = vadd.f32 %v7785, %v8069
      %v8071 = vpop.f32.mrb[0].mxu0
      %8072 = vmatprep.mubr.bf16.mxu0 0
      %8073 = vmatmul.mubr.bf16.gmra.mrb[0].mxu0 %v7848
      %v8074 = vpop.f32.mrb[0].mxu0
      %v8075 = vadd.f32 %v7785, %v8074
      %v8076 = vpop.f32.mrb[0].mxu0
      %v8077 = vpop.f32.mrb[0].mxu0
      %v8078 = vadd.f32 %v7785, %v8077
      %v8079 = vpop.f32.mrb[0].mxu0
      %8080 = vmatprep.mubr.bf16.mxu0 0
      %8081 = vmatmul.mubr.bf16.gmra.mrb[0].mxu0 %v7851
      %v8082 = vpop.f32.mrb[0].mxu0
      %v8083 = vadd.f32 %v7785, %v8082
      %v8084 = vpop.f32.mrb[0].mxu0
      %v8085 = vpop.f32.mrb[0].mxu0
      %v8086 = vadd.f32 %v7785, %v8085
      %v8087 = vpop.f32.mrb[0].mxu0
      %8088 = vmatprep.mubr.bf16.mxu0 0
      %8089 = vmatmul.mubr.bf16.gmra.mrb[0].mxu0 %v7854
      %v8090 = vpop.f32.mrb[0].mxu0
      %v8091 = vadd.f32 %v7785, %v8090
      %v8092 = vpop.f32.mrb[0].mxu0
      %v8093 = vpop.f32.mrb[0].mxu0
      %v8094 = vadd.f32 %v7785, %v8093
      %v8095 = vpop.f32.mrb[0].mxu0
      %8096 = vmatprep.mubr.bf16.mxu0 0
      %8097 = vmatmul.mubr.bf16.gmra.mrb[0].mxu0 %v7857
      %v8098 = vpop.f32.mrb[0].mxu0
      %v8099 = vadd.f32 %v7785, %v8098
      %v8100 = vpop.f32.mrb[0].mxu0
      %v8101 = vpop.f32.mrb[0].mxu0
      %v8102 = vadd.f32 %v7785, %v8101
      %v8103 = vpop.f32.mrb[0].mxu0
      %8104 = vmatprep.mubr.bf16.mxu0 0
      %8105 = vmatmul.mubr.bf16.gmra.mrb[0].mxu0 %v7860
      %v8106 = vpop.f32.mrb[0].mxu0
      %v8107 = vadd.f32 %v7785, %v8106
      %v8108 = vpop.f32.mrb[0].mxu0
      %v8109 = vpop.f32.mrb[0].mxu0
      %v8110 = vadd.f32 %v7785, %v8109
      %v8111 = vpop.f32.mrb[0].mxu0
      %8112 = vmatprep.mubr.bf16.mxu0 0
      %8113 = vmatmul.mubr.bf16.gmra.mrb[0].mxu0 %v7863
      %v8114 = vpop.f32.mrb[0].mxu0
      %v8115 = vadd.f32 %v7785, %v8114
      %v8116 = vpop.f32.mrb[0].mxu0
      %v8117 = vpop.f32.mrb[0].mxu0
      %v8118 = vadd.f32 %v7785, %v8117
      %v8119 = vpop.f32.mrb[0].mxu0
      %8120 = vmatprep.mubr.bf16.mxu0 0
      %8121 = vmatmul.mubr.bf16.gmra.mrb[0].mxu0 %v7866
      %v8122 = vpop.f32.mrb[0].mxu0
      %v8123 = vadd.f32 %v7785, %v8122
      %v8124 = vpop.f32.mrb[0].mxu0
      %v8125 = vpop.f32.mrb[0].mxu0
      %v8126 = vadd.f32 %v7785, %v8125
      %v8127 = vpop.f32.mrb[0].mxu0
      %8128 = vmatprep.mubr.bf16.mxu0 0
      %8129 = vmatmul.mubr.bf16.gmra.mrb[0].mxu0 %v7869
      %v8130 = vpop.f32.mrb[0].mxu0
      %v8131 = vadd.f32 %v7785, %v8130
      %v8132 = vpop.f32.mrb[0].mxu0
      %v8133 = vpop.f32.mrb[0].mxu0
      %v8134 = vadd.f32 %v7785, %v8133
      %v8135 = vpop.f32.mrb[0].mxu0
      %8136 = vmatprep.mubr.bf16.mxu0 0
      %8137 = vmatmul.mubr.bf16.gmra.mrb[0].mxu0 %v7872
      %v8138 = vpop.f32.mrb[0].mxu0
      %v8139 = vadd.f32 %v7785, %v8138
      %v8140 = vpop.f32.mrb[0].mxu0
      %v8141 = vpop.f32.mrb[0].mxu0
      %v8142 = vadd.f32 %v7785, %v8141
      %v8143 = vpop.f32.mrb[0].mxu0
      %8144 = vmatprep.mubr.bf16.mxu0 0
      %8145 = vmatmul.mubr.bf16.gmra.mrb[0].mxu0 %v7875
      %v8146 = vpop.f32.mrb[0].mxu0
      %v8147 = vadd.f32 %v7785, %v8146
      %v8148 = vpop.f32.mrb[0].mxu0
      %v8149 = vpop.f32.mrb[0].mxu0
      %v8150 = vadd.f32 %v7785, %v8149
      %v8151 = vpop.f32.mrb[0].mxu0
      %8152 = vmatprep.mubr.bf16.mxu0 0
      %8153 = vmatmul.mubr.bf16.gmra.mrb[0].mxu0 %v7878
      %v8154 = vpop.f32.mrb[0].mxu0
      %v8155 = vadd.f32 %v7785, %v8154
      %v8156 = vpop.f32.mrb[0].mxu0
      %v8157 = vpop.f32.mrb[0].mxu0
      %v8158 = vadd.f32 %v7785, %v8157
      %v8159 = vpop.f32.mrb[0].mxu0
      %8160 = vmatprep.mubr.bf16.mxu0 0
      %8161 = vmatmul.mubr.bf16.gmra.mrb[0].mxu0 %v7881
      %v8162 = vpop.f32.mrb[0].mxu0
      %v8163 = vadd.f32 %v7785, %v8162
      %v8164 = vpop.f32.mrb[0].mxu0
      %v8165 = vpop.f32.mrb[0].mxu0
      %v8166 = vadd.f32 %v7785, %v8165
      %v8167 = vpop.f32.mrb[0].mxu0
      %8168 = vmatprep.mubr.bf16.mxu0 0
      %8169 = vmatmul.mubr.bf16.gmra.mrb[0].mxu0 %v7884
      %v8170 = vpop.f32.mrb[0].mxu0
      %v8171 = vadd.f32 %v7785, %v8170
      %v8172 = vpop.f32.mrb[0].mxu0
      %v8173 = vpop.f32.mrb[0].mxu0
      %v8174 = vadd.f32 %v7785, %v8173
      %v8175 = vpop.f32.mrb[0].mxu0
      %8176 = vmatprep.mubr.bf16.mxu0 0
      %8177 = vmatmul.mubr.bf16.gmra.mrb[0].mxu0 %v7887
      %v8178 = vpop.f32.mrb[0].mxu0
      %v8179 = vadd.f32 %v7785, %v8178
      %v8180 = vpop.f32.mrb[0].mxu0
      %v8181 = vpop.f32.mrb[0].mxu0
      %v8182 = vadd.f32 %v7785, %v8181
      %v8183 = vpop.f32.mrb[0].mxu0
      %8184 = vmatprep.mubr.bf16.mxu0 0
      %8185 = vmatmul.mubr.bf16.gmra.mrb[0].mxu0 %v7890
      %v8186 = vpop.f32.mrb[0].mxu0
      %v8187 = vadd.f32 %v7785, %v8186
      %v8188 = vpop.f32.mrb[0].mxu0
      %v8189 = vpop.f32.mrb[0].mxu0
      %v8190 = vadd.f32 %v7785, %v8189
      %v8191 = vpop.f32.mrb[0].mxu0
      %8192 = vmatprep.mubr.bf16.mxu0 0
      %8193 = vmatmul.mubr.bf16.gmra.mrb[0].mxu0 %v7893
      %v8194 = vpop.f32.mrb[0].mxu0
      %v8195 = vadd.f32 %v7785, %v8194
      %v8196 = vpop.f32.mrb[0].mxu0
      %v8197 = vpop.f32.mrb[0].mxu0
      %v8198 = vadd.f32 %v7785, %v8197
      %v8199 = vpop.f32.mrb[0].mxu0
      %8200 = vmatprep.mubr.bf16.mxu0 0
      %8201 = vmatmul.mubr.bf16.gmra.mrb[0].mxu0 %v7896
      %v8202 = vpop.f32.mrb[0].mxu0
      %v8203 = vadd.f32 %v7785, %v8202
      %v8204 = vpop.f32.mrb[0].mxu0
      %v8205 = vpop.f32.mrb[0].mxu0
      %v8206 = vadd.f32 %v7785, %v8205
      %v8207 = vpop.f32.mrb[0].mxu0
      %8208 = vmatprep.mubr.bf16.mxu0 0
      %8209 = vmatmul.mubr.bf16.gmra.mrb[0].mxu0 %v7899
      %v8210 = vpop.f32.mrb[0].mxu0
      %v8211 = vadd.f32 %v7785, %v8210
      %v8212 = vpop.f32.mrb[0].mxu0
      %v8213 = vpop.f32.mrb[0].mxu0
      %v8214 = vadd.f32 %v7785, %v8213
      %v8215 = vpop.f32.mrb[0].mxu0
      %8216 = vmatprep.mubr.bf16.mxu0 0
      %8217 = vmatmul.mubr.bf16.gmra.mrb[0].mxu0 %v7902
      %v8218 = vpop.f32.mrb[0].mxu0
      %v8219 = vadd.f32 %v7785, %v8218
      %v8220 = vpop.f32.mrb[0].mxu0
      %v8221 = vpop.f32.mrb[0].mxu0
      %v8222 = vadd.f32 %v7785, %v8221
      %v8223 = vpop.f32.mrb[0].mxu0
      %8224 = vmatprep.mubr.bf16.mxu0 0
      %8225 = vmatmul.mubr.bf16.gmra.mrb[0].mxu0 %v7905
      %v8226 = vpop.f32.mrb[0].mxu0
      %v8227 = vadd.f32 %v7785, %v8226
      %v8228 = vpop.f32.mrb[0].mxu0
      %v8229 = vpop.f32.mrb[0].mxu0
      %v8230 = vadd.f32 %v7785, %v8229
      %v8231 = vpop.f32.mrb[0].mxu0
      %8232 = vdwg.mxu0
      %8233 = vst [vmem:[%s170] sm:$0xff] %v7947
      %8234 = vst [vmem:[%s170 + $0x8] sm:$0xff] %v7950
      %8235 = vst [vmem:[%s170 + $0x10] sm:$0xff] %v7955
      %8236 = vst [vmem:[%s170 + $0x18] sm:$0xff] %v7958
      %8237 = vst [vmem:[%s170 + $0x20] sm:$0xff] %v7963
      %8238 = vst [vmem:[%s170 + $0x28] sm:$0xff] %v7966
      %8239 = vst [vmem:[%s170 + $0x30] sm:$0xff] %v7971
      %8240 = vst [vmem:[%s170 + $0x38] sm:$0xff] %v7974
      %8241 = vst [vmem:[%s170 + $0x40] sm:$0xff] %v7979
      %8242 = vst [vmem:[%s170 + $0x48] sm:$0xff] %v7982
      %8243 = vst [vmem:[%s170 + $0x50] sm:$0xff] %v7987
      %8244 = vst [vmem:[%s170 + $0x58] sm:$0xff] %v7990
      %8245 = vst [vmem:[%s170 + $0x60] sm:$0xff] %v7995
      %8246 = vst [vmem:[%s170 + $0x68] sm:$0xff] %v7998
      %8247 = vst [vmem:[%s170 + $0x70] sm:$0xff] %v8003
      %8248 = vst [vmem:[%s170 + $0x78] sm:$0xff] %v8006
      %8249 = vst [vmem:[%s170 + $0x80] sm:$0xff] %v8011
      %8250 = vst [vmem:[%s170 + $0x88] sm:$0xff] %v8014
      %8251 = vst [vmem:[%s170 + $0x90] sm:$0xff] %v8019
      %8252 = vst [vmem:[%s170 + $0x98] sm:$0xff] %v8022
      %8253 = vst [vmem:[%s170 + $0xa0] sm:$0xff] %v8027
      %8254 = vst [vmem:[%s170 + $0xa8] sm:$0xff] %v8030
      %8255 = vst [vmem:[%s170 + $0xb0] sm:$0xff] %v8035
      %8256 = vst [vmem:[%s170 + $0xb8] sm:$0xff] %v8038
      %8257 = vst [vmem:[%s170 + $0xc0] sm:$0xff] %v8043
      %8258 = vst [vmem:[%s170 + $0xc8] sm:$0xff] %v8046
      %8259 = vst [vmem:[%s170 + $0xd0] sm:$0xff] %v8051
      %8260 = vst [vmem:[%s170 + $0xd8] sm:$0xff] %v8054
      %8261 = vst [vmem:[%s170 + $0xe0] sm:$0xff] %v8059
      %8262 = vst [vmem:[%s170 + $0xe8] sm:$0xff] %v8062
      %8263 = vst [vmem:[%s170 + $0xf0] sm:$0xff] %v8067
      %8264 = vst [vmem:[%s170 + $0xf8] sm:$0xff] %v8070
      %8265 = vst [vmem:[%s170 + $0x100] sm:$0xff] %v8075
      %8266 = vst [vmem:[%s170 + $0x108] sm:$0xff] %v8078
      %8267 = vst [vmem:[%s170 + $0x110] sm:$0xff] %v8083
      %8268 = vst [vmem:[%s170 + $0x118] sm:$0xff] %v8086
      %8269 = vst [vmem:[%s170 + $0x120] sm:$0xff] %v8091
      %8270 = vst [vmem:[%s170 + $0x128] sm:$0xff] %v8094
      %8271 = vst [vmem:[%s170 + $0x130] sm:$0xff] %v8099
      %8272 = vst [vmem:[%s170 + $0x138] sm:$0xff] %v8102
      %8273 = vst [vmem:[%s170 + $0x140] sm:$0xff] %v8107
      %8274 = vst [vmem:[%s170 + $0x148] sm:$0xff] %v8110
      %8275 = vst [vmem:[%s170 + $0x150] sm:$0xff] %v8115
      %8276 = vst [vmem:[%s170 + $0x158] sm:$0xff] %v8118
      %8277 = vst [vmem:[%s170 + $0x160] sm:$0xff] %v8123
      %8278 = vst [vmem:[%s170 + $0x168] sm:$0xff] %v8126
      %8279 = vst [vmem:[%s170 + $0x170] sm:$0xff] %v8131
      %8280 = vst [vmem:[%s170 + $0x178] sm:$0xff] %v8134
      %8281 = vst [vmem:[%s170 + $0x180] sm:$0xff] %v8139
      %8282 = vst [vmem:[%s170 + $0x188] sm:$0xff] %v8142
      %8283 = vst [vmem:[%s170 + $0x190] sm:$0xff] %v8147
      %8284 = vst [vmem:[%s170 + $0x198] sm:$0xff] %v8150
      %8285 = vst [vmem:[%s170 + $0x1a0] sm:$0xff] %v8155
      %8286 = vst [vmem:[%s170 + $0x1a8] sm:$0xff] %v8158
      %8287 = vst [vmem:[%s170 + $0x1b0] sm:$0xff] %v8163
      %8288 = vst [vmem:[%s170 + $0x1b8] sm:$0xff] %v8166
      %8289 = vst [vmem:[%s170 + $0x1c0] sm:$0xff] %v8171
      %8290 = vst [vmem:[%s170 + $0x1c8] sm:$0xff] %v8174
      %8291 = vst [vmem:[%s170 + $0x1d0] sm:$0xff] %v8179
      %8292 = vst [vmem:[%s170 + $0x1d8] sm:$0xff] %v8182
      %8293 = vst [vmem:[%s170 + $0x1e0] sm:$0xff] %v8187
      %8294 = vst [vmem:[%s170 + $0x1e8] sm:$0xff] %v8190
      %8295 = vst [vmem:[%s170 + $0x1f0] sm:$0xff] %v8195
      %8296 = vst [vmem:[%s170 + $0x1f8] sm:$0xff] %v8198
      %8297 = vst [vmem:[%s170 + $0x200] sm:$0xff] %v8203
      %8298 = vst [vmem:[%s170 + $0x208] sm:$0xff] %v8206
      %8299 = vst [vmem:[%s170 + $0x210] sm:$0xff] %v8211
      %8300 = vst [vmem:[%s170 + $0x218] sm:$0xff] %v8214
      %8301 = vst [vmem:[%s170 + $0x220] sm:$0xff] %v8219
      %8302 = vst [vmem:[%s170 + $0x228] sm:$0xff] %v8222
      %8303 = vst [vmem:[%s170 + $0x230] sm:$0xff] %v8227
      %8304 = vst [vmem:[%s170 + $0x238] sm:$0xff] %v8230
      %s8305 = smul.u32 72, %s14
      %p8306 = scmp.lt.s32.totalorder %s8305, 143
      %s8307 = scalar_select %p8306, %s8305, 143
      %s8308 = smul.addr %s8307, 8
      %s8309 = scalar_lea.vmem %s3, %s8308
      // Predicated region
      $region33: #{cnn_mnist_forward.3} parent=31 // pred_check
        %p8310 = pneg %p100
      $region34: #{cnn_mnist_forward.3} parent=31 // pred_check_branch
        %8312 = sbr.rel (%p8310) target = $region36
      $region35: #{cnn_mnist_forward.3} parent=31 // pred_region
        %s8313 = smul.u32 72, %s14
      $region36: #{cnn_mnist_forward.3} parent=31 // pred_fallthru
        _
    $region32: #{cnn_mnist_forward.3} parent=5 // pred_fallthru
      _
    %p8314 = scmp.le.s32.totalorder 2, %s9
    // Predicated region
    $region37: #{cnn_mnist_forward.3} parent=5 // pred_check
      %p8315 = pneg %p8314
    $region38: #{cnn_mnist_forward.3} parent=5 // pred_check_branch
      %8317 = sbr.rel (%p8315) target = $region40
    $region39: #{cnn_mnist_forward.3} parent=5 // pred_region
      %s8318 = ssub.s32 %s9, 2
      // Predicated region
      $region41: #{cnn_mnist_forward.3} parent=39 // pred_check
        %p8319 = pneg %p106
      $region42: #{cnn_mnist_forward.3} parent=39 // pred_check_branch
        %8321 = sbr.rel (%p8319) target = $region44
      $region43: #{cnn_mnist_forward.3} parent=39 // pred_region
        %s8322 = smul.u32 72, %s15
        %p8323 = scmp.lt.s32.totalorder %s8322, 143
        %s8324 = scalar_select %p8323, %s8322, 143
        %s8325 = smul.addr %s8324, 8
        %s8326 = scalar_lea.vmem %s3, %s8325
      $region44: #{cnn_mnist_forward.3} parent=39 // pred_fallthru
        _
    $region40: #{cnn_mnist_forward.3} parent=5 // pred_fallthru
      _
  $region6: #{cnn_mnist_forward.3} parent=0 // loop_footer
    %s13 = sadd.s32 1, %s9
  $region7: #{cnn_mnist_forward.3} parent=0 // loop_footer_branch
    %8 = sbr.rel target = $region3
  $region8: #{cnn_mnist_forward.3} parent=0 // loop_exit
    _

</llo_original>
